<compile_context>
chip_gen: v7x
topology: tpu7x:2x2x1
jax: 0.10.0
libtpu: 0.0.40
codegen_flags: <defaults>
</compile_context>

<pallas_src>
import functools
import math

import jax
import jax.numpy as jnp
from jax.experimental import pallas as pl
from jax.experimental.pallas import tpu as pltpu


def _round_up(x, m):
    return -(-x // m) * m


@functools.lru_cache(maxsize=None)
def _vmem_limit_bytes():
    cap = 128 * 1024 * 1024
    try:
        info = pltpu.get_tpu_info()
        cap = int(getattr(info, "vmem_capacity_bytes", cap))
    except Exception:
        pass
    # Leave headroom for compiler scratch / double buffering (v7x: 64 MiB phys).
    return min((cap * 3) // 4, 100 * 1024 * 1024)


# ----------------------------------------------------------------------------
# Conv2d(k=4, s=2, p=1) + LeakyReLU(0.01): 4 fat dots over interleaved phases.
# ----------------------------------------------------------------------------
def _conv_kernel(ph_ref, w_ref, b_ref, o_ref, *, m_dot, w_out):
    """One batch tile per grid step.

    ph_ref: (1, Mrows, 4*Cin) bf16 -- phase-interleaved padded input; row
            r = img*(Ho+1)*(Wo+1) + i*(Wo+1) + j holds the 4 parity phases of
            phase-position (i, j), concatenated along channels (g = 2a+b).
    w_ref : (4, 4*Cin, Cout) bf16 -- one (4*Cin, Cout) block per filter offset
            (dh, dw) in {0,1}^2 (t = 2*dh+dw), block rows ordered by g = 2a+b.
    b_ref : (1, Cout) f32.
    o_ref : (1, m_dot, Cout) bf16 -- "wide+tall" output: (Ho+1)*(Wo+1) rows
            per image; row i*(Wo+1)+j is output pixel (i, j) for i < Ho,
            j < Wo, garbage otherwise (dropped by the wrapper).
    """
    offs = (0, 1, w_out + 1, w_out + 2)           # dh*(Wo+1) + dw
    acc = jnp.dot(ph_ref[0, pl.ds(offs[0], m_dot), :], w_ref[0],
                  preferred_element_type=jnp.float32)
    for t in range(1, 4):
        acc = acc + jnp.dot(ph_ref[0, pl.ds(offs[t], m_dot), :], w_ref[t],
                            preferred_element_type=jnp.float32)
    y = acc + b_ref[...]
    y = jnp.where(y > 0, y, 0.01 * y)             # LeakyReLU(0.01)
    o_ref[0] = y.astype(o_ref.dtype)


def _pick_batch_tile(batch, m_img, c_out):
    budget = 12 * 1024 * 1024                     # f32 accumulator budget / step
    per_img = m_img * c_out * 4
    bt = max(1, min(batch, budget // max(per_img, 1)))
    while batch % bt:
        bt -= 1
    return bt


def conv2d_s2k4p1_leakyrelu(x_nhwc, w_off, b_row):
    """x_nhwc: (B, H, W, Cin); w_off: (4, 4*Cin, Cout) bf16; b_row: (1, Cout) f32."""
    B, H, W, Cin = x_nhwc.shape
    assert H % 2 == 0 and W % 2 == 0, (H, W)
    assert w_off.shape[1] == 4 * Cin, (w_off.shape, Cin)
    Cout = w_off.shape[2]
    Ho, Wo = H // 2, W // 2
    m_img = (Ho + 1) * (Wo + 1)
    bt = _pick_batch_tile(B, m_img, Cout)
    nbt = B // bt
    m_dot = bt * m_img
    m_rows = _round_up(m_dot + Wo + 2, 8)         # slack for offset overshoot

    # pad (p=1) + channel-interleaved even/odd phase split (one fused XLA op).
    xp = jnp.pad(x_nhwc.astype(jnp.bfloat16), ((0, 0), (1, 1), (1, 1), (0, 0)))
    ph = xp.reshape(B, Ho + 1, 2, Wo + 1, 2, Cin)
    ph = ph.transpose(0, 1, 3, 2, 4, 5).reshape(nbt, m_dot, 4 * Cin)
    ph = jnp.pad(ph, ((0, 0), (0, m_rows - m_dot), (0, 0)))

    out = pl.pallas_call(
        functools.partial(_conv_kernel, m_dot=m_dot, w_out=Wo),
        out_shape=jax.ShapeDtypeStruct((nbt, m_dot, Cout), jnp.bfloat16),
        grid_spec=pltpu.PrefetchScalarGridSpec(
            num_scalar_prefetch=0,
            grid=(nbt,),
            in_specs=[
                pl.BlockSpec((1, m_rows, 4 * Cin), lambda t: (t, 0, 0)),
                pl.BlockSpec((4, 4 * Cin, Cout), lambda t: (0, 0, 0)),
                pl.BlockSpec((1, Cout), lambda t: (0, 0)),
            ],
            out_specs=pl.BlockSpec((1, m_dot, Cout), lambda t: (t, 0, 0)),
        ),
        compiler_params=pltpu.CompilerParams(
            dimension_semantics=("parallel",),
            vmem_limit_bytes=_vmem_limit_bytes(),
        ),
    )(ph, w_off, b_row)

    # drop per-image garbage row/col; fuses with the next layer's phase split.
    return out.reshape(B, Ho + 1, Wo + 1, Cout)[:, :Ho, :Wo, :]


# ----------------------------------------------------------------------------
# Fused MLP tail + Gaussian head.
# ----------------------------------------------------------------------------
def _leaky(v):
    return jnp.where(v > 0, v, 0.01 * v)


def _mlp_tail(h1, b1_ref, w2_ref, b2_ref, w3_ref, b3_ref, wh_ref, bh_ref,
              eps_ref, a_pad):
    h = _leaky(h1 + b1_ref[...])                                             # fc1
    h = _leaky(jnp.dot(h.astype(jnp.bfloat16), w2_ref[...],
                       preferred_element_type=jnp.float32) + b2_ref[...])    # fc2
    h = jnp.dot(h.astype(jnp.bfloat16), w3_ref[...],
                preferred_element_type=jnp.float32) + b3_ref[...]            # fc3
    h = jnp.maximum(h, 0.0)                                                  # relu
    heads = jnp.dot(h.astype(jnp.bfloat16), wh_ref[...],
                    preferred_element_type=jnp.float32) + bh_ref[...]
    means = heads[:, :a_pad]                       # lane-aligned 128-wide group
    log_std = jnp.clip(heads[:, a_pad:], -10.0, 2.0)
    z = means + jnp.exp(log_std) * eps_ref[...]    # Normal(means, stds).rsample()
    return jnp.tanh(z)


def _mlp_head_kernel_single(x_ref, w1_ref, b1_ref, w2_ref, b2_ref, w3_ref,
                            b3_ref, wh_ref, bh_ref, eps_ref, o_ref, *, a_pad):
    h1 = jnp.dot(x_ref[...], w1_ref[...], preferred_element_type=jnp.float32)
    o_ref[...] = _mlp_tail(h1, b1_ref, w2_ref, b2_ref, w3_ref, b3_ref,
                           wh_ref, bh_ref, eps_ref, a_pad).astype(o_ref.dtype)


def _mlp_head_kernel_ktiled(x_ref, w1_ref, b1_ref, w2_ref, b2_ref, w3_ref,
                            b3_ref, wh_ref, bh_ref, eps_ref, o_ref, acc_ref,
                            *, a_pad):
    k = pl.program_id(0)

    @pl.when(k == 0)
    def _():
        acc_ref[...] = jnp.zeros_like(acc_ref)

    acc_ref[...] += jnp.dot(x_ref[...], w1_ref[...],
                            preferred_element_type=jnp.float32)

    @pl.when(k == pl.num_programs(0) - 1)
    def _():
        o_ref[...] = _mlp_tail(acc_ref[...], b1_ref, w2_ref, b2_ref, w3_ref,
                               b3_ref, wh_ref, bh_ref, eps_ref,
                               a_pad).astype(o_ref.dtype)


def _pick_k_tile(flat):
    for t in (8192, 4096, 2048, 1024, 512, 256):
        if flat % t == 0:
            return t
    return None


def mlp_gaussian_head(x_flat, p, eps):
    B, flat = x_flat.shape
    A = eps.shape[1]
    a_pad = p["head_w"].shape[1] // 2
    eps_p = jnp.pad(eps.astype(jnp.float32), ((0, 0), (0, a_pad - A)))
    x_bf = x_flat.astype(jnp.bfloat16)

    weight_specs = [
        pl.BlockSpec((1, 256), lambda k: (0, 0)),          # fc1 b
        pl.BlockSpec((256, 256), lambda k: (0, 0)),        # fc2 w (resident)
        pl.BlockSpec((1, 256), lambda k: (0, 0)),          # fc2 b
        pl.BlockSpec((256, 256), lambda k: (0, 0)),        # fc3 w (resident)
        pl.BlockSpec((1, 256), lambda k: (0, 0)),          # fc3 b
        pl.BlockSpec((256, 2 * a_pad), lambda k: (0, 0)),  # [means|log_stds] w
        pl.BlockSpec((1, 2 * a_pad), lambda k: (0, 0)),    # [means|log_stds] b
        pl.BlockSpec((B, a_pad), lambda k: (0, 0)),        # eps (lane-padded)
    ]
    args = (x_bf, p["fc1_w"], p["fc1_b"], p["fc2_w"], p["fc2_b"],
            p["fc3_w"], p["fc3_b"], p["head_w"], p["head_b"], eps_p)
    out_shape = jax.ShapeDtypeStruct((B, a_pad), jnp.float32)
    out_spec = pl.BlockSpec((B, a_pad), lambda k: (0, 0))
    cparams = pltpu.CompilerParams(dimension_semantics=("arbitrary",),
                                   vmem_limit_bytes=_vmem_limit_bytes())

    tk = None if flat <= 8192 else _pick_k_tile(flat)
    if tk is None:
        # whole fc1 contraction fits: single step, no accumulator scratch.
        out = pl.pallas_call(
            functools.partial(_mlp_head_kernel_single, a_pad=a_pad),
            out_shape=out_shape,
            grid_spec=pltpu.PrefetchScalarGridSpec(
                num_scalar_prefetch=0,
                grid=(1,),
                in_specs=[pl.BlockSpec((B, flat), lambda k: (0, 0)),
                          pl.BlockSpec((flat, 256), lambda k: (0, 0))]
                         + weight_specs,
                out_specs=out_spec,
            ),
            compiler_params=cparams,
        )(*args)
    else:
        nk = flat // tk
        out = pl.pallas_call(
            functools.partial(_mlp_head_kernel_ktiled, a_pad=a_pad),
            out_shape=out_shape,
            grid_spec=pltpu.PrefetchScalarGridSpec(
                num_scalar_prefetch=0,
                grid=(nk,),
                in_specs=[pl.BlockSpec((B, tk), lambda k: (0, k)),
                          pl.BlockSpec((tk, 256), lambda k: (k, 0))]
                         + weight_specs,
                out_specs=out_spec,
                scratch_shapes=[pltpu.VMEM((B, 256), jnp.float32)],
            ),
            compiler_params=cparams,
        )(*args)
    return out[:, :A]


# ----------------------------------------------------------------------------
# Parameter init (mirrors the PyTorch module's shapes & init scheme)
# ----------------------------------------------------------------------------
def init_params(key, action_size, img_size):
    """Conv: kaiming_normal_ fan_out; Linear: N(0, 0.01); biases zero.
    fc1_w rows are stored in NHWC (h, w, c) flatten order (torch flattens
    (c, h, w)); loading a torch checkpoint requires a one-time row permutation
    plus the usual (cout,cin,kh,kw)->(kh,kw,cin,cout) / (out,in)->(in,out)
    weight transposes."""
    def conv_w(k, kh, kw, cin, cout):
        std = math.sqrt(2.0 / (cout * kh * kw))
        return jax.random.normal(k, (kh, kw, cin, cout), jnp.float32) * std

    def linear_w(k, din, dout):
        return jax.random.normal(k, (din, dout), jnp.float32) * 0.01

    keys = jax.random.split(key, 8)
    flat = 256 * (img_size // 8) * (img_size // 8)
    return {
        "conv1_w": conv_w(keys[0], 4, 4, 3, 64),
        "conv1_b": jnp.zeros((64,), jnp.float32),
        "conv2_w": conv_w(keys[1], 4, 4, 64, 128),
        "conv2_b": jnp.zeros((128,), jnp.float32),
        "conv3_w": conv_w(keys[2], 4, 4, 128, 256),
        "conv3_b": jnp.zeros((256,), jnp.float32),
        "fc1_w": linear_w(keys[3], flat, 256), "fc1_b": jnp.zeros((256,), jnp.float32),
        "fc2_w": linear_w(keys[4], 256, 256), "fc2_b": jnp.zeros((256,), jnp.float32),
        "fc3_w": linear_w(keys[5], 256, 256), "fc3_b": jnp.zeros((256,), jnp.float32),
        "mean_w": linear_w(keys[6], 256, action_size),
        "mean_b": jnp.zeros((action_size,), jnp.float32),
        "lstd_w": linear_w(keys[7], 256, action_size),
        "lstd_b": jnp.zeros((action_size,), jnp.float32),
    }


def prepare_params(params, action_size):
    """One-time layout prep: bf16 GEMM weights; conv weights stacked as 4
    offset blocks of shape (4*Cin, Cout) matching the channel-interleaved
    phase buffer; conv1 cout / conv2 cin zero-padded to 128 (lane-dense,
    numerically identical); mean & log_std heads merged into one
    (256, 2*Apad) GEMM with each head in its own 128-lane group."""
    def offset_blocks(w):  # (4,4,Cin,Cout) -> (4, 4*Cin, Cout) bf16
        taps = []
        for dh in range(2):
            for dw in range(2):
                blocks = [w[2 * dh + a, 2 * dw + b]
                          for a in range(2) for b in range(2)]   # g = 2a+b
                taps.append(jnp.concatenate(blocks, axis=0))
        return jnp.stack(taps).astype(jnp.bfloat16)

    def row(b):
        return b.reshape(1, -1).astype(jnp.float32)

    c1_w = jnp.pad(params["conv1_w"], ((0, 0), (0, 0), (0, 0), (0, 64)))  # cout 64->128
    c1_b = jnp.pad(params["conv1_b"], ((0, 64),))
    c2_w = jnp.pad(params["conv2_w"], ((0, 0), (0, 0), (0, 64), (0, 0)))  # cin 64->128

    a_pad = max(128, _round_up(action_size, 128))
    head_w = jnp.zeros((256, 2 * a_pad), jnp.float32)
    head_w = head_w.at[:, :action_size].set(params["mean_w"])
    head_w = head_w.at[:, a_pad:a_pad + action_size].set(params["lstd_w"])
    head_b = jnp.zeros((2 * a_pad,), jnp.float32)
    head_b = head_b.at[:action_size].set(params["mean_b"])
    head_b = head_b.at[a_pad:a_pad + action_size].set(params["lstd_b"])

    return {
        "c1_w": offset_blocks(c1_w), "c1_b": row(c1_b),
        "c2_w": offset_blocks(c2_w), "c2_b": row(params["conv2_b"]),
        "c3_w": offset_blocks(params["conv3_w"]), "c3_b": row(params["conv3_b"]),
        "fc1_w": params["fc1_w"].astype(jnp.bfloat16), "fc1_b": row(params["fc1_b"]),
        "fc2_w": params["fc2_w"].astype(jnp.bfloat16), "fc2_b": row(params["fc2_b"]),
        "fc3_w": params["fc3_w"].astype(jnp.bfloat16), "fc3_b": row(params["fc3_b"]),
        "head_w": head_w.astype(jnp.bfloat16), "head_b": row(head_b),
    }


# ----------------------------------------------------------------------------
# Full forward pass
# ----------------------------------------------------------------------------
@jax.jit
def bc_visual_policy_stochastic_forward(p, x_nchw, eps):
    """x_nchw: (B, 3, H, W) float32 (H, W divisible by 8);
    eps: (B, action_size) std-normal noise for the reparameterized sample."""
    x = jnp.transpose(x_nchw, (0, 2, 3, 1))                       # NCHW -> NHWC
    x = conv2d_s2k4p1_leakyrelu(x, p["c1_w"], p["c1_b"])          # (B, H/2, W/2, 128)
    x = conv2d_s2k4p1_leakyrelu(x, p["c2_w"], p["c2_b"])          # (B, H/4, W/4, 128)
    x = conv2d_s2k4p1_leakyrelu(x, p["c3_w"], p["c3_b"])          # (B, H/8, W/8, 256)
    B = x.shape[0]
    x = x.reshape(B, -1)        # NHWC flatten; fc1_w rows use the same order
    return mlp_gaussian_head(x, p, eps)


# ----------------------------------------------------------------------------
if __name__ == "__main__":
    ACTION_SIZE = 32
    IMG_SIZE = 16
    BATCH = 2

    key = jax.random.PRNGKey(0)
    k_params, k_x, k_eps = jax.random.split(key, 3)

    params = init_params(k_params, ACTION_SIZE, IMG_SIZE)
    prep = prepare_params(params, ACTION_SIZE)

    x = jax.random.normal(k_x, (BATCH, 3, IMG_SIZE, IMG_SIZE), jnp.float32)
    # TODO(synk): torch.distributions.Normal(...).rsample() noise is supplied
    #             as a host-side deterministic input rather than drawn in-kernel.
    eps = jax.random.normal(k_eps, (BATCH, ACTION_SIZE), jnp.float32)

    action = bc_visual_policy_stochastic_forward(prep, x, eps)
    action = jax.block_until_ready(action)

    assert action.shape == (BATCH, ACTION_SIZE), action.shape
    assert bool(jnp.all(jnp.isfinite(action)))
    assert bool(jnp.all(jnp.abs(action) <= 1.0))  # tanh-squashed actions
    print("KERNEL_OK")
</pallas_src>

<mosaic_0001>
module attributes {stable_mosaic.version = 11 : i64} {
  func.func @_conv_kernel(%arg0: i32, %arg1: memref<1x176x12xbf16, #tpu.memory_space<vmem>>, %arg2: memref<4x12x128xbf16, #tpu.memory_space<vmem>>, %arg3: memref<1x128xf32, #tpu.memory_space<vmem>>, %arg4: memref<1x162x128xbf16, #tpu.memory_space<vmem>>) attributes {dimension_semantics = [#tpu.dimension_semantics<parallel>], iteration_bounds = array<i64: 1>, scalar_prefetch = 0 : i64, scratch_operands = 0 : i64, tpu.core_type = #tpu.core_type<tc>, window_params = [{transform_indices = @transform_0, window_bounds = array<i64: 1, 176, 12>}, {pipeline_mode = #tpu.pipeline_mode<synchronous>, transform_indices = @transform_1, window_bounds = array<i64: 4, 12, 128>}, {pipeline_mode = #tpu.pipeline_mode<synchronous>, transform_indices = @transform_2, window_bounds = array<i64: 1, 128>}, {transform_indices = @transform_3, window_bounds = array<i64: 1, 162, 128>}]} {
    %c0 = arith.constant 0 : index
    %c0_0 = arith.constant 0 : index
    %c0_1 = arith.constant 0 : index
    %0 = vector.load %arg1[%c0, %c0_0, %c0_1] : memref<1x176x12xbf16, #tpu.memory_space<vmem>>, vector<1x162x12xbf16>
    %1 = vector.shape_cast %0 : vector<1x162x12xbf16> to vector<162x12xbf16>
    %c0_2 = arith.constant 0 : index
    %c0_3 = arith.constant 0 : index
    %c0_4 = arith.constant 0 : index
    %2 = vector.load %arg2[%c0_2, %c0_3, %c0_4] : memref<4x12x128xbf16, #tpu.memory_space<vmem>>, vector<1x12x128xbf16>
    %3 = vector.shape_cast %2 : vector<1x12x128xbf16> to vector<12x128xbf16>
    %cst = arith.constant dense<0.000000e+00> : vector<162x128xf32>
    %4 = tpu.matmul %1, %3, %cst {dimension_numbers = #tpu.dot_dimension_numbers<[1], [0], [0], [1], [0, 0, 1, 1], [], []>} : vector<162x12xbf16>, vector<12x128xbf16>, vector<162x128xf32> -> vector<162x128xf32>
    %c0_5 = arith.constant 0 : index
    %c1 = arith.constant 1 : index
    %c0_6 = arith.constant 0 : index
    %5 = vector.load %arg1[%c0_5, %c1, %c0_6] : memref<1x176x12xbf16, #tpu.memory_space<vmem>>, vector<1x162x12xbf16>
    %6 = vector.shape_cast %5 : vector<1x162x12xbf16> to vector<162x12xbf16>
    %c1_7 = arith.constant 1 : index
    %c0_8 = arith.constant 0 : index
    %c0_9 = arith.constant 0 : index
    %7 = vector.load %arg2[%c1_7, %c0_8, %c0_9] : memref<4x12x128xbf16, #tpu.memory_space<vmem>>, vector<1x12x128xbf16>
    %8 = vector.shape_cast %7 : vector<1x12x128xbf16> to vector<12x128xbf16>
    %cst_10 = arith.constant dense<0.000000e+00> : vector<162x128xf32>
    %9 = tpu.matmul %6, %8, %cst_10 {dimension_numbers = #tpu.dot_dimension_numbers<[1], [0], [0], [1], [0, 0, 1, 1], [], []>} : vector<162x12xbf16>, vector<12x128xbf16>, vector<162x128xf32> -> vector<162x128xf32>
    %10 = arith.addf %4, %9 : vector<162x128xf32>
    %c0_11 = arith.constant 0 : index
    %c9 = arith.constant 9 : index
    %c0_12 = arith.constant 0 : index
    %11 = vector.load %arg1[%c0_11, %c9, %c0_12] : memref<1x176x12xbf16, #tpu.memory_space<vmem>>, vector<1x162x12xbf16>
    %12 = vector.shape_cast %11 : vector<1x162x12xbf16> to vector<162x12xbf16>
    %c2 = arith.constant 2 : index
    %c0_13 = arith.constant 0 : index
    %c0_14 = arith.constant 0 : index
    %13 = vector.load %arg2[%c2, %c0_13, %c0_14] : memref<4x12x128xbf16, #tpu.memory_space<vmem>>, vector<1x12x128xbf16>
    %14 = vector.shape_cast %13 : vector<1x12x128xbf16> to vector<12x128xbf16>
    %cst_15 = arith.constant dense<0.000000e+00> : vector<162x128xf32>
    %15 = tpu.matmul %12, %14, %cst_15 {dimension_numbers = #tpu.dot_dimension_numbers<[1], [0], [0], [1], [0, 0, 1, 1], [], []>} : vector<162x12xbf16>, vector<12x128xbf16>, vector<162x128xf32> -> vector<162x128xf32>
    %16 = arith.addf %10, %15 : vector<162x128xf32>
    %c0_16 = arith.constant 0 : index
    %c10 = arith.constant 10 : index
    %c0_17 = arith.constant 0 : index
    %17 = vector.load %arg1[%c0_16, %c10, %c0_17] : memref<1x176x12xbf16, #tpu.memory_space<vmem>>, vector<1x162x12xbf16>
    %18 = vector.shape_cast %17 : vector<1x162x12xbf16> to vector<162x12xbf16>
    %c3 = arith.constant 3 : index
    %c0_18 = arith.constant 0 : index
    %c0_19 = arith.constant 0 : index
    %19 = vector.load %arg2[%c3, %c0_18, %c0_19] : memref<4x12x128xbf16, #tpu.memory_space<vmem>>, vector<1x12x128xbf16>
    %20 = vector.shape_cast %19 : vector<1x12x128xbf16> to vector<12x128xbf16>
    %cst_20 = arith.constant dense<0.000000e+00> : vector<162x128xf32>
    %21 = tpu.matmul %18, %20, %cst_20 {dimension_numbers = #tpu.dot_dimension_numbers<[1], [0], [0], [1], [0, 0, 1, 1], [], []>} : vector<162x12xbf16>, vector<12x128xbf16>, vector<162x128xf32> -> vector<162x128xf32>
    %22 = arith.addf %16, %21 : vector<162x128xf32>
    %c0_21 = arith.constant 0 : index
    %c0_22 = arith.constant 0 : index
    %23 = vector.load %arg3[%c0_21, %c0_22] : memref<1x128xf32, #tpu.memory_space<vmem>>, vector<1x128xf32>
    %24 = vector.broadcast %23 : vector<1x128xf32> to vector<162x128xf32>
    %25 = arith.addf %22, %24 : vector<162x128xf32>
    %cst_23 = arith.constant 0.000000e+00 : f32
    %26 = vector.broadcast %cst_23 : f32 to vector<162x128xf32>
    %27 = arith.cmpf ogt, %25, %26 : vector<162x128xf32>
    %cst_24 = arith.constant 0.00999999977 : f32
    %28 = vector.broadcast %cst_24 : f32 to vector<162x128xf32>
    %29 = arith.mulf %28, %25 : vector<162x128xf32>
    %30 = arith.select %27, %25, %29 : vector<162x128xi1>, vector<162x128xf32>
    %31 = arith.truncf %30 : vector<162x128xf32> to vector<162x128xbf16>
    %c0_25 = arith.constant 0 : index
    %c0_26 = arith.constant 0 : index
    %c0_27 = arith.constant 0 : index
    %32 = vector.load %arg4[%c0_25, %c0_26, %c0_27] : memref<1x162x128xbf16, #tpu.memory_space<vmem>>, vector<1x162x128xbf16>
    %33 = vector.shape_cast %32 : vector<1x162x128xbf16> to vector<162x128xbf16>
    %34 = vector.shape_cast %31 : vector<162x128xbf16> to vector<1x162x128xbf16>
    tpu.vector_store %arg4[%c0_25, %c0_26, %c0_27], %34 {strides = array<i32>} : memref<1x162x128xbf16, #tpu.memory_space<vmem>>, vector<1x162x128xbf16>,
    return
  }
  func.func @transform_0(%arg0: i32) -> (i32, i32, i32) {
    %c0_i32 = arith.constant 0 : i32
    %c0_i32_0 = arith.constant 0 : i32
    %c0_i32_1 = arith.constant 0 : i32
    return %arg0, %c0_i32, %c0_i32_0 : i32, i32, i32
  }
  func.func @transform_1(%arg0: i32) -> (i32, i32, i32) {
    %c0_i32 = arith.constant 0 : i32
    %c0_i32_0 = arith.constant 0 : i32
    %c0_i32_1 = arith.constant 0 : i32
    %c0_i32_2 = arith.constant 0 : i32
    return %c0_i32, %c0_i32_0, %c0_i32_1 : i32, i32, i32
  }
  func.func @transform_2(%arg0: i32) -> (i32, i32) {
    %c0_i32 = arith.constant 0 : i32
    %c0_i32_0 = arith.constant 0 : i32
    %c0_i32_1 = arith.constant 0 : i32
    return %c0_i32, %c0_i32_0 : i32, i32
  }
  func.func @transform_3(%arg0: i32) -> (i32, i32, i32) {
    %c0_i32 = arith.constant 0 : i32
    %c0_i32_0 = arith.constant 0 : i32
    %c0_i32_1 = arith.constant 0 : i32
    return %arg0, %c0_i32, %c0_i32_0 : i32, i32, i32
  }
}

module attributes {stable_mosaic.version = 11 : i64} {
  func.func @_conv_kernel(%arg0: i32, %arg1: memref<1x24x512xbf16, #tpu.memory_space<vmem>>, %arg2: memref<4x512x256xbf16, #tpu.memory_space<vmem>>, %arg3: memref<1x256xf32, #tpu.memory_space<vmem>>, %arg4: memref<1x18x256xbf16, #tpu.memory_space<vmem>>) attributes {dimension_semantics = [#tpu.dimension_semantics<parallel>], iteration_bounds = array<i64: 1>, scalar_prefetch = 0 : i64, scratch_operands = 0 : i64, tpu.core_type = #tpu.core_type<tc>, window_params = [{transform_indices = @transform_0, window_bounds = array<i64: 1, 24, 512>}, {pipeline_mode = #tpu.pipeline_mode<synchronous>, transform_indices = @transform_1, window_bounds = array<i64: 4, 512, 256>}, {pipeline_mode = #tpu.pipeline_mode<synchronous>, transform_indices = @transform_2, window_bounds = array<i64: 1, 256>}, {transform_indices = @transform_3, window_bounds = array<i64: 1, 18, 256>}]} {
    %c0 = arith.constant 0 : index
    %c0_0 = arith.constant 0 : index
    %c0_1 = arith.constant 0 : index
    %0 = vector.load %arg1[%c0, %c0_0, %c0_1] : memref<1x24x512xbf16, #tpu.memory_space<vmem>>, vector<1x18x512xbf16>
    %1 = vector.shape_cast %0 : vector<1x18x512xbf16> to vector<18x512xbf16>
    %c0_2 = arith.constant 0 : index
    %c0_3 = arith.constant 0 : index
    %c0_4 = arith.constant 0 : index
    %2 = vector.load %arg2[%c0_2, %c0_3, %c0_4] : memref<4x512x256xbf16, #tpu.memory_space<vmem>>, vector<1x512x256xbf16>
    %3 = vector.shape_cast %2 : vector<1x512x256xbf16> to vector<512x256xbf16>
    %cst = arith.constant dense<0.000000e+00> : vector<18x256xf32>
    %4 = tpu.matmul %1, %3, %cst {dimension_numbers = #tpu.dot_dimension_numbers<[1], [0], [0], [1], [0, 0, 1, 1], [], []>} : vector<18x512xbf16>, vector<512x256xbf16>, vector<18x256xf32> -> vector<18x256xf32>
    %c0_5 = arith.constant 0 : index
    %c1 = arith.constant 1 : index
    %c0_6 = arith.constant 0 : index
    %5 = vector.load %arg1[%c0_5, %c1, %c0_6] : memref<1x24x512xbf16, #tpu.memory_space<vmem>>, vector<1x18x512xbf16>
    %6 = vector.shape_cast %5 : vector<1x18x512xbf16> to vector<18x512xbf16>
    %c1_7 = arith.constant 1 : index
    %c0_8 = arith.constant 0 : index
    %c0_9 = arith.constant 0 : index
    %7 = vector.load %arg2[%c1_7, %c0_8, %c0_9] : memref<4x512x256xbf16, #tpu.memory_space<vmem>>, vector<1x512x256xbf16>
    %8 = vector.shape_cast %7 : vector<1x512x256xbf16> to vector<512x256xbf16>
    %cst_10 = arith.constant dense<0.000000e+00> : vector<18x256xf32>
    %9 = tpu.matmul %6, %8, %cst_10 {dimension_numbers = #tpu.dot_dimension_numbers<[1], [0], [0], [1], [0, 0, 1, 1], [], []>} : vector<18x512xbf16>, vector<512x256xbf16>, vector<18x256xf32> -> vector<18x256xf32>
    %10 = arith.addf %4, %9 : vector<18x256xf32>
    %c0_11 = arith.constant 0 : index
    %c3 = arith.constant 3 : index
    %c0_12 = arith.constant 0 : index
    %11 = vector.load %arg1[%c0_11, %c3, %c0_12] : memref<1x24x512xbf16, #tpu.memory_space<vmem>>, vector<1x18x512xbf16>
    %12 = vector.shape_cast %11 : vector<1x18x512xbf16> to vector<18x512xbf16>
    %c2 = arith.constant 2 : index
    %c0_13 = arith.constant 0 : index
    %c0_14 = arith.constant 0 : index
    %13 = vector.load %arg2[%c2, %c0_13, %c0_14] : memref<4x512x256xbf16, #tpu.memory_space<vmem>>, vector<1x512x256xbf16>
    %14 = vector.shape_cast %13 : vector<1x512x256xbf16> to vector<512x256xbf16>
    %cst_15 = arith.constant dense<0.000000e+00> : vector<18x256xf32>
    %15 = tpu.matmul %12, %14, %cst_15 {dimension_numbers = #tpu.dot_dimension_numbers<[1], [0], [0], [1], [0, 0, 1, 1], [], []>} : vector<18x512xbf16>, vector<512x256xbf16>, vector<18x256xf32> -> vector<18x256xf32>
    %16 = arith.addf %10, %15 : vector<18x256xf32>
    %c0_16 = arith.constant 0 : index
    %c4 = arith.constant 4 : index
    %c0_17 = arith.constant 0 : index
    %17 = vector.load %arg1[%c0_16, %c4, %c0_17] : memref<1x24x512xbf16, #tpu.memory_space<vmem>>, vector<1x18x512xbf16>
    %18 = vector.shape_cast %17 : vector<1x18x512xbf16> to vector<18x512xbf16>
    %c3_18 = arith.constant 3 : index
    %c0_19 = arith.constant 0 : index
    %c0_20 = arith.constant 0 : index
    %19 = vector.load %arg2[%c3_18, %c0_19, %c0_20] : memref<4x512x256xbf16, #tpu.memory_space<vmem>>, vector<1x512x256xbf16>
    %20 = vector.shape_cast %19 : vector<1x512x256xbf16> to vector<512x256xbf16>
    %cst_21 = arith.constant dense<0.000000e+00> : vector<18x256xf32>
    %21 = tpu.matmul %18, %20, %cst_21 {dimension_numbers = #tpu.dot_dimension_numbers<[1], [0], [0], [1], [0, 0, 1, 1], [], []>} : vector<18x512xbf16>, vector<512x256xbf16>, vector<18x256xf32> -> vector<18x256xf32>
    %22 = arith.addf %16, %21 : vector<18x256xf32>
    %c0_22 = arith.constant 0 : index
    %c0_23 = arith.constant 0 : index
    %23 = vector.load %arg3[%c0_22, %c0_23] : memref<1x256xf32, #tpu.memory_space<vmem>>, vector<1x256xf32>
    %24 = vector.broadcast %23 : vector<1x256xf32> to vector<18x256xf32>
    %25 = arith.addf %22, %24 : vector<18x256xf32>
    %cst_24 = arith.constant 0.000000e+00 : f32
    %26 = vector.broadcast %cst_24 : f32 to vector<18x256xf32>
    %27 = arith.cmpf ogt, %25, %26 : vector<18x256xf32>
    %cst_25 = arith.constant 0.00999999977 : f32
    %28 = vector.broadcast %cst_25 : f32 to vector<18x256xf32>
    %29 = arith.mulf %28, %25 : vector<18x256xf32>
    %30 = arith.select %27, %25, %29 : vector<18x256xi1>, vector<18x256xf32>
    %31 = arith.truncf %30 : vector<18x256xf32> to vector<18x256xbf16>
    %c0_26 = arith.constant 0 : index
    %c0_27 = arith.constant 0 : index
    %c0_28 = arith.constant 0 : index
    %32 = vector.load %arg4[%c0_26, %c0_27, %c0_28] : memref<1x18x256xbf16, #tpu.memory_space<vmem>>, vector<1x18x256xbf16>
    %33 = vector.shape_cast %32 : vector<1x18x256xbf16> to vector<18x256xbf16>
    %34 = vector.shape_cast %31 : vector<18x256xbf16> to vector<1x18x256xbf16>
    tpu.vector_store %arg4[%c0_26, %c0_27, %c0_28], %34 {strides = array<i32>} : memref<1x18x256xbf16, #tpu.memory_space<vmem>>, vector<1x18x256xbf16>,
    return
  }
  func.func @transform_0(%arg0: i32) -> (i32, i32, i32) {
    %c0_i32 = arith.constant 0 : i32
    %c0_i32_0 = arith.constant 0 : i32
    %c0_i32_1 = arith.constant 0 : i32
    return %arg0, %c0_i32, %c0_i32_0 : i32, i32, i32
  }
  func.func @transform_1(%arg0: i32) -> (i32, i32, i32) {
    %c0_i32 = arith.constant 0 : i32
    %c0_i32_0 = arith.constant 0 : i32
    %c0_i32_1 = arith.constant 0 : i32
    %c0_i32_2 = arith.constant 0 : i32
    return %c0_i32, %c0_i32_0, %c0_i32_1 : i32, i32, i32
  }
  func.func @transform_2(%arg0: i32) -> (i32, i32) {
    %c0_i32 = arith.constant 0 : i32
    %c0_i32_0 = arith.constant 0 : i32
    %c0_i32_1 = arith.constant 0 : i32
    return %c0_i32, %c0_i32_0 : i32, i32
  }
  func.func @transform_3(%arg0: i32) -> (i32, i32, i32) {
    %c0_i32 = arith.constant 0 : i32
    %c0_i32_0 = arith.constant 0 : i32
    %c0_i32_1 = arith.constant 0 : i32
    return %arg0, %c0_i32, %c0_i32_0 : i32, i32, i32
  }
}

module attributes {stable_mosaic.version = 11 : i64} {
  func.func @_conv_kernel(%arg0: i32, %arg1: memref<1x56x512xbf16, #tpu.memory_space<vmem>>, %arg2: memref<4x512x128xbf16, #tpu.memory_space<vmem>>, %arg3: memref<1x128xf32, #tpu.memory_space<vmem>>, %arg4: memref<1x50x128xbf16, #tpu.memory_space<vmem>>) attributes {dimension_semantics = [#tpu.dimension_semantics<parallel>], iteration_bounds = array<i64: 1>, scalar_prefetch = 0 : i64, scratch_operands = 0 : i64, tpu.core_type = #tpu.core_type<tc>, window_params = [{transform_indices = @transform_0, window_bounds = array<i64: 1, 56, 512>}, {pipeline_mode = #tpu.pipeline_mode<synchronous>, transform_indices = @transform_1, window_bounds = array<i64: 4, 512, 128>}, {pipeline_mode = #tpu.pipeline_mode<synchronous>, transform_indices = @transform_2, window_bounds = array<i64: 1, 128>}, {transform_indices = @transform_3, window_bounds = array<i64: 1, 50, 128>}]} {
    %c0 = arith.constant 0 : index
    %c0_0 = arith.constant 0 : index
    %c0_1 = arith.constant 0 : index
    %0 = vector.load %arg1[%c0, %c0_0, %c0_1] : memref<1x56x512xbf16, #tpu.memory_space<vmem>>, vector<1x50x512xbf16>
    %1 = vector.shape_cast %0 : vector<1x50x512xbf16> to vector<50x512xbf16>
    %c0_2 = arith.constant 0 : index
    %c0_3 = arith.constant 0 : index
    %c0_4 = arith.constant 0 : index
    %2 = vector.load %arg2[%c0_2, %c0_3, %c0_4] : memref<4x512x128xbf16, #tpu.memory_space<vmem>>, vector<1x512x128xbf16>
    %3 = vector.shape_cast %2 : vector<1x512x128xbf16> to vector<512x128xbf16>
    %cst = arith.constant dense<0.000000e+00> : vector<50x128xf32>
    %4 = tpu.matmul %1, %3, %cst {dimension_numbers = #tpu.dot_dimension_numbers<[1], [0], [0], [1], [0, 0, 1, 1], [], []>} : vector<50x512xbf16>, vector<512x128xbf16>, vector<50x128xf32> -> vector<50x128xf32>
    %c0_5 = arith.constant 0 : index
    %c1 = arith.constant 1 : index
    %c0_6 = arith.constant 0 : index
    %5 = vector.load %arg1[%c0_5, %c1, %c0_6] : memref<1x56x512xbf16, #tpu.memory_space<vmem>>, vector<1x50x512xbf16>
    %6 = vector.shape_cast %5 : vector<1x50x512xbf16> to vector<50x512xbf16>
    %c1_7 = arith.constant 1 : index
    %c0_8 = arith.constant 0 : index
    %c0_9 = arith.constant 0 : index
    %7 = vector.load %arg2[%c1_7, %c0_8, %c0_9] : memref<4x512x128xbf16, #tpu.memory_space<vmem>>, vector<1x512x128xbf16>
    %8 = vector.shape_cast %7 : vector<1x512x128xbf16> to vector<512x128xbf16>
    %cst_10 = arith.constant dense<0.000000e+00> : vector<50x128xf32>
    %9 = tpu.matmul %6, %8, %cst_10 {dimension_numbers = #tpu.dot_dimension_numbers<[1], [0], [0], [1], [0, 0, 1, 1], [], []>} : vector<50x512xbf16>, vector<512x128xbf16>, vector<50x128xf32> -> vector<50x128xf32>
    %10 = arith.addf %4, %9 : vector<50x128xf32>
    %c0_11 = arith.constant 0 : index
    %c5 = arith.constant 5 : index
    %c0_12 = arith.constant 0 : index
    %11 = vector.load %arg1[%c0_11, %c5, %c0_12] : memref<1x56x512xbf16, #tpu.memory_space<vmem>>, vector<1x50x512xbf16>
    %12 = vector.shape_cast %11 : vector<1x50x512xbf16> to vector<50x512xbf16>
    %c2 = arith.constant 2 : index
    %c0_13 = arith.constant 0 : index
    %c0_14 = arith.constant 0 : index
    %13 = vector.load %arg2[%c2, %c0_13, %c0_14] : memref<4x512x128xbf16, #tpu.memory_space<vmem>>, vector<1x512x128xbf16>
    %14 = vector.shape_cast %13 : vector<1x512x128xbf16> to vector<512x128xbf16>
    %cst_15 = arith.constant dense<0.000000e+00> : vector<50x128xf32>
    %15 = tpu.matmul %12, %14, %cst_15 {dimension_numbers = #tpu.dot_dimension_numbers<[1], [0], [0], [1], [0, 0, 1, 1], [], []>} : vector<50x512xbf16>, vector<512x128xbf16>, vector<50x128xf32> -> vector<50x128xf32>
    %16 = arith.addf %10, %15 : vector<50x128xf32>
    %c0_16 = arith.constant 0 : index
    %c6 = arith.constant 6 : index
    %c0_17 = arith.constant 0 : index
    %17 = vector.load %arg1[%c0_16, %c6, %c0_17] : memref<1x56x512xbf16, #tpu.memory_space<vmem>>, vector<1x50x512xbf16>
    %18 = vector.shape_cast %17 : vector<1x50x512xbf16> to vector<50x512xbf16>
    %c3 = arith.constant 3 : index
    %c0_18 = arith.constant 0 : index
    %c0_19 = arith.constant 0 : index
    %19 = vector.load %arg2[%c3, %c0_18, %c0_19] : memref<4x512x128xbf16, #tpu.memory_space<vmem>>, vector<1x512x128xbf16>
    %20 = vector.shape_cast %19 : vector<1x512x128xbf16> to vector<512x128xbf16>
    %cst_20 = arith.constant dense<0.000000e+00> : vector<50x128xf32>
    %21 = tpu.matmul %18, %20, %cst_20 {dimension_numbers = #tpu.dot_dimension_numbers<[1], [0], [0], [1], [0, 0, 1, 1], [], []>} : vector<50x512xbf16>, vector<512x128xbf16>, vector<50x128xf32> -> vector<50x128xf32>
    %22 = arith.addf %16, %21 : vector<50x128xf32>
    %c0_21 = arith.constant 0 : index
    %c0_22 = arith.constant 0 : index
    %23 = vector.load %arg3[%c0_21, %c0_22] : memref<1x128xf32, #tpu.memory_space<vmem>>, vector<1x128xf32>
    %24 = vector.broadcast %23 : vector<1x128xf32> to vector<50x128xf32>
    %25 = arith.addf %22, %24 : vector<50x128xf32>
    %cst_23 = arith.constant 0.000000e+00 : f32
    %26 = vector.broadcast %cst_23 : f32 to vector<50x128xf32>
    %27 = arith.cmpf ogt, %25, %26 : vector<50x128xf32>
    %cst_24 = arith.constant 0.00999999977 : f32
    %28 = vector.broadcast %cst_24 : f32 to vector<50x128xf32>
    %29 = arith.mulf %28, %25 : vector<50x128xf32>
    %30 = arith.select %27, %25, %29 : vector<50x128xi1>, vector<50x128xf32>
    %31 = arith.truncf %30 : vector<50x128xf32> to vector<50x128xbf16>
    %c0_25 = arith.constant 0 : index
    %c0_26 = arith.constant 0 : index
    %c0_27 = arith.constant 0 : index
    %32 = vector.load %arg4[%c0_25, %c0_26, %c0_27] : memref<1x50x128xbf16, #tpu.memory_space<vmem>>, vector<1x50x128xbf16>
    %33 = vector.shape_cast %32 : vector<1x50x128xbf16> to vector<50x128xbf16>
    %34 = vector.shape_cast %31 : vector<50x128xbf16> to vector<1x50x128xbf16>
    tpu.vector_store %arg4[%c0_25, %c0_26, %c0_27], %34 {strides = array<i32>} : memref<1x50x128xbf16, #tpu.memory_space<vmem>>, vector<1x50x128xbf16>,
    return
  }
  func.func @transform_0(%arg0: i32) -> (i32, i32, i32) {
    %c0_i32 = arith.constant 0 : i32
    %c0_i32_0 = arith.constant 0 : i32
    %c0_i32_1 = arith.constant 0 : i32
    return %arg0, %c0_i32, %c0_i32_0 : i32, i32, i32
  }
  func.func @transform_1(%arg0: i32) -> (i32, i32, i32) {
    %c0_i32 = arith.constant 0 : i32
    %c0_i32_0 = arith.constant 0 : i32
    %c0_i32_1 = arith.constant 0 : i32
    %c0_i32_2 = arith.constant 0 : i32
    return %c0_i32, %c0_i32_0, %c0_i32_1 : i32, i32, i32
  }
  func.func @transform_2(%arg0: i32) -> (i32, i32) {
    %c0_i32 = arith.constant 0 : i32
    %c0_i32_0 = arith.constant 0 : i32
    %c0_i32_1 = arith.constant 0 : i32
    return %c0_i32, %c0_i32_0 : i32, i32
  }
  func.func @transform_3(%arg0: i32) -> (i32, i32, i32) {
    %c0_i32 = arith.constant 0 : i32
    %c0_i32_0 = arith.constant 0 : i32
    %c0_i32_1 = arith.constant 0 : i32
    return %arg0, %c0_i32, %c0_i32_0 : i32, i32, i32
  }
}

module attributes {stable_mosaic.version = 11 : i64} {
  func.func @_mlp_head_kernel_single(%arg0: i32, %arg1: memref<2x1024xbf16, #tpu.memory_space<vmem>>, %arg2: memref<1024x256xbf16, #tpu.memory_space<vmem>>, %arg3: memref<1x256xf32, #tpu.memory_space<vmem>>, %arg4: memref<256x256xbf16, #tpu.memory_space<vmem>>, %arg5: memref<1x256xf32, #tpu.memory_space<vmem>>, %arg6: memref<256x256xbf16, #tpu.memory_space<vmem>>, %arg7: memref<1x256xf32, #tpu.memory_space<vmem>>, %arg8: memref<256x256xbf16, #tpu.memory_space<vmem>>, %arg9: memref<1x256xf32, #tpu.memory_space<vmem>>, %arg10: memref<2x128xf32, #tpu.memory_space<vmem>>, %arg11: memref<2x128xf32, #tpu.memory_space<vmem>>) attributes {dimension_semantics = [#tpu.dimension_semantics<arbitrary>], iteration_bounds = array<i64: 1>, scalar_prefetch = 0 : i64, scratch_operands = 0 : i64, tpu.core_type = #tpu.core_type<tc>, window_params = [{pipeline_mode = #tpu.pipeline_mode<synchronous>, transform_indices = @transform_0, window_bounds = array<i64: 2, 1024>}, {pipeline_mode = #tpu.pipeline_mode<synchronous>, transform_indices = @transform_1, window_bounds = array<i64: 1024, 256>}, {pipeline_mode = #tpu.pipeline_mode<synchronous>, transform_indices = @transform_2, window_bounds = array<i64: 1, 256>}, {pipeline_mode = #tpu.pipeline_mode<synchronous>, transform_indices = @transform_3, window_bounds = array<i64: 256, 256>}, {pipeline_mode = #tpu.pipeline_mode<synchronous>, transform_indices = @transform_4, window_bounds = array<i64: 1, 256>}, {pipeline_mode = #tpu.pipeline_mode<synchronous>, transform_indices = @transform_5, window_bounds = array<i64: 256, 256>}, {pipeline_mode = #tpu.pipeline_mode<synchronous>, transform_indices = @transform_6, window_bounds = array<i64: 1, 256>}, {pipeline_mode = #tpu.pipeline_mode<synchronous>, transform_indices = @transform_7, window_bounds = array<i64: 256, 256>}, {pipeline_mode = #tpu.pipeline_mode<synchronous>, transform_indices = @transform_8, window_bounds = array<i64: 1, 256>}, {pipeline_mode = #tpu.pipeline_mode<synchronous>, transform_indices = @transform_9, window_bounds = array<i64: 2, 128>}, {pipeline_mode = #tpu.pipeline_mode<synchronous>, transform_indices = @transform_10, window_bounds = array<i64: 2, 128>}]} {
    %c0 = arith.constant 0 : index
    %c0_0 = arith.constant 0 : index
    %0 = vector.load %arg1[%c0, %c0_0] : memref<2x1024xbf16, #tpu.memory_space<vmem>>, vector<2x1024xbf16>
    %c0_1 = arith.constant 0 : index
    %c0_2 = arith.constant 0 : index
    %1 = vector.load %arg2[%c0_1, %c0_2] : memref<1024x256xbf16, #tpu.memory_space<vmem>>, vector<1024x256xbf16>
    %cst = arith.constant dense<0.000000e+00> : vector<2x256xf32>
    %2 = tpu.matmul %0, %1, %cst {dimension_numbers = #tpu.dot_dimension_numbers<[1], [0], [0], [1], [0, 0, 1, 1], [], []>} : vector<2x1024xbf16>, vector<1024x256xbf16>, vector<2x256xf32> -> vector<2x256xf32>
    %c0_3 = arith.constant 0 : index
    %c0_4 = arith.constant 0 : index
    %3 = vector.load %arg3[%c0_3, %c0_4] : memref<1x256xf32, #tpu.memory_space<vmem>>, vector<1x256xf32>
    %4 = vector.broadcast %3 : vector<1x256xf32> to vector<2x256xf32>
    %5 = arith.addf %2, %4 : vector<2x256xf32>
    %cst_5 = arith.constant 0.000000e+00 : f32
    %6 = vector.broadcast %cst_5 : f32 to vector<2x256xf32>
    %7 = arith.cmpf ogt, %5, %6 : vector<2x256xf32>
    %cst_6 = arith.constant 0.00999999977 : f32
    %8 = vector.broadcast %cst_6 : f32 to vector<2x256xf32>
    %9 = arith.mulf %8, %5 : vector<2x256xf32>
    %10 = arith.select %7, %5, %9 : vector<2x256xi1>, vector<2x256xf32>
    %11 = arith.truncf %10 : vector<2x256xf32> to vector<2x256xbf16>
    %c0_7 = arith.constant 0 : index
    %c0_8 = arith.constant 0 : index
    %12 = vector.load %arg4[%c0_7, %c0_8] : memref<256x256xbf16, #tpu.memory_space<vmem>>, vector<256x256xbf16>
    %cst_9 = arith.constant dense<0.000000e+00> : vector<2x256xf32>
    %13 = tpu.matmul %11, %12, %cst_9 {dimension_numbers = #tpu.dot_dimension_numbers<[1], [0], [0], [1], [0, 0, 1, 1], [], []>} : vector<2x256xbf16>, vector<256x256xbf16>, vector<2x256xf32> -> vector<2x256xf32>
    %c0_10 = arith.constant 0 : index
    %c0_11 = arith.constant 0 : index
    %14 = vector.load %arg5[%c0_10, %c0_11] : memref<1x256xf32, #tpu.memory_space<vmem>>, vector<1x256xf32>
    %15 = vector.broadcast %14 : vector<1x256xf32> to vector<2x256xf32>
    %16 = arith.addf %13, %15 : vector<2x256xf32>
    %cst_12 = arith.constant 0.000000e+00 : f32
    %17 = vector.broadcast %cst_12 : f32 to vector<2x256xf32>
    %18 = arith.cmpf ogt, %16, %17 : vector<2x256xf32>
    %cst_13 = arith.constant 0.00999999977 : f32
    %19 = vector.broadcast %cst_13 : f32 to vector<2x256xf32>
    %20 = arith.mulf %19, %16 : vector<2x256xf32>
    %21 = arith.select %18, %16, %20 : vector<2x256xi1>, vector<2x256xf32>
    %22 = arith.truncf %21 : vector<2x256xf32> to vector<2x256xbf16>
    %c0_14 = arith.constant 0 : index
    %c0_15 = arith.constant 0 : index
    %23 = vector.load %arg6[%c0_14, %c0_15] : memref<256x256xbf16, #tpu.memory_space<vmem>>, vector<256x256xbf16>
    %cst_16 = arith.constant dense<0.000000e+00> : vector<2x256xf32>
    %24 = tpu.matmul %22, %23, %cst_16 {dimension_numbers = #tpu.dot_dimension_numbers<[1], [0], [0], [1], [0, 0, 1, 1], [], []>} : vector<2x256xbf16>, vector<256x256xbf16>, vector<2x256xf32> -> vector<2x256xf32>
    %c0_17 = arith.constant 0 : index
    %c0_18 = arith.constant 0 : index
    %25 = vector.load %arg7[%c0_17, %c0_18] : memref<1x256xf32, #tpu.memory_space<vmem>>, vector<1x256xf32>
    %26 = vector.broadcast %25 : vector<1x256xf32> to vector<2x256xf32>
    %27 = arith.addf %24, %26 : vector<2x256xf32>
    %cst_19 = arith.constant 0.000000e+00 : f32
    %28 = vector.broadcast %cst_19 : f32 to vector<2x256xf32>
    %29 = arith.maximumf %27, %28 : vector<2x256xf32>
    %30 = arith.truncf %29 : vector<2x256xf32> to vector<2x256xbf16>
    %c0_20 = arith.constant 0 : index
    %c0_21 = arith.constant 0 : index
    %31 = vector.load %arg8[%c0_20, %c0_21] : memref<256x256xbf16, #tpu.memory_space<vmem>>, vector<256x256xbf16>
    %cst_22 = arith.constant dense<0.000000e+00> : vector<2x256xf32>
    %32 = tpu.matmul %30, %31, %cst_22 {dimension_numbers = #tpu.dot_dimension_numbers<[1], [0], [0], [1], [0, 0, 1, 1], [], []>} : vector<2x256xbf16>, vector<256x256xbf16>, vector<2x256xf32> -> vector<2x256xf32>
    %c0_23 = arith.constant 0 : index
    %c0_24 = arith.constant 0 : index
    %33 = vector.load %arg9[%c0_23, %c0_24] : memref<1x256xf32, #tpu.memory_space<vmem>>, vector<1x256xf32>
    %34 = vector.broadcast %33 : vector<1x256xf32> to vector<2x256xf32>
    %35 = arith.addf %32, %34 : vector<2x256xf32>
    %36 = vector.extract_strided_slice %35 {offsets = [0, 0], sizes = [2, 128], strides = [1, 1]} : vector<2x256xf32> to vector<2x128xf32>
    %37 = vector.extract_strided_slice %35 {offsets = [0, 128], sizes = [2, 128], strides = [1, 1]} : vector<2x256xf32> to vector<2x128xf32>
    %cst_25 = arith.constant -1.000000e+01 : f32
    %cst_26 = arith.constant 2.000000e+00 : f32
    %38 = vector.broadcast %cst_25 : f32 to vector<2x128xf32>
    %39 = arith.maximumf %38, %37 : vector<2x128xf32>
    %40 = vector.broadcast %cst_26 : f32 to vector<2x128xf32>
    %41 = arith.minimumf %40, %39 : vector<2x128xf32>
    %42 = math.exp %41 : vector<2x128xf32>
    %c0_27 = arith.constant 0 : index
    %c0_28 = arith.constant 0 : index
    %43 = vector.load %arg10[%c0_27, %c0_28] : memref<2x128xf32, #tpu.memory_space<vmem>>, vector<2x128xf32>
    %44 = arith.mulf %42, %43 : vector<2x128xf32>
    %45 = arith.addf %36, %44 : vector<2x128xf32>
    %46 = math.tanh %45 : vector<2x128xf32>
    %c0_29 = arith.constant 0 : index
    %c0_30 = arith.constant 0 : index
    %47 = vector.load %arg11[%c0_29, %c0_30] : memref<2x128xf32, #tpu.memory_space<vmem>>, vector<2x128xf32>
    tpu.vector_store %arg11[%c0_29, %c0_30], %46 {strides = array<i32>} : memref<2x128xf32, #tpu.memory_space<vmem>>, vector<2x128xf32>,
    return
  }
  func.func @transform_0(%arg0: i32) -> (i32, i32) {
    %c0_i32 = arith.constant 0 : i32
    %c0_i32_0 = arith.constant 0 : i32
    %c0_i32_1 = arith.constant 0 : i32
    return %c0_i32, %c0_i32_0 : i32, i32
  }
  func.func @transform_1(%arg0: i32) -> (i32, i32) {
    %c0_i32 = arith.constant 0 : i32
    %c0_i32_0 = arith.constant 0 : i32
    %c0_i32_1 = arith.constant 0 : i32
    return %c0_i32, %c0_i32_0 : i32, i32
  }
  func.func @transform_2(%arg0: i32) -> (i32, i32) {
    %c0_i32 = arith.constant 0 : i32
    %c0_i32_0 = arith.constant 0 : i32
    %c0_i32_1 = arith.constant 0 : i32
    return %c0_i32, %c0_i32_0 : i32, i32
  }
  func.func @transform_3(%arg0: i32) -> (i32, i32) {
    %c0_i32 = arith.constant 0 : i32
    %c0_i32_0 = arith.constant 0 : i32
    %c0_i32_1 = arith.constant 0 : i32
    return %c0_i32, %c0_i32_0 : i32, i32
  }
  func.func @transform_4(%arg0: i32) -> (i32, i32) {
    %c0_i32 = arith.constant 0 : i32
    %c0_i32_0 = arith.constant 0 : i32
    %c0_i32_1 = arith.constant 0 : i32
    return %c0_i32, %c0_i32_0 : i32, i32
  }
  func.func @transform_5(%arg0: i32) -> (i32, i32) {
    %c0_i32 = arith.constant 0 : i32
    %c0_i32_0 = arith.constant 0 : i32
    %c0_i32_1 = arith.constant 0 : i32
    return %c0_i32, %c0_i32_0 : i32, i32
  }
  func.func @transform_6(%arg0: i32) -> (i32, i32) {
    %c0_i32 = arith.constant 0 : i32
    %c0_i32_0 = arith.constant 0 : i32
    %c0_i32_1 = arith.constant 0 : i32
    return %c0_i32, %c0_i32_0 : i32, i32
  }
  func.func @transform_7(%arg0: i32) -> (i32, i32) {
    %c0_i32 = arith.constant 0 : i32
    %c0_i32_0 = arith.constant 0 : i32
    %c0_i32_1 = arith.constant 0 : i32
    return %c0_i32, %c0_i32_0 : i32, i32
  }
  func.func @transform_8(%arg0: i32) -> (i32, i32) {
    %c0_i32 = arith.constant 0 : i32
    %c0_i32_0 = arith.constant 0 : i32
    %c0_i32_1 = arith.constant 0 : i32
    return %c0_i32, %c0_i32_0 : i32, i32
  }
  func.func @transform_9(%arg0: i32) -> (i32, i32) {
    %c0_i32 = arith.constant 0 : i32
    %c0_i32_0 = arith.constant 0 : i32
    %c0_i32_1 = arith.constant 0 : i32
    return %c0_i32, %c0_i32_0 : i32, i32
  }
  func.func @transform_10(%arg0: i32) -> (i32, i32) {
    %c0_i32 = arith.constant 0 : i32
    %c0_i32_0 = arith.constant 0 : i32
    %c0_i32_1 = arith.constant 0 : i32
    return %c0_i32, %c0_i32_0 : i32, i32
  }
}

</mosaic_0001>

<llo_original>
// kernel: bc_visual_policy_stochastic_forward.4
$region0: #{bc_visual_policy_stochastic_forward.4}
  #allocation0 [shape = 'u32[]', space=smem, size = 0x4, offset = 0x4, fixed_abs, tag = 'smem constant byte address 0x4 - core index']
  #allocation1 [shape = 'u32[144,128]{1,0:T(1,128)}', space=vmem, size = 0x12000, scoped, tag = 'internal scratch']
  %s0 = inlined_call_operand.hbm [shape: bf16[1,176,12], index: 0, kind: input, shape index: {}]
  %s1 = inlined_call_operand.hbm [shape: bf16[4,12,128], index: 1, kind: input, shape index: {}]
  %s2 = inlined_call_operand.hbm [shape: f32[1,128], index: 2, kind: input, shape index: {}]
  %s3 = inlined_call_operand.hbm [shape: bf16[1,162,128], index: 3, kind: output, shape index: {}]
  %s4 = sld [smem:[#allocation0]]
  $region34: #{bc_visual_policy_stochastic_forward.4} parent=0
    _
  %s6 = ssub.s32 1, %s4
  %s7 = scalar_select 0, %s6, %s4
  $region1: #{bc_visual_policy_stochastic_forward.4} parent=0
    #allocation2 [shape = 'u8[45056]{0}', space=vmem, size = 0xb000, scoped, tag = 'input window, operand 0, single buffered']
    #allocation3 [shape = 's32[1]{0}', space=sflag, size = 0x4, scoped, tag = 'scoped memory for bc_visual_policy_stochastic_forward.4']
    #allocation4 [shape = 's32[1]{0}', space=sflag, size = 0x4, scoped, tag = 'scoped memory for bc_visual_policy_stochastic_forward.4']
    #allocation5 [shape = 'u8[16384]{0}', space=vmem, size = 0x4000, scoped, tag = 'input window, operand 1, single buffered']
    #allocation6 [shape = 's32[1]{0}', space=sflag, size = 0x4, scoped, tag = 'scoped memory for bc_visual_policy_stochastic_forward.4']
    #allocation7 [shape = 'u8[512]{0}', space=vmem, size = 0x400, scoped, tag = 'input window, operand 2, single buffered']
    #allocation8 [shape = 'u8[43008]{0}', space=vmem, size = 0xa800, scoped, tag = 'output window, operand 0, single buffered']
    %8 = vsyncpa [#allocation3], 0
    %9 = vsyncpa [#allocation6], 0
    %10 = vsyncpa [#allocation4], 0
    // Predicated region
    $region2: #{bc_visual_policy_stochastic_forward.4} parent=1 // pred_check
      _
    $region3: #{bc_visual_policy_stochastic_forward.4} parent=1 // pred_check_branch
      %12 = sbr.rel (0) target = $region5
    $region4: #{bc_visual_policy_stochastic_forward.4} parent=1 // pred_region
      %s14 = ssub.s32 1408, 1408
      %15 = vsyncadd [#allocation3], %s14
      %s16 = sshll.u32 [#allocation2], 4
      %s17 = int_to_ptr.vmem [resolvable:$true] %s16
      %22 = dma.hbm_to_vmem [thread:$0]  %s0, 1408, %s17, [#allocation3], 64, 64, 4
    $region5: #{bc_visual_policy_stochastic_forward.4} parent=1 // pred_fallthru
      _
    // Predicated region
    $region6: #{bc_visual_policy_stochastic_forward.4} parent=1 // pred_check
      _
    $region7: #{bc_visual_policy_stochastic_forward.4} parent=1 // pred_check_branch
      %24 = sbr.rel (0) target = $region9
    $region8: #{bc_visual_policy_stochastic_forward.4} parent=1 // pred_region
      %s26 = ssub.s32 512, 512
      %27 = vsyncadd [#allocation6], %s26
      %s28 = sshll.u32 [#allocation5], 4
      %s29 = int_to_ptr.vmem [resolvable:$true] %s28
      %34 = dma.hbm_to_vmem [thread:$0]  %s1, 512, %s29, [#allocation6], 64, 64, 4
    $region9: #{bc_visual_policy_stochastic_forward.4} parent=1 // pred_fallthru
      _
    // Predicated region
    $region10: #{bc_visual_policy_stochastic_forward.4} parent=1 // pred_check
      _
    $region11: #{bc_visual_policy_stochastic_forward.4} parent=1 // pred_check_branch
      %36 = sbr.rel (0) target = $region13
    $region12: #{bc_visual_policy_stochastic_forward.4} parent=1 // pred_region
      %s38 = ssub.s32 16, 16
      %39 = vsyncadd [#allocation6], %s38
      %s41 = sshll.u32 [#allocation7], 4
      %s42 = int_to_ptr.vmem [resolvable:$true] %s41
      %44 = dma.hbm_to_vmem [thread:$0]  %s2, 16, %s42, [#allocation6]
    $region13: #{bc_visual_policy_stochastic_forward.4} parent=1 // pred_fallthru
      _
    // Predicated region
    $region14: #{bc_visual_policy_stochastic_forward.4} parent=1 // pred_check
      _
    $region15: #{bc_visual_policy_stochastic_forward.4} parent=1 // pred_check_branch
      %46 = sbr.rel (0) target = $region17
    $region16: #{bc_visual_policy_stochastic_forward.4} parent=1 // pred_region
      %47 = dma.done [#allocation3], 1408
    $region17: #{bc_visual_policy_stochastic_forward.4} parent=1 // pred_fallthru
      _
    // Predicated region
    $region18: #{bc_visual_policy_stochastic_forward.4} parent=1 // pred_check
      _
    $region19: #{bc_visual_policy_stochastic_forward.4} parent=1 // pred_check_branch
      %49 = sbr.rel (0) target = $region21
    $region20: #{bc_visual_policy_stochastic_forward.4} parent=1 // pred_region
      %50 = dma.done [#allocation6], 512
    $region21: #{bc_visual_policy_stochastic_forward.4} parent=1 // pred_fallthru
      _
    // Predicated region
    $region22: #{bc_visual_policy_stochastic_forward.4} parent=1 // pred_check
      _
    $region23: #{bc_visual_policy_stochastic_forward.4} parent=1 // pred_check_branch
      %52 = sbr.rel (0) target = $region25
    $region24: #{bc_visual_policy_stochastic_forward.4} parent=1 // pred_region
      %53 = dma.done [#allocation6], 16
    $region25: #{bc_visual_policy_stochastic_forward.4} parent=1 // pred_fallthru
      _
    %v55 = vld [vmem:[#allocation2] sm:$0xf]
    %v56 = vld [vmem:[#allocation2 + $0x4] sm:$0xf]
    %v57 = vld [vmem:[#allocation2 + $0x8] sm:$0xf]
    %v58 = vld [vmem:[#allocation2 + $0xc] sm:$0xf]
    %v59 = vld [vmem:[#allocation2 + $0x10] sm:$0xf]
    %v60 = vld [vmem:[#allocation2 + $0x14] sm:$0xf]
    %v61 = vld [vmem:[#allocation2 + $0x18] sm:$0xf]
    %v62 = vld [vmem:[#allocation2 + $0x1c] sm:$0xf]
    %v63 = vld [vmem:[#allocation2 + $0x20] sm:$0xf]
    %v64 = vld [vmem:[#allocation2 + $0x24] sm:$0xf]
    %v65 = vld [vmem:[#allocation2 + $0x28] sm:$0xf]
    %v66 = vld [vmem:[#allocation2 + $0x2c] sm:$0xf]
    %v67 = vld [vmem:[#allocation2 + $0x30] sm:$0xf]
    %v68 = vld [vmem:[#allocation2 + $0x34] sm:$0xf]
    %v69 = vld [vmem:[#allocation2 + $0x38] sm:$0xf]
    %v70 = vld [vmem:[#allocation2 + $0x3c] sm:$0xf]
    %v71 = vld [vmem:[#allocation2 + $0x40] sm:$0xf]
    %v72 = vld [vmem:[#allocation2 + $0x44] sm:$0xf]
    %v73 = vld [vmem:[#allocation2 + $0x48] sm:$0xf]
    %v74 = vld [vmem:[#allocation2 + $0x4c] sm:$0xf]
    %v75 = vld [vmem:[#allocation2 + $0x50] sm:$0x1]
    %v76 = vld [vmem:[#allocation5] sm:$0xf]
    %v77 = vld [vmem:[#allocation5 + $0x4] sm:$0x3]
    %v78 = vld [vmem:[#allocation2 + $0x50] sm:$0x3]
    %s79 = scalar_lea.vmem [#allocation5], 8
    %v80 = vld [vmem:[%s79] sm:$0xf]
    %v81 = vld [vmem:[%s79 + $0x4] sm:$0x3]
    %v103 = vunpack.c.l.b16 %v55
    %v104 = vunpack.c.l.b16 %v56
    %v105 = vunpack.c.l.b16 %v57
    %v106 = vunpack.c.l.b16 %v58
    %v107 = vunpack.c.l.b16 %v59
    %v108 = vunpack.c.l.b16 %v60
    %v109 = vunpack.c.l.b16 %v61
    %v110 = vunpack.c.l.b16 %v62
    %v111 = vunpack.c.l.b16 %v63
    %v112 = vunpack.c.l.b16 %v64
    %v113 = vunpack.c.l.b16 %v65
    %v114 = vunpack.c.l.b16 %v66
    %v115 = vunpack.c.l.b16 %v67
    %v116 = vunpack.c.l.b16 %v68
    %v117 = vunpack.c.l.b16 %v69
    %v118 = vunpack.c.l.b16 %v70
    %v119 = vunpack.c.l.b16 %v71
    %v120 = vunpack.c.l.b16 %v72
    %v121 = vunpack.c.l.b16 %v73
    %v122 = vunpack.c.l.b16 %v74
    %v123 = vunpack.c.l.b16 %v78
    %v124 = vpack.c.b16 %v104, %v103
    %v125 = vpack.c.b16 %v106, %v105
    %v126 = vpack.c.b16 %v108, %v107
    %v127 = vpack.c.b16 %v110, %v109
    %v128 = vpack.c.b16 %v112, %v111
    %v129 = vpack.c.b16 %v114, %v113
    %v130 = vpack.c.b16 %v116, %v115
    %v131 = vpack.c.b16 %v118, %v117
    %v132 = vpack.c.b16 %v120, %v119
    %v133 = vpack.c.b16 %v122, %v121
    %v134 = vpack.c.b16 %v123, %v123
    %vm135 = vsmask.f32 7424
    %v137 = vshrl.u32 %v124, 16
    %v139 = vshll.u32 %v124, 16
    %v141 = vrot.slane %v139, 1
    %v142 = vor.u32 %v137, %v141
    %v144 = vshll.u32 %v125, 16
    %v146 = vrot.slane %v144, 1
    %v147 = vsel %vm135, %v142, %v146
    %v148 = vshrl.u32 %v125, 16
    %v150 = vor.u32 %v148, %v146
    %v152 = vshll.u32 %v126, 16
    %v154 = vrot.slane %v152, 1
    %v155 = vsel %vm135, %v150, %v154
    %v156 = vshrl.u32 %v126, 16
    %v158 = vor.u32 %v156, %v154
    %v160 = vshll.u32 %v127, 16
    %v162 = vrot.slane %v160, 1
    %v163 = vsel %vm135, %v158, %v162
    %v164 = vshrl.u32 %v127, 16
    %v166 = vor.u32 %v164, %v162
    %v168 = vshll.u32 %v128, 16
    %v170 = vrot.slane %v168, 1
    %v171 = vsel %vm135, %v166, %v170
    %v172 = vshrl.u32 %v128, 16
    %v174 = vor.u32 %v172, %v170
    %v176 = vshll.u32 %v129, 16
    %v178 = vrot.slane %v176, 1
    %v179 = vsel %vm135, %v174, %v178
    %v180 = vshrl.u32 %v129, 16
    %v182 = vor.u32 %v180, %v178
    %v184 = vshll.u32 %v130, 16
    %v186 = vrot.slane %v184, 1
    %v187 = vsel %vm135, %v182, %v186
    %v188 = vshrl.u32 %v130, 16
    %v190 = vor.u32 %v188, %v186
    %v192 = vshll.u32 %v131, 16
    %v194 = vrot.slane %v192, 1
    %v195 = vsel %vm135, %v190, %v194
    %v196 = vshrl.u32 %v131, 16
    %v198 = vor.u32 %v196, %v194
    %v200 = vshll.u32 %v132, 16
    %v202 = vrot.slane %v200, 1
    %v203 = vsel %vm135, %v198, %v202
    %v204 = vshrl.u32 %v132, 16
    %v206 = vor.u32 %v204, %v202
    %v208 = vshll.u32 %v133, 16
    %v210 = vrot.slane %v208, 1
    %v211 = vsel %vm135, %v206, %v210
    %v212 = vshrl.u32 %v133, 16
    %v214 = vor.u32 %v212, %v210
    %v216 = vshll.u32 %v134, 16
    %v218 = vrot.slane %v216, 1
    %v219 = vsel %vm135, %v214, %v218
    %v220 = vshrl.u32 %v134, 16
    %v222 = vor.u32 %v220, %v218
    %v225 = vunpack.c.l.b16 %v80
    %v226 = vunpack.c.l.b16 %v81
    %v227 = vpack.c.b16 %v226, %v225
    %vm228 = vcmask 97280
    %v230 = vsel %vm228, %v147, 0
    %v233 = vsel %vm228, %v155, 0
    %v236 = vsel %vm228, %v163, 0
    %v239 = vsel %vm228, %v171, 0
    %v242 = vsel %vm228, %v179, 0
    %v245 = vsel %vm228, %v187, 0
    %v248 = vsel %vm228, %v195, 0
    %v251 = vsel %vm228, %v203, 0
    %v254 = vsel %vm228, %v211, 0
    %v257 = vsel %vm228, %v219, 0
    %v260 = vsel %vm228, %v222, 0
    %vm262 = vcmask 1045504
    %v264 = vsel %vm262, %v227, 0
    %266 = vmatprep.subr.bf16.mxu0 0
    %267 = vmatpush1.bf16.msra.mxu0 %v264
    %268 = vmatprep.subr.bf16.mxu0 0
    %269 = vmatpush1.bf16.msra.mxu0 0
    %270 = vmatprep.subr.bf16.mxu0 0
    %271 = vmatpush1.bf16.msra.mxu0 0
    %272 = vmatprep.subr.bf16.mxu0 0
    %273 = vmatpush1.bf16.msra.mxu0 0
    %274 = vmatprep.subr.bf16.mxu0 0
    %275 = vmatpush1.bf16.msra.mxu0 0
    %276 = vmatprep.subr.bf16.mxu0 0
    %277 = vmatpush1.bf16.msra.mxu0 0
    %278 = vmatprep.subr.bf16.mxu0 0
    %279 = vmatpush1.bf16.msra.mxu0 0
    %280 = vmatprep.subr.bf16.mxu0 0
    %281 = vmatpush1.bf16.msra.mxu0 0
    %282 = vmatprep.subr.bf16.mxu0 0
    %283 = vmatpush1.bf16.msra.mxu0 0
    %284 = vmatprep.subr.bf16.mxu0 0
    %285 = vmatpush1.bf16.msra.mxu0 0
    %286 = vmatprep.subr.bf16.mxu0 0
    %287 = vmatpush1.bf16.msra.mxu0 0
    %288 = vmatprep.subr.bf16.mxu0 0
    %289 = vmatpush1.bf16.msra.mxu0 0
    %290 = vmatprep.subr.bf16.mxu0 0
    %291 = vmatpush1.bf16.msra.mxu0 0
    %292 = vmatprep.subr.bf16.mxu0 0
    %293 = vmatpush1.bf16.msra.mxu0 0
    %294 = vmatprep.subr.bf16.mxu0 0
    %295 = vmatpush1.bf16.msra.mxu0 0
    %296 = vmatprep.subr.bf16.mxu0 0
    %297 = vmatpush1.bf16.msra.mxu0 0
    %298 = vmatprep.mubr.bf16.mxu0 0
    %299 = vmatmul.mubr.bf16.gmra.mrb[0].mxu0 %v230
    %v300 = vpop.f32.mrb[0].mxu0
    %v301 = vadd.f32 0.0, %v300
    %v302 = vpop.f32.mrb[0].mxu0
    %v303 = vpop.f32.mrb[0].mxu0
    %v304 = vadd.f32 0.0, %v303
    %v305 = vpop.f32.mrb[0].mxu0
    %306 = vmatprep.mubr.bf16.mxu0 0
    %307 = vmatmul.mubr.bf16.gmra.mrb[0].mxu0 %v233
    %v308 = vpop.f32.mrb[0].mxu0
    %v309 = vadd.f32 0.0, %v308
    %v310 = vpop.f32.mrb[0].mxu0
    %v311 = vpop.f32.mrb[0].mxu0
    %v312 = vadd.f32 0.0, %v311
    %v313 = vpop.f32.mrb[0].mxu0
    %314 = vmatprep.mubr.bf16.mxu0 0
    %315 = vmatmul.mubr.bf16.gmra.mrb[0].mxu0 %v236
    %v316 = vpop.f32.mrb[0].mxu0
    %v317 = vadd.f32 0.0, %v316
    %v318 = vpop.f32.mrb[0].mxu0
    %v319 = vpop.f32.mrb[0].mxu0
    %v320 = vadd.f32 0.0, %v319
    %v321 = vpop.f32.mrb[0].mxu0
    %322 = vmatprep.mubr.bf16.mxu0 0
    %323 = vmatmul.mubr.bf16.gmra.mrb[0].mxu0 %v239
    %v324 = vpop.f32.mrb[0].mxu0
    %v325 = vadd.f32 0.0, %v324
    %v326 = vpop.f32.mrb[0].mxu0
    %v327 = vpop.f32.mrb[0].mxu0
    %v328 = vadd.f32 0.0, %v327
    %v329 = vpop.f32.mrb[0].mxu0
    %330 = vmatprep.mubr.bf16.mxu0 0
    %331 = vmatmul.mubr.bf16.gmra.mrb[0].mxu0 %v242
    %v332 = vpop.f32.mrb[0].mxu0
    %v333 = vadd.f32 0.0, %v332
    %v334 = vpop.f32.mrb[0].mxu0
    %v335 = vpop.f32.mrb[0].mxu0
    %v336 = vadd.f32 0.0, %v335
    %v337 = vpop.f32.mrb[0].mxu0
    %338 = vmatprep.mubr.bf16.mxu0 0
    %339 = vmatmul.mubr.bf16.gmra.mrb[0].mxu0 %v245
    %v340 = vpop.f32.mrb[0].mxu0
    %v341 = vadd.f32 0.0, %v340
    %v342 = vpop.f32.mrb[0].mxu0
    %v343 = vpop.f32.mrb[0].mxu0
    %v344 = vadd.f32 0.0, %v343
    %v345 = vpop.f32.mrb[0].mxu0
    %346 = vmatprep.mubr.bf16.mxu0 0
    %347 = vmatmul.mubr.bf16.gmra.mrb[0].mxu0 %v248
    %v348 = vpop.f32.mrb[0].mxu0
    %v349 = vadd.f32 0.0, %v348
    %v350 = vpop.f32.mrb[0].mxu0
    %v351 = vpop.f32.mrb[0].mxu0
    %v352 = vadd.f32 0.0, %v351
    %v353 = vpop.f32.mrb[0].mxu0
    %354 = vmatprep.mubr.bf16.mxu0 0
    %355 = vmatmul.mubr.bf16.gmra.mrb[0].mxu0 %v251
    %v356 = vpop.f32.mrb[0].mxu0
    %v357 = vadd.f32 0.0, %v356
    %v358 = vpop.f32.mrb[0].mxu0
    %v359 = vpop.f32.mrb[0].mxu0
    %v360 = vadd.f32 0.0, %v359
    %v361 = vpop.f32.mrb[0].mxu0
    %362 = vmatprep.mubr.bf16.mxu0 0
    %363 = vmatmul.mubr.bf16.gmra.mrb[0].mxu0 %v254
    %v364 = vpop.f32.mrb[0].mxu0
    %v365 = vadd.f32 0.0, %v364
    %v366 = vpop.f32.mrb[0].mxu0
    %v367 = vpop.f32.mrb[0].mxu0
    %v368 = vadd.f32 0.0, %v367
    %v369 = vpop.f32.mrb[0].mxu0
    %370 = vmatprep.mubr.bf16.mxu0 0
    %371 = vmatmul.mubr.bf16.gmra.mrb[0].mxu0 %v257
    %v372 = vpop.f32.mrb[0].mxu0
    %v373 = vadd.f32 0.0, %v372
    %v374 = vpop.f32.mrb[0].mxu0
    %v375 = vpop.f32.mrb[0].mxu0
    %v376 = vadd.f32 0.0, %v375
    %v377 = vpop.f32.mrb[0].mxu0
    %378 = vmatprep.mubr.bf16.mxu0 0
    %379 = vmatmul.mubr.bf16.gmra.mrb[0].mxu0 %v260
    %v380 = vpop.f32.mrb[0].mxu0
    %v381 = vadd.f32 0.0, %v380
    %v382 = vpop.f32.mrb[0].mxu0
    %v383 = vpop.f32.mrb[0].mxu0
    %v384 = vpop.f32.mrb[0].mxu0
    %385 = vdwg.mxu0
    %v387 = vunpack.c.l.b16 %v75
    %v388 = vpack.c.b16 %v387, %v387
    %v391 = vunpack.c.l.b16 %v76
    %v392 = vunpack.c.l.b16 %v77
    %v393 = vpack.c.b16 %v392, %v391
    %v394 = vsel %vm228, %v124, 0
    %v396 = vsel %vm228, %v125, 0
    %v398 = vsel %vm228, %v126, 0
    %v400 = vsel %vm228, %v127, 0
    %v402 = vsel %vm228, %v128, 0
    %v404 = vsel %vm228, %v129, 0
    %v406 = vsel %vm228, %v130, 0
    %v408 = vsel %vm228, %v131, 0
    %v410 = vsel %vm228, %v132, 0
    %v412 = vsel %vm228, %v133, 0
    %v415 = vsel %vm228, %v388, 0
    %v418 = vsel %vm262, %v393, 0
    %420 = vmatprep.subr.bf16.mxu0 0
    %421 = vmatpush1.bf16.msra.mxu0 %v418
    %422 = vmatprep.subr.bf16.mxu0 0
    %423 = vmatpush1.bf16.msra.mxu0 0
    %424 = vmatprep.subr.bf16.mxu0 0
    %425 = vmatpush1.bf16.msra.mxu0 0
    %426 = vmatprep.subr.bf16.mxu0 0
    %427 = vmatpush1.bf16.msra.mxu0 0
    %428 = vmatprep.subr.bf16.mxu0 0
    %429 = vmatpush1.bf16.msra.mxu0 0
    %430 = vmatprep.subr.bf16.mxu0 0
    %431 = vmatpush1.bf16.msra.mxu0 0
    %432 = vmatprep.subr.bf16.mxu0 0
    %433 = vmatpush1.bf16.msra.mxu0 0
    %434 = vmatprep.subr.bf16.mxu0 0
    %435 = vmatpush1.bf16.msra.mxu0 0
    %436 = vmatprep.subr.bf16.mxu0 0
    %437 = vmatpush1.bf16.msra.mxu0 0
    %438 = vmatprep.subr.bf16.mxu0 0
    %439 = vmatpush1.bf16.msra.mxu0 0
    %440 = vmatprep.subr.bf16.mxu0 0
    %441 = vmatpush1.bf16.msra.mxu0 0
    %442 = vmatprep.subr.bf16.mxu0 0
    %443 = vmatpush1.bf16.msra.mxu0 0
    %444 = vmatprep.subr.bf16.mxu0 0
    %445 = vmatpush1.bf16.msra.mxu0 0
    %446 = vmatprep.subr.bf16.mxu0 0
    %447 = vmatpush1.bf16.msra.mxu0 0
    %448 = vmatprep.subr.bf16.mxu0 0
    %449 = vmatpush1.bf16.msra.mxu0 0
    %450 = vmatprep.subr.bf16.mxu0 0
    %451 = vmatpush1.bf16.msra.mxu0 0
    %452 = vmatprep.mubr.bf16.mxu0 0
    %453 = vmatmul.mubr.bf16.gmra.mrb[0].mxu0 %v394
    %v454 = vpop.f32.mrb[0].mxu0
    %v455 = vadd.f32 %v301, %v454
    %v456 = vpop.f32.mrb[0].mxu0
    %v457 = vpop.f32.mrb[0].mxu0
    %v458 = vadd.f32 %v304, %v457
    %v459 = vpop.f32.mrb[0].mxu0
    %460 = vmatprep.mubr.bf16.mxu0 0
    %461 = vmatmul.mubr.bf16.gmra.mrb[0].mxu0 %v396
    %v462 = vpop.f32.mrb[0].mxu0
    %v463 = vadd.f32 %v309, %v462
    %v464 = vpop.f32.mrb[0].mxu0
    %v465 = vpop.f32.mrb[0].mxu0
    %v466 = vadd.f32 %v312, %v465
    %v467 = vpop.f32.mrb[0].mxu0
    %468 = vmatprep.mubr.bf16.mxu0 0
    %469 = vmatmul.mubr.bf16.gmra.mrb[0].mxu0 %v398
    %v470 = vpop.f32.mrb[0].mxu0
    %v471 = vadd.f32 %v317, %v470
    %v472 = vpop.f32.mrb[0].mxu0
    %v473 = vpop.f32.mrb[0].mxu0
    %v474 = vadd.f32 %v320, %v473
    %v475 = vpop.f32.mrb[0].mxu0
    %476 = vmatprep.mubr.bf16.mxu0 0
    %477 = vmatmul.mubr.bf16.gmra.mrb[0].mxu0 %v400
    %v478 = vpop.f32.mrb[0].mxu0
    %v479 = vadd.f32 %v325, %v478
    %v480 = vpop.f32.mrb[0].mxu0
    %v481 = vpop.f32.mrb[0].mxu0
    %v482 = vadd.f32 %v328, %v481
    %v483 = vpop.f32.mrb[0].mxu0
    %484 = vmatprep.mubr.bf16.mxu0 0
    %485 = vmatmul.mubr.bf16.gmra.mrb[0].mxu0 %v402
    %v486 = vpop.f32.mrb[0].mxu0
    %v487 = vadd.f32 %v333, %v486
    %v488 = vpop.f32.mrb[0].mxu0
    %v489 = vpop.f32.mrb[0].mxu0
    %v490 = vadd.f32 %v336, %v489
    %v491 = vpop.f32.mrb[0].mxu0
    %492 = vmatprep.mubr.bf16.mxu0 0
    %493 = vmatmul.mubr.bf16.gmra.mrb[0].mxu0 %v404
    %v494 = vpop.f32.mrb[0].mxu0
    %v495 = vadd.f32 %v341, %v494
    %v496 = vpop.f32.mrb[0].mxu0
    %v497 = vpop.f32.mrb[0].mxu0
    %v498 = vadd.f32 %v344, %v497
    %v499 = vpop.f32.mrb[0].mxu0
    %500 = vmatprep.mubr.bf16.mxu0 0
    %501 = vmatmul.mubr.bf16.gmra.mrb[0].mxu0 %v406
    %v502 = vpop.f32.mrb[0].mxu0
    %v503 = vadd.f32 %v349, %v502
    %v504 = vpop.f32.mrb[0].mxu0
    %v505 = vpop.f32.mrb[0].mxu0
    %v506 = vadd.f32 %v352, %v505
    %v507 = vpop.f32.mrb[0].mxu0
    %508 = vmatprep.mubr.bf16.mxu0 0
    %509 = vmatmul.mubr.bf16.gmra.mrb[0].mxu0 %v408
    %v510 = vpop.f32.mrb[0].mxu0
    %v511 = vadd.f32 %v357, %v510
    %v512 = vpop.f32.mrb[0].mxu0
    %v513 = vpop.f32.mrb[0].mxu0
    %v514 = vadd.f32 %v360, %v513
    %v515 = vpop.f32.mrb[0].mxu0
    %516 = vmatprep.mubr.bf16.mxu0 0
    %517 = vmatmul.mubr.bf16.gmra.mrb[0].mxu0 %v410
    %v518 = vpop.f32.mrb[0].mxu0
    %v519 = vadd.f32 %v365, %v518
    %v520 = vpop.f32.mrb[0].mxu0
    %v521 = vpop.f32.mrb[0].mxu0
    %v522 = vadd.f32 %v368, %v521
    %v523 = vpop.f32.mrb[0].mxu0
    %524 = vmatprep.mubr.bf16.mxu0 0
    %525 = vmatmul.mubr.bf16.gmra.mrb[0].mxu0 %v412
    %v526 = vpop.f32.mrb[0].mxu0
    %v527 = vadd.f32 %v373, %v526
    %v528 = vpop.f32.mrb[0].mxu0
    %v529 = vpop.f32.mrb[0].mxu0
    %v530 = vadd.f32 %v376, %v529
    %v531 = vpop.f32.mrb[0].mxu0
    %532 = vmatprep.mubr.bf16.mxu0 0
    %533 = vmatmul.mubr.bf16.gmra.mrb[0].mxu0 %v415
    %v534 = vpop.f32.mrb[0].mxu0
    %v535 = vadd.f32 %v381, %v534
    %v536 = vpop.f32.mrb[0].mxu0
    %v537 = vpop.f32.mrb[0].mxu0
    %v538 = vpop.f32.mrb[0].mxu0
    %539 = vdwg.mxu0
    %v540 = vld [vmem:[#allocation2 + $0x4] sm:$0xf]
    %v541 = vld [vmem:[#allocation2 + $0x8] sm:$0xf]
    %v542 = vld [vmem:[#allocation2 + $0xc] sm:$0xf]
    %v543 = vld [vmem:[#allocation2 + $0x10] sm:$0xf]
    %v544 = vld [vmem:[#allocation2 + $0x14] sm:$0xf]
    %v545 = vld [vmem:[#allocation2 + $0x18] sm:$0xf]
    %v546 = vld [vmem:[#allocation2 + $0x1c] sm:$0xf]
    %v547 = vld [vmem:[#allocation2 + $0x20] sm:$0xf]
    %v548 = vld [vmem:[#allocation2 + $0x24] sm:$0xf]
    %v549 = vld [vmem:[#allocation2 + $0x28] sm:$0xf]
    %v550 = vld [vmem:[#allocation2 + $0x2c] sm:$0xf]
    %v551 = vld [vmem:[#allocation2 + $0x30] sm:$0xf]
    %v552 = vld [vmem:[#allocation2 + $0x34] sm:$0xf]
    %v553 = vld [vmem:[#allocation2 + $0x38] sm:$0xf]
    %v554 = vld [vmem:[#allocation2 + $0x3c] sm:$0xf]
    %v555 = vld [vmem:[#allocation2 + $0x40] sm:$0xf]
    %v556 = vld [vmem:[#allocation2 + $0x44] sm:$0xf]
    %v557 = vld [vmem:[#allocation2 + $0x48] sm:$0xf]
    %v558 = vld [vmem:[#allocation2 + $0x4c] sm:$0xf]
    %v559 = vld [vmem:[#allocation2 + $0x50] sm:$0xf]
    %v560 = vld [vmem:[#allocation2 + $0x54] sm:$0x3]
    %s561 = scalar_lea.vmem [#allocation5], 16
    %v562 = vld [vmem:[%s561] sm:$0xf]
    %v563 = vld [vmem:[%s561 + $0x4] sm:$0x3]
    %v585 = vunpack.c.l.b16 %v540
    %v586 = vunpack.c.l.b16 %v541
    %v587 = vunpack.c.l.b16 %v542
    %v588 = vunpack.c.l.b16 %v543
    %v589 = vunpack.c.l.b16 %v544
    %v590 = vunpack.c.l.b16 %v545
    %v591 = vunpack.c.l.b16 %v546
    %v592 = vunpack.c.l.b16 %v547
    %v593 = vunpack.c.l.b16 %v548
    %v594 = vunpack.c.l.b16 %v549
    %v595 = vunpack.c.l.b16 %v550
    %v596 = vunpack.c.l.b16 %v551
    %v597 = vunpack.c.l.b16 %v552
    %v598 = vunpack.c.l.b16 %v553
    %v599 = vunpack.c.l.b16 %v554
    %v600 = vunpack.c.l.b16 %v555
    %v601 = vunpack.c.l.b16 %v556
    %v602 = vunpack.c.l.b16 %v557
    %v603 = vunpack.c.l.b16 %v558
    %v604 = vunpack.c.l.b16 %v559
    %v605 = vunpack.c.l.b16 %v560
    %v606 = vpack.c.b16 %v586, %v585
    %v607 = vpack.c.b16 %v588, %v587
    %v608 = vpack.c.b16 %v590, %v589
    %v609 = vpack.c.b16 %v592, %v591
    %v610 = vpack.c.b16 %v594, %v593
    %v611 = vpack.c.b16 %v596, %v595
    %v612 = vpack.c.b16 %v598, %v597
    %v613 = vpack.c.b16 %v600, %v599
    %v614 = vpack.c.b16 %v602, %v601
    %v615 = vpack.c.b16 %v604, %v603
    %v616 = vpack.c.b16 %v605, %v605
    %v618 = vshrl.u32 %v606, 16
    %v620 = vshll.u32 %v606, 16
    %v622 = vrot.slane %v620, 1
    %v623 = vor.u32 %v618, %v622
    %v625 = vshll.u32 %v607, 16
    %v627 = vrot.slane %v625, 1
    %v628 = vsel %vm135, %v623, %v627
    %v629 = vshrl.u32 %v607, 16
    %v631 = vor.u32 %v629, %v627
    %v633 = vshll.u32 %v608, 16
    %v635 = vrot.slane %v633, 1
    %v636 = vsel %vm135, %v631, %v635
    %v637 = vshrl.u32 %v608, 16
    %v639 = vor.u32 %v637, %v635
    %v641 = vshll.u32 %v609, 16
    %v643 = vrot.slane %v641, 1
    %v644 = vsel %vm135, %v639, %v643
    %v645 = vshrl.u32 %v609, 16
    %v647 = vor.u32 %v645, %v643
    %v649 = vshll.u32 %v610, 16
    %v651 = vrot.slane %v649, 1
    %v652 = vsel %vm135, %v647, %v651
    %v653 = vshrl.u32 %v610, 16
    %v655 = vor.u32 %v653, %v651
    %v657 = vshll.u32 %v611, 16
    %v659 = vrot.slane %v657, 1
    %v660 = vsel %vm135, %v655, %v659
    %v661 = vshrl.u32 %v611, 16
    %v663 = vor.u32 %v661, %v659
    %v665 = vshll.u32 %v612, 16
    %v667 = vrot.slane %v665, 1
    %v668 = vsel %vm135, %v663, %v667
    %v669 = vshrl.u32 %v612, 16
    %v671 = vor.u32 %v669, %v667
    %v673 = vshll.u32 %v613, 16
    %v675 = vrot.slane %v673, 1
    %v676 = vsel %vm135, %v671, %v675
    %v677 = vshrl.u32 %v613, 16
    %v679 = vor.u32 %v677, %v675
    %v681 = vshll.u32 %v614, 16
    %v683 = vrot.slane %v681, 1
    %v684 = vsel %vm135, %v679, %v683
    %v685 = vshrl.u32 %v614, 16
    %v687 = vor.u32 %v685, %v683
    %v689 = vshll.u32 %v615, 16
    %v691 = vrot.slane %v689, 1
    %v692 = vsel %vm135, %v687, %v691
    %v693 = vshrl.u32 %v615, 16
    %v695 = vor.u32 %v693, %v691
    %v697 = vshll.u32 %v616, 16
    %v699 = vrot.slane %v697, 1
    %v700 = vsel %vm135, %v695, %v699
    %v701 = vshrl.u32 %v616, 16
    %v703 = vor.u32 %v701, %v699
    %v706 = vunpack.c.l.b16 %v562
    %v707 = vunpack.c.l.b16 %v563
    %v708 = vpack.c.b16 %v707, %v706
    %v710 = vsel %vm228, %v628, 0
    %v713 = vsel %vm228, %v636, 0
    %v716 = vsel %vm228, %v644, 0
    %v719 = vsel %vm228, %v652, 0
    %v722 = vsel %vm228, %v660, 0
    %v725 = vsel %vm228, %v668, 0
    %v728 = vsel %vm228, %v676, 0
    %v731 = vsel %vm228, %v684, 0
    %v734 = vsel %vm228, %v692, 0
    %v737 = vsel %vm228, %v700, 0
    %v740 = vsel %vm228, %v703, 0
    %v743 = vsel %vm262, %v708, 0
    %745 = vmatprep.subr.bf16.mxu0 0
    %746 = vmatpush1.bf16.msra.mxu0 %v743
    %747 = vmatprep.subr.bf16.mxu0 0
    %748 = vmatpush1.bf16.msra.mxu0 0
    %749 = vmatprep.subr.bf16.mxu0 0
    %750 = vmatpush1.bf16.msra.mxu0 0
    %751 = vmatprep.subr.bf16.mxu0 0
    %752 = vmatpush1.bf16.msra.mxu0 0
    %753 = vmatprep.subr.bf16.mxu0 0
    %754 = vmatpush1.bf16.msra.mxu0 0
    %755 = vmatprep.subr.bf16.mxu0 0
    %756 = vmatpush1.bf16.msra.mxu0 0
    %757 = vmatprep.subr.bf16.mxu0 0
    %758 = vmatpush1.bf16.msra.mxu0 0
    %759 = vmatprep.subr.bf16.mxu0 0
    %760 = vmatpush1.bf16.msra.mxu0 0
    %761 = vmatprep.subr.bf16.mxu0 0
    %762 = vmatpush1.bf16.msra.mxu0 0
    %763 = vmatprep.subr.bf16.mxu0 0
    %764 = vmatpush1.bf16.msra.mxu0 0
    %765 = vmatprep.subr.bf16.mxu0 0
    %766 = vmatpush1.bf16.msra.mxu0 0
    %767 = vmatprep.subr.bf16.mxu0 0
    %768 = vmatpush1.bf16.msra.mxu0 0
    %769 = vmatprep.subr.bf16.mxu0 0
    %770 = vmatpush1.bf16.msra.mxu0 0
    %771 = vmatprep.subr.bf16.mxu0 0
    %772 = vmatpush1.bf16.msra.mxu0 0
    %773 = vmatprep.subr.bf16.mxu0 0
    %774 = vmatpush1.bf16.msra.mxu0 0
    %775 = vmatprep.subr.bf16.mxu0 0
    %776 = vmatpush1.bf16.msra.mxu0 0
    %777 = vmatprep.mubr.bf16.mxu0 0
    %778 = vmatmul.mubr.bf16.gmra.mrb[0].mxu0 %v710
    %v779 = vpop.f32.mrb[0].mxu0
    %v780 = vadd.f32 0.0, %v779
    %v781 = vpop.f32.mrb[0].mxu0
    %v782 = vpop.f32.mrb[0].mxu0
    %v783 = vadd.f32 0.0, %v782
    %v784 = vpop.f32.mrb[0].mxu0
    %785 = vmatprep.mubr.bf16.mxu0 0
    %786 = vmatmul.mubr.bf16.gmra.mrb[0].mxu0 %v713
    %v787 = vpop.f32.mrb[0].mxu0
    %v788 = vadd.f32 0.0, %v787
    %v789 = vpop.f32.mrb[0].mxu0
    %v790 = vpop.f32.mrb[0].mxu0
    %v791 = vadd.f32 0.0, %v790
    %v792 = vpop.f32.mrb[0].mxu0
    %793 = vmatprep.mubr.bf16.mxu0 0
    %794 = vmatmul.mubr.bf16.gmra.mrb[0].mxu0 %v716
    %v795 = vpop.f32.mrb[0].mxu0
    %v796 = vadd.f32 0.0, %v795
    %v797 = vpop.f32.mrb[0].mxu0
    %v798 = vpop.f32.mrb[0].mxu0
    %v799 = vadd.f32 0.0, %v798
    %v800 = vpop.f32.mrb[0].mxu0
    %801 = vmatprep.mubr.bf16.mxu0 0
    %802 = vmatmul.mubr.bf16.gmra.mrb[0].mxu0 %v719
    %v803 = vpop.f32.mrb[0].mxu0
    %v804 = vadd.f32 0.0, %v803
    %v805 = vpop.f32.mrb[0].mxu0
    %v806 = vpop.f32.mrb[0].mxu0
    %v807 = vadd.f32 0.0, %v806
    %v808 = vpop.f32.mrb[0].mxu0
    %809 = vmatprep.mubr.bf16.mxu0 0
    %810 = vmatmul.mubr.bf16.gmra.mrb[0].mxu0 %v722
    %v811 = vpop.f32.mrb[0].mxu0
    %v812 = vadd.f32 0.0, %v811
    %v813 = vpop.f32.mrb[0].mxu0
    %v814 = vpop.f32.mrb[0].mxu0
    %v815 = vadd.f32 0.0, %v814
    %v816 = vpop.f32.mrb[0].mxu0
    %817 = vmatprep.mubr.bf16.mxu0 0
    %818 = vmatmul.mubr.bf16.gmra.mrb[0].mxu0 %v725
    %v819 = vpop.f32.mrb[0].mxu0
    %v820 = vadd.f32 0.0, %v819
    %v821 = vpop.f32.mrb[0].mxu0
    %v822 = vpop.f32.mrb[0].mxu0
    %v823 = vadd.f32 0.0, %v822
    %v824 = vpop.f32.mrb[0].mxu0
    %825 = vmatprep.mubr.bf16.mxu0 0
    %826 = vmatmul.mubr.bf16.gmra.mrb[0].mxu0 %v728
    %v827 = vpop.f32.mrb[0].mxu0
    %v828 = vadd.f32 0.0, %v827
    %v829 = vpop.f32.mrb[0].mxu0
    %v830 = vpop.f32.mrb[0].mxu0
    %v831 = vadd.f32 0.0, %v830
    %v832 = vpop.f32.mrb[0].mxu0
    %833 = vmatprep.mubr.bf16.mxu0 0
    %834 = vmatmul.mubr.bf16.gmra.mrb[0].mxu0 %v731
    %v835 = vpop.f32.mrb[0].mxu0
    %v836 = vadd.f32 0.0, %v835
    %v837 = vpop.f32.mrb[0].mxu0
    %v838 = vpop.f32.mrb[0].mxu0
    %v839 = vadd.f32 0.0, %v838
    %v840 = vpop.f32.mrb[0].mxu0
    %841 = vmatprep.mubr.bf16.mxu0 0
    %842 = vmatmul.mubr.bf16.gmra.mrb[0].mxu0 %v734
    %v843 = vpop.f32.mrb[0].mxu0
    %v844 = vadd.f32 0.0, %v843
    %v845 = vpop.f32.mrb[0].mxu0
    %v846 = vpop.f32.mrb[0].mxu0
    %v847 = vadd.f32 0.0, %v846
    %v848 = vpop.f32.mrb[0].mxu0
    %849 = vmatprep.mubr.bf16.mxu0 0
    %850 = vmatmul.mubr.bf16.gmra.mrb[0].mxu0 %v737
    %v851 = vpop.f32.mrb[0].mxu0
    %v852 = vadd.f32 0.0, %v851
    %v853 = vpop.f32.mrb[0].mxu0
    %v854 = vpop.f32.mrb[0].mxu0
    %v855 = vadd.f32 0.0, %v854
    %v856 = vpop.f32.mrb[0].mxu0
    %857 = vmatprep.mubr.bf16.mxu0 0
    %858 = vmatmul.mubr.bf16.gmra.mrb[0].mxu0 %v740
    %v859 = vpop.f32.mrb[0].mxu0
    %v860 = vadd.f32 0.0, %v859
    %v861 = vpop.f32.mrb[0].mxu0
    %v862 = vpop.f32.mrb[0].mxu0
    %v863 = vpop.f32.mrb[0].mxu0
    %864 = vdwg.mxu0
    %v865 = vadd.f32 %v455, %v780
    %v866 = vadd.f32 %v458, %v783
    %v867 = vadd.f32 %v463, %v788
    %v868 = vadd.f32 %v466, %v791
    %v869 = vadd.f32 %v471, %v796
    %v870 = vadd.f32 %v474, %v799
    %v871 = vadd.f32 %v479, %v804
    %v872 = vadd.f32 %v482, %v807
    %v873 = vadd.f32 %v487, %v812
    %v874 = vadd.f32 %v490, %v815
    %v875 = vadd.f32 %v495, %v820
    %v876 = vadd.f32 %v498, %v823
    %v877 = vadd.f32 %v503, %v828
    %v878 = vadd.f32 %v506, %v831
    %v879 = vadd.f32 %v511, %v836
    %v880 = vadd.f32 %v514, %v839
    %v881 = vadd.f32 %v519, %v844
    %v882 = vadd.f32 %v522, %v847
    %v883 = vadd.f32 %v527, %v852
    %v884 = vadd.f32 %v530, %v855
    %v885 = vadd.f32 %v535, %v860
    %v886 = vld [vmem:[#allocation2 + $0x4] sm:$0xe]
    %s887 = scalar_lea.vmem [#allocation5], 24
    %v888 = vld [vmem:[%s887] sm:$0xf]
    %v889 = vld [vmem:[%s887 + $0x4] sm:$0x3]
    %v891 = vunpack.c.l.b16 %v886
    %v892 = vpack.c.b16 %v586, %v891
    %vm893 = vcmask 1046528
    %v894 = vrot.slane %v892, 1
    %v895 = vrot.slane %v607, 1
    %v896 = vsel %vm893, %v894, %v895
    %v897 = vrot.slane %v608, 1
    %v898 = vsel %vm893, %v895, %v897
    %v899 = vrot.slane %v609, 1
    %v900 = vsel %vm893, %v897, %v899
    %v901 = vrot.slane %v610, 1
    %v902 = vsel %vm893, %v899, %v901
    %v903 = vrot.slane %v611, 1
    %v904 = vsel %vm893, %v901, %v903
    %v905 = vrot.slane %v612, 1
    %v906 = vsel %vm893, %v903, %v905
    %v907 = vrot.slane %v613, 1
    %v908 = vsel %vm893, %v905, %v907
    %v909 = vrot.slane %v614, 1
    %v910 = vsel %vm893, %v907, %v909
    %v911 = vrot.slane %v615, 1
    %v912 = vsel %vm893, %v909, %v911
    %v913 = vrot.slane %v616, 1
    %v914 = vsel %vm893, %v911, %v913
    %v917 = vunpack.c.l.b16 %v888
    %v918 = vunpack.c.l.b16 %v889
    %v919 = vpack.c.b16 %v918, %v917
    %v921 = vsel %vm228, %v896, 0
    %v924 = vsel %vm228, %v898, 0
    %v927 = vsel %vm228, %v900, 0
    %v930 = vsel %vm228, %v902, 0
    %v933 = vsel %vm228, %v904, 0
    %v936 = vsel %vm228, %v906, 0
    %v939 = vsel %vm228, %v908, 0
    %v942 = vsel %vm228, %v910, 0
    %v945 = vsel %vm228, %v912, 0
    %v948 = vsel %vm228, %v914, 0
    %v951 = vsel %vm228, %v913, 0
    %v954 = vsel %vm262, %v919, 0
    %956 = vmatprep.subr.bf16.mxu0 0
    %957 = vmatpush1.bf16.msra.mxu0 %v954
    %958 = vmatprep.subr.bf16.mxu0 0
    %959 = vmatpush1.bf16.msra.mxu0 0
    %960 = vmatprep.subr.bf16.mxu0 0
    %961 = vmatpush1.bf16.msra.mxu0 0
    %962 = vmatprep.subr.bf16.mxu0 0
    %963 = vmatpush1.bf16.msra.mxu0 0
    %964 = vmatprep.subr.bf16.mxu0 0
    %965 = vmatpush1.bf16.msra.mxu0 0
    %966 = vmatprep.subr.bf16.mxu0 0
    %967 = vmatpush1.bf16.msra.mxu0 0
    %968 = vmatprep.subr.bf16.mxu0 0
    %969 = vmatpush1.bf16.msra.mxu0 0
    %970 = vmatprep.subr.bf16.mxu0 0
    %971 = vmatpush1.bf16.msra.mxu0 0
    %972 = vmatprep.subr.bf16.mxu0 0
    %973 = vmatpush1.bf16.msra.mxu0 0
    %974 = vmatprep.subr.bf16.mxu0 0
    %975 = vmatpush1.bf16.msra.mxu0 0
    %976 = vmatprep.subr.bf16.mxu0 0
    %977 = vmatpush1.bf16.msra.mxu0 0
    %978 = vmatprep.subr.bf16.mxu0 0
    %979 = vmatpush1.bf16.msra.mxu0 0
    %980 = vmatprep.subr.bf16.mxu0 0
    %981 = vmatpush1.bf16.msra.mxu0 0
    %982 = vmatprep.subr.bf16.mxu0 0
    %983 = vmatpush1.bf16.msra.mxu0 0
    %984 = vmatprep.subr.bf16.mxu0 0
    %985 = vmatpush1.bf16.msra.mxu0 0
    %986 = vmatprep.subr.bf16.mxu0 0
    %987 = vmatpush1.bf16.msra.mxu0 0
    %988 = vmatprep.mubr.bf16.mxu0 0
    %989 = vmatmul.mubr.bf16.gmra.mrb[0].mxu0 %v921
    %v990 = vpop.f32.mrb[0].mxu0
    %v991 = vadd.f32 0.0, %v990
    %v992 = vpop.f32.mrb[0].mxu0
    %v993 = vpop.f32.mrb[0].mxu0
    %v994 = vadd.f32 0.0, %v993
    %v995 = vpop.f32.mrb[0].mxu0
    %996 = vmatprep.mubr.bf16.mxu0 0
    %997 = vmatmul.mubr.bf16.gmra.mrb[0].mxu0 %v924
    %v998 = vpop.f32.mrb[0].mxu0
    %v999 = vadd.f32 0.0, %v998
    %v1000 = vpop.f32.mrb[0].mxu0
    %v1001 = vpop.f32.mrb[0].mxu0
    %v1002 = vadd.f32 0.0, %v1001
    %v1003 = vpop.f32.mrb[0].mxu0
    %1004 = vmatprep.mubr.bf16.mxu0 0
    %1005 = vmatmul.mubr.bf16.gmra.mrb[0].mxu0 %v927
    %v1006 = vpop.f32.mrb[0].mxu0
    %v1007 = vadd.f32 0.0, %v1006
    %v1008 = vpop.f32.mrb[0].mxu0
    %v1009 = vpop.f32.mrb[0].mxu0
    %v1010 = vadd.f32 0.0, %v1009
    %v1011 = vpop.f32.mrb[0].mxu0
    %1012 = vmatprep.mubr.bf16.mxu0 0
    %1013 = vmatmul.mubr.bf16.gmra.mrb[0].mxu0 %v930
    %v1014 = vpop.f32.mrb[0].mxu0
    %v1015 = vadd.f32 0.0, %v1014
    %v1016 = vpop.f32.mrb[0].mxu0
    %v1017 = vpop.f32.mrb[0].mxu0
    %v1018 = vadd.f32 0.0, %v1017
    %v1019 = vpop.f32.mrb[0].mxu0
    %1020 = vmatprep.mubr.bf16.mxu0 0
    %1021 = vmatmul.mubr.bf16.gmra.mrb[0].mxu0 %v933
    %v1022 = vpop.f32.mrb[0].mxu0
    %v1023 = vadd.f32 0.0, %v1022
    %v1024 = vpop.f32.mrb[0].mxu0
    %v1025 = vpop.f32.mrb[0].mxu0
    %v1026 = vadd.f32 0.0, %v1025
    %v1027 = vpop.f32.mrb[0].mxu0
    %1028 = vmatprep.mubr.bf16.mxu0 0
    %1029 = vmatmul.mubr.bf16.gmra.mrb[0].mxu0 %v936
    %v1030 = vpop.f32.mrb[0].mxu0
    %v1031 = vadd.f32 0.0, %v1030
    %v1032 = vpop.f32.mrb[0].mxu0
    %v1033 = vpop.f32.mrb[0].mxu0
    %v1034 = vadd.f32 0.0, %v1033
    %v1035 = vpop.f32.mrb[0].mxu0
    %1036 = vmatprep.mubr.bf16.mxu0 0
    %1037 = vmatmul.mubr.bf16.gmra.mrb[0].mxu0 %v939
    %v1038 = vpop.f32.mrb[0].mxu0
    %v1039 = vadd.f32 0.0, %v1038
    %v1040 = vpop.f32.mrb[0].mxu0
    %v1041 = vpop.f32.mrb[0].mxu0
    %v1042 = vadd.f32 0.0, %v1041
    %v1043 = vpop.f32.mrb[0].mxu0
    %1044 = vmatprep.mubr.bf16.mxu0 0
    %1045 = vmatmul.mubr.bf16.gmra.mrb[0].mxu0 %v942
    %v1046 = vpop.f32.mrb[0].mxu0
    %v1047 = vadd.f32 0.0, %v1046
    %v1048 = vpop.f32.mrb[0].mxu0
    %v1049 = vpop.f32.mrb[0].mxu0
    %v1050 = vadd.f32 0.0, %v1049
    %v1051 = vpop.f32.mrb[0].mxu0
    %1052 = vmatprep.mubr.bf16.mxu0 0
    %1053 = vmatmul.mubr.bf16.gmra.mrb[0].mxu0 %v945
    %v1054 = vpop.f32.mrb[0].mxu0
    %v1055 = vadd.f32 0.0, %v1054
    %v1056 = vpop.f32.mrb[0].mxu0
    %v1057 = vpop.f32.mrb[0].mxu0
    %v1058 = vadd.f32 0.0, %v1057
    %v1059 = vpop.f32.mrb[0].mxu0
    %1060 = vmatprep.mubr.bf16.mxu0 0
    %1061 = vmatmul.mubr.bf16.gmra.mrb[0].mxu0 %v948
    %v1062 = vpop.f32.mrb[0].mxu0
    %v1063 = vadd.f32 0.0, %v1062
    %v1064 = vpop.f32.mrb[0].mxu0
    %v1065 = vpop.f32.mrb[0].mxu0
    %v1066 = vadd.f32 0.0, %v1065
    %v1067 = vpop.f32.mrb[0].mxu0
    %1068 = vmatprep.mubr.bf16.mxu0 0
    %1069 = vmatmul.mubr.bf16.gmra.mrb[0].mxu0 %v951
    %v1070 = vpop.f32.mrb[0].mxu0
    %v1071 = vadd.f32 0.0, %v1070
    %v1072 = vpop.f32.mrb[0].mxu0
    %v1073 = vpop.f32.mrb[0].mxu0
    %v1074 = vpop.f32.mrb[0].mxu0
    %1075 = vdwg.mxu0
    %v1076 = vadd.f32 %v865, %v991
    %v1077 = vadd.f32 %v866, %v994
    %v1078 = vadd.f32 %v867, %v999
    %v1079 = vadd.f32 %v868, %v1002
    %v1080 = vadd.f32 %v869, %v1007
    %v1081 = vadd.f32 %v870, %v1010
    %v1082 = vadd.f32 %v871, %v1015
    %v1083 = vadd.f32 %v872, %v1018
    %v1084 = vadd.f32 %v873, %v1023
    %v1085 = vadd.f32 %v874, %v1026
    %v1086 = vadd.f32 %v875, %v1031
    %v1087 = vadd.f32 %v876, %v1034
    %v1088 = vadd.f32 %v877, %v1039
    %v1089 = vadd.f32 %v878, %v1042
    %v1090 = vadd.f32 %v879, %v1047
    %v1091 = vadd.f32 %v880, %v1050
    %v1092 = vadd.f32 %v881, %v1055
    %v1093 = vadd.f32 %v882, %v1058
    %v1094 = vadd.f32 %v883, %v1063
    %v1095 = vadd.f32 %v884, %v1066
    %v1096 = vadd.f32 %v885, %v1071
    %v1097 = vld [vmem:[#allocation7] sm:$0x1]
    %v1099 = vlaneseq
    %v1100 = vshrl.u32 %v1099, 7
    %v1101 = vsub.s32 0, %v1100
    %v1102 = vrot.slane %v1097, %v1101
    %v1104 = vadd.f32 %v1076, %v1102
    %v1105 = vadd.f32 %v1077, %v1102
    %v1106 = vadd.f32 %v1078, %v1102
    %v1107 = vadd.f32 %v1079, %v1102
    %v1108 = vadd.f32 %v1080, %v1102
    %v1109 = vadd.f32 %v1081, %v1102
    %v1110 = vadd.f32 %v1082, %v1102
    %v1111 = vadd.f32 %v1083, %v1102
    %v1112 = vadd.f32 %v1084, %v1102
    %v1113 = vadd.f32 %v1085, %v1102
    %v1114 = vadd.f32 %v1086, %v1102
    %v1115 = vadd.f32 %v1087, %v1102
    %v1116 = vadd.f32 %v1088, %v1102
    %v1117 = vadd.f32 %v1089, %v1102
    %v1118 = vadd.f32 %v1090, %v1102
    %v1119 = vadd.f32 %v1091, %v1102
    %v1120 = vadd.f32 %v1092, %v1102
    %v1121 = vadd.f32 %v1093, %v1102
    %v1122 = vadd.f32 %v1094, %v1102
    %v1123 = vadd.f32 %v1095, %v1102
    %v1124 = vadd.f32 %v1096, %v1102
    %vm1125 = vcmp.gt.f32.partialorder %v1104, 0.0
    %vm1126 = vcmp.gt.f32.partialorder %v1105, 0.0
    %vm1127 = vcmp.gt.f32.partialorder %v1106, 0.0
    %vm1128 = vcmp.gt.f32.partialorder %v1107, 0.0
    %vm1129 = vcmp.gt.f32.partialorder %v1108, 0.0
    %vm1130 = vcmp.gt.f32.partialorder %v1109, 0.0
    %vm1131 = vcmp.gt.f32.partialorder %v1110, 0.0
    %vm1132 = vcmp.gt.f32.partialorder %v1111, 0.0
    %vm1133 = vcmp.gt.f32.partialorder %v1112, 0.0
    %vm1134 = vcmp.gt.f32.partialorder %v1113, 0.0
    %vm1135 = vcmp.gt.f32.partialorder %v1114, 0.0
    %vm1136 = vcmp.gt.f32.partialorder %v1115, 0.0
    %vm1137 = vcmp.gt.f32.partialorder %v1116, 0.0
    %vm1138 = vcmp.gt.f32.partialorder %v1117, 0.0
    %vm1139 = vcmp.gt.f32.partialorder %v1118, 0.0
    %vm1140 = vcmp.gt.f32.partialorder %v1119, 0.0
    %vm1141 = vcmp.gt.f32.partialorder %v1120, 0.0
    %vm1142 = vcmp.gt.f32.partialorder %v1121, 0.0
    %vm1143 = vcmp.gt.f32.partialorder %v1122, 0.0
    %vm1144 = vcmp.gt.f32.partialorder %v1123, 0.0
    %vm1145 = vcmp.gt.f32.partialorder %v1124, 0.0
    %v1146 = vmul.f32 %v1104, 0.01
    %v1147 = vmul.f32 %v1105, 0.01
    %v1148 = vmul.f32 %v1106, 0.01
    %v1149 = vmul.f32 %v1107, 0.01
    %v1150 = vmul.f32 %v1108, 0.01
    %v1151 = vmul.f32 %v1109, 0.01
    %v1152 = vmul.f32 %v1110, 0.01
    %v1153 = vmul.f32 %v1111, 0.01
    %v1154 = vmul.f32 %v1112, 0.01
    %v1155 = vmul.f32 %v1113, 0.01
    %v1156 = vmul.f32 %v1114, 0.01
    %v1157 = vmul.f32 %v1115, 0.01
    %v1158 = vmul.f32 %v1116, 0.01
    %v1159 = vmul.f32 %v1117, 0.01
    %v1160 = vmul.f32 %v1118, 0.01
    %v1161 = vmul.f32 %v1119, 0.01
    %v1162 = vmul.f32 %v1120, 0.01
    %v1163 = vmul.f32 %v1121, 0.01
    %v1164 = vmul.f32 %v1122, 0.01
    %v1165 = vmul.f32 %v1123, 0.01
    %v1166 = vmul.f32 %v1124, 0.01
    %v1167 = vsel %vm1125, %v1104, %v1146
    %v1168 = vsel %vm1126, %v1105, %v1147
    %v1169 = vsel %vm1127, %v1106, %v1148
    %v1170 = vsel %vm1128, %v1107, %v1149
    %v1171 = vsel %vm1129, %v1108, %v1150
    %v1172 = vsel %vm1130, %v1109, %v1151
    %v1173 = vsel %vm1131, %v1110, %v1152
    %v1174 = vsel %vm1132, %v1111, %v1153
    %v1175 = vsel %vm1133, %v1112, %v1154
    %v1176 = vsel %vm1134, %v1113, %v1155
    %v1177 = vsel %vm1135, %v1114, %v1156
    %v1178 = vsel %vm1136, %v1115, %v1157
    %v1179 = vsel %vm1137, %v1116, %v1158
    %v1180 = vsel %vm1138, %v1117, %v1159
    %v1181 = vsel %vm1139, %v1118, %v1160
    %v1182 = vsel %vm1140, %v1119, %v1161
    %v1183 = vsel %vm1141, %v1120, %v1162
    %v1184 = vsel %vm1142, %v1121, %v1163
    %v1185 = vsel %vm1143, %v1122, %v1164
    %v1186 = vsel %vm1144, %v1123, %v1165
    %v1187 = vsel %vm1145, %v1124, %v1166
    %v1188 = vpack.c.bf16 %v1168, %v1167
    %v1189 = vpack.c.bf16 %v1170, %v1169
    %v1190 = vpack.c.bf16 %v1172, %v1171
    %v1191 = vpack.c.bf16 %v1174, %v1173
    %v1192 = vpack.c.bf16 %v1176, %v1175
    %v1193 = vpack.c.bf16 %v1178, %v1177
    %v1194 = vpack.c.bf16 %v1180, %v1179
    %v1195 = vpack.c.bf16 %v1182, %v1181
    %v1196 = vpack.c.bf16 %v1184, %v1183
    %v1197 = vpack.c.bf16 %v1186, %v1185
    %v1198 = vpack.c.bf16 %v1187, %v1187
    %v1210 = vunpack.c.l.b16 %v1188
    %v1211 = vunpack.c.h.b16 %v1188
    %v1212 = vunpack.c.l.b16 %v1189
    %v1213 = vunpack.c.h.b16 %v1189
    %v1214 = vunpack.c.l.b16 %v1190
    %v1215 = vunpack.c.h.b16 %v1190
    %v1216 = vunpack.c.l.b16 %v1191
    %v1217 = vunpack.c.h.b16 %v1191
    %v1218 = vunpack.c.l.b16 %v1192
    %v1219 = vunpack.c.h.b16 %v1192
    %v1220 = vunpack.c.l.b16 %v1193
    %v1221 = vunpack.c.h.b16 %v1193
    %v1222 = vunpack.c.l.b16 %v1194
    %v1223 = vunpack.c.h.b16 %v1194
    %v1224 = vunpack.c.l.b16 %v1195
    %v1225 = vunpack.c.h.b16 %v1195
    %v1226 = vunpack.c.l.b16 %v1196
    %v1227 = vunpack.c.h.b16 %v1196
    %v1228 = vunpack.c.l.b16 %v1197
    %v1229 = vunpack.c.h.b16 %v1197
    %v1230 = vunpack.c.l.b16 %v1198
    %v1231 = vpack.c.b16 %v1210, %v1210
    %v1232 = vpack.c.b16 %v1211, %v1211
    %v1233 = vpack.c.b16 %v1212, %v1212
    %v1234 = vpack.c.b16 %v1213, %v1213
    %v1235 = vpack.c.b16 %v1214, %v1214
    %v1236 = vpack.c.b16 %v1215, %v1215
    %v1237 = vpack.c.b16 %v1216, %v1216
    %v1238 = vpack.c.b16 %v1217, %v1217
    %v1239 = vpack.c.b16 %v1218, %v1218
    %v1240 = vpack.c.b16 %v1219, %v1219
    %v1241 = vpack.c.b16 %v1220, %v1220
    %v1242 = vpack.c.b16 %v1221, %v1221
    %v1243 = vpack.c.b16 %v1222, %v1222
    %v1244 = vpack.c.b16 %v1223, %v1223
    %v1245 = vpack.c.b16 %v1224, %v1224
    %v1246 = vpack.c.b16 %v1225, %v1225
    %v1247 = vpack.c.b16 %v1226, %v1226
    %v1248 = vpack.c.b16 %v1227, %v1227
    %v1249 = vpack.c.b16 %v1228, %v1228
    %v1250 = vpack.c.b16 %v1229, %v1229
    %v1251 = vpack.c.b16 %v1230, %v1230
    %1273 = vst [vmem:[#allocation8] sm:$0xf] %v1231
    %1274 = vst [vmem:[#allocation8 + $0x4] sm:$0xf] %v1232
    %1275 = vst [vmem:[#allocation8 + $0x8] sm:$0xf] %v1233
    %1276 = vst [vmem:[#allocation8 + $0xc] sm:$0xf] %v1234
    %1277 = vst [vmem:[#allocation8 + $0x10] sm:$0xf] %v1235
    %1278 = vst [vmem:[#allocation8 + $0x14] sm:$0xf] %v1236
    %1279 = vst [vmem:[#allocation8 + $0x18] sm:$0xf] %v1237
    %1280 = vst [vmem:[#allocation8 + $0x1c] sm:$0xf] %v1238
    %1281 = vst [vmem:[#allocation8 + $0x20] sm:$0xf] %v1239
    %1282 = vst [vmem:[#allocation8 + $0x24] sm:$0xf] %v1240
    %1283 = vst [vmem:[#allocation8 + $0x28] sm:$0xf] %v1241
    %1284 = vst [vmem:[#allocation8 + $0x2c] sm:$0xf] %v1242
    %1285 = vst [vmem:[#allocation8 + $0x30] sm:$0xf] %v1243
    %1286 = vst [vmem:[#allocation8 + $0x34] sm:$0xf] %v1244
    %1287 = vst [vmem:[#allocation8 + $0x38] sm:$0xf] %v1245
    %1288 = vst [vmem:[#allocation8 + $0x3c] sm:$0xf] %v1246
    %1289 = vst [vmem:[#allocation8 + $0x40] sm:$0xf] %v1247
    %1290 = vst [vmem:[#allocation8 + $0x44] sm:$0xf] %v1248
    %1291 = vst [vmem:[#allocation8 + $0x48] sm:$0xf] %v1249
    %1292 = vst [vmem:[#allocation8 + $0x4c] sm:$0xf] %v1250
    %1293 = vst [vmem:[#allocation8 + $0x50] sm:$0x1] %v1251
    // Predicated region
    $region26: #{bc_visual_policy_stochastic_forward.4} parent=1 // pred_check
      _
    $region27: #{bc_visual_policy_stochastic_forward.4} parent=1 // pred_check_branch
      %1295 = sbr.rel (0) target = $region29
    $region28: #{bc_visual_policy_stochastic_forward.4} parent=1 // pred_region
      %s1297 = ssub.s32 1344, 1344
      %1298 = vsyncadd [#allocation4], %s1297
      %s1299 = sshll.u32 [#allocation8], 4
      %s1300 = int_to_ptr.vmem [resolvable:$true] %s1299
      %1305 = dma.vmem_to_hbm [thread:$0]  %s1300, 1344, %s3, [#allocation4], 64, 64, 4
    $region29: #{bc_visual_policy_stochastic_forward.4} parent=1 // pred_fallthru
      _
    // Predicated region
    $region30: #{bc_visual_policy_stochastic_forward.4} parent=1 // pred_check
      _
    $region31: #{bc_visual_policy_stochastic_forward.4} parent=1 // pred_check_branch
      %1307 = sbr.rel (0) target = $region33
    $region32: #{bc_visual_policy_stochastic_forward.4} parent=1 // pred_region
      %1308 = dma.done [#allocation4], 1344
    $region33: #{bc_visual_policy_stochastic_forward.4} parent=1 // pred_fallthru
      _
    %1309 = vsyncpa [#allocation3], 1
    %1310 = vsyncpa [#allocation6], 1
    %1311 = vsyncpa [#allocation4], 1

// kernel: bc_visual_policy_stochastic_forward.5
$region0: #{bc_visual_policy_stochastic_forward.5}
  #allocation0 [shape = 'u32[]', space=smem, size = 0x4, offset = 0x4, fixed_abs, tag = 'smem constant byte address 0x4 - core index']
  #allocation1 [shape = 'u32[144,128]{1,0:T(1,128)}', space=vmem, size = 0x12000, scoped, tag = 'internal scratch']
  %s0 = inlined_call_operand.hbm [shape: bf16[1,56,512], index: 0, kind: input, shape index: {}]
  %s1 = inlined_call_operand.hbm [shape: bf16[4,512,128], index: 1, kind: input, shape index: {}]
  %s2 = inlined_call_operand.hbm [shape: f32[1,128], index: 2, kind: input, shape index: {}]
  %s3 = inlined_call_operand.hbm [shape: bf16[1,50,128], index: 3, kind: output, shape index: {}]
  %s4 = sld [smem:[#allocation0]]
  $region34: #{bc_visual_policy_stochastic_forward.5} parent=0
    _
  %s6 = ssub.s32 1, %s4
  %s7 = scalar_select 0, %s6, %s4
  $region1: #{bc_visual_policy_stochastic_forward.5} parent=0
    #allocation2 [shape = 'u8[57344]{0}', space=vmem, size = 0xe000, scoped, tag = 'input window, operand 0, single buffered']
    #allocation3 [shape = 's32[1]{0}', space=sflag, size = 0x4, scoped, tag = 'scoped memory for bc_visual_policy_stochastic_forward.5']
    #allocation4 [shape = 's32[1]{0}', space=sflag, size = 0x4, scoped, tag = 'scoped memory for bc_visual_policy_stochastic_forward.5']
    #allocation5 [shape = 'u8[524288]{0}', space=vmem, size = 0x80000, scoped, tag = 'input window, operand 1, single buffered']
    #allocation6 [shape = 's32[1]{0}', space=sflag, size = 0x4, scoped, tag = 'scoped memory for bc_visual_policy_stochastic_forward.5']
    #allocation7 [shape = 'u8[512]{0}', space=vmem, size = 0x400, scoped, tag = 'input window, operand 2, single buffered']
    #allocation8 [shape = 'u8[14336]{0}', space=vmem, size = 0x3800, scoped, tag = 'output window, operand 0, single buffered']
    %8 = vsyncpa [#allocation3], 0
    %9 = vsyncpa [#allocation6], 0
    %10 = vsyncpa [#allocation4], 0
    // Predicated region
    $region2: #{bc_visual_policy_stochastic_forward.5} parent=1 // pred_check
      _
    $region3: #{bc_visual_policy_stochastic_forward.5} parent=1 // pred_check_branch
      %12 = sbr.rel (0) target = $region5
    $region4: #{bc_visual_policy_stochastic_forward.5} parent=1 // pred_region
      %s14 = ssub.s32 1792, 1792
      %15 = vsyncadd [#allocation3], %s14
      %s16 = sshll.u32 [#allocation2], 4
      %s17 = int_to_ptr.vmem [resolvable:$true] %s16
      %22 = dma.hbm_to_vmem [thread:$0]  %s0, 1792, %s17, [#allocation3], 256, 256, 16
    $region5: #{bc_visual_policy_stochastic_forward.5} parent=1 // pred_fallthru
      _
    // Predicated region
    $region6: #{bc_visual_policy_stochastic_forward.5} parent=1 // pred_check
      _
    $region7: #{bc_visual_policy_stochastic_forward.5} parent=1 // pred_check_branch
      %24 = sbr.rel (0) target = $region9
    $region8: #{bc_visual_policy_stochastic_forward.5} parent=1 // pred_region
      %s26 = ssub.s32 16384, 16384
      %27 = vsyncadd [#allocation6], %s26
      %s28 = sshll.u32 [#allocation5], 4
      %s29 = int_to_ptr.vmem [resolvable:$true] %s28
      %34 = dma.hbm_to_vmem [thread:$0]  %s1, 16384, %s29, [#allocation6], 64, 64, 4
    $region9: #{bc_visual_policy_stochastic_forward.5} parent=1 // pred_fallthru
      _
    // Predicated region
    $region10: #{bc_visual_policy_stochastic_forward.5} parent=1 // pred_check
      _
    $region11: #{bc_visual_policy_stochastic_forward.5} parent=1 // pred_check_branch
      %36 = sbr.rel (0) target = $region13
    $region12: #{bc_visual_policy_stochastic_forward.5} parent=1 // pred_region
      %s38 = ssub.s32 16, 16
      %39 = vsyncadd [#allocation6], %s38
      %s41 = sshll.u32 [#allocation7], 4
      %s42 = int_to_ptr.vmem [resolvable:$true] %s41
      %44 = dma.hbm_to_vmem [thread:$0]  %s2, 16, %s42, [#allocation6]
    $region13: #{bc_visual_policy_stochastic_forward.5} parent=1 // pred_fallthru
      _
    // Predicated region
    $region14: #{bc_visual_policy_stochastic_forward.5} parent=1 // pred_check
      _
    $region15: #{bc_visual_policy_stochastic_forward.5} parent=1 // pred_check_branch
      %46 = sbr.rel (0) target = $region17
    $region16: #{bc_visual_policy_stochastic_forward.5} parent=1 // pred_region
      %47 = dma.done [#allocation3], 1792
    $region17: #{bc_visual_policy_stochastic_forward.5} parent=1 // pred_fallthru
      _
    // Predicated region
    $region18: #{bc_visual_policy_stochastic_forward.5} parent=1 // pred_check
      _
    $region19: #{bc_visual_policy_stochastic_forward.5} parent=1 // pred_check_branch
      %49 = sbr.rel (0) target = $region21
    $region20: #{bc_visual_policy_stochastic_forward.5} parent=1 // pred_region
      %50 = dma.done [#allocation6], 16384
    $region21: #{bc_visual_policy_stochastic_forward.5} parent=1 // pred_fallthru
      _
    // Predicated region
    $region22: #{bc_visual_policy_stochastic_forward.5} parent=1 // pred_check
      _
    $region23: #{bc_visual_policy_stochastic_forward.5} parent=1 // pred_check_branch
      %52 = sbr.rel (0) target = $region25
    $region24: #{bc_visual_policy_stochastic_forward.5} parent=1 // pred_region
      %53 = dma.done [#allocation6], 16
    $region25: #{bc_visual_policy_stochastic_forward.5} parent=1 // pred_fallthru
      _
    %v55 = vld [vmem:[#allocation2] sm:$0xff]
    %v56 = vld [vmem:[#allocation2 + $0x8] sm:$0xff]
    %v57 = vld [vmem:[#allocation2 + $0x10] sm:$0xff]
    %v58 = vld [vmem:[#allocation2 + $0x18] sm:$0xff]
    %v59 = vld [vmem:[#allocation2 + $0x20] sm:$0xff]
    %v60 = vld [vmem:[#allocation2 + $0x28] sm:$0xff]
    %v61 = vld [vmem:[#allocation2 + $0x30] sm:$0xff]
    %v62 = vld [vmem:[#allocation2 + $0x38] sm:$0xff]
    %v63 = vld [vmem:[#allocation2 + $0x40] sm:$0xff]
    %v64 = vld [vmem:[#allocation2 + $0x48] sm:$0xff]
    %v65 = vld [vmem:[#allocation2 + $0x50] sm:$0xff]
    %v66 = vld [vmem:[#allocation2 + $0x58] sm:$0xff]
    %v67 = vld [vmem:[#allocation2 + $0x60] sm:$0x11]
    %v68 = vld [vmem:[#allocation2 + $0x68] sm:$0x11]
    %v69 = vld [vmem:[#allocation5] sm:$0xf]
    %v70 = vld [vmem:[#allocation5 + $0x4] sm:$0xf]
    %v71 = vld [vmem:[#allocation5 + $0x8] sm:$0xf]
    %v72 = vld [vmem:[#allocation5 + $0xc] sm:$0xf]
    %v73 = vld [vmem:[#allocation5 + $0x10] sm:$0xf]
    %v74 = vld [vmem:[#allocation5 + $0x14] sm:$0xf]
    %v75 = vld [vmem:[#allocation5 + $0x18] sm:$0xf]
    %v76 = vld [vmem:[#allocation5 + $0x1c] sm:$0xf]
    %v77 = vld [vmem:[#allocation5 + $0x20] sm:$0xf]
    %v78 = vld [vmem:[#allocation5 + $0x24] sm:$0xf]
    %v79 = vld [vmem:[#allocation5 + $0x28] sm:$0xf]
    %v80 = vld [vmem:[#allocation5 + $0x2c] sm:$0xf]
    %v81 = vld [vmem:[#allocation5 + $0x30] sm:$0xf]
    %v82 = vld [vmem:[#allocation5 + $0x34] sm:$0xf]
    %v83 = vld [vmem:[#allocation5 + $0x38] sm:$0xf]
    %v84 = vld [vmem:[#allocation5 + $0x3c] sm:$0xf]
    %v85 = vld [vmem:[#allocation5 + $0x40] sm:$0xf]
    %v86 = vld [vmem:[#allocation5 + $0x44] sm:$0xf]
    %v87 = vld [vmem:[#allocation5 + $0x48] sm:$0xf]
    %v88 = vld [vmem:[#allocation5 + $0x4c] sm:$0xf]
    %v89 = vld [vmem:[#allocation5 + $0x50] sm:$0xf]
    %v90 = vld [vmem:[#allocation5 + $0x54] sm:$0xf]
    %v91 = vld [vmem:[#allocation5 + $0x58] sm:$0xf]
    %v92 = vld [vmem:[#allocation5 + $0x5c] sm:$0xf]
    %v93 = vld [vmem:[#allocation5 + $0x60] sm:$0xf]
    %v94 = vld [vmem:[#allocation5 + $0x64] sm:$0xf]
    %v95 = vld [vmem:[#allocation5 + $0x68] sm:$0xf]
    %v96 = vld [vmem:[#allocation5 + $0x6c] sm:$0xf]
    %v97 = vld [vmem:[#allocation5 + $0x70] sm:$0xf]
    %v98 = vld [vmem:[#allocation5 + $0x74] sm:$0xf]
    %v99 = vld [vmem:[#allocation5 + $0x78] sm:$0xf]
    %v100 = vld [vmem:[#allocation5 + $0x7c] sm:$0xf]
    %v101 = vld [vmem:[#allocation5 + $0x80] sm:$0xf]
    %v102 = vld [vmem:[#allocation5 + $0x84] sm:$0xf]
    %v103 = vld [vmem:[#allocation5 + $0x88] sm:$0xf]
    %v104 = vld [vmem:[#allocation5 + $0x8c] sm:$0xf]
    %v105 = vld [vmem:[#allocation5 + $0x90] sm:$0xf]
    %v106 = vld [vmem:[#allocation5 + $0x94] sm:$0xf]
    %v107 = vld [vmem:[#allocation5 + $0x98] sm:$0xf]
    %v108 = vld [vmem:[#allocation5 + $0x9c] sm:$0xf]
    %v109 = vld [vmem:[#allocation5 + $0xa0] sm:$0xf]
    %v110 = vld [vmem:[#allocation5 + $0xa4] sm:$0xf]
    %v111 = vld [vmem:[#allocation5 + $0xa8] sm:$0xf]
    %v112 = vld [vmem:[#allocation5 + $0xac] sm:$0xf]
    %v113 = vld [vmem:[#allocation5 + $0xb0] sm:$0xf]
    %v114 = vld [vmem:[#allocation5 + $0xb4] sm:$0xf]
    %v115 = vld [vmem:[#allocation5 + $0xb8] sm:$0xf]
    %v116 = vld [vmem:[#allocation5 + $0xbc] sm:$0xf]
    %v117 = vld [vmem:[#allocation5 + $0xc0] sm:$0xf]
    %v118 = vld [vmem:[#allocation5 + $0xc4] sm:$0xf]
    %v119 = vld [vmem:[#allocation5 + $0xc8] sm:$0xf]
    %v120 = vld [vmem:[#allocation5 + $0xcc] sm:$0xf]
    %v121 = vld [vmem:[#allocation5 + $0xd0] sm:$0xf]
    %v122 = vld [vmem:[#allocation5 + $0xd4] sm:$0xf]
    %v123 = vld [vmem:[#allocation5 + $0xd8] sm:$0xf]
    %v124 = vld [vmem:[#allocation5 + $0xdc] sm:$0xf]
    %v125 = vld [vmem:[#allocation5 + $0xe0] sm:$0xf]
    %v126 = vld [vmem:[#allocation5 + $0xe4] sm:$0xf]
    %v127 = vld [vmem:[#allocation5 + $0xe8] sm:$0xf]
    %v128 = vld [vmem:[#allocation5 + $0xec] sm:$0xf]
    %v129 = vld [vmem:[#allocation5 + $0xf0] sm:$0xf]
    %v130 = vld [vmem:[#allocation5 + $0xf4] sm:$0xf]
    %v131 = vld [vmem:[#allocation5 + $0xf8] sm:$0xf]
    %v132 = vld [vmem:[#allocation5 + $0xfc] sm:$0xf]
    %v133 = vld [vmem:[#allocation2 + $0x60] sm:$0x33]
    %v134 = vld [vmem:[#allocation2 + $0x68] sm:$0x33]
    %s135 = scalar_lea.vmem [#allocation5], 256
    %v136 = vld [vmem:[%s135] sm:$0xf]
    %v137 = vld [vmem:[%s135 + $0x4] sm:$0xf]
    %v138 = vld [vmem:[%s135 + $0x8] sm:$0xf]
    %v139 = vld [vmem:[%s135 + $0xc] sm:$0xf]
    %v140 = vld [vmem:[%s135 + $0x10] sm:$0xf]
    %v141 = vld [vmem:[%s135 + $0x14] sm:$0xf]
    %v142 = vld [vmem:[%s135 + $0x18] sm:$0xf]
    %v143 = vld [vmem:[%s135 + $0x1c] sm:$0xf]
    %v144 = vld [vmem:[%s135 + $0x20] sm:$0xf]
    %v145 = vld [vmem:[%s135 + $0x24] sm:$0xf]
    %v146 = vld [vmem:[%s135 + $0x28] sm:$0xf]
    %v147 = vld [vmem:[%s135 + $0x2c] sm:$0xf]
    %v148 = vld [vmem:[%s135 + $0x30] sm:$0xf]
    %v149 = vld [vmem:[%s135 + $0x34] sm:$0xf]
    %v150 = vld [vmem:[%s135 + $0x38] sm:$0xf]
    %v151 = vld [vmem:[%s135 + $0x3c] sm:$0xf]
    %v152 = vld [vmem:[%s135 + $0x40] sm:$0xf]
    %v153 = vld [vmem:[%s135 + $0x44] sm:$0xf]
    %v154 = vld [vmem:[%s135 + $0x48] sm:$0xf]
    %v155 = vld [vmem:[%s135 + $0x4c] sm:$0xf]
    %v156 = vld [vmem:[%s135 + $0x50] sm:$0xf]
    %v157 = vld [vmem:[%s135 + $0x54] sm:$0xf]
    %v158 = vld [vmem:[%s135 + $0x58] sm:$0xf]
    %v159 = vld [vmem:[%s135 + $0x5c] sm:$0xf]
    %v160 = vld [vmem:[%s135 + $0x60] sm:$0xf]
    %v161 = vld [vmem:[%s135 + $0x64] sm:$0xf]
    %v162 = vld [vmem:[%s135 + $0x68] sm:$0xf]
    %v163 = vld [vmem:[%s135 + $0x6c] sm:$0xf]
    %v164 = vld [vmem:[%s135 + $0x70] sm:$0xf]
    %v165 = vld [vmem:[%s135 + $0x74] sm:$0xf]
    %v166 = vld [vmem:[%s135 + $0x78] sm:$0xf]
    %v167 = vld [vmem:[%s135 + $0x7c] sm:$0xf]
    %v168 = vld [vmem:[%s135 + $0x80] sm:$0xf]
    %v169 = vld [vmem:[%s135 + $0x84] sm:$0xf]
    %v170 = vld [vmem:[%s135 + $0x88] sm:$0xf]
    %v171 = vld [vmem:[%s135 + $0x8c] sm:$0xf]
    %v172 = vld [vmem:[%s135 + $0x90] sm:$0xf]
    %v173 = vld [vmem:[%s135 + $0x94] sm:$0xf]
    %v174 = vld [vmem:[%s135 + $0x98] sm:$0xf]
    %v175 = vld [vmem:[%s135 + $0x9c] sm:$0xf]
    %v176 = vld [vmem:[%s135 + $0xa0] sm:$0xf]
    %v177 = vld [vmem:[%s135 + $0xa4] sm:$0xf]
    %v178 = vld [vmem:[%s135 + $0xa8] sm:$0xf]
    %v179 = vld [vmem:[%s135 + $0xac] sm:$0xf]
    %v180 = vld [vmem:[%s135 + $0xb0] sm:$0xf]
    %v181 = vld [vmem:[%s135 + $0xb4] sm:$0xf]
    %v182 = vld [vmem:[%s135 + $0xb8] sm:$0xf]
    %v183 = vld [vmem:[%s135 + $0xbc] sm:$0xf]
    %v184 = vld [vmem:[%s135 + $0xc0] sm:$0xf]
    %v185 = vld [vmem:[%s135 + $0xc4] sm:$0xf]
    %v186 = vld [vmem:[%s135 + $0xc8] sm:$0xf]
    %v187 = vld [vmem:[%s135 + $0xcc] sm:$0xf]
    %v188 = vld [vmem:[%s135 + $0xd0] sm:$0xf]
    %v189 = vld [vmem:[%s135 + $0xd4] sm:$0xf]
    %v190 = vld [vmem:[%s135 + $0xd8] sm:$0xf]
    %v191 = vld [vmem:[%s135 + $0xdc] sm:$0xf]
    %v192 = vld [vmem:[%s135 + $0xe0] sm:$0xf]
    %v193 = vld [vmem:[%s135 + $0xe4] sm:$0xf]
    %v194 = vld [vmem:[%s135 + $0xe8] sm:$0xf]
    %v195 = vld [vmem:[%s135 + $0xec] sm:$0xf]
    %v196 = vld [vmem:[%s135 + $0xf0] sm:$0xf]
    %v197 = vld [vmem:[%s135 + $0xf4] sm:$0xf]
    %v198 = vld [vmem:[%s135 + $0xf8] sm:$0xf]
    %v199 = vld [vmem:[%s135 + $0xfc] sm:$0xf]
    %v214 = vunpack.c.l.b16 %v55
    %v215 = vunpack.c.h.b16 %v55
    %v216 = vunpack.c.l.b16 %v56
    %v217 = vunpack.c.h.b16 %v56
    %v218 = vunpack.c.l.b16 %v57
    %v219 = vunpack.c.h.b16 %v57
    %v220 = vunpack.c.l.b16 %v58
    %v221 = vunpack.c.h.b16 %v58
    %v222 = vunpack.c.l.b16 %v59
    %v223 = vunpack.c.h.b16 %v59
    %v224 = vunpack.c.l.b16 %v60
    %v225 = vunpack.c.h.b16 %v60
    %v226 = vunpack.c.l.b16 %v61
    %v227 = vunpack.c.h.b16 %v61
    %v228 = vunpack.c.l.b16 %v62
    %v229 = vunpack.c.h.b16 %v62
    %v230 = vunpack.c.l.b16 %v63
    %v231 = vunpack.c.h.b16 %v63
    %v232 = vunpack.c.l.b16 %v64
    %v233 = vunpack.c.h.b16 %v64
    %v234 = vunpack.c.l.b16 %v65
    %v235 = vunpack.c.h.b16 %v65
    %v236 = vunpack.c.l.b16 %v66
    %v237 = vunpack.c.h.b16 %v66
    %v238 = vunpack.c.l.b16 %v133
    %v239 = vunpack.c.h.b16 %v133
    %v240 = vunpack.c.l.b16 %v134
    %v241 = vunpack.c.h.b16 %v134
    %v242 = vpack.c.b16 %v218, %v214
    %v243 = vpack.c.b16 %v219, %v215
    %v244 = vpack.c.b16 %v220, %v216
    %v245 = vpack.c.b16 %v221, %v217
    %v246 = vpack.c.b16 %v226, %v222
    %v247 = vpack.c.b16 %v227, %v223
    %v248 = vpack.c.b16 %v228, %v224
    %v249 = vpack.c.b16 %v229, %v225
    %v250 = vpack.c.b16 %v234, %v230
    %v251 = vpack.c.b16 %v235, %v231
    %v252 = vpack.c.b16 %v236, %v232
    %v253 = vpack.c.b16 %v237, %v233
    %v254 = vpack.c.b16 %v238, %v238
    %v255 = vpack.c.b16 %v239, %v239
    %v256 = vpack.c.b16 %v240, %v240
    %v257 = vpack.c.b16 %v241, %v241
    %vm258 = vsmask.f32 7424
    %v260 = vshrl.u32 %v242, 16
    %v262 = vshll.u32 %v242, 16
    %v264 = vrot.slane %v262, 1
    %v265 = vor.u32 %v260, %v264
    %v267 = vshll.u32 %v246, 16
    %v269 = vrot.slane %v267, 1
    %v270 = vsel %vm258, %v265, %v269
    %v272 = vshrl.u32 %v243, 16
    %v274 = vshll.u32 %v243, 16
    %v276 = vrot.slane %v274, 1
    %v277 = vor.u32 %v272, %v276
    %v279 = vshll.u32 %v247, 16
    %v281 = vrot.slane %v279, 1
    %v282 = vsel %vm258, %v277, %v281
    %v284 = vshrl.u32 %v244, 16
    %v286 = vshll.u32 %v244, 16
    %v288 = vrot.slane %v286, 1
    %v289 = vor.u32 %v284, %v288
    %v291 = vshll.u32 %v248, 16
    %v293 = vrot.slane %v291, 1
    %v294 = vsel %vm258, %v289, %v293
    %v296 = vshrl.u32 %v245, 16
    %v298 = vshll.u32 %v245, 16
    %v300 = vrot.slane %v298, 1
    %v301 = vor.u32 %v296, %v300
    %v303 = vshll.u32 %v249, 16
    %v305 = vrot.slane %v303, 1
    %v306 = vsel %vm258, %v301, %v305
    %v307 = vshrl.u32 %v246, 16
    %v309 = vor.u32 %v307, %v269
    %v311 = vshll.u32 %v250, 16
    %v313 = vrot.slane %v311, 1
    %v314 = vsel %vm258, %v309, %v313
    %v315 = vshrl.u32 %v247, 16
    %v317 = vor.u32 %v315, %v281
    %v319 = vshll.u32 %v251, 16
    %v321 = vrot.slane %v319, 1
    %v322 = vsel %vm258, %v317, %v321
    %v323 = vshrl.u32 %v248, 16
    %v325 = vor.u32 %v323, %v293
    %v327 = vshll.u32 %v252, 16
    %v329 = vrot.slane %v327, 1
    %v330 = vsel %vm258, %v325, %v329
    %v331 = vshrl.u32 %v249, 16
    %v333 = vor.u32 %v331, %v305
    %v335 = vshll.u32 %v253, 16
    %v337 = vrot.slane %v335, 1
    %v338 = vsel %vm258, %v333, %v337
    %v339 = vshrl.u32 %v250, 16
    %v341 = vor.u32 %v339, %v313
    %v343 = vshll.u32 %v254, 16
    %v345 = vrot.slane %v343, 1
    %v346 = vsel %vm258, %v341, %v345
    %v347 = vshrl.u32 %v251, 16
    %v349 = vor.u32 %v347, %v321
    %v351 = vshll.u32 %v255, 16
    %v353 = vrot.slane %v351, 1
    %v354 = vsel %vm258, %v349, %v353
    %v355 = vshrl.u32 %v252, 16
    %v357 = vor.u32 %v355, %v329
    %v359 = vshll.u32 %v256, 16
    %v361 = vrot.slane %v359, 1
    %v362 = vsel %vm258, %v357, %v361
    %v363 = vshrl.u32 %v253, 16
    %v365 = vor.u32 %v363, %v337
    %v367 = vshll.u32 %v257, 16
    %v369 = vrot.slane %v367, 1
    %v370 = vsel %vm258, %v365, %v369
    %v371 = vshrl.u32 %v254, 16
    %v373 = vor.u32 %v371, %v345
    %v374 = vshrl.u32 %v255, 16
    %v376 = vor.u32 %v374, %v353
    %v377 = vshrl.u32 %v256, 16
    %v379 = vor.u32 %v377, %v361
    %v380 = vshrl.u32 %v257, 16
    %v382 = vor.u32 %v380, %v369
    %v463 = vunpack.c.l.b16 %v136
    %v464 = vunpack.c.l.b16 %v137
    %v465 = vunpack.c.l.b16 %v138
    %v466 = vunpack.c.l.b16 %v139
    %v467 = vunpack.c.l.b16 %v140
    %v468 = vunpack.c.l.b16 %v141
    %v469 = vunpack.c.l.b16 %v142
    %v470 = vunpack.c.l.b16 %v143
    %v471 = vunpack.c.l.b16 %v144
    %v472 = vunpack.c.l.b16 %v145
    %v473 = vunpack.c.l.b16 %v146
    %v474 = vunpack.c.l.b16 %v147
    %v475 = vunpack.c.l.b16 %v148
    %v476 = vunpack.c.l.b16 %v149
    %v477 = vunpack.c.l.b16 %v150
    %v478 = vunpack.c.l.b16 %v151
    %v479 = vunpack.c.l.b16 %v152
    %v480 = vunpack.c.l.b16 %v153
    %v481 = vunpack.c.l.b16 %v154
    %v482 = vunpack.c.l.b16 %v155
    %v483 = vunpack.c.l.b16 %v156
    %v484 = vunpack.c.l.b16 %v157
    %v485 = vunpack.c.l.b16 %v158
    %v486 = vunpack.c.l.b16 %v159
    %v487 = vunpack.c.l.b16 %v160
    %v488 = vunpack.c.l.b16 %v161
    %v489 = vunpack.c.l.b16 %v162
    %v490 = vunpack.c.l.b16 %v163
    %v491 = vunpack.c.l.b16 %v164
    %v492 = vunpack.c.l.b16 %v165
    %v493 = vunpack.c.l.b16 %v166
    %v494 = vunpack.c.l.b16 %v167
    %v495 = vunpack.c.l.b16 %v168
    %v496 = vunpack.c.l.b16 %v169
    %v497 = vunpack.c.l.b16 %v170
    %v498 = vunpack.c.l.b16 %v171
    %v499 = vunpack.c.l.b16 %v172
    %v500 = vunpack.c.l.b16 %v173
    %v501 = vunpack.c.l.b16 %v174
    %v502 = vunpack.c.l.b16 %v175
    %v503 = vunpack.c.l.b16 %v176
    %v504 = vunpack.c.l.b16 %v177
    %v505 = vunpack.c.l.b16 %v178
    %v506 = vunpack.c.l.b16 %v179
    %v507 = vunpack.c.l.b16 %v180
    %v508 = vunpack.c.l.b16 %v181
    %v509 = vunpack.c.l.b16 %v182
    %v510 = vunpack.c.l.b16 %v183
    %v511 = vunpack.c.l.b16 %v184
    %v512 = vunpack.c.l.b16 %v185
    %v513 = vunpack.c.l.b16 %v186
    %v514 = vunpack.c.l.b16 %v187
    %v515 = vunpack.c.l.b16 %v188
    %v516 = vunpack.c.l.b16 %v189
    %v517 = vunpack.c.l.b16 %v190
    %v518 = vunpack.c.l.b16 %v191
    %v519 = vunpack.c.l.b16 %v192
    %v520 = vunpack.c.l.b16 %v193
    %v521 = vunpack.c.l.b16 %v194
    %v522 = vunpack.c.l.b16 %v195
    %v523 = vunpack.c.l.b16 %v196
    %v524 = vunpack.c.l.b16 %v197
    %v525 = vunpack.c.l.b16 %v198
    %v526 = vunpack.c.l.b16 %v199
    %v527 = vpack.c.b16 %v464, %v463
    %v528 = vpack.c.b16 %v466, %v465
    %v529 = vpack.c.b16 %v468, %v467
    %v530 = vpack.c.b16 %v470, %v469
    %v531 = vpack.c.b16 %v472, %v471
    %v532 = vpack.c.b16 %v474, %v473
    %v533 = vpack.c.b16 %v476, %v475
    %v534 = vpack.c.b16 %v478, %v477
    %v535 = vpack.c.b16 %v480, %v479
    %v536 = vpack.c.b16 %v482, %v481
    %v537 = vpack.c.b16 %v484, %v483
    %v538 = vpack.c.b16 %v486, %v485
    %v539 = vpack.c.b16 %v488, %v487
    %v540 = vpack.c.b16 %v490, %v489
    %v541 = vpack.c.b16 %v492, %v491
    %v542 = vpack.c.b16 %v494, %v493
    %v543 = vpack.c.b16 %v496, %v495
    %v544 = vpack.c.b16 %v498, %v497
    %v545 = vpack.c.b16 %v500, %v499
    %v546 = vpack.c.b16 %v502, %v501
    %v547 = vpack.c.b16 %v504, %v503
    %v548 = vpack.c.b16 %v506, %v505
    %v549 = vpack.c.b16 %v508, %v507
    %v550 = vpack.c.b16 %v510, %v509
    %v551 = vpack.c.b16 %v512, %v511
    %v552 = vpack.c.b16 %v514, %v513
    %v553 = vpack.c.b16 %v516, %v515
    %v554 = vpack.c.b16 %v518, %v517
    %v555 = vpack.c.b16 %v520, %v519
    %v556 = vpack.c.b16 %v522, %v521
    %v557 = vpack.c.b16 %v524, %v523
    %v558 = vpack.c.b16 %v526, %v525
    %591 = vmatprep.subr.bf16.mxu0 0
    %592 = vmatpush1.bf16.msra.mxu0 %v527
    %593 = vmatprep.subr.bf16.mxu0 0
    %594 = vmatpush1.bf16.msra.mxu0 %v528
    %595 = vmatprep.subr.bf16.mxu0 0
    %596 = vmatpush1.bf16.msra.mxu0 %v529
    %597 = vmatprep.subr.bf16.mxu0 0
    %598 = vmatpush1.bf16.msra.mxu0 %v530
    %599 = vmatprep.subr.bf16.mxu0 0
    %600 = vmatpush1.bf16.msra.mxu0 %v531
    %601 = vmatprep.subr.bf16.mxu0 0
    %602 = vmatpush1.bf16.msra.mxu0 %v532
    %603 = vmatprep.subr.bf16.mxu0 0
    %604 = vmatpush1.bf16.msra.mxu0 %v533
    %605 = vmatprep.subr.bf16.mxu0 0
    %606 = vmatpush1.bf16.msra.mxu0 %v534
    %607 = vmatprep.subr.bf16.mxu0 0
    %608 = vmatpush1.bf16.msra.mxu0 %v535
    %609 = vmatprep.subr.bf16.mxu0 0
    %610 = vmatpush1.bf16.msra.mxu0 %v536
    %611 = vmatprep.subr.bf16.mxu0 0
    %612 = vmatpush1.bf16.msra.mxu0 %v537
    %613 = vmatprep.subr.bf16.mxu0 0
    %614 = vmatpush1.bf16.msra.mxu0 %v538
    %615 = vmatprep.subr.bf16.mxu0 0
    %616 = vmatpush1.bf16.msra.mxu0 %v539
    %617 = vmatprep.subr.bf16.mxu0 0
    %618 = vmatpush1.bf16.msra.mxu0 %v540
    %619 = vmatprep.subr.bf16.mxu0 0
    %620 = vmatpush1.bf16.msra.mxu0 %v541
    %621 = vmatprep.subr.bf16.mxu0 0
    %622 = vmatpush1.bf16.msra.mxu0 %v542
    %623 = vmatprep.mubr.bf16.mxu0 %v282
    %624 = vmatmul.mubr.bf16.gmra.mrb[0].mxu0 %v270
    %v625 = vpop.f32.mrb[0].mxu0
    %v626 = vadd.f32 0.0, %v625
    %v627 = vpop.f32.mrb[0].mxu0
    %v628 = vpop.f32.mrb[0].mxu0
    %v629 = vadd.f32 0.0, %v628
    %v630 = vpop.f32.mrb[0].mxu0
    %631 = vmatprep.mubr.bf16.mxu0 %v322
    %632 = vmatmul.mubr.bf16.gmra.mrb[0].mxu0 %v314
    %v633 = vpop.f32.mrb[0].mxu0
    %v634 = vadd.f32 0.0, %v633
    %v635 = vpop.f32.mrb[0].mxu0
    %v636 = vpop.f32.mrb[0].mxu0
    %v637 = vadd.f32 0.0, %v636
    %v638 = vpop.f32.mrb[0].mxu0
    %639 = vmatprep.mubr.bf16.mxu0 %v354
    %640 = vmatmul.mubr.bf16.gmra.mrb[0].mxu0 %v346
    %v641 = vpop.f32.mrb[0].mxu0
    %v642 = vadd.f32 0.0, %v641
    %v643 = vpop.f32.mrb[0].mxu0
    %v644 = vpop.f32.mrb[0].mxu0
    %v645 = vadd.f32 0.0, %v644
    %v646 = vpop.f32.mrb[0].mxu0
    %647 = vmatprep.mubr.bf16.mxu0 %v376
    %648 = vmatmul.mubr.bf16.gmra.mrb[0].mxu0 %v373
    %v649 = vpop.f32.mrb[0].mxu0
    %v650 = vadd.f32 0.0, %v649
    %v651 = vpop.f32.mrb[0].mxu0
    %v652 = vpop.f32.mrb[0].mxu0
    %v653 = vpop.f32.mrb[0].mxu0
    %654 = vdwg.mxu0
    %655 = vmatprep.subr.bf16.mxu0 0
    %656 = vmatpush1.bf16.msra.mxu0 %v543
    %657 = vmatprep.subr.bf16.mxu0 0
    %658 = vmatpush1.bf16.msra.mxu0 %v544
    %659 = vmatprep.subr.bf16.mxu0 0
    %660 = vmatpush1.bf16.msra.mxu0 %v545
    %661 = vmatprep.subr.bf16.mxu0 0
    %662 = vmatpush1.bf16.msra.mxu0 %v546
    %663 = vmatprep.subr.bf16.mxu0 0
    %664 = vmatpush1.bf16.msra.mxu0 %v547
    %665 = vmatprep.subr.bf16.mxu0 0
    %666 = vmatpush1.bf16.msra.mxu0 %v548
    %667 = vmatprep.subr.bf16.mxu0 0
    %668 = vmatpush1.bf16.msra.mxu0 %v549
    %669 = vmatprep.subr.bf16.mxu0 0
    %670 = vmatpush1.bf16.msra.mxu0 %v550
    %671 = vmatprep.subr.bf16.mxu0 0
    %672 = vmatpush1.bf16.msra.mxu0 %v551
    %673 = vmatprep.subr.bf16.mxu0 0
    %674 = vmatpush1.bf16.msra.mxu0 %v552
    %675 = vmatprep.subr.bf16.mxu0 0
    %676 = vmatpush1.bf16.msra.mxu0 %v553
    %677 = vmatprep.subr.bf16.mxu0 0
    %678 = vmatpush1.bf16.msra.mxu0 %v554
    %679 = vmatprep.subr.bf16.mxu0 0
    %680 = vmatpush1.bf16.msra.mxu0 %v555
    %681 = vmatprep.subr.bf16.mxu0 0
    %682 = vmatpush1.bf16.msra.mxu0 %v556
    %683 = vmatprep.subr.bf16.mxu0 0
    %684 = vmatpush1.bf16.msra.mxu0 %v557
    %685 = vmatprep.subr.bf16.mxu0 0
    %686 = vmatpush1.bf16.msra.mxu0 %v558
    %687 = vmatprep.mubr.bf16.mxu0 %v306
    %688 = vmatmul.mubr.bf16.gmra.mrb[0].mxu0 %v294
    %v689 = vpop.f32.mrb[0].mxu0
    %v690 = vadd.f32 %v626, %v689
    %v691 = vpop.f32.mrb[0].mxu0
    %v692 = vpop.f32.mrb[0].mxu0
    %v693 = vadd.f32 %v629, %v692
    %v694 = vpop.f32.mrb[0].mxu0
    %695 = vmatprep.mubr.bf16.mxu0 %v338
    %696 = vmatmul.mubr.bf16.gmra.mrb[0].mxu0 %v330
    %v697 = vpop.f32.mrb[0].mxu0
    %v698 = vadd.f32 %v634, %v697
    %v699 = vpop.f32.mrb[0].mxu0
    %v700 = vpop.f32.mrb[0].mxu0
    %v701 = vadd.f32 %v637, %v700
    %v702 = vpop.f32.mrb[0].mxu0
    %703 = vmatprep.mubr.bf16.mxu0 %v370
    %704 = vmatmul.mubr.bf16.gmra.mrb[0].mxu0 %v362
    %v705 = vpop.f32.mrb[0].mxu0
    %v706 = vadd.f32 %v642, %v705
    %v707 = vpop.f32.mrb[0].mxu0
    %v708 = vpop.f32.mrb[0].mxu0
    %v709 = vadd.f32 %v645, %v708
    %v710 = vpop.f32.mrb[0].mxu0
    %711 = vmatprep.mubr.bf16.mxu0 %v382
    %712 = vmatmul.mubr.bf16.gmra.mrb[0].mxu0 %v379
    %v713 = vpop.f32.mrb[0].mxu0
    %v714 = vadd.f32 %v650, %v713
    %v715 = vpop.f32.mrb[0].mxu0
    %v716 = vpop.f32.mrb[0].mxu0
    %v717 = vpop.f32.mrb[0].mxu0
    %718 = vdwg.mxu0
    %v721 = vunpack.c.l.b16 %v67
    %v722 = vunpack.c.h.b16 %v67
    %v723 = vunpack.c.l.b16 %v68
    %v724 = vunpack.c.h.b16 %v68
    %v725 = vpack.c.b16 %v721, %v721
    %v726 = vpack.c.b16 %v722, %v722
    %v727 = vpack.c.b16 %v723, %v723
    %v728 = vpack.c.b16 %v724, %v724
    %v809 = vunpack.c.l.b16 %v69
    %v810 = vunpack.c.l.b16 %v70
    %v811 = vunpack.c.l.b16 %v71
    %v812 = vunpack.c.l.b16 %v72
    %v813 = vunpack.c.l.b16 %v73
    %v814 = vunpack.c.l.b16 %v74
    %v815 = vunpack.c.l.b16 %v75
    %v816 = vunpack.c.l.b16 %v76
    %v817 = vunpack.c.l.b16 %v77
    %v818 = vunpack.c.l.b16 %v78
    %v819 = vunpack.c.l.b16 %v79
    %v820 = vunpack.c.l.b16 %v80
    %v821 = vunpack.c.l.b16 %v81
    %v822 = vunpack.c.l.b16 %v82
    %v823 = vunpack.c.l.b16 %v83
    %v824 = vunpack.c.l.b16 %v84
    %v825 = vunpack.c.l.b16 %v85
    %v826 = vunpack.c.l.b16 %v86
    %v827 = vunpack.c.l.b16 %v87
    %v828 = vunpack.c.l.b16 %v88
    %v829 = vunpack.c.l.b16 %v89
    %v830 = vunpack.c.l.b16 %v90
    %v831 = vunpack.c.l.b16 %v91
    %v832 = vunpack.c.l.b16 %v92
    %v833 = vunpack.c.l.b16 %v93
    %v834 = vunpack.c.l.b16 %v94
    %v835 = vunpack.c.l.b16 %v95
    %v836 = vunpack.c.l.b16 %v96
    %v837 = vunpack.c.l.b16 %v97
    %v838 = vunpack.c.l.b16 %v98
    %v839 = vunpack.c.l.b16 %v99
    %v840 = vunpack.c.l.b16 %v100
    %v841 = vunpack.c.l.b16 %v101
    %v842 = vunpack.c.l.b16 %v102
    %v843 = vunpack.c.l.b16 %v103
    %v844 = vunpack.c.l.b16 %v104
    %v845 = vunpack.c.l.b16 %v105
    %v846 = vunpack.c.l.b16 %v106
    %v847 = vunpack.c.l.b16 %v107
    %v848 = vunpack.c.l.b16 %v108
    %v849 = vunpack.c.l.b16 %v109
    %v850 = vunpack.c.l.b16 %v110
    %v851 = vunpack.c.l.b16 %v111
    %v852 = vunpack.c.l.b16 %v112
    %v853 = vunpack.c.l.b16 %v113
    %v854 = vunpack.c.l.b16 %v114
    %v855 = vunpack.c.l.b16 %v115
    %v856 = vunpack.c.l.b16 %v116
    %v857 = vunpack.c.l.b16 %v117
    %v858 = vunpack.c.l.b16 %v118
    %v859 = vunpack.c.l.b16 %v119
    %v860 = vunpack.c.l.b16 %v120
    %v861 = vunpack.c.l.b16 %v121
    %v862 = vunpack.c.l.b16 %v122
    %v863 = vunpack.c.l.b16 %v123
    %v864 = vunpack.c.l.b16 %v124
    %v865 = vunpack.c.l.b16 %v125
    %v866 = vunpack.c.l.b16 %v126
    %v867 = vunpack.c.l.b16 %v127
    %v868 = vunpack.c.l.b16 %v128
    %v869 = vunpack.c.l.b16 %v129
    %v870 = vunpack.c.l.b16 %v130
    %v871 = vunpack.c.l.b16 %v131
    %v872 = vunpack.c.l.b16 %v132
    %v873 = vpack.c.b16 %v810, %v809
    %v874 = vpack.c.b16 %v812, %v811
    %v875 = vpack.c.b16 %v814, %v813
    %v876 = vpack.c.b16 %v816, %v815
    %v877 = vpack.c.b16 %v818, %v817
    %v878 = vpack.c.b16 %v820, %v819
    %v879 = vpack.c.b16 %v822, %v821
    %v880 = vpack.c.b16 %v824, %v823
    %v881 = vpack.c.b16 %v826, %v825
    %v882 = vpack.c.b16 %v828, %v827
    %v883 = vpack.c.b16 %v830, %v829
    %v884 = vpack.c.b16 %v832, %v831
    %v885 = vpack.c.b16 %v834, %v833
    %v886 = vpack.c.b16 %v836, %v835
    %v887 = vpack.c.b16 %v838, %v837
    %v888 = vpack.c.b16 %v840, %v839
    %v889 = vpack.c.b16 %v842, %v841
    %v890 = vpack.c.b16 %v844, %v843
    %v891 = vpack.c.b16 %v846, %v845
    %v892 = vpack.c.b16 %v848, %v847
    %v893 = vpack.c.b16 %v850, %v849
    %v894 = vpack.c.b16 %v852, %v851
    %v895 = vpack.c.b16 %v854, %v853
    %v896 = vpack.c.b16 %v856, %v855
    %v897 = vpack.c.b16 %v858, %v857
    %v898 = vpack.c.b16 %v860, %v859
    %v899 = vpack.c.b16 %v862, %v861
    %v900 = vpack.c.b16 %v864, %v863
    %v901 = vpack.c.b16 %v866, %v865
    %v902 = vpack.c.b16 %v868, %v867
    %v903 = vpack.c.b16 %v870, %v869
    %v904 = vpack.c.b16 %v872, %v871
    %937 = vmatprep.subr.bf16.mxu0 0
    %938 = vmatpush1.bf16.msra.mxu0 %v873
    %939 = vmatprep.subr.bf16.mxu0 0
    %940 = vmatpush1.bf16.msra.mxu0 %v874
    %941 = vmatprep.subr.bf16.mxu0 0
    %942 = vmatpush1.bf16.msra.mxu0 %v875
    %943 = vmatprep.subr.bf16.mxu0 0
    %944 = vmatpush1.bf16.msra.mxu0 %v876
    %945 = vmatprep.subr.bf16.mxu0 0
    %946 = vmatpush1.bf16.msra.mxu0 %v877
    %947 = vmatprep.subr.bf16.mxu0 0
    %948 = vmatpush1.bf16.msra.mxu0 %v878
    %949 = vmatprep.subr.bf16.mxu0 0
    %950 = vmatpush1.bf16.msra.mxu0 %v879
    %951 = vmatprep.subr.bf16.mxu0 0
    %952 = vmatpush1.bf16.msra.mxu0 %v880
    %953 = vmatprep.subr.bf16.mxu0 0
    %954 = vmatpush1.bf16.msra.mxu0 %v881
    %955 = vmatprep.subr.bf16.mxu0 0
    %956 = vmatpush1.bf16.msra.mxu0 %v882
    %957 = vmatprep.subr.bf16.mxu0 0
    %958 = vmatpush1.bf16.msra.mxu0 %v883
    %959 = vmatprep.subr.bf16.mxu0 0
    %960 = vmatpush1.bf16.msra.mxu0 %v884
    %961 = vmatprep.subr.bf16.mxu0 0
    %962 = vmatpush1.bf16.msra.mxu0 %v885
    %963 = vmatprep.subr.bf16.mxu0 0
    %964 = vmatpush1.bf16.msra.mxu0 %v886
    %965 = vmatprep.subr.bf16.mxu0 0
    %966 = vmatpush1.bf16.msra.mxu0 %v887
    %967 = vmatprep.subr.bf16.mxu0 0
    %968 = vmatpush1.bf16.msra.mxu0 %v888
    %969 = vmatprep.mubr.bf16.mxu0 %v243
    %970 = vmatmul.mubr.bf16.gmra.mrb[0].mxu0 %v242
    %v971 = vpop.f32.mrb[0].mxu0
    %v972 = vadd.f32 %v690, %v971
    %v973 = vpop.f32.mrb[0].mxu0
    %v974 = vpop.f32.mrb[0].mxu0
    %v975 = vadd.f32 %v693, %v974
    %v976 = vpop.f32.mrb[0].mxu0
    %977 = vmatprep.mubr.bf16.mxu0 %v247
    %978 = vmatmul.mubr.bf16.gmra.mrb[0].mxu0 %v246
    %v979 = vpop.f32.mrb[0].mxu0
    %v980 = vadd.f32 %v698, %v979
    %v981 = vpop.f32.mrb[0].mxu0
    %v982 = vpop.f32.mrb[0].mxu0
    %v983 = vadd.f32 %v701, %v982
    %v984 = vpop.f32.mrb[0].mxu0
    %985 = vmatprep.mubr.bf16.mxu0 %v251
    %986 = vmatmul.mubr.bf16.gmra.mrb[0].mxu0 %v250
    %v987 = vpop.f32.mrb[0].mxu0
    %v988 = vadd.f32 %v706, %v987
    %v989 = vpop.f32.mrb[0].mxu0
    %v990 = vpop.f32.mrb[0].mxu0
    %v991 = vadd.f32 %v709, %v990
    %v992 = vpop.f32.mrb[0].mxu0
    %993 = vmatprep.mubr.bf16.mxu0 %v726
    %994 = vmatmul.mubr.bf16.gmra.mrb[0].mxu0 %v725
    %v995 = vpop.f32.mrb[0].mxu0
    %v996 = vadd.f32 %v714, %v995
    %v997 = vpop.f32.mrb[0].mxu0
    %v998 = vpop.f32.mrb[0].mxu0
    %v999 = vpop.f32.mrb[0].mxu0
    %1000 = vdwg.mxu0
    %1001 = vmatprep.subr.bf16.mxu0 0
    %1002 = vmatpush1.bf16.msra.mxu0 %v889
    %1003 = vmatprep.subr.bf16.mxu0 0
    %1004 = vmatpush1.bf16.msra.mxu0 %v890
    %1005 = vmatprep.subr.bf16.mxu0 0
    %1006 = vmatpush1.bf16.msra.mxu0 %v891
    %1007 = vmatprep.subr.bf16.mxu0 0
    %1008 = vmatpush1.bf16.msra.mxu0 %v892
    %1009 = vmatprep.subr.bf16.mxu0 0
    %1010 = vmatpush1.bf16.msra.mxu0 %v893
    %1011 = vmatprep.subr.bf16.mxu0 0
    %1012 = vmatpush1.bf16.msra.mxu0 %v894
    %1013 = vmatprep.subr.bf16.mxu0 0
    %1014 = vmatpush1.bf16.msra.mxu0 %v895
    %1015 = vmatprep.subr.bf16.mxu0 0
    %1016 = vmatpush1.bf16.msra.mxu0 %v896
    %1017 = vmatprep.subr.bf16.mxu0 0
    %1018 = vmatpush1.bf16.msra.mxu0 %v897
    %1019 = vmatprep.subr.bf16.mxu0 0
    %1020 = vmatpush1.bf16.msra.mxu0 %v898
    %1021 = vmatprep.subr.bf16.mxu0 0
    %1022 = vmatpush1.bf16.msra.mxu0 %v899
    %1023 = vmatprep.subr.bf16.mxu0 0
    %1024 = vmatpush1.bf16.msra.mxu0 %v900
    %1025 = vmatprep.subr.bf16.mxu0 0
    %1026 = vmatpush1.bf16.msra.mxu0 %v901
    %1027 = vmatprep.subr.bf16.mxu0 0
    %1028 = vmatpush1.bf16.msra.mxu0 %v902
    %1029 = vmatprep.subr.bf16.mxu0 0
    %1030 = vmatpush1.bf16.msra.mxu0 %v903
    %1031 = vmatprep.subr.bf16.mxu0 0
    %1032 = vmatpush1.bf16.msra.mxu0 %v904
    %1033 = vmatprep.mubr.bf16.mxu0 %v245
    %1034 = vmatmul.mubr.bf16.gmra.mrb[0].mxu0 %v244
    %v1035 = vpop.f32.mrb[0].mxu0
    %v1036 = vadd.f32 %v972, %v1035
    %v1037 = vpop.f32.mrb[0].mxu0
    %v1038 = vpop.f32.mrb[0].mxu0
    %v1039 = vadd.f32 %v975, %v1038
    %v1040 = vpop.f32.mrb[0].mxu0
    %1041 = vmatprep.mubr.bf16.mxu0 %v249
    %1042 = vmatmul.mubr.bf16.gmra.mrb[0].mxu0 %v248
    %v1043 = vpop.f32.mrb[0].mxu0
    %v1044 = vadd.f32 %v980, %v1043
    %v1045 = vpop.f32.mrb[0].mxu0
    %v1046 = vpop.f32.mrb[0].mxu0
    %v1047 = vadd.f32 %v983, %v1046
    %v1048 = vpop.f32.mrb[0].mxu0
    %1049 = vmatprep.mubr.bf16.mxu0 %v253
    %1050 = vmatmul.mubr.bf16.gmra.mrb[0].mxu0 %v252
    %v1051 = vpop.f32.mrb[0].mxu0
    %v1052 = vadd.f32 %v988, %v1051
    %v1053 = vpop.f32.mrb[0].mxu0
    %v1054 = vpop.f32.mrb[0].mxu0
    %v1055 = vadd.f32 %v991, %v1054
    %v1056 = vpop.f32.mrb[0].mxu0
    %1057 = vmatprep.mubr.bf16.mxu0 %v728
    %1058 = vmatmul.mubr.bf16.gmra.mrb[0].mxu0 %v727
    %v1059 = vpop.f32.mrb[0].mxu0
    %v1060 = vadd.f32 %v996, %v1059
    %v1061 = vpop.f32.mrb[0].mxu0
    %v1062 = vpop.f32.mrb[0].mxu0
    %v1063 = vpop.f32.mrb[0].mxu0
    %1064 = vdwg.mxu0
    %v1065 = vld [vmem:[#allocation2] sm:$0xcc]
    %v1066 = vld [vmem:[#allocation2 + $0x8] sm:$0xcc]
    %v1067 = vld [vmem:[#allocation2 + $0x60] sm:$0xff]
    %v1068 = vld [vmem:[#allocation2 + $0x68] sm:$0xff]
    %s1069 = scalar_lea.vmem [#allocation5], 512
    %v1070 = vld [vmem:[%s1069] sm:$0xf]
    %v1071 = vld [vmem:[%s1069 + $0x4] sm:$0xf]
    %v1072 = vld [vmem:[%s1069 + $0x8] sm:$0xf]
    %v1073 = vld [vmem:[%s1069 + $0xc] sm:$0xf]
    %v1074 = vld [vmem:[%s1069 + $0x10] sm:$0xf]
    %v1075 = vld [vmem:[%s1069 + $0x14] sm:$0xf]
    %v1076 = vld [vmem:[%s1069 + $0x18] sm:$0xf]
    %v1077 = vld [vmem:[%s1069 + $0x1c] sm:$0xf]
    %v1078 = vld [vmem:[%s1069 + $0x20] sm:$0xf]
    %v1079 = vld [vmem:[%s1069 + $0x24] sm:$0xf]
    %v1080 = vld [vmem:[%s1069 + $0x28] sm:$0xf]
    %v1081 = vld [vmem:[%s1069 + $0x2c] sm:$0xf]
    %v1082 = vld [vmem:[%s1069 + $0x30] sm:$0xf]
    %v1083 = vld [vmem:[%s1069 + $0x34] sm:$0xf]
    %v1084 = vld [vmem:[%s1069 + $0x38] sm:$0xf]
    %v1085 = vld [vmem:[%s1069 + $0x3c] sm:$0xf]
    %v1086 = vld [vmem:[%s1069 + $0x40] sm:$0xf]
    %v1087 = vld [vmem:[%s1069 + $0x44] sm:$0xf]
    %v1088 = vld [vmem:[%s1069 + $0x48] sm:$0xf]
    %v1089 = vld [vmem:[%s1069 + $0x4c] sm:$0xf]
    %v1090 = vld [vmem:[%s1069 + $0x50] sm:$0xf]
    %v1091 = vld [vmem:[%s1069 + $0x54] sm:$0xf]
    %v1092 = vld [vmem:[%s1069 + $0x58] sm:$0xf]
    %v1093 = vld [vmem:[%s1069 + $0x5c] sm:$0xf]
    %v1094 = vld [vmem:[%s1069 + $0x60] sm:$0xf]
    %v1095 = vld [vmem:[%s1069 + $0x64] sm:$0xf]
    %v1096 = vld [vmem:[%s1069 + $0x68] sm:$0xf]
    %v1097 = vld [vmem:[%s1069 + $0x6c] sm:$0xf]
    %v1098 = vld [vmem:[%s1069 + $0x70] sm:$0xf]
    %v1099 = vld [vmem:[%s1069 + $0x74] sm:$0xf]
    %v1100 = vld [vmem:[%s1069 + $0x78] sm:$0xf]
    %v1101 = vld [vmem:[%s1069 + $0x7c] sm:$0xf]
    %v1102 = vld [vmem:[%s1069 + $0x80] sm:$0xf]
    %v1103 = vld [vmem:[%s1069 + $0x84] sm:$0xf]
    %v1104 = vld [vmem:[%s1069 + $0x88] sm:$0xf]
    %v1105 = vld [vmem:[%s1069 + $0x8c] sm:$0xf]
    %v1106 = vld [vmem:[%s1069 + $0x90] sm:$0xf]
    %v1107 = vld [vmem:[%s1069 + $0x94] sm:$0xf]
    %v1108 = vld [vmem:[%s1069 + $0x98] sm:$0xf]
    %v1109 = vld [vmem:[%s1069 + $0x9c] sm:$0xf]
    %v1110 = vld [vmem:[%s1069 + $0xa0] sm:$0xf]
    %v1111 = vld [vmem:[%s1069 + $0xa4] sm:$0xf]
    %v1112 = vld [vmem:[%s1069 + $0xa8] sm:$0xf]
    %v1113 = vld [vmem:[%s1069 + $0xac] sm:$0xf]
    %v1114 = vld [vmem:[%s1069 + $0xb0] sm:$0xf]
    %v1115 = vld [vmem:[%s1069 + $0xb4] sm:$0xf]
    %v1116 = vld [vmem:[%s1069 + $0xb8] sm:$0xf]
    %v1117 = vld [vmem:[%s1069 + $0xbc] sm:$0xf]
    %v1118 = vld [vmem:[%s1069 + $0xc0] sm:$0xf]
    %v1119 = vld [vmem:[%s1069 + $0xc4] sm:$0xf]
    %v1120 = vld [vmem:[%s1069 + $0xc8] sm:$0xf]
    %v1121 = vld [vmem:[%s1069 + $0xcc] sm:$0xf]
    %v1122 = vld [vmem:[%s1069 + $0xd0] sm:$0xf]
    %v1123 = vld [vmem:[%s1069 + $0xd4] sm:$0xf]
    %v1124 = vld [vmem:[%s1069 + $0xd8] sm:$0xf]
    %v1125 = vld [vmem:[%s1069 + $0xdc] sm:$0xf]
    %v1126 = vld [vmem:[%s1069 + $0xe0] sm:$0xf]
    %v1127 = vld [vmem:[%s1069 + $0xe4] sm:$0xf]
    %v1128 = vld [vmem:[%s1069 + $0xe8] sm:$0xf]
    %v1129 = vld [vmem:[%s1069 + $0xec] sm:$0xf]
    %v1130 = vld [vmem:[%s1069 + $0xf0] sm:$0xf]
    %v1131 = vld [vmem:[%s1069 + $0xf4] sm:$0xf]
    %v1132 = vld [vmem:[%s1069 + $0xf8] sm:$0xf]
    %v1133 = vld [vmem:[%s1069 + $0xfc] sm:$0xf]
    %v1138 = vunpack.c.l.b16 %v1065
    %v1139 = vunpack.c.h.b16 %v1065
    %v1140 = vunpack.c.l.b16 %v1066
    %v1141 = vunpack.c.h.b16 %v1066
    %v1142 = vunpack.c.l.b16 %v1067
    %v1143 = vunpack.c.h.b16 %v1067
    %v1144 = vunpack.c.l.b16 %v1068
    %v1145 = vunpack.c.h.b16 %v1068
    %v1146 = vpack.c.b16 %v218, %v1138
    %v1147 = vpack.c.b16 %v219, %v1139
    %v1148 = vpack.c.b16 %v220, %v1140
    %v1149 = vpack.c.b16 %v221, %v1141
    %v1150 = vpack.c.b16 %v1142, %v1142
    %v1151 = vpack.c.b16 %v1143, %v1143
    %v1152 = vpack.c.b16 %v1144, %v1144
    %v1153 = vpack.c.b16 %v1145, %v1145
    %vm1154 = vsmask.f32 5376
    %v1156 = vshrl.u32 %v1146, 16
    %v1158 = vrot.slane %v1156, 2
    %v1159 = vshll.u32 %v1146, 16
    %v1161 = vrot.slane %v1159, 3
    %v1162 = vor.u32 %v1158, %v1161
    %v1163 = vrot.slane %v307, 2
    %v1164 = vrot.slane %v267, 3
    %v1165 = vor.u32 %v1163, %v1164
    %v1166 = vsel %vm1154, %v1162, %v1165
    %v1168 = vshrl.u32 %v1147, 16
    %v1170 = vrot.slane %v1168, 2
    %v1171 = vshll.u32 %v1147, 16
    %v1173 = vrot.slane %v1171, 3
    %v1174 = vor.u32 %v1170, %v1173
    %v1175 = vrot.slane %v315, 2
    %v1176 = vrot.slane %v279, 3
    %v1177 = vor.u32 %v1175, %v1176
    %v1178 = vsel %vm1154, %v1174, %v1177
    %v1180 = vshrl.u32 %v1148, 16
    %v1182 = vrot.slane %v1180, 2
    %v1183 = vshll.u32 %v1148, 16
    %v1185 = vrot.slane %v1183, 3
    %v1186 = vor.u32 %v1182, %v1185
    %v1187 = vrot.slane %v323, 2
    %v1188 = vrot.slane %v291, 3
    %v1189 = vor.u32 %v1187, %v1188
    %v1190 = vsel %vm1154, %v1186, %v1189
    %v1192 = vshrl.u32 %v1149, 16
    %v1194 = vrot.slane %v1192, 2
    %v1195 = vshll.u32 %v1149, 16
    %v1197 = vrot.slane %v1195, 3
    %v1198 = vor.u32 %v1194, %v1197
    %v1199 = vrot.slane %v331, 2
    %v1200 = vrot.slane %v303, 3
    %v1201 = vor.u32 %v1199, %v1200
    %v1202 = vsel %vm1154, %v1198, %v1201
    %v1203 = vrot.slane %v339, 2
    %v1204 = vrot.slane %v311, 3
    %v1205 = vor.u32 %v1203, %v1204
    %v1206 = vsel %vm1154, %v1165, %v1205
    %v1207 = vrot.slane %v347, 2
    %v1208 = vrot.slane %v319, 3
    %v1209 = vor.u32 %v1207, %v1208
    %v1210 = vsel %vm1154, %v1177, %v1209
    %v1211 = vrot.slane %v355, 2
    %v1212 = vrot.slane %v327, 3
    %v1213 = vor.u32 %v1211, %v1212
    %v1214 = vsel %vm1154, %v1189, %v1213
    %v1215 = vrot.slane %v363, 2
    %v1216 = vrot.slane %v335, 3
    %v1217 = vor.u32 %v1215, %v1216
    %v1218 = vsel %vm1154, %v1201, %v1217
    %v1220 = vshrl.u32 %v1150, 16
    %v1222 = vrot.slane %v1220, 2
    %v1223 = vshll.u32 %v1150, 16
    %v1225 = vrot.slane %v1223, 3
    %v1226 = vor.u32 %v1222, %v1225
    %v1227 = vsel %vm1154, %v1205, %v1226
    %v1229 = vshrl.u32 %v1151, 16
    %v1231 = vrot.slane %v1229, 2
    %v1232 = vshll.u32 %v1151, 16
    %v1234 = vrot.slane %v1232, 3
    %v1235 = vor.u32 %v1231, %v1234
    %v1236 = vsel %vm1154, %v1209, %v1235
    %v1238 = vshrl.u32 %v1152, 16
    %v1240 = vrot.slane %v1238, 2
    %v1241 = vshll.u32 %v1152, 16
    %v1243 = vrot.slane %v1241, 3
    %v1244 = vor.u32 %v1240, %v1243
    %v1245 = vsel %vm1154, %v1213, %v1244
    %v1247 = vshrl.u32 %v1153, 16
    %v1249 = vrot.slane %v1247, 2
    %v1250 = vshll.u32 %v1153, 16
    %v1252 = vrot.slane %v1250, 3
    %v1253 = vor.u32 %v1249, %v1252
    %v1254 = vsel %vm1154, %v1217, %v1253
    %v1335 = vunpack.c.l.b16 %v1070
    %v1336 = vunpack.c.l.b16 %v1071
    %v1337 = vunpack.c.l.b16 %v1072
    %v1338 = vunpack.c.l.b16 %v1073
    %v1339 = vunpack.c.l.b16 %v1074
    %v1340 = vunpack.c.l.b16 %v1075
    %v1341 = vunpack.c.l.b16 %v1076
    %v1342 = vunpack.c.l.b16 %v1077
    %v1343 = vunpack.c.l.b16 %v1078
    %v1344 = vunpack.c.l.b16 %v1079
    %v1345 = vunpack.c.l.b16 %v1080
    %v1346 = vunpack.c.l.b16 %v1081
    %v1347 = vunpack.c.l.b16 %v1082
    %v1348 = vunpack.c.l.b16 %v1083
    %v1349 = vunpack.c.l.b16 %v1084
    %v1350 = vunpack.c.l.b16 %v1085
    %v1351 = vunpack.c.l.b16 %v1086
    %v1352 = vunpack.c.l.b16 %v1087
    %v1353 = vunpack.c.l.b16 %v1088
    %v1354 = vunpack.c.l.b16 %v1089
    %v1355 = vunpack.c.l.b16 %v1090
    %v1356 = vunpack.c.l.b16 %v1091
    %v1357 = vunpack.c.l.b16 %v1092
    %v1358 = vunpack.c.l.b16 %v1093
    %v1359 = vunpack.c.l.b16 %v1094
    %v1360 = vunpack.c.l.b16 %v1095
    %v1361 = vunpack.c.l.b16 %v1096
    %v1362 = vunpack.c.l.b16 %v1097
    %v1363 = vunpack.c.l.b16 %v1098
    %v1364 = vunpack.c.l.b16 %v1099
    %v1365 = vunpack.c.l.b16 %v1100
    %v1366 = vunpack.c.l.b16 %v1101
    %v1367 = vunpack.c.l.b16 %v1102
    %v1368 = vunpack.c.l.b16 %v1103
    %v1369 = vunpack.c.l.b16 %v1104
    %v1370 = vunpack.c.l.b16 %v1105
    %v1371 = vunpack.c.l.b16 %v1106
    %v1372 = vunpack.c.l.b16 %v1107
    %v1373 = vunpack.c.l.b16 %v1108
    %v1374 = vunpack.c.l.b16 %v1109
    %v1375 = vunpack.c.l.b16 %v1110
    %v1376 = vunpack.c.l.b16 %v1111
    %v1377 = vunpack.c.l.b16 %v1112
    %v1378 = vunpack.c.l.b16 %v1113
    %v1379 = vunpack.c.l.b16 %v1114
    %v1380 = vunpack.c.l.b16 %v1115
    %v1381 = vunpack.c.l.b16 %v1116
    %v1382 = vunpack.c.l.b16 %v1117
    %v1383 = vunpack.c.l.b16 %v1118
    %v1384 = vunpack.c.l.b16 %v1119
    %v1385 = vunpack.c.l.b16 %v1120
    %v1386 = vunpack.c.l.b16 %v1121
    %v1387 = vunpack.c.l.b16 %v1122
    %v1388 = vunpack.c.l.b16 %v1123
    %v1389 = vunpack.c.l.b16 %v1124
    %v1390 = vunpack.c.l.b16 %v1125
    %v1391 = vunpack.c.l.b16 %v1126
    %v1392 = vunpack.c.l.b16 %v1127
    %v1393 = vunpack.c.l.b16 %v1128
    %v1394 = vunpack.c.l.b16 %v1129
    %v1395 = vunpack.c.l.b16 %v1130
    %v1396 = vunpack.c.l.b16 %v1131
    %v1397 = vunpack.c.l.b16 %v1132
    %v1398 = vunpack.c.l.b16 %v1133
    %v1399 = vpack.c.b16 %v1336, %v1335
    %v1400 = vpack.c.b16 %v1338, %v1337
    %v1401 = vpack.c.b16 %v1340, %v1339
    %v1402 = vpack.c.b16 %v1342, %v1341
    %v1403 = vpack.c.b16 %v1344, %v1343
    %v1404 = vpack.c.b16 %v1346, %v1345
    %v1405 = vpack.c.b16 %v1348, %v1347
    %v1406 = vpack.c.b16 %v1350, %v1349
    %v1407 = vpack.c.b16 %v1352, %v1351
    %v1408 = vpack.c.b16 %v1354, %v1353
    %v1409 = vpack.c.b16 %v1356, %v1355
    %v1410 = vpack.c.b16 %v1358, %v1357
    %v1411 = vpack.c.b16 %v1360, %v1359
    %v1412 = vpack.c.b16 %v1362, %v1361
    %v1413 = vpack.c.b16 %v1364, %v1363
    %v1414 = vpack.c.b16 %v1366, %v1365
    %v1415 = vpack.c.b16 %v1368, %v1367
    %v1416 = vpack.c.b16 %v1370, %v1369
    %v1417 = vpack.c.b16 %v1372, %v1371
    %v1418 = vpack.c.b16 %v1374, %v1373
    %v1419 = vpack.c.b16 %v1376, %v1375
    %v1420 = vpack.c.b16 %v1378, %v1377
    %v1421 = vpack.c.b16 %v1380, %v1379
    %v1422 = vpack.c.b16 %v1382, %v1381
    %v1423 = vpack.c.b16 %v1384, %v1383
    %v1424 = vpack.c.b16 %v1386, %v1385
    %v1425 = vpack.c.b16 %v1388, %v1387
    %v1426 = vpack.c.b16 %v1390, %v1389
    %v1427 = vpack.c.b16 %v1392, %v1391
    %v1428 = vpack.c.b16 %v1394, %v1393
    %v1429 = vpack.c.b16 %v1396, %v1395
    %v1430 = vpack.c.b16 %v1398, %v1397
    %1463 = vmatprep.subr.bf16.mxu0 0
    %1464 = vmatpush1.bf16.msra.mxu0 %v1399
    %1465 = vmatprep.subr.bf16.mxu0 0
    %1466 = vmatpush1.bf16.msra.mxu0 %v1400
    %1467 = vmatprep.subr.bf16.mxu0 0
    %1468 = vmatpush1.bf16.msra.mxu0 %v1401
    %1469 = vmatprep.subr.bf16.mxu0 0
    %1470 = vmatpush1.bf16.msra.mxu0 %v1402
    %1471 = vmatprep.subr.bf16.mxu0 0
    %1472 = vmatpush1.bf16.msra.mxu0 %v1403
    %1473 = vmatprep.subr.bf16.mxu0 0
    %1474 = vmatpush1.bf16.msra.mxu0 %v1404
    %1475 = vmatprep.subr.bf16.mxu0 0
    %1476 = vmatpush1.bf16.msra.mxu0 %v1405
    %1477 = vmatprep.subr.bf16.mxu0 0
    %1478 = vmatpush1.bf16.msra.mxu0 %v1406
    %1479 = vmatprep.subr.bf16.mxu0 0
    %1480 = vmatpush1.bf16.msra.mxu0 %v1407
    %1481 = vmatprep.subr.bf16.mxu0 0
    %1482 = vmatpush1.bf16.msra.mxu0 %v1408
    %1483 = vmatprep.subr.bf16.mxu0 0
    %1484 = vmatpush1.bf16.msra.mxu0 %v1409
    %1485 = vmatprep.subr.bf16.mxu0 0
    %1486 = vmatpush1.bf16.msra.mxu0 %v1410
    %1487 = vmatprep.subr.bf16.mxu0 0
    %1488 = vmatpush1.bf16.msra.mxu0 %v1411
    %1489 = vmatprep.subr.bf16.mxu0 0
    %1490 = vmatpush1.bf16.msra.mxu0 %v1412
    %1491 = vmatprep.subr.bf16.mxu0 0
    %1492 = vmatpush1.bf16.msra.mxu0 %v1413
    %1493 = vmatprep.subr.bf16.mxu0 0
    %1494 = vmatpush1.bf16.msra.mxu0 %v1414
    %1495 = vmatprep.mubr.bf16.mxu0 %v1178
    %1496 = vmatmul.mubr.bf16.gmra.mrb[0].mxu0 %v1166
    %v1497 = vpop.f32.mrb[0].mxu0
    %v1498 = vadd.f32 0.0, %v1497
    %v1499 = vpop.f32.mrb[0].mxu0
    %v1500 = vpop.f32.mrb[0].mxu0
    %v1501 = vadd.f32 0.0, %v1500
    %v1502 = vpop.f32.mrb[0].mxu0
    %1503 = vmatprep.mubr.bf16.mxu0 %v1210
    %1504 = vmatmul.mubr.bf16.gmra.mrb[0].mxu0 %v1206
    %v1505 = vpop.f32.mrb[0].mxu0
    %v1506 = vadd.f32 0.0, %v1505
    %v1507 = vpop.f32.mrb[0].mxu0
    %v1508 = vpop.f32.mrb[0].mxu0
    %v1509 = vadd.f32 0.0, %v1508
    %v1510 = vpop.f32.mrb[0].mxu0
    %1511 = vmatprep.mubr.bf16.mxu0 %v1236
    %1512 = vmatmul.mubr.bf16.gmra.mrb[0].mxu0 %v1227
    %v1513 = vpop.f32.mrb[0].mxu0
    %v1514 = vadd.f32 0.0, %v1513
    %v1515 = vpop.f32.mrb[0].mxu0
    %v1516 = vpop.f32.mrb[0].mxu0
    %v1517 = vadd.f32 0.0, %v1516
    %v1518 = vpop.f32.mrb[0].mxu0
    %1519 = vmatprep.mubr.bf16.mxu0 %v1235
    %1520 = vmatmul.mubr.bf16.gmra.mrb[0].mxu0 %v1226
    %v1521 = vpop.f32.mrb[0].mxu0
    %v1522 = vadd.f32 0.0, %v1521
    %v1523 = vpop.f32.mrb[0].mxu0
    %v1524 = vpop.f32.mrb[0].mxu0
    %v1525 = vpop.f32.mrb[0].mxu0
    %1526 = vdwg.mxu0
    %1527 = vmatprep.subr.bf16.mxu0 0
    %1528 = vmatpush1.bf16.msra.mxu0 %v1415
    %1529 = vmatprep.subr.bf16.mxu0 0
    %1530 = vmatpush1.bf16.msra.mxu0 %v1416
    %1531 = vmatprep.subr.bf16.mxu0 0
    %1532 = vmatpush1.bf16.msra.mxu0 %v1417
    %1533 = vmatprep.subr.bf16.mxu0 0
    %1534 = vmatpush1.bf16.msra.mxu0 %v1418
    %1535 = vmatprep.subr.bf16.mxu0 0
    %1536 = vmatpush1.bf16.msra.mxu0 %v1419
    %1537 = vmatprep.subr.bf16.mxu0 0
    %1538 = vmatpush1.bf16.msra.mxu0 %v1420
    %1539 = vmatprep.subr.bf16.mxu0 0
    %1540 = vmatpush1.bf16.msra.mxu0 %v1421
    %1541 = vmatprep.subr.bf16.mxu0 0
    %1542 = vmatpush1.bf16.msra.mxu0 %v1422
    %1543 = vmatprep.subr.bf16.mxu0 0
    %1544 = vmatpush1.bf16.msra.mxu0 %v1423
    %1545 = vmatprep.subr.bf16.mxu0 0
    %1546 = vmatpush1.bf16.msra.mxu0 %v1424
    %1547 = vmatprep.subr.bf16.mxu0 0
    %1548 = vmatpush1.bf16.msra.mxu0 %v1425
    %1549 = vmatprep.subr.bf16.mxu0 0
    %1550 = vmatpush1.bf16.msra.mxu0 %v1426
    %1551 = vmatprep.subr.bf16.mxu0 0
    %1552 = vmatpush1.bf16.msra.mxu0 %v1427
    %1553 = vmatprep.subr.bf16.mxu0 0
    %1554 = vmatpush1.bf16.msra.mxu0 %v1428
    %1555 = vmatprep.subr.bf16.mxu0 0
    %1556 = vmatpush1.bf16.msra.mxu0 %v1429
    %1557 = vmatprep.subr.bf16.mxu0 0
    %1558 = vmatpush1.bf16.msra.mxu0 %v1430
    %1559 = vmatprep.mubr.bf16.mxu0 %v1202
    %1560 = vmatmul.mubr.bf16.gmra.mrb[0].mxu0 %v1190
    %v1561 = vpop.f32.mrb[0].mxu0
    %v1562 = vadd.f32 %v1498, %v1561
    %v1563 = vpop.f32.mrb[0].mxu0
    %v1564 = vpop.f32.mrb[0].mxu0
    %v1565 = vadd.f32 %v1501, %v1564
    %v1566 = vpop.f32.mrb[0].mxu0
    %1567 = vmatprep.mubr.bf16.mxu0 %v1218
    %1568 = vmatmul.mubr.bf16.gmra.mrb[0].mxu0 %v1214
    %v1569 = vpop.f32.mrb[0].mxu0
    %v1570 = vadd.f32 %v1506, %v1569
    %v1571 = vpop.f32.mrb[0].mxu0
    %v1572 = vpop.f32.mrb[0].mxu0
    %v1573 = vadd.f32 %v1509, %v1572
    %v1574 = vpop.f32.mrb[0].mxu0
    %1575 = vmatprep.mubr.bf16.mxu0 %v1254
    %1576 = vmatmul.mubr.bf16.gmra.mrb[0].mxu0 %v1245
    %v1577 = vpop.f32.mrb[0].mxu0
    %v1578 = vadd.f32 %v1514, %v1577
    %v1579 = vpop.f32.mrb[0].mxu0
    %v1580 = vpop.f32.mrb[0].mxu0
    %v1581 = vadd.f32 %v1517, %v1580
    %v1582 = vpop.f32.mrb[0].mxu0
    %1583 = vmatprep.mubr.bf16.mxu0 %v1253
    %1584 = vmatmul.mubr.bf16.gmra.mrb[0].mxu0 %v1244
    %v1585 = vpop.f32.mrb[0].mxu0
    %v1586 = vadd.f32 %v1522, %v1585
    %v1587 = vpop.f32.mrb[0].mxu0
    %v1588 = vpop.f32.mrb[0].mxu0
    %v1589 = vpop.f32.mrb[0].mxu0
    %1590 = vdwg.mxu0
    %v1591 = vadd.f32 %v1036, %v1562
    %v1592 = vadd.f32 %v1039, %v1565
    %v1593 = vadd.f32 %v1044, %v1570
    %v1594 = vadd.f32 %v1047, %v1573
    %v1595 = vadd.f32 %v1052, %v1578
    %v1596 = vadd.f32 %v1055, %v1581
    %v1597 = vadd.f32 %v1060, %v1586
    %v1598 = vld [vmem:[#allocation2] sm:$0x88]
    %v1599 = vld [vmem:[#allocation2 + $0x8] sm:$0x88]
    %s1600 = scalar_lea.vmem [#allocation5], 768
    %v1601 = vld [vmem:[%s1600] sm:$0xf]
    %v1602 = vld [vmem:[%s1600 + $0x4] sm:$0xf]
    %v1603 = vld [vmem:[%s1600 + $0x8] sm:$0xf]
    %v1604 = vld [vmem:[%s1600 + $0xc] sm:$0xf]
    %v1605 = vld [vmem:[%s1600 + $0x10] sm:$0xf]
    %v1606 = vld [vmem:[%s1600 + $0x14] sm:$0xf]
    %v1607 = vld [vmem:[%s1600 + $0x18] sm:$0xf]
    %v1608 = vld [vmem:[%s1600 + $0x1c] sm:$0xf]
    %v1609 = vld [vmem:[%s1600 + $0x20] sm:$0xf]
    %v1610 = vld [vmem:[%s1600 + $0x24] sm:$0xf]
    %v1611 = vld [vmem:[%s1600 + $0x28] sm:$0xf]
    %v1612 = vld [vmem:[%s1600 + $0x2c] sm:$0xf]
    %v1613 = vld [vmem:[%s1600 + $0x30] sm:$0xf]
    %v1614 = vld [vmem:[%s1600 + $0x34] sm:$0xf]
    %v1615 = vld [vmem:[%s1600 + $0x38] sm:$0xf]
    %v1616 = vld [vmem:[%s1600 + $0x3c] sm:$0xf]
    %v1617 = vld [vmem:[%s1600 + $0x40] sm:$0xf]
    %v1618 = vld [vmem:[%s1600 + $0x44] sm:$0xf]
    %v1619 = vld [vmem:[%s1600 + $0x48] sm:$0xf]
    %v1620 = vld [vmem:[%s1600 + $0x4c] sm:$0xf]
    %v1621 = vld [vmem:[%s1600 + $0x50] sm:$0xf]
    %v1622 = vld [vmem:[%s1600 + $0x54] sm:$0xf]
    %v1623 = vld [vmem:[%s1600 + $0x58] sm:$0xf]
    %v1624 = vld [vmem:[%s1600 + $0x5c] sm:$0xf]
    %v1625 = vld [vmem:[%s1600 + $0x60] sm:$0xf]
    %v1626 = vld [vmem:[%s1600 + $0x64] sm:$0xf]
    %v1627 = vld [vmem:[%s1600 + $0x68] sm:$0xf]
    %v1628 = vld [vmem:[%s1600 + $0x6c] sm:$0xf]
    %v1629 = vld [vmem:[%s1600 + $0x70] sm:$0xf]
    %v1630 = vld [vmem:[%s1600 + $0x74] sm:$0xf]
    %v1631 = vld [vmem:[%s1600 + $0x78] sm:$0xf]
    %v1632 = vld [vmem:[%s1600 + $0x7c] sm:$0xf]
    %v1633 = vld [vmem:[%s1600 + $0x80] sm:$0xf]
    %v1634 = vld [vmem:[%s1600 + $0x84] sm:$0xf]
    %v1635 = vld [vmem:[%s1600 + $0x88] sm:$0xf]
    %v1636 = vld [vmem:[%s1600 + $0x8c] sm:$0xf]
    %v1637 = vld [vmem:[%s1600 + $0x90] sm:$0xf]
    %v1638 = vld [vmem:[%s1600 + $0x94] sm:$0xf]
    %v1639 = vld [vmem:[%s1600 + $0x98] sm:$0xf]
    %v1640 = vld [vmem:[%s1600 + $0x9c] sm:$0xf]
    %v1641 = vld [vmem:[%s1600 + $0xa0] sm:$0xf]
    %v1642 = vld [vmem:[%s1600 + $0xa4] sm:$0xf]
    %v1643 = vld [vmem:[%s1600 + $0xa8] sm:$0xf]
    %v1644 = vld [vmem:[%s1600 + $0xac] sm:$0xf]
    %v1645 = vld [vmem:[%s1600 + $0xb0] sm:$0xf]
    %v1646 = vld [vmem:[%s1600 + $0xb4] sm:$0xf]
    %v1647 = vld [vmem:[%s1600 + $0xb8] sm:$0xf]
    %v1648 = vld [vmem:[%s1600 + $0xbc] sm:$0xf]
    %v1649 = vld [vmem:[%s1600 + $0xc0] sm:$0xf]
    %v1650 = vld [vmem:[%s1600 + $0xc4] sm:$0xf]
    %v1651 = vld [vmem:[%s1600 + $0xc8] sm:$0xf]
    %v1652 = vld [vmem:[%s1600 + $0xcc] sm:$0xf]
    %v1653 = vld [vmem:[%s1600 + $0xd0] sm:$0xf]
    %v1654 = vld [vmem:[%s1600 + $0xd4] sm:$0xf]
    %v1655 = vld [vmem:[%s1600 + $0xd8] sm:$0xf]
    %v1656 = vld [vmem:[%s1600 + $0xdc] sm:$0xf]
    %v1657 = vld [vmem:[%s1600 + $0xe0] sm:$0xf]
    %v1658 = vld [vmem:[%s1600 + $0xe4] sm:$0xf]
    %v1659 = vld [vmem:[%s1600 + $0xe8] sm:$0xf]
    %v1660 = vld [vmem:[%s1600 + $0xec] sm:$0xf]
    %v1661 = vld [vmem:[%s1600 + $0xf0] sm:$0xf]
    %v1662 = vld [vmem:[%s1600 + $0xf4] sm:$0xf]
    %v1663 = vld [vmem:[%s1600 + $0xf8] sm:$0xf]
    %v1664 = vld [vmem:[%s1600 + $0xfc] sm:$0xf]
    %v1667 = vunpack.c.l.b16 %v1598
    %v1668 = vunpack.c.h.b16 %v1598
    %v1669 = vunpack.c.l.b16 %v1599
    %v1670 = vunpack.c.h.b16 %v1599
    %v1671 = vpack.c.b16 %v218, %v1667
    %v1672 = vpack.c.b16 %v219, %v1668
    %v1673 = vpack.c.b16 %v220, %v1669
    %v1674 = vpack.c.b16 %v221, %v1670
    %vm1675 = vcmask 1044480
    %v1676 = vrot.slane %v1671, 3
    %v1677 = vrot.slane %v246, 3
    %v1678 = vsel %vm1675, %v1676, %v1677
    %v1679 = vrot.slane %v1672, 3
    %v1680 = vrot.slane %v247, 3
    %v1681 = vsel %vm1675, %v1679, %v1680
    %v1682 = vrot.slane %v1673, 3
    %v1683 = vrot.slane %v248, 3
    %v1684 = vsel %vm1675, %v1682, %v1683
    %v1685 = vrot.slane %v1674, 3
    %v1686 = vrot.slane %v249, 3
    %v1687 = vsel %vm1675, %v1685, %v1686
    %v1688 = vrot.slane %v250, 3
    %v1689 = vsel %vm1675, %v1677, %v1688
    %v1690 = vrot.slane %v251, 3
    %v1691 = vsel %vm1675, %v1680, %v1690
    %v1692 = vrot.slane %v252, 3
    %v1693 = vsel %vm1675, %v1683, %v1692
    %v1694 = vrot.slane %v253, 3
    %v1695 = vsel %vm1675, %v1686, %v1694
    %v1696 = vrot.slane %v1150, 3
    %v1697 = vsel %vm1675, %v1688, %v1696
    %v1698 = vrot.slane %v1151, 3
    %v1699 = vsel %vm1675, %v1690, %v1698
    %v1700 = vrot.slane %v1152, 3
    %v1701 = vsel %vm1675, %v1692, %v1700
    %v1702 = vrot.slane %v1153, 3
    %v1703 = vsel %vm1675, %v1694, %v1702
    %v1784 = vunpack.c.l.b16 %v1601
    %v1785 = vunpack.c.l.b16 %v1602
    %v1786 = vunpack.c.l.b16 %v1603
    %v1787 = vunpack.c.l.b16 %v1604
    %v1788 = vunpack.c.l.b16 %v1605
    %v1789 = vunpack.c.l.b16 %v1606
    %v1790 = vunpack.c.l.b16 %v1607
    %v1791 = vunpack.c.l.b16 %v1608
    %v1792 = vunpack.c.l.b16 %v1609
    %v1793 = vunpack.c.l.b16 %v1610
    %v1794 = vunpack.c.l.b16 %v1611
    %v1795 = vunpack.c.l.b16 %v1612
    %v1796 = vunpack.c.l.b16 %v1613
    %v1797 = vunpack.c.l.b16 %v1614
    %v1798 = vunpack.c.l.b16 %v1615
    %v1799 = vunpack.c.l.b16 %v1616
    %v1800 = vunpack.c.l.b16 %v1617
    %v1801 = vunpack.c.l.b16 %v1618
    %v1802 = vunpack.c.l.b16 %v1619
    %v1803 = vunpack.c.l.b16 %v1620
    %v1804 = vunpack.c.l.b16 %v1621
    %v1805 = vunpack.c.l.b16 %v1622
    %v1806 = vunpack.c.l.b16 %v1623
    %v1807 = vunpack.c.l.b16 %v1624
    %v1808 = vunpack.c.l.b16 %v1625
    %v1809 = vunpack.c.l.b16 %v1626
    %v1810 = vunpack.c.l.b16 %v1627
    %v1811 = vunpack.c.l.b16 %v1628
    %v1812 = vunpack.c.l.b16 %v1629
    %v1813 = vunpack.c.l.b16 %v1630
    %v1814 = vunpack.c.l.b16 %v1631
    %v1815 = vunpack.c.l.b16 %v1632
    %v1816 = vunpack.c.l.b16 %v1633
    %v1817 = vunpack.c.l.b16 %v1634
    %v1818 = vunpack.c.l.b16 %v1635
    %v1819 = vunpack.c.l.b16 %v1636
    %v1820 = vunpack.c.l.b16 %v1637
    %v1821 = vunpack.c.l.b16 %v1638
    %v1822 = vunpack.c.l.b16 %v1639
    %v1823 = vunpack.c.l.b16 %v1640
    %v1824 = vunpack.c.l.b16 %v1641
    %v1825 = vunpack.c.l.b16 %v1642
    %v1826 = vunpack.c.l.b16 %v1643
    %v1827 = vunpack.c.l.b16 %v1644
    %v1828 = vunpack.c.l.b16 %v1645
    %v1829 = vunpack.c.l.b16 %v1646
    %v1830 = vunpack.c.l.b16 %v1647
    %v1831 = vunpack.c.l.b16 %v1648
    %v1832 = vunpack.c.l.b16 %v1649
    %v1833 = vunpack.c.l.b16 %v1650
    %v1834 = vunpack.c.l.b16 %v1651
    %v1835 = vunpack.c.l.b16 %v1652
    %v1836 = vunpack.c.l.b16 %v1653
    %v1837 = vunpack.c.l.b16 %v1654
    %v1838 = vunpack.c.l.b16 %v1655
    %v1839 = vunpack.c.l.b16 %v1656
    %v1840 = vunpack.c.l.b16 %v1657
    %v1841 = vunpack.c.l.b16 %v1658
    %v1842 = vunpack.c.l.b16 %v1659
    %v1843 = vunpack.c.l.b16 %v1660
    %v1844 = vunpack.c.l.b16 %v1661
    %v1845 = vunpack.c.l.b16 %v1662
    %v1846 = vunpack.c.l.b16 %v1663
    %v1847 = vunpack.c.l.b16 %v1664
    %v1848 = vpack.c.b16 %v1785, %v1784
    %v1849 = vpack.c.b16 %v1787, %v1786
    %v1850 = vpack.c.b16 %v1789, %v1788
    %v1851 = vpack.c.b16 %v1791, %v1790
    %v1852 = vpack.c.b16 %v1793, %v1792
    %v1853 = vpack.c.b16 %v1795, %v1794
    %v1854 = vpack.c.b16 %v1797, %v1796
    %v1855 = vpack.c.b16 %v1799, %v1798
    %v1856 = vpack.c.b16 %v1801, %v1800
    %v1857 = vpack.c.b16 %v1803, %v1802
    %v1858 = vpack.c.b16 %v1805, %v1804
    %v1859 = vpack.c.b16 %v1807, %v1806
    %v1860 = vpack.c.b16 %v1809, %v1808
    %v1861 = vpack.c.b16 %v1811, %v1810
    %v1862 = vpack.c.b16 %v1813, %v1812
    %v1863 = vpack.c.b16 %v1815, %v1814
    %v1864 = vpack.c.b16 %v1817, %v1816
    %v1865 = vpack.c.b16 %v1819, %v1818
    %v1866 = vpack.c.b16 %v1821, %v1820
    %v1867 = vpack.c.b16 %v1823, %v1822
    %v1868 = vpack.c.b16 %v1825, %v1824
    %v1869 = vpack.c.b16 %v1827, %v1826
    %v1870 = vpack.c.b16 %v1829, %v1828
    %v1871 = vpack.c.b16 %v1831, %v1830
    %v1872 = vpack.c.b16 %v1833, %v1832
    %v1873 = vpack.c.b16 %v1835, %v1834
    %v1874 = vpack.c.b16 %v1837, %v1836
    %v1875 = vpack.c.b16 %v1839, %v1838
    %v1876 = vpack.c.b16 %v1841, %v1840
    %v1877 = vpack.c.b16 %v1843, %v1842
    %v1878 = vpack.c.b16 %v1845, %v1844
    %v1879 = vpack.c.b16 %v1847, %v1846
    %1912 = vmatprep.subr.bf16.mxu0 0
    %1913 = vmatpush1.bf16.msra.mxu0 %v1848
    %1914 = vmatprep.subr.bf16.mxu0 0
    %1915 = vmatpush1.bf16.msra.mxu0 %v1849
    %1916 = vmatprep.subr.bf16.mxu0 0
    %1917 = vmatpush1.bf16.msra.mxu0 %v1850
    %1918 = vmatprep.subr.bf16.mxu0 0
    %1919 = vmatpush1.bf16.msra.mxu0 %v1851
    %1920 = vmatprep.subr.bf16.mxu0 0
    %1921 = vmatpush1.bf16.msra.mxu0 %v1852
    %1922 = vmatprep.subr.bf16.mxu0 0
    %1923 = vmatpush1.bf16.msra.mxu0 %v1853
    %1924 = vmatprep.subr.bf16.mxu0 0
    %1925 = vmatpush1.bf16.msra.mxu0 %v1854
    %1926 = vmatprep.subr.bf16.mxu0 0
    %1927 = vmatpush1.bf16.msra.mxu0 %v1855
    %1928 = vmatprep.subr.bf16.mxu0 0
    %1929 = vmatpush1.bf16.msra.mxu0 %v1856
    %1930 = vmatprep.subr.bf16.mxu0 0
    %1931 = vmatpush1.bf16.msra.mxu0 %v1857
    %1932 = vmatprep.subr.bf16.mxu0 0
    %1933 = vmatpush1.bf16.msra.mxu0 %v1858
    %1934 = vmatprep.subr.bf16.mxu0 0
    %1935 = vmatpush1.bf16.msra.mxu0 %v1859
    %1936 = vmatprep.subr.bf16.mxu0 0
    %1937 = vmatpush1.bf16.msra.mxu0 %v1860
    %1938 = vmatprep.subr.bf16.mxu0 0
    %1939 = vmatpush1.bf16.msra.mxu0 %v1861
    %1940 = vmatprep.subr.bf16.mxu0 0
    %1941 = vmatpush1.bf16.msra.mxu0 %v1862
    %1942 = vmatprep.subr.bf16.mxu0 0
    %1943 = vmatpush1.bf16.msra.mxu0 %v1863
    %1944 = vmatprep.mubr.bf16.mxu0 %v1681
    %1945 = vmatmul.mubr.bf16.gmra.mrb[0].mxu0 %v1678
    %v1946 = vpop.f32.mrb[0].mxu0
    %v1947 = vadd.f32 0.0, %v1946
    %v1948 = vpop.f32.mrb[0].mxu0
    %v1949 = vpop.f32.mrb[0].mxu0
    %v1950 = vadd.f32 0.0, %v1949
    %v1951 = vpop.f32.mrb[0].mxu0
    %1952 = vmatprep.mubr.bf16.mxu0 %v1691
    %1953 = vmatmul.mubr.bf16.gmra.mrb[0].mxu0 %v1689
    %v1954 = vpop.f32.mrb[0].mxu0
    %v1955 = vadd.f32 0.0, %v1954
    %v1956 = vpop.f32.mrb[0].mxu0
    %v1957 = vpop.f32.mrb[0].mxu0
    %v1958 = vadd.f32 0.0, %v1957
    %v1959 = vpop.f32.mrb[0].mxu0
    %1960 = vmatprep.mubr.bf16.mxu0 %v1699
    %1961 = vmatmul.mubr.bf16.gmra.mrb[0].mxu0 %v1697
    %v1962 = vpop.f32.mrb[0].mxu0
    %v1963 = vadd.f32 0.0, %v1962
    %v1964 = vpop.f32.mrb[0].mxu0
    %v1965 = vpop.f32.mrb[0].mxu0
    %v1966 = vadd.f32 0.0, %v1965
    %v1967 = vpop.f32.mrb[0].mxu0
    %1968 = vmatprep.mubr.bf16.mxu0 %v1698
    %1969 = vmatmul.mubr.bf16.gmra.mrb[0].mxu0 %v1696
    %v1970 = vpop.f32.mrb[0].mxu0
    %v1971 = vadd.f32 0.0, %v1970
    %v1972 = vpop.f32.mrb[0].mxu0
    %v1973 = vpop.f32.mrb[0].mxu0
    %v1974 = vpop.f32.mrb[0].mxu0
    %1975 = vdwg.mxu0
    %1976 = vmatprep.subr.bf16.mxu0 0
    %1977 = vmatpush1.bf16.msra.mxu0 %v1864
    %1978 = vmatprep.subr.bf16.mxu0 0
    %1979 = vmatpush1.bf16.msra.mxu0 %v1865
    %1980 = vmatprep.subr.bf16.mxu0 0
    %1981 = vmatpush1.bf16.msra.mxu0 %v1866
    %1982 = vmatprep.subr.bf16.mxu0 0
    %1983 = vmatpush1.bf16.msra.mxu0 %v1867
    %1984 = vmatprep.subr.bf16.mxu0 0
    %1985 = vmatpush1.bf16.msra.mxu0 %v1868
    %1986 = vmatprep.subr.bf16.mxu0 0
    %1987 = vmatpush1.bf16.msra.mxu0 %v1869
    %1988 = vmatprep.subr.bf16.mxu0 0
    %1989 = vmatpush1.bf16.msra.mxu0 %v1870
    %1990 = vmatprep.subr.bf16.mxu0 0
    %1991 = vmatpush1.bf16.msra.mxu0 %v1871
    %1992 = vmatprep.subr.bf16.mxu0 0
    %1993 = vmatpush1.bf16.msra.mxu0 %v1872
    %1994 = vmatprep.subr.bf16.mxu0 0
    %1995 = vmatpush1.bf16.msra.mxu0 %v1873
    %1996 = vmatprep.subr.bf16.mxu0 0
    %1997 = vmatpush1.bf16.msra.mxu0 %v1874
    %1998 = vmatprep.subr.bf16.mxu0 0
    %1999 = vmatpush1.bf16.msra.mxu0 %v1875
    %2000 = vmatprep.subr.bf16.mxu0 0
    %2001 = vmatpush1.bf16.msra.mxu0 %v1876
    %2002 = vmatprep.subr.bf16.mxu0 0
    %2003 = vmatpush1.bf16.msra.mxu0 %v1877
    %2004 = vmatprep.subr.bf16.mxu0 0
    %2005 = vmatpush1.bf16.msra.mxu0 %v1878
    %2006 = vmatprep.subr.bf16.mxu0 0
    %2007 = vmatpush1.bf16.msra.mxu0 %v1879
    %2008 = vmatprep.mubr.bf16.mxu0 %v1687
    %2009 = vmatmul.mubr.bf16.gmra.mrb[0].mxu0 %v1684
    %v2010 = vpop.f32.mrb[0].mxu0
    %v2011 = vadd.f32 %v1947, %v2010
    %v2012 = vpop.f32.mrb[0].mxu0
    %v2013 = vpop.f32.mrb[0].mxu0
    %v2014 = vadd.f32 %v1950, %v2013
    %v2015 = vpop.f32.mrb[0].mxu0
    %2016 = vmatprep.mubr.bf16.mxu0 %v1695
    %2017 = vmatmul.mubr.bf16.gmra.mrb[0].mxu0 %v1693
    %v2018 = vpop.f32.mrb[0].mxu0
    %v2019 = vadd.f32 %v1955, %v2018
    %v2020 = vpop.f32.mrb[0].mxu0
    %v2021 = vpop.f32.mrb[0].mxu0
    %v2022 = vadd.f32 %v1958, %v2021
    %v2023 = vpop.f32.mrb[0].mxu0
    %2024 = vmatprep.mubr.bf16.mxu0 %v1703
    %2025 = vmatmul.mubr.bf16.gmra.mrb[0].mxu0 %v1701
    %v2026 = vpop.f32.mrb[0].mxu0
    %v2027 = vadd.f32 %v1963, %v2026
    %v2028 = vpop.f32.mrb[0].mxu0
    %v2029 = vpop.f32.mrb[0].mxu0
    %v2030 = vadd.f32 %v1966, %v2029
    %v2031 = vpop.f32.mrb[0].mxu0
    %2032 = vmatprep.mubr.bf16.mxu0 %v1702
    %2033 = vmatmul.mubr.bf16.gmra.mrb[0].mxu0 %v1700
    %v2034 = vpop.f32.mrb[0].mxu0
    %v2035 = vadd.f32 %v1971, %v2034
    %v2036 = vpop.f32.mrb[0].mxu0
    %v2037 = vpop.f32.mrb[0].mxu0
    %v2038 = vpop.f32.mrb[0].mxu0
    %2039 = vdwg.mxu0
    %v2040 = vadd.f32 %v1591, %v2011
    %v2041 = vadd.f32 %v1592, %v2014
    %v2042 = vadd.f32 %v1593, %v2019
    %v2043 = vadd.f32 %v1594, %v2022
    %v2044 = vadd.f32 %v1595, %v2027
    %v2045 = vadd.f32 %v1596, %v2030
    %v2046 = vadd.f32 %v1597, %v2035
    %v2047 = vld [vmem:[#allocation7] sm:$0x1]
    %v2049 = vlaneseq
    %v2050 = vshrl.u32 %v2049, 7
    %v2051 = vsub.s32 0, %v2050
    %v2052 = vrot.slane %v2047, %v2051
    %v2054 = vadd.f32 %v2040, %v2052
    %v2055 = vadd.f32 %v2041, %v2052
    %v2056 = vadd.f32 %v2042, %v2052
    %v2057 = vadd.f32 %v2043, %v2052
    %v2058 = vadd.f32 %v2044, %v2052
    %v2059 = vadd.f32 %v2045, %v2052
    %v2060 = vadd.f32 %v2046, %v2052
    %vm2061 = vcmp.gt.f32.partialorder %v2054, 0.0
    %vm2062 = vcmp.gt.f32.partialorder %v2055, 0.0
    %vm2063 = vcmp.gt.f32.partialorder %v2056, 0.0
    %vm2064 = vcmp.gt.f32.partialorder %v2057, 0.0
    %vm2065 = vcmp.gt.f32.partialorder %v2058, 0.0
    %vm2066 = vcmp.gt.f32.partialorder %v2059, 0.0
    %vm2067 = vcmp.gt.f32.partialorder %v2060, 0.0
    %v2068 = vmul.f32 %v2054, 0.01
    %v2069 = vmul.f32 %v2055, 0.01
    %v2070 = vmul.f32 %v2056, 0.01
    %v2071 = vmul.f32 %v2057, 0.01
    %v2072 = vmul.f32 %v2058, 0.01
    %v2073 = vmul.f32 %v2059, 0.01
    %v2074 = vmul.f32 %v2060, 0.01
    %v2075 = vsel %vm2061, %v2054, %v2068
    %v2076 = vsel %vm2062, %v2055, %v2069
    %v2077 = vsel %vm2063, %v2056, %v2070
    %v2078 = vsel %vm2064, %v2057, %v2071
    %v2079 = vsel %vm2065, %v2058, %v2072
    %v2080 = vsel %vm2066, %v2059, %v2073
    %v2081 = vsel %vm2067, %v2060, %v2074
    %v2082 = vpack.c.bf16 %v2076, %v2075
    %v2083 = vpack.c.bf16 %v2078, %v2077
    %v2084 = vpack.c.bf16 %v2080, %v2079
    %v2085 = vpack.c.bf16 %v2081, %v2081
    %v2090 = vunpack.c.l.b16 %v2082
    %v2091 = vunpack.c.h.b16 %v2082
    %v2092 = vunpack.c.l.b16 %v2083
    %v2093 = vunpack.c.h.b16 %v2083
    %v2094 = vunpack.c.l.b16 %v2084
    %v2095 = vunpack.c.h.b16 %v2084
    %v2096 = vunpack.c.l.b16 %v2085
    %v2097 = vpack.c.b16 %v2090, %v2090
    %v2098 = vpack.c.b16 %v2091, %v2091
    %v2099 = vpack.c.b16 %v2092, %v2092
    %v2100 = vpack.c.b16 %v2093, %v2093
    %v2101 = vpack.c.b16 %v2094, %v2094
    %v2102 = vpack.c.b16 %v2095, %v2095
    %v2103 = vpack.c.b16 %v2096, %v2096
    %2111 = vst [vmem:[#allocation8] sm:$0xf] %v2097
    %2112 = vst [vmem:[#allocation8 + $0x4] sm:$0xf] %v2098
    %2113 = vst [vmem:[#allocation8 + $0x8] sm:$0xf] %v2099
    %2114 = vst [vmem:[#allocation8 + $0xc] sm:$0xf] %v2100
    %2115 = vst [vmem:[#allocation8 + $0x10] sm:$0xf] %v2101
    %2116 = vst [vmem:[#allocation8 + $0x14] sm:$0xf] %v2102
    %2117 = vst [vmem:[#allocation8 + $0x18] sm:$0x1] %v2103
    // Predicated region
    $region26: #{bc_visual_policy_stochastic_forward.5} parent=1 // pred_check
      _
    $region27: #{bc_visual_policy_stochastic_forward.5} parent=1 // pred_check_branch
      %2119 = sbr.rel (0) target = $region29
    $region28: #{bc_visual_policy_stochastic_forward.5} parent=1 // pred_region
      %s2121 = ssub.s32 448, 448
      %2122 = vsyncadd [#allocation4], %s2121
      %s2123 = sshll.u32 [#allocation8], 4
      %s2124 = int_to_ptr.vmem [resolvable:$true] %s2123
      %2129 = dma.vmem_to_hbm [thread:$0]  %s2124, 448, %s3, [#allocation4], 64, 64, 4
    $region29: #{bc_visual_policy_stochastic_forward.5} parent=1 // pred_fallthru
      _
    // Predicated region
    $region30: #{bc_visual_policy_stochastic_forward.5} parent=1 // pred_check
      _
    $region31: #{bc_visual_policy_stochastic_forward.5} parent=1 // pred_check_branch
      %2131 = sbr.rel (0) target = $region33
    $region32: #{bc_visual_policy_stochastic_forward.5} parent=1 // pred_region
      %2132 = dma.done [#allocation4], 448
    $region33: #{bc_visual_policy_stochastic_forward.5} parent=1 // pred_fallthru
      _
    %2133 = vsyncpa [#allocation3], 1
    %2134 = vsyncpa [#allocation6], 1
    %2135 = vsyncpa [#allocation4], 1

// kernel: bc_visual_policy_stochastic_forward.6
$region0: #{bc_visual_policy_stochastic_forward.6}
  #allocation0 [shape = 'u32[]', space=smem, size = 0x4, offset = 0x4, fixed_abs, tag = 'smem constant byte address 0x4 - core index']
  #allocation1 [shape = 'u32[144,128]{1,0:T(1,128)}', space=vmem, size = 0x12000, scoped, tag = 'internal scratch']
  %s0 = inlined_call_operand.hbm [shape: bf16[1,24,512], index: 0, kind: input, shape index: {}]
  %s1 = inlined_call_operand.hbm [shape: bf16[4,512,256], index: 1, kind: input, shape index: {}]
  %s2 = inlined_call_operand.hbm [shape: f32[1,256], index: 2, kind: input, shape index: {}]
  %s3 = inlined_call_operand.hbm [shape: bf16[1,18,256], index: 3, kind: output, shape index: {}]
  %s4 = sld [smem:[#allocation0]]
  $region34: #{bc_visual_policy_stochastic_forward.6} parent=0
    _
  %s6 = ssub.s32 1, %s4
  %s7 = scalar_select 0, %s6, %s4
  $region1: #{bc_visual_policy_stochastic_forward.6} parent=0
    #allocation2 [shape = 'u8[24576]{0}', space=vmem, size = 0x6000, scoped, tag = 'input window, operand 0, single buffered']
    #allocation3 [shape = 's32[1]{0}', space=sflag, size = 0x4, scoped, tag = 'scoped memory for bc_visual_policy_stochastic_forward.6']
    #allocation4 [shape = 's32[1]{0}', space=sflag, size = 0x4, scoped, tag = 'scoped memory for bc_visual_policy_stochastic_forward.6']
    #allocation5 [shape = 'u8[1048576]{0}', space=vmem, size = 0x100000, scoped, tag = 'input window, operand 1, single buffered']
    #allocation6 [shape = 's32[1]{0}', space=sflag, size = 0x4, scoped, tag = 'scoped memory for bc_visual_policy_stochastic_forward.6']
    #allocation7 [shape = 'u8[1024]{0}', space=vmem, size = 0x400, scoped, tag = 'input window, operand 2, single buffered']
    #allocation8 [shape = 'u8[12288]{0}', space=vmem, size = 0x3000, scoped, tag = 'output window, operand 0, single buffered']
    %8 = vsyncpa [#allocation3], 0
    %9 = vsyncpa [#allocation6], 0
    %10 = vsyncpa [#allocation4], 0
    // Predicated region
    $region2: #{bc_visual_policy_stochastic_forward.6} parent=1 // pred_check
      _
    $region3: #{bc_visual_policy_stochastic_forward.6} parent=1 // pred_check_branch
      %12 = sbr.rel (0) target = $region5
    $region4: #{bc_visual_policy_stochastic_forward.6} parent=1 // pred_region
      %s14 = ssub.s32 768, 768
      %15 = vsyncadd [#allocation3], %s14
      %s16 = sshll.u32 [#allocation2], 4
      %s17 = int_to_ptr.vmem [resolvable:$true] %s16
      %22 = dma.hbm_to_vmem [thread:$0]  %s0, 768, %s17, [#allocation3], 256, 256, 16
    $region5: #{bc_visual_policy_stochastic_forward.6} parent=1 // pred_fallthru
      _
    // Predicated region
    $region6: #{bc_visual_policy_stochastic_forward.6} parent=1 // pred_check
      _
    $region7: #{bc_visual_policy_stochastic_forward.6} parent=1 // pred_check_branch
      %24 = sbr.rel (0) target = $region9
    $region8: #{bc_visual_policy_stochastic_forward.6} parent=1 // pred_region
      %s26 = ssub.s32 32768, 32768
      %27 = vsyncadd [#allocation6], %s26
      %s28 = sshll.u32 [#allocation5], 4
      %s29 = int_to_ptr.vmem [resolvable:$true] %s28
      %34 = dma.hbm_to_vmem [thread:$0]  %s1, 32768, %s29, [#allocation6], 128, 128, 8
    $region9: #{bc_visual_policy_stochastic_forward.6} parent=1 // pred_fallthru
      _
    // Predicated region
    $region10: #{bc_visual_policy_stochastic_forward.6} parent=1 // pred_check
      _
    $region11: #{bc_visual_policy_stochastic_forward.6} parent=1 // pred_check_branch
      %36 = sbr.rel (0) target = $region13
    $region12: #{bc_visual_policy_stochastic_forward.6} parent=1 // pred_region
      %s38 = ssub.s32 32, 32
      %39 = vsyncadd [#allocation6], %s38
      %s41 = sshll.u32 [#allocation7], 4
      %s42 = int_to_ptr.vmem [resolvable:$true] %s41
      %44 = dma.hbm_to_vmem [thread:$0]  %s2, 32, %s42, [#allocation6]
    $region13: #{bc_visual_policy_stochastic_forward.6} parent=1 // pred_fallthru
      _
    // Predicated region
    $region14: #{bc_visual_policy_stochastic_forward.6} parent=1 // pred_check
      _
    $region15: #{bc_visual_policy_stochastic_forward.6} parent=1 // pred_check_branch
      %46 = sbr.rel (0) target = $region17
    $region16: #{bc_visual_policy_stochastic_forward.6} parent=1 // pred_region
      %47 = dma.done [#allocation3], 768
    $region17: #{bc_visual_policy_stochastic_forward.6} parent=1 // pred_fallthru
      _
    // Predicated region
    $region18: #{bc_visual_policy_stochastic_forward.6} parent=1 // pred_check
      _
    $region19: #{bc_visual_policy_stochastic_forward.6} parent=1 // pred_check_branch
      %49 = sbr.rel (0) target = $region21
    $region20: #{bc_visual_policy_stochastic_forward.6} parent=1 // pred_region
      %50 = dma.done [#allocation6], 32768
    $region21: #{bc_visual_policy_stochastic_forward.6} parent=1 // pred_fallthru
      _
    // Predicated region
    $region22: #{bc_visual_policy_stochastic_forward.6} parent=1 // pred_check
      _
    $region23: #{bc_visual_policy_stochastic_forward.6} parent=1 // pred_check_branch
      %52 = sbr.rel (0) target = $region25
    $region24: #{bc_visual_policy_stochastic_forward.6} parent=1 // pred_region
      %53 = dma.done [#allocation6], 32
    $region25: #{bc_visual_policy_stochastic_forward.6} parent=1 // pred_fallthru
      _
    %v54 = vld [vmem:[#allocation2] sm:$0xff]
    %v55 = vld [vmem:[#allocation2 + $0x8] sm:$0xff]
    %v56 = vld [vmem:[#allocation2 + $0x10] sm:$0xff]
    %v57 = vld [vmem:[#allocation2 + $0x18] sm:$0xff]
    %v58 = vld [vmem:[#allocation2 + $0x20] sm:$0x11]
    %v59 = vld [vmem:[#allocation2 + $0x28] sm:$0x11]
    %v60 = vld [vmem:[#allocation5] sm:$0xff]
    %v61 = vld [vmem:[#allocation5 + $0x8] sm:$0xff]
    %v62 = vld [vmem:[#allocation5 + $0x10] sm:$0xff]
    %v63 = vld [vmem:[#allocation5 + $0x18] sm:$0xff]
    %v64 = vld [vmem:[#allocation5 + $0x20] sm:$0xff]
    %v65 = vld [vmem:[#allocation5 + $0x28] sm:$0xff]
    %v66 = vld [vmem:[#allocation5 + $0x30] sm:$0xff]
    %v67 = vld [vmem:[#allocation5 + $0x38] sm:$0xff]
    %v68 = vld [vmem:[#allocation5 + $0x40] sm:$0xff]
    %v69 = vld [vmem:[#allocation5 + $0x48] sm:$0xff]
    %v70 = vld [vmem:[#allocation5 + $0x50] sm:$0xff]
    %v71 = vld [vmem:[#allocation5 + $0x58] sm:$0xff]
    %v72 = vld [vmem:[#allocation5 + $0x60] sm:$0xff]
    %v73 = vld [vmem:[#allocation5 + $0x68] sm:$0xff]
    %v74 = vld [vmem:[#allocation5 + $0x70] sm:$0xff]
    %v75 = vld [vmem:[#allocation5 + $0x78] sm:$0xff]
    %v76 = vld [vmem:[#allocation5 + $0x80] sm:$0xff]
    %v77 = vld [vmem:[#allocation5 + $0x88] sm:$0xff]
    %v78 = vld [vmem:[#allocation5 + $0x90] sm:$0xff]
    %v79 = vld [vmem:[#allocation5 + $0x98] sm:$0xff]
    %v80 = vld [vmem:[#allocation5 + $0xa0] sm:$0xff]
    %v81 = vld [vmem:[#allocation5 + $0xa8] sm:$0xff]
    %v82 = vld [vmem:[#allocation5 + $0xb0] sm:$0xff]
    %v83 = vld [vmem:[#allocation5 + $0xb8] sm:$0xff]
    %v84 = vld [vmem:[#allocation5 + $0xc0] sm:$0xff]
    %v85 = vld [vmem:[#allocation5 + $0xc8] sm:$0xff]
    %v86 = vld [vmem:[#allocation5 + $0xd0] sm:$0xff]
    %v87 = vld [vmem:[#allocation5 + $0xd8] sm:$0xff]
    %v88 = vld [vmem:[#allocation5 + $0xe0] sm:$0xff]
    %v89 = vld [vmem:[#allocation5 + $0xe8] sm:$0xff]
    %v90 = vld [vmem:[#allocation5 + $0xf0] sm:$0xff]
    %v91 = vld [vmem:[#allocation5 + $0xf8] sm:$0xff]
    %v92 = vld [vmem:[#allocation5 + $0x100] sm:$0xff]
    %v93 = vld [vmem:[#allocation5 + $0x108] sm:$0xff]
    %v94 = vld [vmem:[#allocation5 + $0x110] sm:$0xff]
    %v95 = vld [vmem:[#allocation5 + $0x118] sm:$0xff]
    %v96 = vld [vmem:[#allocation5 + $0x120] sm:$0xff]
    %v97 = vld [vmem:[#allocation5 + $0x128] sm:$0xff]
    %v98 = vld [vmem:[#allocation5 + $0x130] sm:$0xff]
    %v99 = vld [vmem:[#allocation5 + $0x138] sm:$0xff]
    %v100 = vld [vmem:[#allocation5 + $0x140] sm:$0xff]
    %v101 = vld [vmem:[#allocation5 + $0x148] sm:$0xff]
    %v102 = vld [vmem:[#allocation5 + $0x150] sm:$0xff]
    %v103 = vld [vmem:[#allocation5 + $0x158] sm:$0xff]
    %v104 = vld [vmem:[#allocation5 + $0x160] sm:$0xff]
    %v105 = vld [vmem:[#allocation5 + $0x168] sm:$0xff]
    %v106 = vld [vmem:[#allocation5 + $0x170] sm:$0xff]
    %v107 = vld [vmem:[#allocation5 + $0x178] sm:$0xff]
    %v108 = vld [vmem:[#allocation5 + $0x180] sm:$0xff]
    %v109 = vld [vmem:[#allocation5 + $0x188] sm:$0xff]
    %v110 = vld [vmem:[#allocation5 + $0x190] sm:$0xff]
    %v111 = vld [vmem:[#allocation5 + $0x198] sm:$0xff]
    %v112 = vld [vmem:[#allocation5 + $0x1a0] sm:$0xff]
    %v113 = vld [vmem:[#allocation5 + $0x1a8] sm:$0xff]
    %v114 = vld [vmem:[#allocation5 + $0x1b0] sm:$0xff]
    %v115 = vld [vmem:[#allocation5 + $0x1b8] sm:$0xff]
    %v116 = vld [vmem:[#allocation5 + $0x1c0] sm:$0xff]
    %v117 = vld [vmem:[#allocation5 + $0x1c8] sm:$0xff]
    %v118 = vld [vmem:[#allocation5 + $0x1d0] sm:$0xff]
    %v119 = vld [vmem:[#allocation5 + $0x1d8] sm:$0xff]
    %v120 = vld [vmem:[#allocation5 + $0x1e0] sm:$0xff]
    %v121 = vld [vmem:[#allocation5 + $0x1e8] sm:$0xff]
    %v122 = vld [vmem:[#allocation5 + $0x1f0] sm:$0xff]
    %v123 = vld [vmem:[#allocation5 + $0x1f8] sm:$0xff]
    %v124 = vld [vmem:[#allocation2 + $0x20] sm:$0x33]
    %v125 = vld [vmem:[#allocation2 + $0x28] sm:$0x33]
    %s126 = scalar_lea.vmem [#allocation5], 512
    %v127 = vld [vmem:[%s126] sm:$0xff]
    %v128 = vld [vmem:[%s126 + $0x8] sm:$0xff]
    %v129 = vld [vmem:[%s126 + $0x10] sm:$0xff]
    %v130 = vld [vmem:[%s126 + $0x18] sm:$0xff]
    %v131 = vld [vmem:[%s126 + $0x20] sm:$0xff]
    %v132 = vld [vmem:[%s126 + $0x28] sm:$0xff]
    %v133 = vld [vmem:[%s126 + $0x30] sm:$0xff]
    %v134 = vld [vmem:[%s126 + $0x38] sm:$0xff]
    %v135 = vld [vmem:[%s126 + $0x40] sm:$0xff]
    %v136 = vld [vmem:[%s126 + $0x48] sm:$0xff]
    %v137 = vld [vmem:[%s126 + $0x50] sm:$0xff]
    %v138 = vld [vmem:[%s126 + $0x58] sm:$0xff]
    %v139 = vld [vmem:[%s126 + $0x60] sm:$0xff]
    %v140 = vld [vmem:[%s126 + $0x68] sm:$0xff]
    %v141 = vld [vmem:[%s126 + $0x70] sm:$0xff]
    %v142 = vld [vmem:[%s126 + $0x78] sm:$0xff]
    %v143 = vld [vmem:[%s126 + $0x80] sm:$0xff]
    %v144 = vld [vmem:[%s126 + $0x88] sm:$0xff]
    %v145 = vld [vmem:[%s126 + $0x90] sm:$0xff]
    %v146 = vld [vmem:[%s126 + $0x98] sm:$0xff]
    %v147 = vld [vmem:[%s126 + $0xa0] sm:$0xff]
    %v148 = vld [vmem:[%s126 + $0xa8] sm:$0xff]
    %v149 = vld [vmem:[%s126 + $0xb0] sm:$0xff]
    %v150 = vld [vmem:[%s126 + $0xb8] sm:$0xff]
    %v151 = vld [vmem:[%s126 + $0xc0] sm:$0xff]
    %v152 = vld [vmem:[%s126 + $0xc8] sm:$0xff]
    %v153 = vld [vmem:[%s126 + $0xd0] sm:$0xff]
    %v154 = vld [vmem:[%s126 + $0xd8] sm:$0xff]
    %v155 = vld [vmem:[%s126 + $0xe0] sm:$0xff]
    %v156 = vld [vmem:[%s126 + $0xe8] sm:$0xff]
    %v157 = vld [vmem:[%s126 + $0xf0] sm:$0xff]
    %v158 = vld [vmem:[%s126 + $0xf8] sm:$0xff]
    %v159 = vld [vmem:[%s126 + $0x100] sm:$0xff]
    %v160 = vld [vmem:[%s126 + $0x108] sm:$0xff]
    %v161 = vld [vmem:[%s126 + $0x110] sm:$0xff]
    %v162 = vld [vmem:[%s126 + $0x118] sm:$0xff]
    %v163 = vld [vmem:[%s126 + $0x120] sm:$0xff]
    %v164 = vld [vmem:[%s126 + $0x128] sm:$0xff]
    %v165 = vld [vmem:[%s126 + $0x130] sm:$0xff]
    %v166 = vld [vmem:[%s126 + $0x138] sm:$0xff]
    %v167 = vld [vmem:[%s126 + $0x140] sm:$0xff]
    %v168 = vld [vmem:[%s126 + $0x148] sm:$0xff]
    %v169 = vld [vmem:[%s126 + $0x150] sm:$0xff]
    %v170 = vld [vmem:[%s126 + $0x158] sm:$0xff]
    %v171 = vld [vmem:[%s126 + $0x160] sm:$0xff]
    %v172 = vld [vmem:[%s126 + $0x168] sm:$0xff]
    %v173 = vld [vmem:[%s126 + $0x170] sm:$0xff]
    %v174 = vld [vmem:[%s126 + $0x178] sm:$0xff]
    %v175 = vld [vmem:[%s126 + $0x180] sm:$0xff]
    %v176 = vld [vmem:[%s126 + $0x188] sm:$0xff]
    %v177 = vld [vmem:[%s126 + $0x190] sm:$0xff]
    %v178 = vld [vmem:[%s126 + $0x198] sm:$0xff]
    %v179 = vld [vmem:[%s126 + $0x1a0] sm:$0xff]
    %v180 = vld [vmem:[%s126 + $0x1a8] sm:$0xff]
    %v181 = vld [vmem:[%s126 + $0x1b0] sm:$0xff]
    %v182 = vld [vmem:[%s126 + $0x1b8] sm:$0xff]
    %v183 = vld [vmem:[%s126 + $0x1c0] sm:$0xff]
    %v184 = vld [vmem:[%s126 + $0x1c8] sm:$0xff]
    %v185 = vld [vmem:[%s126 + $0x1d0] sm:$0xff]
    %v186 = vld [vmem:[%s126 + $0x1d8] sm:$0xff]
    %v187 = vld [vmem:[%s126 + $0x1e0] sm:$0xff]
    %v188 = vld [vmem:[%s126 + $0x1e8] sm:$0xff]
    %v189 = vld [vmem:[%s126 + $0x1f0] sm:$0xff]
    %v190 = vld [vmem:[%s126 + $0x1f8] sm:$0xff]
    %v197 = vunpack.c.l.b16 %v54
    %v198 = vunpack.c.h.b16 %v54
    %v199 = vunpack.c.l.b16 %v55
    %v200 = vunpack.c.h.b16 %v55
    %v201 = vunpack.c.l.b16 %v56
    %v202 = vunpack.c.h.b16 %v56
    %v203 = vunpack.c.l.b16 %v57
    %v204 = vunpack.c.h.b16 %v57
    %v205 = vunpack.c.l.b16 %v124
    %v206 = vunpack.c.h.b16 %v124
    %v207 = vunpack.c.l.b16 %v125
    %v208 = vunpack.c.h.b16 %v125
    %v209 = vpack.c.b16 %v201, %v197
    %v210 = vpack.c.b16 %v202, %v198
    %v211 = vpack.c.b16 %v203, %v199
    %v212 = vpack.c.b16 %v204, %v200
    %v213 = vpack.c.b16 %v205, %v205
    %v214 = vpack.c.b16 %v206, %v206
    %v215 = vpack.c.b16 %v207, %v207
    %v216 = vpack.c.b16 %v208, %v208
    %vm217 = vsmask.f32 7424
    %v219 = vshrl.u32 %v209, 16
    %v221 = vshll.u32 %v209, 16
    %v223 = vrot.slane %v221, 1
    %v224 = vor.u32 %v219, %v223
    %v226 = vshll.u32 %v213, 16
    %v228 = vrot.slane %v226, 1
    %v229 = vsel %vm217, %v224, %v228
    %v231 = vshrl.u32 %v210, 16
    %v233 = vshll.u32 %v210, 16
    %v235 = vrot.slane %v233, 1
    %v236 = vor.u32 %v231, %v235
    %v238 = vshll.u32 %v214, 16
    %v240 = vrot.slane %v238, 1
    %v241 = vsel %vm217, %v236, %v240
    %v243 = vshrl.u32 %v211, 16
    %v245 = vshll.u32 %v211, 16
    %v247 = vrot.slane %v245, 1
    %v248 = vor.u32 %v243, %v247
    %v250 = vshll.u32 %v215, 16
    %v252 = vrot.slane %v250, 1
    %v253 = vsel %vm217, %v248, %v252
    %v255 = vshrl.u32 %v212, 16
    %v257 = vshll.u32 %v212, 16
    %v259 = vrot.slane %v257, 1
    %v260 = vor.u32 %v255, %v259
    %v262 = vshll.u32 %v216, 16
    %v264 = vrot.slane %v262, 1
    %v265 = vsel %vm217, %v260, %v264
    %v266 = vshrl.u32 %v213, 16
    %v268 = vor.u32 %v266, %v228
    %v269 = vshrl.u32 %v214, 16
    %v271 = vor.u32 %v269, %v240
    %v272 = vshrl.u32 %v215, 16
    %v274 = vor.u32 %v272, %v252
    %v275 = vshrl.u32 %v216, 16
    %v277 = vor.u32 %v275, %v264
    %v350 = vunpack.c.l.b16 %v127
    %v351 = vunpack.c.h.b16 %v127
    %v352 = vunpack.c.l.b16 %v128
    %v353 = vunpack.c.h.b16 %v128
    %v354 = vunpack.c.l.b16 %v129
    %v355 = vunpack.c.h.b16 %v129
    %v356 = vunpack.c.l.b16 %v130
    %v357 = vunpack.c.h.b16 %v130
    %v358 = vunpack.c.l.b16 %v131
    %v359 = vunpack.c.h.b16 %v131
    %v360 = vunpack.c.l.b16 %v132
    %v361 = vunpack.c.h.b16 %v132
    %v362 = vunpack.c.l.b16 %v133
    %v363 = vunpack.c.h.b16 %v133
    %v364 = vunpack.c.l.b16 %v134
    %v365 = vunpack.c.h.b16 %v134
    %v366 = vunpack.c.l.b16 %v135
    %v367 = vunpack.c.h.b16 %v135
    %v368 = vunpack.c.l.b16 %v136
    %v369 = vunpack.c.h.b16 %v136
    %v370 = vunpack.c.l.b16 %v137
    %v371 = vunpack.c.h.b16 %v137
    %v372 = vunpack.c.l.b16 %v138
    %v373 = vunpack.c.h.b16 %v138
    %v374 = vunpack.c.l.b16 %v139
    %v375 = vunpack.c.h.b16 %v139
    %v376 = vunpack.c.l.b16 %v140
    %v377 = vunpack.c.h.b16 %v140
    %v378 = vunpack.c.l.b16 %v141
    %v379 = vunpack.c.h.b16 %v141
    %v380 = vunpack.c.l.b16 %v142
    %v381 = vunpack.c.h.b16 %v142
    %v382 = vunpack.c.l.b16 %v143
    %v383 = vunpack.c.h.b16 %v143
    %v384 = vunpack.c.l.b16 %v144
    %v385 = vunpack.c.h.b16 %v144
    %v386 = vunpack.c.l.b16 %v145
    %v387 = vunpack.c.h.b16 %v145
    %v388 = vunpack.c.l.b16 %v146
    %v389 = vunpack.c.h.b16 %v146
    %v390 = vunpack.c.l.b16 %v147
    %v391 = vunpack.c.h.b16 %v147
    %v392 = vunpack.c.l.b16 %v148
    %v393 = vunpack.c.h.b16 %v148
    %v394 = vunpack.c.l.b16 %v149
    %v395 = vunpack.c.h.b16 %v149
    %v396 = vunpack.c.l.b16 %v150
    %v397 = vunpack.c.h.b16 %v150
    %v398 = vunpack.c.l.b16 %v151
    %v399 = vunpack.c.h.b16 %v151
    %v400 = vunpack.c.l.b16 %v152
    %v401 = vunpack.c.h.b16 %v152
    %v402 = vunpack.c.l.b16 %v153
    %v403 = vunpack.c.h.b16 %v153
    %v404 = vunpack.c.l.b16 %v154
    %v405 = vunpack.c.h.b16 %v154
    %v406 = vunpack.c.l.b16 %v155
    %v407 = vunpack.c.h.b16 %v155
    %v408 = vunpack.c.l.b16 %v156
    %v409 = vunpack.c.h.b16 %v156
    %v410 = vunpack.c.l.b16 %v157
    %v411 = vunpack.c.h.b16 %v157
    %v412 = vunpack.c.l.b16 %v158
    %v413 = vunpack.c.h.b16 %v158
    %v414 = vunpack.c.l.b16 %v159
    %v415 = vunpack.c.h.b16 %v159
    %v416 = vunpack.c.l.b16 %v160
    %v417 = vunpack.c.h.b16 %v160
    %v418 = vunpack.c.l.b16 %v161
    %v419 = vunpack.c.h.b16 %v161
    %v420 = vunpack.c.l.b16 %v162
    %v421 = vunpack.c.h.b16 %v162
    %v422 = vunpack.c.l.b16 %v163
    %v423 = vunpack.c.h.b16 %v163
    %v424 = vunpack.c.l.b16 %v164
    %v425 = vunpack.c.h.b16 %v164
    %v426 = vunpack.c.l.b16 %v165
    %v427 = vunpack.c.h.b16 %v165
    %v428 = vunpack.c.l.b16 %v166
    %v429 = vunpack.c.h.b16 %v166
    %v430 = vunpack.c.l.b16 %v167
    %v431 = vunpack.c.h.b16 %v167
    %v432 = vunpack.c.l.b16 %v168
    %v433 = vunpack.c.h.b16 %v168
    %v434 = vunpack.c.l.b16 %v169
    %v435 = vunpack.c.h.b16 %v169
    %v436 = vunpack.c.l.b16 %v170
    %v437 = vunpack.c.h.b16 %v170
    %v438 = vunpack.c.l.b16 %v171
    %v439 = vunpack.c.h.b16 %v171
    %v440 = vunpack.c.l.b16 %v172
    %v441 = vunpack.c.h.b16 %v172
    %v442 = vunpack.c.l.b16 %v173
    %v443 = vunpack.c.h.b16 %v173
    %v444 = vunpack.c.l.b16 %v174
    %v445 = vunpack.c.h.b16 %v174
    %v446 = vunpack.c.l.b16 %v175
    %v447 = vunpack.c.h.b16 %v175
    %v448 = vunpack.c.l.b16 %v176
    %v449 = vunpack.c.h.b16 %v176
    %v450 = vunpack.c.l.b16 %v177
    %v451 = vunpack.c.h.b16 %v177
    %v452 = vunpack.c.l.b16 %v178
    %v453 = vunpack.c.h.b16 %v178
    %v454 = vunpack.c.l.b16 %v179
    %v455 = vunpack.c.h.b16 %v179
    %v456 = vunpack.c.l.b16 %v180
    %v457 = vunpack.c.h.b16 %v180
    %v458 = vunpack.c.l.b16 %v181
    %v459 = vunpack.c.h.b16 %v181
    %v460 = vunpack.c.l.b16 %v182
    %v461 = vunpack.c.h.b16 %v182
    %v462 = vunpack.c.l.b16 %v183
    %v463 = vunpack.c.h.b16 %v183
    %v464 = vunpack.c.l.b16 %v184
    %v465 = vunpack.c.h.b16 %v184
    %v466 = vunpack.c.l.b16 %v185
    %v467 = vunpack.c.h.b16 %v185
    %v468 = vunpack.c.l.b16 %v186
    %v469 = vunpack.c.h.b16 %v186
    %v470 = vunpack.c.l.b16 %v187
    %v471 = vunpack.c.h.b16 %v187
    %v472 = vunpack.c.l.b16 %v188
    %v473 = vunpack.c.h.b16 %v188
    %v474 = vunpack.c.l.b16 %v189
    %v475 = vunpack.c.h.b16 %v189
    %v476 = vunpack.c.l.b16 %v190
    %v477 = vunpack.c.h.b16 %v190
    %v478 = vpack.c.b16 %v352, %v350
    %v479 = vpack.c.b16 %v353, %v351
    %v480 = vpack.c.b16 %v356, %v354
    %v481 = vpack.c.b16 %v357, %v355
    %v482 = vpack.c.b16 %v360, %v358
    %v483 = vpack.c.b16 %v361, %v359
    %v484 = vpack.c.b16 %v364, %v362
    %v485 = vpack.c.b16 %v365, %v363
    %v486 = vpack.c.b16 %v368, %v366
    %v487 = vpack.c.b16 %v369, %v367
    %v488 = vpack.c.b16 %v372, %v370
    %v489 = vpack.c.b16 %v373, %v371
    %v490 = vpack.c.b16 %v376, %v374
    %v491 = vpack.c.b16 %v377, %v375
    %v492 = vpack.c.b16 %v380, %v378
    %v493 = vpack.c.b16 %v381, %v379
    %v494 = vpack.c.b16 %v384, %v382
    %v495 = vpack.c.b16 %v385, %v383
    %v496 = vpack.c.b16 %v388, %v386
    %v497 = vpack.c.b16 %v389, %v387
    %v498 = vpack.c.b16 %v392, %v390
    %v499 = vpack.c.b16 %v393, %v391
    %v500 = vpack.c.b16 %v396, %v394
    %v501 = vpack.c.b16 %v397, %v395
    %v502 = vpack.c.b16 %v400, %v398
    %v503 = vpack.c.b16 %v401, %v399
    %v504 = vpack.c.b16 %v404, %v402
    %v505 = vpack.c.b16 %v405, %v403
    %v506 = vpack.c.b16 %v408, %v406
    %v507 = vpack.c.b16 %v409, %v407
    %v508 = vpack.c.b16 %v412, %v410
    %v509 = vpack.c.b16 %v413, %v411
    %v510 = vpack.c.b16 %v416, %v414
    %v511 = vpack.c.b16 %v417, %v415
    %v512 = vpack.c.b16 %v420, %v418
    %v513 = vpack.c.b16 %v421, %v419
    %v514 = vpack.c.b16 %v424, %v422
    %v515 = vpack.c.b16 %v425, %v423
    %v516 = vpack.c.b16 %v428, %v426
    %v517 = vpack.c.b16 %v429, %v427
    %v518 = vpack.c.b16 %v432, %v430
    %v519 = vpack.c.b16 %v433, %v431
    %v520 = vpack.c.b16 %v436, %v434
    %v521 = vpack.c.b16 %v437, %v435
    %v522 = vpack.c.b16 %v440, %v438
    %v523 = vpack.c.b16 %v441, %v439
    %v524 = vpack.c.b16 %v444, %v442
    %v525 = vpack.c.b16 %v445, %v443
    %v526 = vpack.c.b16 %v448, %v446
    %v527 = vpack.c.b16 %v449, %v447
    %v528 = vpack.c.b16 %v452, %v450
    %v529 = vpack.c.b16 %v453, %v451
    %v530 = vpack.c.b16 %v456, %v454
    %v531 = vpack.c.b16 %v457, %v455
    %v532 = vpack.c.b16 %v460, %v458
    %v533 = vpack.c.b16 %v461, %v459
    %v534 = vpack.c.b16 %v464, %v462
    %v535 = vpack.c.b16 %v465, %v463
    %v536 = vpack.c.b16 %v468, %v466
    %v537 = vpack.c.b16 %v469, %v467
    %v538 = vpack.c.b16 %v472, %v470
    %v539 = vpack.c.b16 %v473, %v471
    %v540 = vpack.c.b16 %v476, %v474
    %v541 = vpack.c.b16 %v477, %v475
    %606 = vmatprep.subr.bf16.mxu0 %v479
    %607 = vmatpush1.bf16.msra.mxu0 %v478
    %608 = vmatprep.subr.bf16.mxu0 %v481
    %609 = vmatpush1.bf16.msra.mxu0 %v480
    %610 = vmatprep.subr.bf16.mxu0 %v483
    %611 = vmatpush1.bf16.msra.mxu0 %v482
    %612 = vmatprep.subr.bf16.mxu0 %v485
    %613 = vmatpush1.bf16.msra.mxu0 %v484
    %614 = vmatprep.subr.bf16.mxu0 %v487
    %615 = vmatpush1.bf16.msra.mxu0 %v486
    %616 = vmatprep.subr.bf16.mxu0 %v489
    %617 = vmatpush1.bf16.msra.mxu0 %v488
    %618 = vmatprep.subr.bf16.mxu0 %v491
    %619 = vmatpush1.bf16.msra.mxu0 %v490
    %620 = vmatprep.subr.bf16.mxu0 %v493
    %621 = vmatpush1.bf16.msra.mxu0 %v492
    %622 = vmatprep.subr.bf16.mxu0 %v495
    %623 = vmatpush1.bf16.msra.mxu0 %v494
    %624 = vmatprep.subr.bf16.mxu0 %v497
    %625 = vmatpush1.bf16.msra.mxu0 %v496
    %626 = vmatprep.subr.bf16.mxu0 %v499
    %627 = vmatpush1.bf16.msra.mxu0 %v498
    %628 = vmatprep.subr.bf16.mxu0 %v501
    %629 = vmatpush1.bf16.msra.mxu0 %v500
    %630 = vmatprep.subr.bf16.mxu0 %v503
    %631 = vmatpush1.bf16.msra.mxu0 %v502
    %632 = vmatprep.subr.bf16.mxu0 %v505
    %633 = vmatpush1.bf16.msra.mxu0 %v504
    %634 = vmatprep.subr.bf16.mxu0 %v507
    %635 = vmatpush1.bf16.msra.mxu0 %v506
    %636 = vmatprep.subr.bf16.mxu0 %v509
    %637 = vmatpush1.bf16.msra.mxu0 %v508
    %638 = vmatprep.mubr.bf16.mxu0 %v241
    %639 = vmatmul.mubr.bf16.gmra.mrb[0].mxu0 %v229
    %v640 = vpop.f32.mrb[0].mxu0
    %v641 = vadd.f32 0.0, %v640
    %v642 = vpop.f32.mrb[0].mxu0
    %v643 = vadd.f32 0.0, %v642
    %v644 = vpop.f32.mrb[0].mxu0
    %v645 = vadd.f32 0.0, %v644
    %v646 = vpop.f32.mrb[0].mxu0
    %v647 = vadd.f32 0.0, %v646
    %648 = vmatprep.mubr.bf16.mxu0 %v271
    %649 = vmatmul.mubr.bf16.gmra.mrb[0].mxu0 %v268
    %v650 = vpop.f32.mrb[0].mxu0
    %v651 = vadd.f32 0.0, %v650
    %v652 = vpop.f32.mrb[0].mxu0
    %v653 = vadd.f32 0.0, %v652
    %v654 = vpop.f32.mrb[0].mxu0
    %v655 = vpop.f32.mrb[0].mxu0
    %656 = vdwg.mxu0
    %657 = vmatprep.subr.bf16.mxu0 %v511
    %658 = vmatpush1.bf16.msra.mxu0 %v510
    %659 = vmatprep.subr.bf16.mxu0 %v513
    %660 = vmatpush1.bf16.msra.mxu0 %v512
    %661 = vmatprep.subr.bf16.mxu0 %v515
    %662 = vmatpush1.bf16.msra.mxu0 %v514
    %663 = vmatprep.subr.bf16.mxu0 %v517
    %664 = vmatpush1.bf16.msra.mxu0 %v516
    %665 = vmatprep.subr.bf16.mxu0 %v519
    %666 = vmatpush1.bf16.msra.mxu0 %v518
    %667 = vmatprep.subr.bf16.mxu0 %v521
    %668 = vmatpush1.bf16.msra.mxu0 %v520
    %669 = vmatprep.subr.bf16.mxu0 %v523
    %670 = vmatpush1.bf16.msra.mxu0 %v522
    %671 = vmatprep.subr.bf16.mxu0 %v525
    %672 = vmatpush1.bf16.msra.mxu0 %v524
    %673 = vmatprep.subr.bf16.mxu0 %v527
    %674 = vmatpush1.bf16.msra.mxu0 %v526
    %675 = vmatprep.subr.bf16.mxu0 %v529
    %676 = vmatpush1.bf16.msra.mxu0 %v528
    %677 = vmatprep.subr.bf16.mxu0 %v531
    %678 = vmatpush1.bf16.msra.mxu0 %v530
    %679 = vmatprep.subr.bf16.mxu0 %v533
    %680 = vmatpush1.bf16.msra.mxu0 %v532
    %681 = vmatprep.subr.bf16.mxu0 %v535
    %682 = vmatpush1.bf16.msra.mxu0 %v534
    %683 = vmatprep.subr.bf16.mxu0 %v537
    %684 = vmatpush1.bf16.msra.mxu0 %v536
    %685 = vmatprep.subr.bf16.mxu0 %v539
    %686 = vmatpush1.bf16.msra.mxu0 %v538
    %687 = vmatprep.subr.bf16.mxu0 %v541
    %688 = vmatpush1.bf16.msra.mxu0 %v540
    %689 = vmatprep.mubr.bf16.mxu0 %v265
    %690 = vmatmul.mubr.bf16.gmra.mrb[0].mxu0 %v253
    %v691 = vpop.f32.mrb[0].mxu0
    %v692 = vadd.f32 %v641, %v691
    %v693 = vpop.f32.mrb[0].mxu0
    %v694 = vadd.f32 %v643, %v693
    %v695 = vpop.f32.mrb[0].mxu0
    %v696 = vadd.f32 %v645, %v695
    %v697 = vpop.f32.mrb[0].mxu0
    %v698 = vadd.f32 %v647, %v697
    %699 = vmatprep.mubr.bf16.mxu0 %v277
    %700 = vmatmul.mubr.bf16.gmra.mrb[0].mxu0 %v274
    %v701 = vpop.f32.mrb[0].mxu0
    %v702 = vadd.f32 %v651, %v701
    %v703 = vpop.f32.mrb[0].mxu0
    %v704 = vadd.f32 %v653, %v703
    %v705 = vpop.f32.mrb[0].mxu0
    %v706 = vpop.f32.mrb[0].mxu0
    %707 = vdwg.mxu0
    %v710 = vunpack.c.l.b16 %v58
    %v711 = vunpack.c.h.b16 %v58
    %v712 = vunpack.c.l.b16 %v59
    %v713 = vunpack.c.h.b16 %v59
    %v714 = vpack.c.b16 %v710, %v710
    %v715 = vpack.c.b16 %v711, %v711
    %v716 = vpack.c.b16 %v712, %v712
    %v717 = vpack.c.b16 %v713, %v713
    %v790 = vunpack.c.l.b16 %v60
    %v791 = vunpack.c.h.b16 %v60
    %v792 = vunpack.c.l.b16 %v61
    %v793 = vunpack.c.h.b16 %v61
    %v794 = vunpack.c.l.b16 %v62
    %v795 = vunpack.c.h.b16 %v62
    %v796 = vunpack.c.l.b16 %v63
    %v797 = vunpack.c.h.b16 %v63
    %v798 = vunpack.c.l.b16 %v64
    %v799 = vunpack.c.h.b16 %v64
    %v800 = vunpack.c.l.b16 %v65
    %v801 = vunpack.c.h.b16 %v65
    %v802 = vunpack.c.l.b16 %v66
    %v803 = vunpack.c.h.b16 %v66
    %v804 = vunpack.c.l.b16 %v67
    %v805 = vunpack.c.h.b16 %v67
    %v806 = vunpack.c.l.b16 %v68
    %v807 = vunpack.c.h.b16 %v68
    %v808 = vunpack.c.l.b16 %v69
    %v809 = vunpack.c.h.b16 %v69
    %v810 = vunpack.c.l.b16 %v70
    %v811 = vunpack.c.h.b16 %v70
    %v812 = vunpack.c.l.b16 %v71
    %v813 = vunpack.c.h.b16 %v71
    %v814 = vunpack.c.l.b16 %v72
    %v815 = vunpack.c.h.b16 %v72
    %v816 = vunpack.c.l.b16 %v73
    %v817 = vunpack.c.h.b16 %v73
    %v818 = vunpack.c.l.b16 %v74
    %v819 = vunpack.c.h.b16 %v74
    %v820 = vunpack.c.l.b16 %v75
    %v821 = vunpack.c.h.b16 %v75
    %v822 = vunpack.c.l.b16 %v76
    %v823 = vunpack.c.h.b16 %v76
    %v824 = vunpack.c.l.b16 %v77
    %v825 = vunpack.c.h.b16 %v77
    %v826 = vunpack.c.l.b16 %v78
    %v827 = vunpack.c.h.b16 %v78
    %v828 = vunpack.c.l.b16 %v79
    %v829 = vunpack.c.h.b16 %v79
    %v830 = vunpack.c.l.b16 %v80
    %v831 = vunpack.c.h.b16 %v80
    %v832 = vunpack.c.l.b16 %v81
    %v833 = vunpack.c.h.b16 %v81
    %v834 = vunpack.c.l.b16 %v82
    %v835 = vunpack.c.h.b16 %v82
    %v836 = vunpack.c.l.b16 %v83
    %v837 = vunpack.c.h.b16 %v83
    %v838 = vunpack.c.l.b16 %v84
    %v839 = vunpack.c.h.b16 %v84
    %v840 = vunpack.c.l.b16 %v85
    %v841 = vunpack.c.h.b16 %v85
    %v842 = vunpack.c.l.b16 %v86
    %v843 = vunpack.c.h.b16 %v86
    %v844 = vunpack.c.l.b16 %v87
    %v845 = vunpack.c.h.b16 %v87
    %v846 = vunpack.c.l.b16 %v88
    %v847 = vunpack.c.h.b16 %v88
    %v848 = vunpack.c.l.b16 %v89
    %v849 = vunpack.c.h.b16 %v89
    %v850 = vunpack.c.l.b16 %v90
    %v851 = vunpack.c.h.b16 %v90
    %v852 = vunpack.c.l.b16 %v91
    %v853 = vunpack.c.h.b16 %v91
    %v854 = vunpack.c.l.b16 %v92
    %v855 = vunpack.c.h.b16 %v92
    %v856 = vunpack.c.l.b16 %v93
    %v857 = vunpack.c.h.b16 %v93
    %v858 = vunpack.c.l.b16 %v94
    %v859 = vunpack.c.h.b16 %v94
    %v860 = vunpack.c.l.b16 %v95
    %v861 = vunpack.c.h.b16 %v95
    %v862 = vunpack.c.l.b16 %v96
    %v863 = vunpack.c.h.b16 %v96
    %v864 = vunpack.c.l.b16 %v97
    %v865 = vunpack.c.h.b16 %v97
    %v866 = vunpack.c.l.b16 %v98
    %v867 = vunpack.c.h.b16 %v98
    %v868 = vunpack.c.l.b16 %v99
    %v869 = vunpack.c.h.b16 %v99
    %v870 = vunpack.c.l.b16 %v100
    %v871 = vunpack.c.h.b16 %v100
    %v872 = vunpack.c.l.b16 %v101
    %v873 = vunpack.c.h.b16 %v101
    %v874 = vunpack.c.l.b16 %v102
    %v875 = vunpack.c.h.b16 %v102
    %v876 = vunpack.c.l.b16 %v103
    %v877 = vunpack.c.h.b16 %v103
    %v878 = vunpack.c.l.b16 %v104
    %v879 = vunpack.c.h.b16 %v104
    %v880 = vunpack.c.l.b16 %v105
    %v881 = vunpack.c.h.b16 %v105
    %v882 = vunpack.c.l.b16 %v106
    %v883 = vunpack.c.h.b16 %v106
    %v884 = vunpack.c.l.b16 %v107
    %v885 = vunpack.c.h.b16 %v107
    %v886 = vunpack.c.l.b16 %v108
    %v887 = vunpack.c.h.b16 %v108
    %v888 = vunpack.c.l.b16 %v109
    %v889 = vunpack.c.h.b16 %v109
    %v890 = vunpack.c.l.b16 %v110
    %v891 = vunpack.c.h.b16 %v110
    %v892 = vunpack.c.l.b16 %v111
    %v893 = vunpack.c.h.b16 %v111
    %v894 = vunpack.c.l.b16 %v112
    %v895 = vunpack.c.h.b16 %v112
    %v896 = vunpack.c.l.b16 %v113
    %v897 = vunpack.c.h.b16 %v113
    %v898 = vunpack.c.l.b16 %v114
    %v899 = vunpack.c.h.b16 %v114
    %v900 = vunpack.c.l.b16 %v115
    %v901 = vunpack.c.h.b16 %v115
    %v902 = vunpack.c.l.b16 %v116
    %v903 = vunpack.c.h.b16 %v116
    %v904 = vunpack.c.l.b16 %v117
    %v905 = vunpack.c.h.b16 %v117
    %v906 = vunpack.c.l.b16 %v118
    %v907 = vunpack.c.h.b16 %v118
    %v908 = vunpack.c.l.b16 %v119
    %v909 = vunpack.c.h.b16 %v119
    %v910 = vunpack.c.l.b16 %v120
    %v911 = vunpack.c.h.b16 %v120
    %v912 = vunpack.c.l.b16 %v121
    %v913 = vunpack.c.h.b16 %v121
    %v914 = vunpack.c.l.b16 %v122
    %v915 = vunpack.c.h.b16 %v122
    %v916 = vunpack.c.l.b16 %v123
    %v917 = vunpack.c.h.b16 %v123
    %v918 = vpack.c.b16 %v792, %v790
    %v919 = vpack.c.b16 %v793, %v791
    %v920 = vpack.c.b16 %v796, %v794
    %v921 = vpack.c.b16 %v797, %v795
    %v922 = vpack.c.b16 %v800, %v798
    %v923 = vpack.c.b16 %v801, %v799
    %v924 = vpack.c.b16 %v804, %v802
    %v925 = vpack.c.b16 %v805, %v803
    %v926 = vpack.c.b16 %v808, %v806
    %v927 = vpack.c.b16 %v809, %v807
    %v928 = vpack.c.b16 %v812, %v810
    %v929 = vpack.c.b16 %v813, %v811
    %v930 = vpack.c.b16 %v816, %v814
    %v931 = vpack.c.b16 %v817, %v815
    %v932 = vpack.c.b16 %v820, %v818
    %v933 = vpack.c.b16 %v821, %v819
    %v934 = vpack.c.b16 %v824, %v822
    %v935 = vpack.c.b16 %v825, %v823
    %v936 = vpack.c.b16 %v828, %v826
    %v937 = vpack.c.b16 %v829, %v827
    %v938 = vpack.c.b16 %v832, %v830
    %v939 = vpack.c.b16 %v833, %v831
    %v940 = vpack.c.b16 %v836, %v834
    %v941 = vpack.c.b16 %v837, %v835
    %v942 = vpack.c.b16 %v840, %v838
    %v943 = vpack.c.b16 %v841, %v839
    %v944 = vpack.c.b16 %v844, %v842
    %v945 = vpack.c.b16 %v845, %v843
    %v946 = vpack.c.b16 %v848, %v846
    %v947 = vpack.c.b16 %v849, %v847
    %v948 = vpack.c.b16 %v852, %v850
    %v949 = vpack.c.b16 %v853, %v851
    %v950 = vpack.c.b16 %v856, %v854
    %v951 = vpack.c.b16 %v857, %v855
    %v952 = vpack.c.b16 %v860, %v858
    %v953 = vpack.c.b16 %v861, %v859
    %v954 = vpack.c.b16 %v864, %v862
    %v955 = vpack.c.b16 %v865, %v863
    %v956 = vpack.c.b16 %v868, %v866
    %v957 = vpack.c.b16 %v869, %v867
    %v958 = vpack.c.b16 %v872, %v870
    %v959 = vpack.c.b16 %v873, %v871
    %v960 = vpack.c.b16 %v876, %v874
    %v961 = vpack.c.b16 %v877, %v875
    %v962 = vpack.c.b16 %v880, %v878
    %v963 = vpack.c.b16 %v881, %v879
    %v964 = vpack.c.b16 %v884, %v882
    %v965 = vpack.c.b16 %v885, %v883
    %v966 = vpack.c.b16 %v888, %v886
    %v967 = vpack.c.b16 %v889, %v887
    %v968 = vpack.c.b16 %v892, %v890
    %v969 = vpack.c.b16 %v893, %v891
    %v970 = vpack.c.b16 %v896, %v894
    %v971 = vpack.c.b16 %v897, %v895
    %v972 = vpack.c.b16 %v900, %v898
    %v973 = vpack.c.b16 %v901, %v899
    %v974 = vpack.c.b16 %v904, %v902
    %v975 = vpack.c.b16 %v905, %v903
    %v976 = vpack.c.b16 %v908, %v906
    %v977 = vpack.c.b16 %v909, %v907
    %v978 = vpack.c.b16 %v912, %v910
    %v979 = vpack.c.b16 %v913, %v911
    %v980 = vpack.c.b16 %v916, %v914
    %v981 = vpack.c.b16 %v917, %v915
    %1046 = vmatprep.subr.bf16.mxu0 %v919
    %1047 = vmatpush1.bf16.msra.mxu0 %v918
    %1048 = vmatprep.subr.bf16.mxu0 %v921
    %1049 = vmatpush1.bf16.msra.mxu0 %v920
    %1050 = vmatprep.subr.bf16.mxu0 %v923
    %1051 = vmatpush1.bf16.msra.mxu0 %v922
    %1052 = vmatprep.subr.bf16.mxu0 %v925
    %1053 = vmatpush1.bf16.msra.mxu0 %v924
    %1054 = vmatprep.subr.bf16.mxu0 %v927
    %1055 = vmatpush1.bf16.msra.mxu0 %v926
    %1056 = vmatprep.subr.bf16.mxu0 %v929
    %1057 = vmatpush1.bf16.msra.mxu0 %v928
    %1058 = vmatprep.subr.bf16.mxu0 %v931
    %1059 = vmatpush1.bf16.msra.mxu0 %v930
    %1060 = vmatprep.subr.bf16.mxu0 %v933
    %1061 = vmatpush1.bf16.msra.mxu0 %v932
    %1062 = vmatprep.subr.bf16.mxu0 %v935
    %1063 = vmatpush1.bf16.msra.mxu0 %v934
    %1064 = vmatprep.subr.bf16.mxu0 %v937
    %1065 = vmatpush1.bf16.msra.mxu0 %v936
    %1066 = vmatprep.subr.bf16.mxu0 %v939
    %1067 = vmatpush1.bf16.msra.mxu0 %v938
    %1068 = vmatprep.subr.bf16.mxu0 %v941
    %1069 = vmatpush1.bf16.msra.mxu0 %v940
    %1070 = vmatprep.subr.bf16.mxu0 %v943
    %1071 = vmatpush1.bf16.msra.mxu0 %v942
    %1072 = vmatprep.subr.bf16.mxu0 %v945
    %1073 = vmatpush1.bf16.msra.mxu0 %v944
    %1074 = vmatprep.subr.bf16.mxu0 %v947
    %1075 = vmatpush1.bf16.msra.mxu0 %v946
    %1076 = vmatprep.subr.bf16.mxu0 %v949
    %1077 = vmatpush1.bf16.msra.mxu0 %v948
    %1078 = vmatprep.mubr.bf16.mxu0 %v210
    %1079 = vmatmul.mubr.bf16.gmra.mrb[0].mxu0 %v209
    %v1080 = vpop.f32.mrb[0].mxu0
    %v1081 = vadd.f32 %v692, %v1080
    %v1082 = vpop.f32.mrb[0].mxu0
    %v1083 = vadd.f32 %v694, %v1082
    %v1084 = vpop.f32.mrb[0].mxu0
    %v1085 = vadd.f32 %v696, %v1084
    %v1086 = vpop.f32.mrb[0].mxu0
    %v1087 = vadd.f32 %v698, %v1086
    %1088 = vmatprep.mubr.bf16.mxu0 %v715
    %1089 = vmatmul.mubr.bf16.gmra.mrb[0].mxu0 %v714
    %v1090 = vpop.f32.mrb[0].mxu0
    %v1091 = vadd.f32 %v702, %v1090
    %v1092 = vpop.f32.mrb[0].mxu0
    %v1093 = vadd.f32 %v704, %v1092
    %v1094 = vpop.f32.mrb[0].mxu0
    %v1095 = vpop.f32.mrb[0].mxu0
    %1096 = vdwg.mxu0
    %1097 = vmatprep.subr.bf16.mxu0 %v951
    %1098 = vmatpush1.bf16.msra.mxu0 %v950
    %1099 = vmatprep.subr.bf16.mxu0 %v953
    %1100 = vmatpush1.bf16.msra.mxu0 %v952
    %1101 = vmatprep.subr.bf16.mxu0 %v955
    %1102 = vmatpush1.bf16.msra.mxu0 %v954
    %1103 = vmatprep.subr.bf16.mxu0 %v957
    %1104 = vmatpush1.bf16.msra.mxu0 %v956
    %1105 = vmatprep.subr.bf16.mxu0 %v959
    %1106 = vmatpush1.bf16.msra.mxu0 %v958
    %1107 = vmatprep.subr.bf16.mxu0 %v961
    %1108 = vmatpush1.bf16.msra.mxu0 %v960
    %1109 = vmatprep.subr.bf16.mxu0 %v963
    %1110 = vmatpush1.bf16.msra.mxu0 %v962
    %1111 = vmatprep.subr.bf16.mxu0 %v965
    %1112 = vmatpush1.bf16.msra.mxu0 %v964
    %1113 = vmatprep.subr.bf16.mxu0 %v967
    %1114 = vmatpush1.bf16.msra.mxu0 %v966
    %1115 = vmatprep.subr.bf16.mxu0 %v969
    %1116 = vmatpush1.bf16.msra.mxu0 %v968
    %1117 = vmatprep.subr.bf16.mxu0 %v971
    %1118 = vmatpush1.bf16.msra.mxu0 %v970
    %1119 = vmatprep.subr.bf16.mxu0 %v973
    %1120 = vmatpush1.bf16.msra.mxu0 %v972
    %1121 = vmatprep.subr.bf16.mxu0 %v975
    %1122 = vmatpush1.bf16.msra.mxu0 %v974
    %1123 = vmatprep.subr.bf16.mxu0 %v977
    %1124 = vmatpush1.bf16.msra.mxu0 %v976
    %1125 = vmatprep.subr.bf16.mxu0 %v979
    %1126 = vmatpush1.bf16.msra.mxu0 %v978
    %1127 = vmatprep.subr.bf16.mxu0 %v981
    %1128 = vmatpush1.bf16.msra.mxu0 %v980
    %1129 = vmatprep.mubr.bf16.mxu0 %v212
    %1130 = vmatmul.mubr.bf16.gmra.mrb[0].mxu0 %v211
    %v1131 = vpop.f32.mrb[0].mxu0
    %v1132 = vadd.f32 %v1081, %v1131
    %v1133 = vpop.f32.mrb[0].mxu0
    %v1134 = vadd.f32 %v1083, %v1133
    %v1135 = vpop.f32.mrb[0].mxu0
    %v1136 = vadd.f32 %v1085, %v1135
    %v1137 = vpop.f32.mrb[0].mxu0
    %v1138 = vadd.f32 %v1087, %v1137
    %1139 = vmatprep.mubr.bf16.mxu0 %v717
    %1140 = vmatmul.mubr.bf16.gmra.mrb[0].mxu0 %v716
    %v1141 = vpop.f32.mrb[0].mxu0
    %v1142 = vadd.f32 %v1091, %v1141
    %v1143 = vpop.f32.mrb[0].mxu0
    %v1144 = vadd.f32 %v1093, %v1143
    %v1145 = vpop.f32.mrb[0].mxu0
    %v1146 = vpop.f32.mrb[0].mxu0
    %1147 = vdwg.mxu0
    %v1148 = vld [vmem:[#allocation2] sm:$0xee]
    %v1149 = vld [vmem:[#allocation2 + $0x8] sm:$0xee]
    %v1150 = vld [vmem:[#allocation2 + $0x20] sm:$0x77]
    %v1151 = vld [vmem:[#allocation2 + $0x28] sm:$0x77]
    %s1152 = scalar_lea.vmem [#allocation5], 1024
    %v1153 = vld [vmem:[%s1152] sm:$0xff]
    %v1154 = vld [vmem:[%s1152 + $0x8] sm:$0xff]
    %v1155 = vld [vmem:[%s1152 + $0x10] sm:$0xff]
    %v1156 = vld [vmem:[%s1152 + $0x18] sm:$0xff]
    %v1157 = vld [vmem:[%s1152 + $0x20] sm:$0xff]
    %v1158 = vld [vmem:[%s1152 + $0x28] sm:$0xff]
    %v1159 = vld [vmem:[%s1152 + $0x30] sm:$0xff]
    %v1160 = vld [vmem:[%s1152 + $0x38] sm:$0xff]
    %v1161 = vld [vmem:[%s1152 + $0x40] sm:$0xff]
    %v1162 = vld [vmem:[%s1152 + $0x48] sm:$0xff]
    %v1163 = vld [vmem:[%s1152 + $0x50] sm:$0xff]
    %v1164 = vld [vmem:[%s1152 + $0x58] sm:$0xff]
    %v1165 = vld [vmem:[%s1152 + $0x60] sm:$0xff]
    %v1166 = vld [vmem:[%s1152 + $0x68] sm:$0xff]
    %v1167 = vld [vmem:[%s1152 + $0x70] sm:$0xff]
    %v1168 = vld [vmem:[%s1152 + $0x78] sm:$0xff]
    %v1169 = vld [vmem:[%s1152 + $0x80] sm:$0xff]
    %v1170 = vld [vmem:[%s1152 + $0x88] sm:$0xff]
    %v1171 = vld [vmem:[%s1152 + $0x90] sm:$0xff]
    %v1172 = vld [vmem:[%s1152 + $0x98] sm:$0xff]
    %v1173 = vld [vmem:[%s1152 + $0xa0] sm:$0xff]
    %v1174 = vld [vmem:[%s1152 + $0xa8] sm:$0xff]
    %v1175 = vld [vmem:[%s1152 + $0xb0] sm:$0xff]
    %v1176 = vld [vmem:[%s1152 + $0xb8] sm:$0xff]
    %v1177 = vld [vmem:[%s1152 + $0xc0] sm:$0xff]
    %v1178 = vld [vmem:[%s1152 + $0xc8] sm:$0xff]
    %v1179 = vld [vmem:[%s1152 + $0xd0] sm:$0xff]
    %v1180 = vld [vmem:[%s1152 + $0xd8] sm:$0xff]
    %v1181 = vld [vmem:[%s1152 + $0xe0] sm:$0xff]
    %v1182 = vld [vmem:[%s1152 + $0xe8] sm:$0xff]
    %v1183 = vld [vmem:[%s1152 + $0xf0] sm:$0xff]
    %v1184 = vld [vmem:[%s1152 + $0xf8] sm:$0xff]
    %v1185 = vld [vmem:[%s1152 + $0x100] sm:$0xff]
    %v1186 = vld [vmem:[%s1152 + $0x108] sm:$0xff]
    %v1187 = vld [vmem:[%s1152 + $0x110] sm:$0xff]
    %v1188 = vld [vmem:[%s1152 + $0x118] sm:$0xff]
    %v1189 = vld [vmem:[%s1152 + $0x120] sm:$0xff]
    %v1190 = vld [vmem:[%s1152 + $0x128] sm:$0xff]
    %v1191 = vld [vmem:[%s1152 + $0x130] sm:$0xff]
    %v1192 = vld [vmem:[%s1152 + $0x138] sm:$0xff]
    %v1193 = vld [vmem:[%s1152 + $0x140] sm:$0xff]
    %v1194 = vld [vmem:[%s1152 + $0x148] sm:$0xff]
    %v1195 = vld [vmem:[%s1152 + $0x150] sm:$0xff]
    %v1196 = vld [vmem:[%s1152 + $0x158] sm:$0xff]
    %v1197 = vld [vmem:[%s1152 + $0x160] sm:$0xff]
    %v1198 = vld [vmem:[%s1152 + $0x168] sm:$0xff]
    %v1199 = vld [vmem:[%s1152 + $0x170] sm:$0xff]
    %v1200 = vld [vmem:[%s1152 + $0x178] sm:$0xff]
    %v1201 = vld [vmem:[%s1152 + $0x180] sm:$0xff]
    %v1202 = vld [vmem:[%s1152 + $0x188] sm:$0xff]
    %v1203 = vld [vmem:[%s1152 + $0x190] sm:$0xff]
    %v1204 = vld [vmem:[%s1152 + $0x198] sm:$0xff]
    %v1205 = vld [vmem:[%s1152 + $0x1a0] sm:$0xff]
    %v1206 = vld [vmem:[%s1152 + $0x1a8] sm:$0xff]
    %v1207 = vld [vmem:[%s1152 + $0x1b0] sm:$0xff]
    %v1208 = vld [vmem:[%s1152 + $0x1b8] sm:$0xff]
    %v1209 = vld [vmem:[%s1152 + $0x1c0] sm:$0xff]
    %v1210 = vld [vmem:[%s1152 + $0x1c8] sm:$0xff]
    %v1211 = vld [vmem:[%s1152 + $0x1d0] sm:$0xff]
    %v1212 = vld [vmem:[%s1152 + $0x1d8] sm:$0xff]
    %v1213 = vld [vmem:[%s1152 + $0x1e0] sm:$0xff]
    %v1214 = vld [vmem:[%s1152 + $0x1e8] sm:$0xff]
    %v1215 = vld [vmem:[%s1152 + $0x1f0] sm:$0xff]
    %v1216 = vld [vmem:[%s1152 + $0x1f8] sm:$0xff]
    %v1221 = vunpack.c.l.b16 %v1148
    %v1222 = vunpack.c.h.b16 %v1148
    %v1223 = vunpack.c.l.b16 %v1149
    %v1224 = vunpack.c.h.b16 %v1149
    %v1225 = vunpack.c.l.b16 %v1150
    %v1226 = vunpack.c.h.b16 %v1150
    %v1227 = vunpack.c.l.b16 %v1151
    %v1228 = vunpack.c.h.b16 %v1151
    %v1229 = vpack.c.b16 %v201, %v1221
    %v1230 = vpack.c.b16 %v202, %v1222
    %v1231 = vpack.c.b16 %v203, %v1223
    %v1232 = vpack.c.b16 %v204, %v1224
    %v1233 = vpack.c.b16 %v1225, %v1225
    %v1234 = vpack.c.b16 %v1226, %v1226
    %v1235 = vpack.c.b16 %v1227, %v1227
    %v1236 = vpack.c.b16 %v1228, %v1228
    %vm1237 = vsmask.f32 6400
    %v1239 = vshrl.u32 %v1229, 16
    %v1241 = vrot.slane %v1239, 1
    %v1242 = vshll.u32 %v1229, 16
    %v1244 = vrot.slane %v1242, 2
    %v1245 = vor.u32 %v1241, %v1244
    %v1247 = vshrl.u32 %v1233, 16
    %v1249 = vrot.slane %v1247, 1
    %v1250 = vshll.u32 %v1233, 16
    %v1252 = vrot.slane %v1250, 2
    %v1253 = vor.u32 %v1249, %v1252
    %v1254 = vsel %vm1237, %v1245, %v1253
    %v1256 = vshrl.u32 %v1230, 16
    %v1258 = vrot.slane %v1256, 1
    %v1259 = vshll.u32 %v1230, 16
    %v1261 = vrot.slane %v1259, 2
    %v1262 = vor.u32 %v1258, %v1261
    %v1264 = vshrl.u32 %v1234, 16
    %v1266 = vrot.slane %v1264, 1
    %v1267 = vshll.u32 %v1234, 16
    %v1269 = vrot.slane %v1267, 2
    %v1270 = vor.u32 %v1266, %v1269
    %v1271 = vsel %vm1237, %v1262, %v1270
    %v1273 = vshrl.u32 %v1231, 16
    %v1275 = vrot.slane %v1273, 1
    %v1276 = vshll.u32 %v1231, 16
    %v1278 = vrot.slane %v1276, 2
    %v1279 = vor.u32 %v1275, %v1278
    %v1281 = vshrl.u32 %v1235, 16
    %v1283 = vrot.slane %v1281, 1
    %v1284 = vshll.u32 %v1235, 16
    %v1286 = vrot.slane %v1284, 2
    %v1287 = vor.u32 %v1283, %v1286
    %v1288 = vsel %vm1237, %v1279, %v1287
    %v1290 = vshrl.u32 %v1232, 16
    %v1292 = vrot.slane %v1290, 1
    %v1293 = vshll.u32 %v1232, 16
    %v1295 = vrot.slane %v1293, 2
    %v1296 = vor.u32 %v1292, %v1295
    %v1298 = vshrl.u32 %v1236, 16
    %v1300 = vrot.slane %v1298, 1
    %v1301 = vshll.u32 %v1236, 16
    %v1303 = vrot.slane %v1301, 2
    %v1304 = vor.u32 %v1300, %v1303
    %v1305 = vsel %vm1237, %v1296, %v1304
    %v1378 = vunpack.c.l.b16 %v1153
    %v1379 = vunpack.c.h.b16 %v1153
    %v1380 = vunpack.c.l.b16 %v1154
    %v1381 = vunpack.c.h.b16 %v1154
    %v1382 = vunpack.c.l.b16 %v1155
    %v1383 = vunpack.c.h.b16 %v1155
    %v1384 = vunpack.c.l.b16 %v1156
    %v1385 = vunpack.c.h.b16 %v1156
    %v1386 = vunpack.c.l.b16 %v1157
    %v1387 = vunpack.c.h.b16 %v1157
    %v1388 = vunpack.c.l.b16 %v1158
    %v1389 = vunpack.c.h.b16 %v1158
    %v1390 = vunpack.c.l.b16 %v1159
    %v1391 = vunpack.c.h.b16 %v1159
    %v1392 = vunpack.c.l.b16 %v1160
    %v1393 = vunpack.c.h.b16 %v1160
    %v1394 = vunpack.c.l.b16 %v1161
    %v1395 = vunpack.c.h.b16 %v1161
    %v1396 = vunpack.c.l.b16 %v1162
    %v1397 = vunpack.c.h.b16 %v1162
    %v1398 = vunpack.c.l.b16 %v1163
    %v1399 = vunpack.c.h.b16 %v1163
    %v1400 = vunpack.c.l.b16 %v1164
    %v1401 = vunpack.c.h.b16 %v1164
    %v1402 = vunpack.c.l.b16 %v1165
    %v1403 = vunpack.c.h.b16 %v1165
    %v1404 = vunpack.c.l.b16 %v1166
    %v1405 = vunpack.c.h.b16 %v1166
    %v1406 = vunpack.c.l.b16 %v1167
    %v1407 = vunpack.c.h.b16 %v1167
    %v1408 = vunpack.c.l.b16 %v1168
    %v1409 = vunpack.c.h.b16 %v1168
    %v1410 = vunpack.c.l.b16 %v1169
    %v1411 = vunpack.c.h.b16 %v1169
    %v1412 = vunpack.c.l.b16 %v1170
    %v1413 = vunpack.c.h.b16 %v1170
    %v1414 = vunpack.c.l.b16 %v1171
    %v1415 = vunpack.c.h.b16 %v1171
    %v1416 = vunpack.c.l.b16 %v1172
    %v1417 = vunpack.c.h.b16 %v1172
    %v1418 = vunpack.c.l.b16 %v1173
    %v1419 = vunpack.c.h.b16 %v1173
    %v1420 = vunpack.c.l.b16 %v1174
    %v1421 = vunpack.c.h.b16 %v1174
    %v1422 = vunpack.c.l.b16 %v1175
    %v1423 = vunpack.c.h.b16 %v1175
    %v1424 = vunpack.c.l.b16 %v1176
    %v1425 = vunpack.c.h.b16 %v1176
    %v1426 = vunpack.c.l.b16 %v1177
    %v1427 = vunpack.c.h.b16 %v1177
    %v1428 = vunpack.c.l.b16 %v1178
    %v1429 = vunpack.c.h.b16 %v1178
    %v1430 = vunpack.c.l.b16 %v1179
    %v1431 = vunpack.c.h.b16 %v1179
    %v1432 = vunpack.c.l.b16 %v1180
    %v1433 = vunpack.c.h.b16 %v1180
    %v1434 = vunpack.c.l.b16 %v1181
    %v1435 = vunpack.c.h.b16 %v1181
    %v1436 = vunpack.c.l.b16 %v1182
    %v1437 = vunpack.c.h.b16 %v1182
    %v1438 = vunpack.c.l.b16 %v1183
    %v1439 = vunpack.c.h.b16 %v1183
    %v1440 = vunpack.c.l.b16 %v1184
    %v1441 = vunpack.c.h.b16 %v1184
    %v1442 = vunpack.c.l.b16 %v1185
    %v1443 = vunpack.c.h.b16 %v1185
    %v1444 = vunpack.c.l.b16 %v1186
    %v1445 = vunpack.c.h.b16 %v1186
    %v1446 = vunpack.c.l.b16 %v1187
    %v1447 = vunpack.c.h.b16 %v1187
    %v1448 = vunpack.c.l.b16 %v1188
    %v1449 = vunpack.c.h.b16 %v1188
    %v1450 = vunpack.c.l.b16 %v1189
    %v1451 = vunpack.c.h.b16 %v1189
    %v1452 = vunpack.c.l.b16 %v1190
    %v1453 = vunpack.c.h.b16 %v1190
    %v1454 = vunpack.c.l.b16 %v1191
    %v1455 = vunpack.c.h.b16 %v1191
    %v1456 = vunpack.c.l.b16 %v1192
    %v1457 = vunpack.c.h.b16 %v1192
    %v1458 = vunpack.c.l.b16 %v1193
    %v1459 = vunpack.c.h.b16 %v1193
    %v1460 = vunpack.c.l.b16 %v1194
    %v1461 = vunpack.c.h.b16 %v1194
    %v1462 = vunpack.c.l.b16 %v1195
    %v1463 = vunpack.c.h.b16 %v1195
    %v1464 = vunpack.c.l.b16 %v1196
    %v1465 = vunpack.c.h.b16 %v1196
    %v1466 = vunpack.c.l.b16 %v1197
    %v1467 = vunpack.c.h.b16 %v1197
    %v1468 = vunpack.c.l.b16 %v1198
    %v1469 = vunpack.c.h.b16 %v1198
    %v1470 = vunpack.c.l.b16 %v1199
    %v1471 = vunpack.c.h.b16 %v1199
    %v1472 = vunpack.c.l.b16 %v1200
    %v1473 = vunpack.c.h.b16 %v1200
    %v1474 = vunpack.c.l.b16 %v1201
    %v1475 = vunpack.c.h.b16 %v1201
    %v1476 = vunpack.c.l.b16 %v1202
    %v1477 = vunpack.c.h.b16 %v1202
    %v1478 = vunpack.c.l.b16 %v1203
    %v1479 = vunpack.c.h.b16 %v1203
    %v1480 = vunpack.c.l.b16 %v1204
    %v1481 = vunpack.c.h.b16 %v1204
    %v1482 = vunpack.c.l.b16 %v1205
    %v1483 = vunpack.c.h.b16 %v1205
    %v1484 = vunpack.c.l.b16 %v1206
    %v1485 = vunpack.c.h.b16 %v1206
    %v1486 = vunpack.c.l.b16 %v1207
    %v1487 = vunpack.c.h.b16 %v1207
    %v1488 = vunpack.c.l.b16 %v1208
    %v1489 = vunpack.c.h.b16 %v1208
    %v1490 = vunpack.c.l.b16 %v1209
    %v1491 = vunpack.c.h.b16 %v1209
    %v1492 = vunpack.c.l.b16 %v1210
    %v1493 = vunpack.c.h.b16 %v1210
    %v1494 = vunpack.c.l.b16 %v1211
    %v1495 = vunpack.c.h.b16 %v1211
    %v1496 = vunpack.c.l.b16 %v1212
    %v1497 = vunpack.c.h.b16 %v1212
    %v1498 = vunpack.c.l.b16 %v1213
    %v1499 = vunpack.c.h.b16 %v1213
    %v1500 = vunpack.c.l.b16 %v1214
    %v1501 = vunpack.c.h.b16 %v1214
    %v1502 = vunpack.c.l.b16 %v1215
    %v1503 = vunpack.c.h.b16 %v1215
    %v1504 = vunpack.c.l.b16 %v1216
    %v1505 = vunpack.c.h.b16 %v1216
    %v1506 = vpack.c.b16 %v1380, %v1378
    %v1507 = vpack.c.b16 %v1381, %v1379
    %v1508 = vpack.c.b16 %v1384, %v1382
    %v1509 = vpack.c.b16 %v1385, %v1383
    %v1510 = vpack.c.b16 %v1388, %v1386
    %v1511 = vpack.c.b16 %v1389, %v1387
    %v1512 = vpack.c.b16 %v1392, %v1390
    %v1513 = vpack.c.b16 %v1393, %v1391
    %v1514 = vpack.c.b16 %v1396, %v1394
    %v1515 = vpack.c.b16 %v1397, %v1395
    %v1516 = vpack.c.b16 %v1400, %v1398
    %v1517 = vpack.c.b16 %v1401, %v1399
    %v1518 = vpack.c.b16 %v1404, %v1402
    %v1519 = vpack.c.b16 %v1405, %v1403
    %v1520 = vpack.c.b16 %v1408, %v1406
    %v1521 = vpack.c.b16 %v1409, %v1407
    %v1522 = vpack.c.b16 %v1412, %v1410
    %v1523 = vpack.c.b16 %v1413, %v1411
    %v1524 = vpack.c.b16 %v1416, %v1414
    %v1525 = vpack.c.b16 %v1417, %v1415
    %v1526 = vpack.c.b16 %v1420, %v1418
    %v1527 = vpack.c.b16 %v1421, %v1419
    %v1528 = vpack.c.b16 %v1424, %v1422
    %v1529 = vpack.c.b16 %v1425, %v1423
    %v1530 = vpack.c.b16 %v1428, %v1426
    %v1531 = vpack.c.b16 %v1429, %v1427
    %v1532 = vpack.c.b16 %v1432, %v1430
    %v1533 = vpack.c.b16 %v1433, %v1431
    %v1534 = vpack.c.b16 %v1436, %v1434
    %v1535 = vpack.c.b16 %v1437, %v1435
    %v1536 = vpack.c.b16 %v1440, %v1438
    %v1537 = vpack.c.b16 %v1441, %v1439
    %v1538 = vpack.c.b16 %v1444, %v1442
    %v1539 = vpack.c.b16 %v1445, %v1443
    %v1540 = vpack.c.b16 %v1448, %v1446
    %v1541 = vpack.c.b16 %v1449, %v1447
    %v1542 = vpack.c.b16 %v1452, %v1450
    %v1543 = vpack.c.b16 %v1453, %v1451
    %v1544 = vpack.c.b16 %v1456, %v1454
    %v1545 = vpack.c.b16 %v1457, %v1455
    %v1546 = vpack.c.b16 %v1460, %v1458
    %v1547 = vpack.c.b16 %v1461, %v1459
    %v1548 = vpack.c.b16 %v1464, %v1462
    %v1549 = vpack.c.b16 %v1465, %v1463
    %v1550 = vpack.c.b16 %v1468, %v1466
    %v1551 = vpack.c.b16 %v1469, %v1467
    %v1552 = vpack.c.b16 %v1472, %v1470
    %v1553 = vpack.c.b16 %v1473, %v1471
    %v1554 = vpack.c.b16 %v1476, %v1474
    %v1555 = vpack.c.b16 %v1477, %v1475
    %v1556 = vpack.c.b16 %v1480, %v1478
    %v1557 = vpack.c.b16 %v1481, %v1479
    %v1558 = vpack.c.b16 %v1484, %v1482
    %v1559 = vpack.c.b16 %v1485, %v1483
    %v1560 = vpack.c.b16 %v1488, %v1486
    %v1561 = vpack.c.b16 %v1489, %v1487
    %v1562 = vpack.c.b16 %v1492, %v1490
    %v1563 = vpack.c.b16 %v1493, %v1491
    %v1564 = vpack.c.b16 %v1496, %v1494
    %v1565 = vpack.c.b16 %v1497, %v1495
    %v1566 = vpack.c.b16 %v1500, %v1498
    %v1567 = vpack.c.b16 %v1501, %v1499
    %v1568 = vpack.c.b16 %v1504, %v1502
    %v1569 = vpack.c.b16 %v1505, %v1503
    %1634 = vmatprep.subr.bf16.mxu0 %v1507
    %1635 = vmatpush1.bf16.msra.mxu0 %v1506
    %1636 = vmatprep.subr.bf16.mxu0 %v1509
    %1637 = vmatpush1.bf16.msra.mxu0 %v1508
    %1638 = vmatprep.subr.bf16.mxu0 %v1511
    %1639 = vmatpush1.bf16.msra.mxu0 %v1510
    %1640 = vmatprep.subr.bf16.mxu0 %v1513
    %1641 = vmatpush1.bf16.msra.mxu0 %v1512
    %1642 = vmatprep.subr.bf16.mxu0 %v1515
    %1643 = vmatpush1.bf16.msra.mxu0 %v1514
    %1644 = vmatprep.subr.bf16.mxu0 %v1517
    %1645 = vmatpush1.bf16.msra.mxu0 %v1516
    %1646 = vmatprep.subr.bf16.mxu0 %v1519
    %1647 = vmatpush1.bf16.msra.mxu0 %v1518
    %1648 = vmatprep.subr.bf16.mxu0 %v1521
    %1649 = vmatpush1.bf16.msra.mxu0 %v1520
    %1650 = vmatprep.subr.bf16.mxu0 %v1523
    %1651 = vmatpush1.bf16.msra.mxu0 %v1522
    %1652 = vmatprep.subr.bf16.mxu0 %v1525
    %1653 = vmatpush1.bf16.msra.mxu0 %v1524
    %1654 = vmatprep.subr.bf16.mxu0 %v1527
    %1655 = vmatpush1.bf16.msra.mxu0 %v1526
    %1656 = vmatprep.subr.bf16.mxu0 %v1529
    %1657 = vmatpush1.bf16.msra.mxu0 %v1528
    %1658 = vmatprep.subr.bf16.mxu0 %v1531
    %1659 = vmatpush1.bf16.msra.mxu0 %v1530
    %1660 = vmatprep.subr.bf16.mxu0 %v1533
    %1661 = vmatpush1.bf16.msra.mxu0 %v1532
    %1662 = vmatprep.subr.bf16.mxu0 %v1535
    %1663 = vmatpush1.bf16.msra.mxu0 %v1534
    %1664 = vmatprep.subr.bf16.mxu0 %v1537
    %1665 = vmatpush1.bf16.msra.mxu0 %v1536
    %1666 = vmatprep.mubr.bf16.mxu0 %v1271
    %1667 = vmatmul.mubr.bf16.gmra.mrb[0].mxu0 %v1254
    %v1668 = vpop.f32.mrb[0].mxu0
    %v1669 = vadd.f32 0.0, %v1668
    %v1670 = vpop.f32.mrb[0].mxu0
    %v1671 = vadd.f32 0.0, %v1670
    %v1672 = vpop.f32.mrb[0].mxu0
    %v1673 = vadd.f32 0.0, %v1672
    %v1674 = vpop.f32.mrb[0].mxu0
    %v1675 = vadd.f32 0.0, %v1674
    %1676 = vmatprep.mubr.bf16.mxu0 %v1270
    %1677 = vmatmul.mubr.bf16.gmra.mrb[0].mxu0 %v1253
    %v1678 = vpop.f32.mrb[0].mxu0
    %v1679 = vadd.f32 0.0, %v1678
    %v1680 = vpop.f32.mrb[0].mxu0
    %v1681 = vadd.f32 0.0, %v1680
    %v1682 = vpop.f32.mrb[0].mxu0
    %v1683 = vpop.f32.mrb[0].mxu0
    %1684 = vdwg.mxu0
    %1685 = vmatprep.subr.bf16.mxu0 %v1539
    %1686 = vmatpush1.bf16.msra.mxu0 %v1538
    %1687 = vmatprep.subr.bf16.mxu0 %v1541
    %1688 = vmatpush1.bf16.msra.mxu0 %v1540
    %1689 = vmatprep.subr.bf16.mxu0 %v1543
    %1690 = vmatpush1.bf16.msra.mxu0 %v1542
    %1691 = vmatprep.subr.bf16.mxu0 %v1545
    %1692 = vmatpush1.bf16.msra.mxu0 %v1544
    %1693 = vmatprep.subr.bf16.mxu0 %v1547
    %1694 = vmatpush1.bf16.msra.mxu0 %v1546
    %1695 = vmatprep.subr.bf16.mxu0 %v1549
    %1696 = vmatpush1.bf16.msra.mxu0 %v1548
    %1697 = vmatprep.subr.bf16.mxu0 %v1551
    %1698 = vmatpush1.bf16.msra.mxu0 %v1550
    %1699 = vmatprep.subr.bf16.mxu0 %v1553
    %1700 = vmatpush1.bf16.msra.mxu0 %v1552
    %1701 = vmatprep.subr.bf16.mxu0 %v1555
    %1702 = vmatpush1.bf16.msra.mxu0 %v1554
    %1703 = vmatprep.subr.bf16.mxu0 %v1557
    %1704 = vmatpush1.bf16.msra.mxu0 %v1556
    %1705 = vmatprep.subr.bf16.mxu0 %v1559
    %1706 = vmatpush1.bf16.msra.mxu0 %v1558
    %1707 = vmatprep.subr.bf16.mxu0 %v1561
    %1708 = vmatpush1.bf16.msra.mxu0 %v1560
    %1709 = vmatprep.subr.bf16.mxu0 %v1563
    %1710 = vmatpush1.bf16.msra.mxu0 %v1562
    %1711 = vmatprep.subr.bf16.mxu0 %v1565
    %1712 = vmatpush1.bf16.msra.mxu0 %v1564
    %1713 = vmatprep.subr.bf16.mxu0 %v1567
    %1714 = vmatpush1.bf16.msra.mxu0 %v1566
    %1715 = vmatprep.subr.bf16.mxu0 %v1569
    %1716 = vmatpush1.bf16.msra.mxu0 %v1568
    %1717 = vmatprep.mubr.bf16.mxu0 %v1305
    %1718 = vmatmul.mubr.bf16.gmra.mrb[0].mxu0 %v1288
    %v1719 = vpop.f32.mrb[0].mxu0
    %v1720 = vadd.f32 %v1669, %v1719
    %v1721 = vpop.f32.mrb[0].mxu0
    %v1722 = vadd.f32 %v1671, %v1721
    %v1723 = vpop.f32.mrb[0].mxu0
    %v1724 = vadd.f32 %v1673, %v1723
    %v1725 = vpop.f32.mrb[0].mxu0
    %v1726 = vadd.f32 %v1675, %v1725
    %1727 = vmatprep.mubr.bf16.mxu0 %v1304
    %1728 = vmatmul.mubr.bf16.gmra.mrb[0].mxu0 %v1287
    %v1729 = vpop.f32.mrb[0].mxu0
    %v1730 = vadd.f32 %v1679, %v1729
    %v1731 = vpop.f32.mrb[0].mxu0
    %v1732 = vadd.f32 %v1681, %v1731
    %v1733 = vpop.f32.mrb[0].mxu0
    %v1734 = vpop.f32.mrb[0].mxu0
    %1735 = vdwg.mxu0
    %v1736 = vadd.f32 %v1132, %v1720
    %v1737 = vadd.f32 %v1134, %v1722
    %v1738 = vadd.f32 %v1136, %v1724
    %v1739 = vadd.f32 %v1138, %v1726
    %v1740 = vadd.f32 %v1142, %v1730
    %v1741 = vadd.f32 %v1144, %v1732
    %v1742 = vld [vmem:[#allocation2] sm:$0xcc]
    %v1743 = vld [vmem:[#allocation2 + $0x8] sm:$0xcc]
    %s1744 = scalar_lea.vmem [#allocation5], 1536
    %v1745 = vld [vmem:[%s1744] sm:$0xff]
    %v1746 = vld [vmem:[%s1744 + $0x8] sm:$0xff]
    %v1747 = vld [vmem:[%s1744 + $0x10] sm:$0xff]
    %v1748 = vld [vmem:[%s1744 + $0x18] sm:$0xff]
    %v1749 = vld [vmem:[%s1744 + $0x20] sm:$0xff]
    %v1750 = vld [vmem:[%s1744 + $0x28] sm:$0xff]
    %v1751 = vld [vmem:[%s1744 + $0x30] sm:$0xff]
    %v1752 = vld [vmem:[%s1744 + $0x38] sm:$0xff]
    %v1753 = vld [vmem:[%s1744 + $0x40] sm:$0xff]
    %v1754 = vld [vmem:[%s1744 + $0x48] sm:$0xff]
    %v1755 = vld [vmem:[%s1744 + $0x50] sm:$0xff]
    %v1756 = vld [vmem:[%s1744 + $0x58] sm:$0xff]
    %v1757 = vld [vmem:[%s1744 + $0x60] sm:$0xff]
    %v1758 = vld [vmem:[%s1744 + $0x68] sm:$0xff]
    %v1759 = vld [vmem:[%s1744 + $0x70] sm:$0xff]
    %v1760 = vld [vmem:[%s1744 + $0x78] sm:$0xff]
    %v1761 = vld [vmem:[%s1744 + $0x80] sm:$0xff]
    %v1762 = vld [vmem:[%s1744 + $0x88] sm:$0xff]
    %v1763 = vld [vmem:[%s1744 + $0x90] sm:$0xff]
    %v1764 = vld [vmem:[%s1744 + $0x98] sm:$0xff]
    %v1765 = vld [vmem:[%s1744 + $0xa0] sm:$0xff]
    %v1766 = vld [vmem:[%s1744 + $0xa8] sm:$0xff]
    %v1767 = vld [vmem:[%s1744 + $0xb0] sm:$0xff]
    %v1768 = vld [vmem:[%s1744 + $0xb8] sm:$0xff]
    %v1769 = vld [vmem:[%s1744 + $0xc0] sm:$0xff]
    %v1770 = vld [vmem:[%s1744 + $0xc8] sm:$0xff]
    %v1771 = vld [vmem:[%s1744 + $0xd0] sm:$0xff]
    %v1772 = vld [vmem:[%s1744 + $0xd8] sm:$0xff]
    %v1773 = vld [vmem:[%s1744 + $0xe0] sm:$0xff]
    %v1774 = vld [vmem:[%s1744 + $0xe8] sm:$0xff]
    %v1775 = vld [vmem:[%s1744 + $0xf0] sm:$0xff]
    %v1776 = vld [vmem:[%s1744 + $0xf8] sm:$0xff]
    %v1777 = vld [vmem:[%s1744 + $0x100] sm:$0xff]
    %v1778 = vld [vmem:[%s1744 + $0x108] sm:$0xff]
    %v1779 = vld [vmem:[%s1744 + $0x110] sm:$0xff]
    %v1780 = vld [vmem:[%s1744 + $0x118] sm:$0xff]
    %v1781 = vld [vmem:[%s1744 + $0x120] sm:$0xff]
    %v1782 = vld [vmem:[%s1744 + $0x128] sm:$0xff]
    %v1783 = vld [vmem:[%s1744 + $0x130] sm:$0xff]
    %v1784 = vld [vmem:[%s1744 + $0x138] sm:$0xff]
    %v1785 = vld [vmem:[%s1744 + $0x140] sm:$0xff]
    %v1786 = vld [vmem:[%s1744 + $0x148] sm:$0xff]
    %v1787 = vld [vmem:[%s1744 + $0x150] sm:$0xff]
    %v1788 = vld [vmem:[%s1744 + $0x158] sm:$0xff]
    %v1789 = vld [vmem:[%s1744 + $0x160] sm:$0xff]
    %v1790 = vld [vmem:[%s1744 + $0x168] sm:$0xff]
    %v1791 = vld [vmem:[%s1744 + $0x170] sm:$0xff]
    %v1792 = vld [vmem:[%s1744 + $0x178] sm:$0xff]
    %v1793 = vld [vmem:[%s1744 + $0x180] sm:$0xff]
    %v1794 = vld [vmem:[%s1744 + $0x188] sm:$0xff]
    %v1795 = vld [vmem:[%s1744 + $0x190] sm:$0xff]
    %v1796 = vld [vmem:[%s1744 + $0x198] sm:$0xff]
    %v1797 = vld [vmem:[%s1744 + $0x1a0] sm:$0xff]
    %v1798 = vld [vmem:[%s1744 + $0x1a8] sm:$0xff]
    %v1799 = vld [vmem:[%s1744 + $0x1b0] sm:$0xff]
    %v1800 = vld [vmem:[%s1744 + $0x1b8] sm:$0xff]
    %v1801 = vld [vmem:[%s1744 + $0x1c0] sm:$0xff]
    %v1802 = vld [vmem:[%s1744 + $0x1c8] sm:$0xff]
    %v1803 = vld [vmem:[%s1744 + $0x1d0] sm:$0xff]
    %v1804 = vld [vmem:[%s1744 + $0x1d8] sm:$0xff]
    %v1805 = vld [vmem:[%s1744 + $0x1e0] sm:$0xff]
    %v1806 = vld [vmem:[%s1744 + $0x1e8] sm:$0xff]
    %v1807 = vld [vmem:[%s1744 + $0x1f0] sm:$0xff]
    %v1808 = vld [vmem:[%s1744 + $0x1f8] sm:$0xff]
    %v1811 = vunpack.c.l.b16 %v1742
    %v1812 = vunpack.c.h.b16 %v1742
    %v1813 = vunpack.c.l.b16 %v1743
    %v1814 = vunpack.c.h.b16 %v1743
    %v1815 = vpack.c.b16 %v201, %v1811
    %v1816 = vpack.c.b16 %v202, %v1812
    %v1817 = vpack.c.b16 %v203, %v1813
    %v1818 = vpack.c.b16 %v204, %v1814
    %vm1819 = vcmask 1045504
    %v1820 = vrot.slane %v1815, 2
    %v1821 = vrot.slane %v1233, 2
    %v1822 = vsel %vm1819, %v1820, %v1821
    %v1823 = vrot.slane %v1816, 2
    %v1824 = vrot.slane %v1234, 2
    %v1825 = vsel %vm1819, %v1823, %v1824
    %v1826 = vrot.slane %v1817, 2
    %v1827 = vrot.slane %v1235, 2
    %v1828 = vsel %vm1819, %v1826, %v1827
    %v1829 = vrot.slane %v1818, 2
    %v1830 = vrot.slane %v1236, 2
    %v1831 = vsel %vm1819, %v1829, %v1830
    %v1904 = vunpack.c.l.b16 %v1745
    %v1905 = vunpack.c.h.b16 %v1745
    %v1906 = vunpack.c.l.b16 %v1746
    %v1907 = vunpack.c.h.b16 %v1746
    %v1908 = vunpack.c.l.b16 %v1747
    %v1909 = vunpack.c.h.b16 %v1747
    %v1910 = vunpack.c.l.b16 %v1748
    %v1911 = vunpack.c.h.b16 %v1748
    %v1912 = vunpack.c.l.b16 %v1749
    %v1913 = vunpack.c.h.b16 %v1749
    %v1914 = vunpack.c.l.b16 %v1750
    %v1915 = vunpack.c.h.b16 %v1750
    %v1916 = vunpack.c.l.b16 %v1751
    %v1917 = vunpack.c.h.b16 %v1751
    %v1918 = vunpack.c.l.b16 %v1752
    %v1919 = vunpack.c.h.b16 %v1752
    %v1920 = vunpack.c.l.b16 %v1753
    %v1921 = vunpack.c.h.b16 %v1753
    %v1922 = vunpack.c.l.b16 %v1754
    %v1923 = vunpack.c.h.b16 %v1754
    %v1924 = vunpack.c.l.b16 %v1755
    %v1925 = vunpack.c.h.b16 %v1755
    %v1926 = vunpack.c.l.b16 %v1756
    %v1927 = vunpack.c.h.b16 %v1756
    %v1928 = vunpack.c.l.b16 %v1757
    %v1929 = vunpack.c.h.b16 %v1757
    %v1930 = vunpack.c.l.b16 %v1758
    %v1931 = vunpack.c.h.b16 %v1758
    %v1932 = vunpack.c.l.b16 %v1759
    %v1933 = vunpack.c.h.b16 %v1759
    %v1934 = vunpack.c.l.b16 %v1760
    %v1935 = vunpack.c.h.b16 %v1760
    %v1936 = vunpack.c.l.b16 %v1761
    %v1937 = vunpack.c.h.b16 %v1761
    %v1938 = vunpack.c.l.b16 %v1762
    %v1939 = vunpack.c.h.b16 %v1762
    %v1940 = vunpack.c.l.b16 %v1763
    %v1941 = vunpack.c.h.b16 %v1763
    %v1942 = vunpack.c.l.b16 %v1764
    %v1943 = vunpack.c.h.b16 %v1764
    %v1944 = vunpack.c.l.b16 %v1765
    %v1945 = vunpack.c.h.b16 %v1765
    %v1946 = vunpack.c.l.b16 %v1766
    %v1947 = vunpack.c.h.b16 %v1766
    %v1948 = vunpack.c.l.b16 %v1767
    %v1949 = vunpack.c.h.b16 %v1767
    %v1950 = vunpack.c.l.b16 %v1768
    %v1951 = vunpack.c.h.b16 %v1768
    %v1952 = vunpack.c.l.b16 %v1769
    %v1953 = vunpack.c.h.b16 %v1769
    %v1954 = vunpack.c.l.b16 %v1770
    %v1955 = vunpack.c.h.b16 %v1770
    %v1956 = vunpack.c.l.b16 %v1771
    %v1957 = vunpack.c.h.b16 %v1771
    %v1958 = vunpack.c.l.b16 %v1772
    %v1959 = vunpack.c.h.b16 %v1772
    %v1960 = vunpack.c.l.b16 %v1773
    %v1961 = vunpack.c.h.b16 %v1773
    %v1962 = vunpack.c.l.b16 %v1774
    %v1963 = vunpack.c.h.b16 %v1774
    %v1964 = vunpack.c.l.b16 %v1775
    %v1965 = vunpack.c.h.b16 %v1775
    %v1966 = vunpack.c.l.b16 %v1776
    %v1967 = vunpack.c.h.b16 %v1776
    %v1968 = vunpack.c.l.b16 %v1777
    %v1969 = vunpack.c.h.b16 %v1777
    %v1970 = vunpack.c.l.b16 %v1778
    %v1971 = vunpack.c.h.b16 %v1778
    %v1972 = vunpack.c.l.b16 %v1779
    %v1973 = vunpack.c.h.b16 %v1779
    %v1974 = vunpack.c.l.b16 %v1780
    %v1975 = vunpack.c.h.b16 %v1780
    %v1976 = vunpack.c.l.b16 %v1781
    %v1977 = vunpack.c.h.b16 %v1781
    %v1978 = vunpack.c.l.b16 %v1782
    %v1979 = vunpack.c.h.b16 %v1782
    %v1980 = vunpack.c.l.b16 %v1783
    %v1981 = vunpack.c.h.b16 %v1783
    %v1982 = vunpack.c.l.b16 %v1784
    %v1983 = vunpack.c.h.b16 %v1784
    %v1984 = vunpack.c.l.b16 %v1785
    %v1985 = vunpack.c.h.b16 %v1785
    %v1986 = vunpack.c.l.b16 %v1786
    %v1987 = vunpack.c.h.b16 %v1786
    %v1988 = vunpack.c.l.b16 %v1787
    %v1989 = vunpack.c.h.b16 %v1787
    %v1990 = vunpack.c.l.b16 %v1788
    %v1991 = vunpack.c.h.b16 %v1788
    %v1992 = vunpack.c.l.b16 %v1789
    %v1993 = vunpack.c.h.b16 %v1789
    %v1994 = vunpack.c.l.b16 %v1790
    %v1995 = vunpack.c.h.b16 %v1790
    %v1996 = vunpack.c.l.b16 %v1791
    %v1997 = vunpack.c.h.b16 %v1791
    %v1998 = vunpack.c.l.b16 %v1792
    %v1999 = vunpack.c.h.b16 %v1792
    %v2000 = vunpack.c.l.b16 %v1793
    %v2001 = vunpack.c.h.b16 %v1793
    %v2002 = vunpack.c.l.b16 %v1794
    %v2003 = vunpack.c.h.b16 %v1794
    %v2004 = vunpack.c.l.b16 %v1795
    %v2005 = vunpack.c.h.b16 %v1795
    %v2006 = vunpack.c.l.b16 %v1796
    %v2007 = vunpack.c.h.b16 %v1796
    %v2008 = vunpack.c.l.b16 %v1797
    %v2009 = vunpack.c.h.b16 %v1797
    %v2010 = vunpack.c.l.b16 %v1798
    %v2011 = vunpack.c.h.b16 %v1798
    %v2012 = vunpack.c.l.b16 %v1799
    %v2013 = vunpack.c.h.b16 %v1799
    %v2014 = vunpack.c.l.b16 %v1800
    %v2015 = vunpack.c.h.b16 %v1800
    %v2016 = vunpack.c.l.b16 %v1801
    %v2017 = vunpack.c.h.b16 %v1801
    %v2018 = vunpack.c.l.b16 %v1802
    %v2019 = vunpack.c.h.b16 %v1802
    %v2020 = vunpack.c.l.b16 %v1803
    %v2021 = vunpack.c.h.b16 %v1803
    %v2022 = vunpack.c.l.b16 %v1804
    %v2023 = vunpack.c.h.b16 %v1804
    %v2024 = vunpack.c.l.b16 %v1805
    %v2025 = vunpack.c.h.b16 %v1805
    %v2026 = vunpack.c.l.b16 %v1806
    %v2027 = vunpack.c.h.b16 %v1806
    %v2028 = vunpack.c.l.b16 %v1807
    %v2029 = vunpack.c.h.b16 %v1807
    %v2030 = vunpack.c.l.b16 %v1808
    %v2031 = vunpack.c.h.b16 %v1808
    %v2032 = vpack.c.b16 %v1906, %v1904
    %v2033 = vpack.c.b16 %v1907, %v1905
    %v2034 = vpack.c.b16 %v1910, %v1908
    %v2035 = vpack.c.b16 %v1911, %v1909
    %v2036 = vpack.c.b16 %v1914, %v1912
    %v2037 = vpack.c.b16 %v1915, %v1913
    %v2038 = vpack.c.b16 %v1918, %v1916
    %v2039 = vpack.c.b16 %v1919, %v1917
    %v2040 = vpack.c.b16 %v1922, %v1920
    %v2041 = vpack.c.b16 %v1923, %v1921
    %v2042 = vpack.c.b16 %v1926, %v1924
    %v2043 = vpack.c.b16 %v1927, %v1925
    %v2044 = vpack.c.b16 %v1930, %v1928
    %v2045 = vpack.c.b16 %v1931, %v1929
    %v2046 = vpack.c.b16 %v1934, %v1932
    %v2047 = vpack.c.b16 %v1935, %v1933
    %v2048 = vpack.c.b16 %v1938, %v1936
    %v2049 = vpack.c.b16 %v1939, %v1937
    %v2050 = vpack.c.b16 %v1942, %v1940
    %v2051 = vpack.c.b16 %v1943, %v1941
    %v2052 = vpack.c.b16 %v1946, %v1944
    %v2053 = vpack.c.b16 %v1947, %v1945
    %v2054 = vpack.c.b16 %v1950, %v1948
    %v2055 = vpack.c.b16 %v1951, %v1949
    %v2056 = vpack.c.b16 %v1954, %v1952
    %v2057 = vpack.c.b16 %v1955, %v1953
    %v2058 = vpack.c.b16 %v1958, %v1956
    %v2059 = vpack.c.b16 %v1959, %v1957
    %v2060 = vpack.c.b16 %v1962, %v1960
    %v2061 = vpack.c.b16 %v1963, %v1961
    %v2062 = vpack.c.b16 %v1966, %v1964
    %v2063 = vpack.c.b16 %v1967, %v1965
    %v2064 = vpack.c.b16 %v1970, %v1968
    %v2065 = vpack.c.b16 %v1971, %v1969
    %v2066 = vpack.c.b16 %v1974, %v1972
    %v2067 = vpack.c.b16 %v1975, %v1973
    %v2068 = vpack.c.b16 %v1978, %v1976
    %v2069 = vpack.c.b16 %v1979, %v1977
    %v2070 = vpack.c.b16 %v1982, %v1980
    %v2071 = vpack.c.b16 %v1983, %v1981
    %v2072 = vpack.c.b16 %v1986, %v1984
    %v2073 = vpack.c.b16 %v1987, %v1985
    %v2074 = vpack.c.b16 %v1990, %v1988
    %v2075 = vpack.c.b16 %v1991, %v1989
    %v2076 = vpack.c.b16 %v1994, %v1992
    %v2077 = vpack.c.b16 %v1995, %v1993
    %v2078 = vpack.c.b16 %v1998, %v1996
    %v2079 = vpack.c.b16 %v1999, %v1997
    %v2080 = vpack.c.b16 %v2002, %v2000
    %v2081 = vpack.c.b16 %v2003, %v2001
    %v2082 = vpack.c.b16 %v2006, %v2004
    %v2083 = vpack.c.b16 %v2007, %v2005
    %v2084 = vpack.c.b16 %v2010, %v2008
    %v2085 = vpack.c.b16 %v2011, %v2009
    %v2086 = vpack.c.b16 %v2014, %v2012
    %v2087 = vpack.c.b16 %v2015, %v2013
    %v2088 = vpack.c.b16 %v2018, %v2016
    %v2089 = vpack.c.b16 %v2019, %v2017
    %v2090 = vpack.c.b16 %v2022, %v2020
    %v2091 = vpack.c.b16 %v2023, %v2021
    %v2092 = vpack.c.b16 %v2026, %v2024
    %v2093 = vpack.c.b16 %v2027, %v2025
    %v2094 = vpack.c.b16 %v2030, %v2028
    %v2095 = vpack.c.b16 %v2031, %v2029
    %2160 = vmatprep.subr.bf16.mxu0 %v2033
    %2161 = vmatpush1.bf16.msra.mxu0 %v2032
    %2162 = vmatprep.subr.bf16.mxu0 %v2035
    %2163 = vmatpush1.bf16.msra.mxu0 %v2034
    %2164 = vmatprep.subr.bf16.mxu0 %v2037
    %2165 = vmatpush1.bf16.msra.mxu0 %v2036
    %2166 = vmatprep.subr.bf16.mxu0 %v2039
    %2167 = vmatpush1.bf16.msra.mxu0 %v2038
    %2168 = vmatprep.subr.bf16.mxu0 %v2041
    %2169 = vmatpush1.bf16.msra.mxu0 %v2040
    %2170 = vmatprep.subr.bf16.mxu0 %v2043
    %2171 = vmatpush1.bf16.msra.mxu0 %v2042
    %2172 = vmatprep.subr.bf16.mxu0 %v2045
    %2173 = vmatpush1.bf16.msra.mxu0 %v2044
    %2174 = vmatprep.subr.bf16.mxu0 %v2047
    %2175 = vmatpush1.bf16.msra.mxu0 %v2046
    %2176 = vmatprep.subr.bf16.mxu0 %v2049
    %2177 = vmatpush1.bf16.msra.mxu0 %v2048
    %2178 = vmatprep.subr.bf16.mxu0 %v2051
    %2179 = vmatpush1.bf16.msra.mxu0 %v2050
    %2180 = vmatprep.subr.bf16.mxu0 %v2053
    %2181 = vmatpush1.bf16.msra.mxu0 %v2052
    %2182 = vmatprep.subr.bf16.mxu0 %v2055
    %2183 = vmatpush1.bf16.msra.mxu0 %v2054
    %2184 = vmatprep.subr.bf16.mxu0 %v2057
    %2185 = vmatpush1.bf16.msra.mxu0 %v2056
    %2186 = vmatprep.subr.bf16.mxu0 %v2059
    %2187 = vmatpush1.bf16.msra.mxu0 %v2058
    %2188 = vmatprep.subr.bf16.mxu0 %v2061
    %2189 = vmatpush1.bf16.msra.mxu0 %v2060
    %2190 = vmatprep.subr.bf16.mxu0 %v2063
    %2191 = vmatpush1.bf16.msra.mxu0 %v2062
    %2192 = vmatprep.mubr.bf16.mxu0 %v1825
    %2193 = vmatmul.mubr.bf16.gmra.mrb[0].mxu0 %v1822
    %v2194 = vpop.f32.mrb[0].mxu0
    %v2195 = vadd.f32 0.0, %v2194
    %v2196 = vpop.f32.mrb[0].mxu0
    %v2197 = vadd.f32 0.0, %v2196
    %v2198 = vpop.f32.mrb[0].mxu0
    %v2199 = vadd.f32 0.0, %v2198
    %v2200 = vpop.f32.mrb[0].mxu0
    %v2201 = vadd.f32 0.0, %v2200
    %2202 = vmatprep.mubr.bf16.mxu0 %v1824
    %2203 = vmatmul.mubr.bf16.gmra.mrb[0].mxu0 %v1821
    %v2204 = vpop.f32.mrb[0].mxu0
    %v2205 = vadd.f32 0.0, %v2204
    %v2206 = vpop.f32.mrb[0].mxu0
    %v2207 = vadd.f32 0.0, %v2206
    %v2208 = vpop.f32.mrb[0].mxu0
    %v2209 = vpop.f32.mrb[0].mxu0
    %2210 = vdwg.mxu0
    %2211 = vmatprep.subr.bf16.mxu0 %v2065
    %2212 = vmatpush1.bf16.msra.mxu0 %v2064
    %2213 = vmatprep.subr.bf16.mxu0 %v2067
    %2214 = vmatpush1.bf16.msra.mxu0 %v2066
    %2215 = vmatprep.subr.bf16.mxu0 %v2069
    %2216 = vmatpush1.bf16.msra.mxu0 %v2068
    %2217 = vmatprep.subr.bf16.mxu0 %v2071
    %2218 = vmatpush1.bf16.msra.mxu0 %v2070
    %2219 = vmatprep.subr.bf16.mxu0 %v2073
    %2220 = vmatpush1.bf16.msra.mxu0 %v2072
    %2221 = vmatprep.subr.bf16.mxu0 %v2075
    %2222 = vmatpush1.bf16.msra.mxu0 %v2074
    %2223 = vmatprep.subr.bf16.mxu0 %v2077
    %2224 = vmatpush1.bf16.msra.mxu0 %v2076
    %2225 = vmatprep.subr.bf16.mxu0 %v2079
    %2226 = vmatpush1.bf16.msra.mxu0 %v2078
    %2227 = vmatprep.subr.bf16.mxu0 %v2081
    %2228 = vmatpush1.bf16.msra.mxu0 %v2080
    %2229 = vmatprep.subr.bf16.mxu0 %v2083
    %2230 = vmatpush1.bf16.msra.mxu0 %v2082
    %2231 = vmatprep.subr.bf16.mxu0 %v2085
    %2232 = vmatpush1.bf16.msra.mxu0 %v2084
    %2233 = vmatprep.subr.bf16.mxu0 %v2087
    %2234 = vmatpush1.bf16.msra.mxu0 %v2086
    %2235 = vmatprep.subr.bf16.mxu0 %v2089
    %2236 = vmatpush1.bf16.msra.mxu0 %v2088
    %2237 = vmatprep.subr.bf16.mxu0 %v2091
    %2238 = vmatpush1.bf16.msra.mxu0 %v2090
    %2239 = vmatprep.subr.bf16.mxu0 %v2093
    %2240 = vmatpush1.bf16.msra.mxu0 %v2092
    %2241 = vmatprep.subr.bf16.mxu0 %v2095
    %2242 = vmatpush1.bf16.msra.mxu0 %v2094
    %2243 = vmatprep.mubr.bf16.mxu0 %v1831
    %2244 = vmatmul.mubr.bf16.gmra.mrb[0].mxu0 %v1828
    %v2245 = vpop.f32.mrb[0].mxu0
    %v2246 = vadd.f32 %v2195, %v2245
    %v2247 = vpop.f32.mrb[0].mxu0
    %v2248 = vadd.f32 %v2197, %v2247
    %v2249 = vpop.f32.mrb[0].mxu0
    %v2250 = vadd.f32 %v2199, %v2249
    %v2251 = vpop.f32.mrb[0].mxu0
    %v2252 = vadd.f32 %v2201, %v2251
    %2253 = vmatprep.mubr.bf16.mxu0 %v1830
    %2254 = vmatmul.mubr.bf16.gmra.mrb[0].mxu0 %v1827
    %v2255 = vpop.f32.mrb[0].mxu0
    %v2256 = vadd.f32 %v2205, %v2255
    %v2257 = vpop.f32.mrb[0].mxu0
    %v2258 = vadd.f32 %v2207, %v2257
    %v2259 = vpop.f32.mrb[0].mxu0
    %v2260 = vpop.f32.mrb[0].mxu0
    %2261 = vdwg.mxu0
    %v2262 = vadd.f32 %v1736, %v2246
    %v2263 = vadd.f32 %v1737, %v2248
    %v2264 = vadd.f32 %v1738, %v2250
    %v2265 = vadd.f32 %v1739, %v2252
    %v2266 = vadd.f32 %v1740, %v2256
    %v2267 = vadd.f32 %v1741, %v2258
    %v2268 = vld [vmem:[#allocation7] sm:$0x3]
    %v2270 = vlaneseq
    %v2271 = vshrl.u32 %v2270, 7
    %v2272 = vsub.s32 0, %v2271
    %v2273 = vrot.slane %v2268, %v2272
    %v2274 = vlaneseq
    %v2275 = vshrl.u32 %v2274, 7
    %v2276 = vsub.s32 1, %v2275
    %v2277 = vrot.slane %v2268, %v2276
    %v2280 = vadd.f32 %v2262, %v2273
    %v2281 = vadd.f32 %v2263, %v2277
    %v2282 = vadd.f32 %v2264, %v2273
    %v2283 = vadd.f32 %v2265, %v2277
    %v2284 = vadd.f32 %v2266, %v2273
    %v2285 = vadd.f32 %v2267, %v2277
    %vm2286 = vcmp.gt.f32.partialorder %v2280, 0.0
    %vm2287 = vcmp.gt.f32.partialorder %v2281, 0.0
    %vm2288 = vcmp.gt.f32.partialorder %v2282, 0.0
    %vm2289 = vcmp.gt.f32.partialorder %v2283, 0.0
    %vm2290 = vcmp.gt.f32.partialorder %v2284, 0.0
    %vm2291 = vcmp.gt.f32.partialorder %v2285, 0.0
    %v2292 = vmul.f32 %v2280, 0.01
    %v2293 = vmul.f32 %v2281, 0.01
    %v2294 = vmul.f32 %v2282, 0.01
    %v2295 = vmul.f32 %v2283, 0.01
    %v2296 = vmul.f32 %v2284, 0.01
    %v2297 = vmul.f32 %v2285, 0.01
    %v2298 = vsel %vm2286, %v2280, %v2292
    %v2299 = vsel %vm2287, %v2281, %v2293
    %v2300 = vsel %vm2288, %v2282, %v2294
    %v2301 = vsel %vm2289, %v2283, %v2295
    %v2302 = vsel %vm2290, %v2284, %v2296
    %v2303 = vsel %vm2291, %v2285, %v2297
    %v2304 = vpack.c.bf16 %v2300, %v2298
    %v2305 = vpack.c.bf16 %v2301, %v2299
    %v2306 = vpack.c.bf16 %v2302, %v2302
    %v2307 = vpack.c.bf16 %v2303, %v2303
    %v2312 = vunpack.c.l.b16 %v2304
    %v2313 = vunpack.c.l.b16 %v2305
    %v2314 = vunpack.c.h.b16 %v2304
    %v2315 = vunpack.c.h.b16 %v2305
    %v2316 = vunpack.c.l.b16 %v2306
    %v2317 = vunpack.c.l.b16 %v2307
    %v2318 = vpack.c.b16 %v2313, %v2312
    %v2319 = vpack.c.b16 %v2315, %v2314
    %v2320 = vpack.c.b16 %v2317, %v2316
    %2324 = vst [vmem:[#allocation8] sm:$0xff] %v2318
    %2325 = vst [vmem:[#allocation8 + $0x8] sm:$0xff] %v2319
    %2326 = vst [vmem:[#allocation8 + $0x10] sm:$0x11] %v2320
    // Predicated region
    $region26: #{bc_visual_policy_stochastic_forward.6} parent=1 // pred_check
      _
    $region27: #{bc_visual_policy_stochastic_forward.6} parent=1 // pred_check_branch
      %2328 = sbr.rel (0) target = $region29
    $region28: #{bc_visual_policy_stochastic_forward.6} parent=1 // pred_region
      %s2330 = ssub.s32 384, 384
      %2331 = vsyncadd [#allocation4], %s2330
      %s2332 = sshll.u32 [#allocation8], 4
      %s2333 = int_to_ptr.vmem [resolvable:$true] %s2332
      %2338 = dma.vmem_to_hbm [thread:$0]  %s2333, 384, %s3, [#allocation4], 128, 128, 8
    $region29: #{bc_visual_policy_stochastic_forward.6} parent=1 // pred_fallthru
      _
    // Predicated region
    $region30: #{bc_visual_policy_stochastic_forward.6} parent=1 // pred_check
      _
    $region31: #{bc_visual_policy_stochastic_forward.6} parent=1 // pred_check_branch
      %2340 = sbr.rel (0) target = $region33
    $region32: #{bc_visual_policy_stochastic_forward.6} parent=1 // pred_region
      %2341 = dma.done [#allocation4], 384
    $region33: #{bc_visual_policy_stochastic_forward.6} parent=1 // pred_fallthru
      _
    %2342 = vsyncpa [#allocation3], 1
    %2343 = vsyncpa [#allocation6], 1
    %2344 = vsyncpa [#allocation4], 1

// kernel: bc_visual_policy_stochastic_forward.7
$region0: #{bc_visual_policy_stochastic_forward.7}
  #allocation0 [shape = 'u32[]', space=smem, size = 0x4, offset = 0x4, fixed_abs, tag = 'smem constant byte address 0x4 - core index']
  #allocation1 [shape = 'u32[144,128]{1,0:T(1,128)}', space=vmem, size = 0x12000, scoped, tag = 'internal scratch']
  %s0 = inlined_call_operand.hbm [shape: bf16[2,1024], index: 0, kind: input, shape index: {}]
  %s1 = inlined_call_operand.hbm [shape: bf16[1024,256], index: 1, kind: input, shape index: {}]
  %s2 = inlined_call_operand.hbm [shape: f32[1,256], index: 2, kind: input, shape index: {}]
  %s3 = inlined_call_operand.hbm [shape: bf16[256,256], index: 3, kind: input, shape index: {}]
  %s4 = inlined_call_operand.hbm [shape: f32[1,256], index: 4, kind: input, shape index: {}]
  %s5 = inlined_call_operand.hbm [shape: bf16[256,256], index: 5, kind: input, shape index: {}]
  %s6 = inlined_call_operand.hbm [shape: f32[1,256], index: 6, kind: input, shape index: {}]
  %s7 = inlined_call_operand.hbm [shape: bf16[256,256], index: 7, kind: input, shape index: {}]
  %s8 = inlined_call_operand.hbm [shape: f32[1,256], index: 8, kind: input, shape index: {}]
  %s9 = inlined_call_operand.hbm [shape: f32[2,128], index: 9, kind: input, shape index: {}]
  %s10 = inlined_call_operand.hbm [shape: f32[2,128], index: 10, kind: output, shape index: {}]
  %s11 = sld [smem:[#allocation0]]
  $region90: #{bc_visual_policy_stochastic_forward.7} parent=0
    _
  %s13 = ssub.s32 1, %s11
  %s14 = scalar_select 0, %s13, %s11
  $region1: #{bc_visual_policy_stochastic_forward.7} parent=0
    #allocation2 [shape = 'u8[4096]{0}', space=vmem, size = 0x1000, scoped, tag = 'input window, operand 0, single buffered']
    #allocation3 [shape = 's32[1]{0}', space=sflag, size = 0x4, scoped, tag = 'scoped memory for bc_visual_policy_stochastic_forward.7']
    #allocation4 [shape = 's32[1]{0}', space=sflag, size = 0x4, scoped, tag = 'scoped memory for bc_visual_policy_stochastic_forward.7']
    #allocation5 [shape = 'u8[524288]{0}', space=vmem, size = 0x80000, scoped, tag = 'input window, operand 1, single buffered']
    #allocation6 [shape = 's32[1]{0}', space=sflag, size = 0x4, scoped, tag = 'scoped memory for bc_visual_policy_stochastic_forward.7']
    #allocation7 [shape = 'u8[1024]{0}', space=vmem, size = 0x400, scoped, tag = 'input window, operand 2, single buffered']
    #allocation8 [shape = 'u8[131072]{0}', space=vmem, size = 0x20000, scoped, tag = 'input window, operand 3, single buffered']
    #allocation9 [shape = 's32[1]{0}', space=sflag, size = 0x4, scoped, tag = 'scoped memory for bc_visual_policy_stochastic_forward.7']
    #allocation10 [shape = 'u8[1024]{0}', space=vmem, size = 0x400, scoped, tag = 'input window, operand 4, single buffered']
    #allocation11 [shape = 'u8[131072]{0}', space=vmem, size = 0x20000, scoped, tag = 'input window, operand 5, single buffered']
    #allocation12 [shape = 's32[1]{0}', space=sflag, size = 0x4, scoped, tag = 'scoped memory for bc_visual_policy_stochastic_forward.7']
    #allocation13 [shape = 'u8[1024]{0}', space=vmem, size = 0x400, scoped, tag = 'input window, operand 6, single buffered']
    #allocation14 [shape = 'u8[131072]{0}', space=vmem, size = 0x20000, scoped, tag = 'input window, operand 7, single buffered']
    #allocation15 [shape = 's32[1]{0}', space=sflag, size = 0x4, scoped, tag = 'scoped memory for bc_visual_policy_stochastic_forward.7']
    #allocation16 [shape = 'u8[1024]{0}', space=vmem, size = 0x400, scoped, tag = 'input window, operand 8, single buffered']
    #allocation17 [shape = 'u8[1024]{0}', space=vmem, size = 0x400, scoped, tag = 'input window, operand 9, single buffered']
    #allocation18 [shape = 's32[1]{0}', space=sflag, size = 0x4, scoped, tag = 'scoped memory for bc_visual_policy_stochastic_forward.7']
    #allocation19 [shape = 'u8[1024]{0}', space=vmem, size = 0x400, scoped, tag = 'output window, operand 0, single buffered']
    %15 = vsyncpa [#allocation3], 0
    %16 = vsyncpa [#allocation6], 0
    %17 = vsyncpa [#allocation9], 0
    %18 = vsyncpa [#allocation12], 0
    %19 = vsyncpa [#allocation15], 0
    %20 = vsyncpa [#allocation18], 0
    %21 = vsyncpa [#allocation4], 0
    // Predicated region
    $region2: #{bc_visual_policy_stochastic_forward.7} parent=1 // pred_check
      _
    $region3: #{bc_visual_policy_stochastic_forward.7} parent=1 // pred_check_branch
      %23 = sbr.rel (0) target = $region5
    $region4: #{bc_visual_policy_stochastic_forward.7} parent=1 // pred_region
      %s25 = ssub.s32 128, 128
      %26 = vsyncadd [#allocation3], %s25
      %s28 = sshll.u32 [#allocation2], 4
      %s29 = int_to_ptr.vmem [resolvable:$true] %s28
      %31 = dma.hbm_to_vmem [thread:$0]  %s0, 128, %s29, [#allocation3]
    $region5: #{bc_visual_policy_stochastic_forward.7} parent=1 // pred_fallthru
      _
    // Predicated region
    $region6: #{bc_visual_policy_stochastic_forward.7} parent=1 // pred_check
      _
    $region7: #{bc_visual_policy_stochastic_forward.7} parent=1 // pred_check_branch
      %33 = sbr.rel (0) target = $region9
    $region8: #{bc_visual_policy_stochastic_forward.7} parent=1 // pred_region
      %s35 = ssub.s32 16384, 16384
      %36 = vsyncadd [#allocation6], %s35
      %s37 = sshll.u32 [#allocation5], 4
      %s38 = int_to_ptr.vmem [resolvable:$true] %s37
      %43 = dma.hbm_to_vmem [thread:$0]  %s1, 16384, %s38, [#allocation6], 128, 128, 8
    $region9: #{bc_visual_policy_stochastic_forward.7} parent=1 // pred_fallthru
      _
    // Predicated region
    $region10: #{bc_visual_policy_stochastic_forward.7} parent=1 // pred_check
      _
    $region11: #{bc_visual_policy_stochastic_forward.7} parent=1 // pred_check_branch
      %45 = sbr.rel (0) target = $region13
    $region12: #{bc_visual_policy_stochastic_forward.7} parent=1 // pred_region
      %s47 = ssub.s32 32, 32
      %48 = vsyncadd [#allocation6], %s47
      %s50 = sshll.u32 [#allocation7], 4
      %s51 = int_to_ptr.vmem [resolvable:$true] %s50
      %53 = dma.hbm_to_vmem [thread:$0]  %s2, 32, %s51, [#allocation6]
    $region13: #{bc_visual_policy_stochastic_forward.7} parent=1 // pred_fallthru
      _
    // Predicated region
    $region14: #{bc_visual_policy_stochastic_forward.7} parent=1 // pred_check
      _
    $region15: #{bc_visual_policy_stochastic_forward.7} parent=1 // pred_check_branch
      %55 = sbr.rel (0) target = $region17
    $region16: #{bc_visual_policy_stochastic_forward.7} parent=1 // pred_region
      %s57 = ssub.s32 4096, 4096
      %58 = vsyncadd [#allocation9], %s57
      %s59 = sshll.u32 [#allocation8], 4
      %s60 = int_to_ptr.vmem [resolvable:$true] %s59
      %65 = dma.hbm_to_vmem [thread:$0]  %s3, 4096, %s60, [#allocation9], 128, 128, 8
    $region17: #{bc_visual_policy_stochastic_forward.7} parent=1 // pred_fallthru
      _
    // Predicated region
    $region18: #{bc_visual_policy_stochastic_forward.7} parent=1 // pred_check
      _
    $region19: #{bc_visual_policy_stochastic_forward.7} parent=1 // pred_check_branch
      %67 = sbr.rel (0) target = $region21
    $region20: #{bc_visual_policy_stochastic_forward.7} parent=1 // pred_region
      %s69 = ssub.s32 32, 32
      %70 = vsyncadd [#allocation9], %s69
      %s72 = sshll.u32 [#allocation10], 4
      %s73 = int_to_ptr.vmem [resolvable:$true] %s72
      %75 = dma.hbm_to_vmem [thread:$0]  %s4, 32, %s73, [#allocation9]
    $region21: #{bc_visual_policy_stochastic_forward.7} parent=1 // pred_fallthru
      _
    // Predicated region
    $region22: #{bc_visual_policy_stochastic_forward.7} parent=1 // pred_check
      _
    $region23: #{bc_visual_policy_stochastic_forward.7} parent=1 // pred_check_branch
      %77 = sbr.rel (0) target = $region25
    $region24: #{bc_visual_policy_stochastic_forward.7} parent=1 // pred_region
      %s79 = ssub.s32 4096, 4096
      %80 = vsyncadd [#allocation12], %s79
      %s81 = sshll.u32 [#allocation11], 4
      %s82 = int_to_ptr.vmem [resolvable:$true] %s81
      %87 = dma.hbm_to_vmem [thread:$0]  %s5, 4096, %s82, [#allocation12], 128, 128, 8
    $region25: #{bc_visual_policy_stochastic_forward.7} parent=1 // pred_fallthru
      _
    // Predicated region
    $region26: #{bc_visual_policy_stochastic_forward.7} parent=1 // pred_check
      _
    $region27: #{bc_visual_policy_stochastic_forward.7} parent=1 // pred_check_branch
      %89 = sbr.rel (0) target = $region29
    $region28: #{bc_visual_policy_stochastic_forward.7} parent=1 // pred_region
      %s91 = ssub.s32 32, 32
      %92 = vsyncadd [#allocation12], %s91
      %s94 = sshll.u32 [#allocation13], 4
      %s95 = int_to_ptr.vmem [resolvable:$true] %s94
      %97 = dma.hbm_to_vmem [thread:$0]  %s6, 32, %s95, [#allocation12]
    $region29: #{bc_visual_policy_stochastic_forward.7} parent=1 // pred_fallthru
      _
    // Predicated region
    $region30: #{bc_visual_policy_stochastic_forward.7} parent=1 // pred_check
      _
    $region31: #{bc_visual_policy_stochastic_forward.7} parent=1 // pred_check_branch
      %99 = sbr.rel (0) target = $region33
    $region32: #{bc_visual_policy_stochastic_forward.7} parent=1 // pred_region
      %s101 = ssub.s32 4096, 4096
      %102 = vsyncadd [#allocation15], %s101
      %s103 = sshll.u32 [#allocation14], 4
      %s104 = int_to_ptr.vmem [resolvable:$true] %s103
      %109 = dma.hbm_to_vmem [thread:$0]  %s7, 4096, %s104, [#allocation15], 128, 128, 8
    $region33: #{bc_visual_policy_stochastic_forward.7} parent=1 // pred_fallthru
      _
    // Predicated region
    $region34: #{bc_visual_policy_stochastic_forward.7} parent=1 // pred_check
      _
    $region35: #{bc_visual_policy_stochastic_forward.7} parent=1 // pred_check_branch
      %111 = sbr.rel (0) target = $region37
    $region36: #{bc_visual_policy_stochastic_forward.7} parent=1 // pred_region
      %s113 = ssub.s32 32, 32
      %114 = vsyncadd [#allocation15], %s113
      %s116 = sshll.u32 [#allocation16], 4
      %s117 = int_to_ptr.vmem [resolvable:$true] %s116
      %119 = dma.hbm_to_vmem [thread:$0]  %s8, 32, %s117, [#allocation15]
    $region37: #{bc_visual_policy_stochastic_forward.7} parent=1 // pred_fallthru
      _
    // Predicated region
    $region38: #{bc_visual_policy_stochastic_forward.7} parent=1 // pred_check
      _
    $region39: #{bc_visual_policy_stochastic_forward.7} parent=1 // pred_check_branch
      %121 = sbr.rel (0) target = $region41
    $region40: #{bc_visual_policy_stochastic_forward.7} parent=1 // pred_region
      %s123 = ssub.s32 32, 32
      %124 = vsyncadd [#allocation18], %s123
      %s126 = sshll.u32 [#allocation17], 4
      %s127 = int_to_ptr.vmem [resolvable:$true] %s126
      %129 = dma.hbm_to_vmem [thread:$0]  %s9, 32, %s127, [#allocation18]
    $region41: #{bc_visual_policy_stochastic_forward.7} parent=1 // pred_fallthru
      _
    // Predicated region
    $region42: #{bc_visual_policy_stochastic_forward.7} parent=1 // pred_check
      _
    $region43: #{bc_visual_policy_stochastic_forward.7} parent=1 // pred_check_branch
      %131 = sbr.rel (0) target = $region45
    $region44: #{bc_visual_policy_stochastic_forward.7} parent=1 // pred_region
      %132 = dma.done [#allocation3], 128
    $region45: #{bc_visual_policy_stochastic_forward.7} parent=1 // pred_fallthru
      _
    // Predicated region
    $region46: #{bc_visual_policy_stochastic_forward.7} parent=1 // pred_check
      _
    $region47: #{bc_visual_policy_stochastic_forward.7} parent=1 // pred_check_branch
      %134 = sbr.rel (0) target = $region49
    $region48: #{bc_visual_policy_stochastic_forward.7} parent=1 // pred_region
      %135 = dma.done [#allocation6], 16384
    $region49: #{bc_visual_policy_stochastic_forward.7} parent=1 // pred_fallthru
      _
    // Predicated region
    $region50: #{bc_visual_policy_stochastic_forward.7} parent=1 // pred_check
      _
    $region51: #{bc_visual_policy_stochastic_forward.7} parent=1 // pred_check_branch
      %137 = sbr.rel (0) target = $region53
    $region52: #{bc_visual_policy_stochastic_forward.7} parent=1 // pred_region
      %138 = dma.done [#allocation6], 32
    $region53: #{bc_visual_policy_stochastic_forward.7} parent=1 // pred_fallthru
      _
    // Predicated region
    $region54: #{bc_visual_policy_stochastic_forward.7} parent=1 // pred_check
      _
    $region55: #{bc_visual_policy_stochastic_forward.7} parent=1 // pred_check_branch
      %140 = sbr.rel (0) target = $region57
    $region56: #{bc_visual_policy_stochastic_forward.7} parent=1 // pred_region
      %141 = dma.done [#allocation9], 4096
    $region57: #{bc_visual_policy_stochastic_forward.7} parent=1 // pred_fallthru
      _
    // Predicated region
    $region58: #{bc_visual_policy_stochastic_forward.7} parent=1 // pred_check
      _
    $region59: #{bc_visual_policy_stochastic_forward.7} parent=1 // pred_check_branch
      %143 = sbr.rel (0) target = $region61
    $region60: #{bc_visual_policy_stochastic_forward.7} parent=1 // pred_region
      %144 = dma.done [#allocation9], 32
    $region61: #{bc_visual_policy_stochastic_forward.7} parent=1 // pred_fallthru
      _
    // Predicated region
    $region62: #{bc_visual_policy_stochastic_forward.7} parent=1 // pred_check
      _
    $region63: #{bc_visual_policy_stochastic_forward.7} parent=1 // pred_check_branch
      %146 = sbr.rel (0) target = $region65
    $region64: #{bc_visual_policy_stochastic_forward.7} parent=1 // pred_region
      %147 = dma.done [#allocation12], 4096
    $region65: #{bc_visual_policy_stochastic_forward.7} parent=1 // pred_fallthru
      _
    // Predicated region
    $region66: #{bc_visual_policy_stochastic_forward.7} parent=1 // pred_check
      _
    $region67: #{bc_visual_policy_stochastic_forward.7} parent=1 // pred_check_branch
      %149 = sbr.rel (0) target = $region69
    $region68: #{bc_visual_policy_stochastic_forward.7} parent=1 // pred_region
      %150 = dma.done [#allocation12], 32
    $region69: #{bc_visual_policy_stochastic_forward.7} parent=1 // pred_fallthru
      _
    // Predicated region
    $region70: #{bc_visual_policy_stochastic_forward.7} parent=1 // pred_check
      _
    $region71: #{bc_visual_policy_stochastic_forward.7} parent=1 // pred_check_branch
      %152 = sbr.rel (0) target = $region73
    $region72: #{bc_visual_policy_stochastic_forward.7} parent=1 // pred_region
      %153 = dma.done [#allocation15], 4096
    $region73: #{bc_visual_policy_stochastic_forward.7} parent=1 // pred_fallthru
      _
    // Predicated region
    $region74: #{bc_visual_policy_stochastic_forward.7} parent=1 // pred_check
      _
    $region75: #{bc_visual_policy_stochastic_forward.7} parent=1 // pred_check_branch
      %155 = sbr.rel (0) target = $region77
    $region76: #{bc_visual_policy_stochastic_forward.7} parent=1 // pred_region
      %156 = dma.done [#allocation15], 32
    $region77: #{bc_visual_policy_stochastic_forward.7} parent=1 // pred_fallthru
      _
    // Predicated region
    $region78: #{bc_visual_policy_stochastic_forward.7} parent=1 // pred_check
      _
    $region79: #{bc_visual_policy_stochastic_forward.7} parent=1 // pred_check_branch
      %158 = sbr.rel (0) target = $region81
    $region80: #{bc_visual_policy_stochastic_forward.7} parent=1 // pred_region
      %159 = dma.done [#allocation18], 32
    $region81: #{bc_visual_policy_stochastic_forward.7} parent=1 // pred_fallthru
      _
    %v160 = vld [vmem:[#allocation2] sm:$0xff]
    %v161 = vld [vmem:[#allocation5] sm:$0xff]
    %v162 = vld [vmem:[#allocation5 + $0x8] sm:$0xff]
    %v163 = vld [vmem:[#allocation5 + $0x10] sm:$0xff]
    %v164 = vld [vmem:[#allocation5 + $0x18] sm:$0xff]
    %v165 = vld [vmem:[#allocation5 + $0x20] sm:$0xff]
    %v166 = vld [vmem:[#allocation5 + $0x28] sm:$0xff]
    %v167 = vld [vmem:[#allocation5 + $0x30] sm:$0xff]
    %v168 = vld [vmem:[#allocation5 + $0x38] sm:$0xff]
    %v169 = vld [vmem:[#allocation5 + $0x40] sm:$0xff]
    %v170 = vld [vmem:[#allocation5 + $0x48] sm:$0xff]
    %v171 = vld [vmem:[#allocation5 + $0x50] sm:$0xff]
    %v172 = vld [vmem:[#allocation5 + $0x58] sm:$0xff]
    %v173 = vld [vmem:[#allocation5 + $0x60] sm:$0xff]
    %v174 = vld [vmem:[#allocation5 + $0x68] sm:$0xff]
    %v175 = vld [vmem:[#allocation5 + $0x70] sm:$0xff]
    %v176 = vld [vmem:[#allocation5 + $0x78] sm:$0xff]
    %v177 = vld [vmem:[#allocation5 + $0x80] sm:$0xff]
    %v178 = vld [vmem:[#allocation5 + $0x88] sm:$0xff]
    %v179 = vld [vmem:[#allocation5 + $0x90] sm:$0xff]
    %v180 = vld [vmem:[#allocation5 + $0x98] sm:$0xff]
    %v181 = vld [vmem:[#allocation5 + $0xa0] sm:$0xff]
    %v182 = vld [vmem:[#allocation5 + $0xa8] sm:$0xff]
    %v183 = vld [vmem:[#allocation5 + $0xb0] sm:$0xff]
    %v184 = vld [vmem:[#allocation5 + $0xb8] sm:$0xff]
    %v185 = vld [vmem:[#allocation5 + $0xc0] sm:$0xff]
    %v186 = vld [vmem:[#allocation5 + $0xc8] sm:$0xff]
    %v187 = vld [vmem:[#allocation5 + $0xd0] sm:$0xff]
    %v188 = vld [vmem:[#allocation5 + $0xd8] sm:$0xff]
    %v189 = vld [vmem:[#allocation5 + $0xe0] sm:$0xff]
    %v190 = vld [vmem:[#allocation5 + $0xe8] sm:$0xff]
    %v191 = vld [vmem:[#allocation5 + $0xf0] sm:$0xff]
    %v192 = vld [vmem:[#allocation5 + $0xf8] sm:$0xff]
    %v193 = vld [vmem:[#allocation5 + $0x100] sm:$0xff]
    %v194 = vld [vmem:[#allocation5 + $0x108] sm:$0xff]
    %v195 = vld [vmem:[#allocation5 + $0x110] sm:$0xff]
    %v196 = vld [vmem:[#allocation5 + $0x118] sm:$0xff]
    %v197 = vld [vmem:[#allocation5 + $0x120] sm:$0xff]
    %v198 = vld [vmem:[#allocation5 + $0x128] sm:$0xff]
    %v199 = vld [vmem:[#allocation5 + $0x130] sm:$0xff]
    %v200 = vld [vmem:[#allocation5 + $0x138] sm:$0xff]
    %v201 = vld [vmem:[#allocation5 + $0x140] sm:$0xff]
    %v202 = vld [vmem:[#allocation5 + $0x148] sm:$0xff]
    %v203 = vld [vmem:[#allocation5 + $0x150] sm:$0xff]
    %v204 = vld [vmem:[#allocation5 + $0x158] sm:$0xff]
    %v205 = vld [vmem:[#allocation5 + $0x160] sm:$0xff]
    %v206 = vld [vmem:[#allocation5 + $0x168] sm:$0xff]
    %v207 = vld [vmem:[#allocation5 + $0x170] sm:$0xff]
    %v208 = vld [vmem:[#allocation5 + $0x178] sm:$0xff]
    %v209 = vld [vmem:[#allocation5 + $0x180] sm:$0xff]
    %v210 = vld [vmem:[#allocation5 + $0x188] sm:$0xff]
    %v211 = vld [vmem:[#allocation5 + $0x190] sm:$0xff]
    %v212 = vld [vmem:[#allocation5 + $0x198] sm:$0xff]
    %v213 = vld [vmem:[#allocation5 + $0x1a0] sm:$0xff]
    %v214 = vld [vmem:[#allocation5 + $0x1a8] sm:$0xff]
    %v215 = vld [vmem:[#allocation5 + $0x1b0] sm:$0xff]
    %v216 = vld [vmem:[#allocation5 + $0x1b8] sm:$0xff]
    %v217 = vld [vmem:[#allocation5 + $0x1c0] sm:$0xff]
    %v218 = vld [vmem:[#allocation5 + $0x1c8] sm:$0xff]
    %v219 = vld [vmem:[#allocation5 + $0x1d0] sm:$0xff]
    %v220 = vld [vmem:[#allocation5 + $0x1d8] sm:$0xff]
    %v221 = vld [vmem:[#allocation5 + $0x1e0] sm:$0xff]
    %v222 = vld [vmem:[#allocation5 + $0x1e8] sm:$0xff]
    %v223 = vld [vmem:[#allocation5 + $0x1f0] sm:$0xff]
    %v224 = vld [vmem:[#allocation5 + $0x1f8] sm:$0xff]
    %v225 = vld [vmem:[#allocation5 + $0x200] sm:$0xff]
    %v226 = vld [vmem:[#allocation5 + $0x208] sm:$0xff]
    %v227 = vld [vmem:[#allocation5 + $0x210] sm:$0xff]
    %v228 = vld [vmem:[#allocation5 + $0x218] sm:$0xff]
    %v229 = vld [vmem:[#allocation5 + $0x220] sm:$0xff]
    %v230 = vld [vmem:[#allocation5 + $0x228] sm:$0xff]
    %v231 = vld [vmem:[#allocation5 + $0x230] sm:$0xff]
    %v232 = vld [vmem:[#allocation5 + $0x238] sm:$0xff]
    %v233 = vld [vmem:[#allocation5 + $0x240] sm:$0xff]
    %v234 = vld [vmem:[#allocation5 + $0x248] sm:$0xff]
    %v235 = vld [vmem:[#allocation5 + $0x250] sm:$0xff]
    %v236 = vld [vmem:[#allocation5 + $0x258] sm:$0xff]
    %v237 = vld [vmem:[#allocation5 + $0x260] sm:$0xff]
    %v238 = vld [vmem:[#allocation5 + $0x268] sm:$0xff]
    %v239 = vld [vmem:[#allocation5 + $0x270] sm:$0xff]
    %v240 = vld [vmem:[#allocation5 + $0x278] sm:$0xff]
    %v241 = vld [vmem:[#allocation5 + $0x280] sm:$0xff]
    %v242 = vld [vmem:[#allocation5 + $0x288] sm:$0xff]
    %v243 = vld [vmem:[#allocation5 + $0x290] sm:$0xff]
    %v244 = vld [vmem:[#allocation5 + $0x298] sm:$0xff]
    %v245 = vld [vmem:[#allocation5 + $0x2a0] sm:$0xff]
    %v246 = vld [vmem:[#allocation5 + $0x2a8] sm:$0xff]
    %v247 = vld [vmem:[#allocation5 + $0x2b0] sm:$0xff]
    %v248 = vld [vmem:[#allocation5 + $0x2b8] sm:$0xff]
    %v249 = vld [vmem:[#allocation5 + $0x2c0] sm:$0xff]
    %v250 = vld [vmem:[#allocation5 + $0x2c8] sm:$0xff]
    %v251 = vld [vmem:[#allocation5 + $0x2d0] sm:$0xff]
    %v252 = vld [vmem:[#allocation5 + $0x2d8] sm:$0xff]
    %v253 = vld [vmem:[#allocation5 + $0x2e0] sm:$0xff]
    %v254 = vld [vmem:[#allocation5 + $0x2e8] sm:$0xff]
    %v255 = vld [vmem:[#allocation5 + $0x2f0] sm:$0xff]
    %v256 = vld [vmem:[#allocation5 + $0x2f8] sm:$0xff]
    %v257 = vld [vmem:[#allocation5 + $0x300] sm:$0xff]
    %v258 = vld [vmem:[#allocation5 + $0x308] sm:$0xff]
    %v259 = vld [vmem:[#allocation5 + $0x310] sm:$0xff]
    %v260 = vld [vmem:[#allocation5 + $0x318] sm:$0xff]
    %v261 = vld [vmem:[#allocation5 + $0x320] sm:$0xff]
    %v262 = vld [vmem:[#allocation5 + $0x328] sm:$0xff]
    %v263 = vld [vmem:[#allocation5 + $0x330] sm:$0xff]
    %v264 = vld [vmem:[#allocation5 + $0x338] sm:$0xff]
    %v265 = vld [vmem:[#allocation5 + $0x340] sm:$0xff]
    %v266 = vld [vmem:[#allocation5 + $0x348] sm:$0xff]
    %v267 = vld [vmem:[#allocation5 + $0x350] sm:$0xff]
    %v268 = vld [vmem:[#allocation5 + $0x358] sm:$0xff]
    %v269 = vld [vmem:[#allocation5 + $0x360] sm:$0xff]
    %v270 = vld [vmem:[#allocation5 + $0x368] sm:$0xff]
    %v271 = vld [vmem:[#allocation5 + $0x370] sm:$0xff]
    %v272 = vld [vmem:[#allocation5 + $0x378] sm:$0xff]
    %v273 = vld [vmem:[#allocation5 + $0x380] sm:$0xff]
    %v274 = vld [vmem:[#allocation5 + $0x388] sm:$0xff]
    %v275 = vld [vmem:[#allocation5 + $0x390] sm:$0xff]
    %v276 = vld [vmem:[#allocation5 + $0x398] sm:$0xff]
    %v277 = vld [vmem:[#allocation5 + $0x3a0] sm:$0xff]
    %v278 = vld [vmem:[#allocation5 + $0x3a8] sm:$0xff]
    %v279 = vld [vmem:[#allocation5 + $0x3b0] sm:$0xff]
    %v280 = vld [vmem:[#allocation5 + $0x3b8] sm:$0xff]
    %v281 = vld [vmem:[#allocation5 + $0x3c0] sm:$0xff]
    %v282 = vld [vmem:[#allocation5 + $0x3c8] sm:$0xff]
    %v283 = vld [vmem:[#allocation5 + $0x3d0] sm:$0xff]
    %v284 = vld [vmem:[#allocation5 + $0x3d8] sm:$0xff]
    %v285 = vld [vmem:[#allocation5 + $0x3e0] sm:$0xff]
    %v286 = vld [vmem:[#allocation5 + $0x3e8] sm:$0xff]
    %v287 = vld [vmem:[#allocation5 + $0x3f0] sm:$0xff]
    %v288 = vld [vmem:[#allocation5 + $0x3f8] sm:$0xff]
    %v289 = vld [vmem:[#allocation7] sm:$0x3]
    %v291 = vlaneseq
    %v292 = vshrl.u32 %v291, 7
    %v293 = vsub.s32 0, %v292
    %v294 = vrot.slane %v289, %v293
    %v295 = vlaneseq
    %v296 = vshrl.u32 %v295, 7
    %v297 = vsub.s32 1, %v296
    %v298 = vrot.slane %v289, %v297
    %v302 = vcombine.high %v160, %v160
    %v304 = vunpack.c.l.s4 1966171168
    %v305 = vunpack.c.0.s8 %v304
    %v306 = vlaneseq
    %v307 = vshrl.u32 %v306, 7
    %v308 = vsub.s32 %v305, %v307
    %v309 = vrot.slane %v160, %v308
    %v311 = vunpack.c.l.s4 1966171168
    %v312 = vunpack.c.0.s8 %v311
    %v313 = vlaneseq
    %v314 = vshrl.u32 %v313, 7
    %v315 = vsub.s32 %v312, %v314
    %v316 = vrot.slane %v302, %v315
    %v317 = vcombine.high %v309, %v309
    %v318 = vcombine.high %v316, %v316
    %v320 = vunpack.c.l.s4 1966171168
    %v321 = vunpack.c.0.s8 %v320
    %v322 = vlaneseq
    %v323 = vshrl.u32 %v322, 7
    %v324 = vsub.s32 %v321, %v323
    %v325 = vrot.slane %v309, %v324
    %v327 = vunpack.c.l.s4 1966171168
    %v328 = vunpack.c.0.s8 %v327
    %v329 = vlaneseq
    %v330 = vshrl.u32 %v329, 7
    %v331 = vsub.s32 %v328, %v330
    %v332 = vrot.slane %v316, %v331
    %v334 = vunpack.c.l.s4 1966171168
    %v335 = vunpack.c.0.s8 %v334
    %v336 = vlaneseq
    %v337 = vshrl.u32 %v336, 7
    %v338 = vsub.s32 %v335, %v337
    %v339 = vrot.slane %v317, %v338
    %v341 = vunpack.c.l.s4 1966171168
    %v342 = vunpack.c.0.s8 %v341
    %v343 = vlaneseq
    %v344 = vshrl.u32 %v343, 7
    %v345 = vsub.s32 %v342, %v344
    %v346 = vrot.slane %v318, %v345
    %v347 = vcombine.high %v325, %v325
    %v348 = vcombine.high %v332, %v332
    %v349 = vcombine.high %v339, %v339
    %v350 = vcombine.high %v346, %v346
    %v487 = vunpack.c.l.b16 %v161
    %v488 = vunpack.c.h.b16 %v161
    %v489 = vunpack.c.l.b16 %v162
    %v490 = vunpack.c.h.b16 %v162
    %v491 = vunpack.c.l.b16 %v163
    %v492 = vunpack.c.h.b16 %v163
    %v493 = vunpack.c.l.b16 %v164
    %v494 = vunpack.c.h.b16 %v164
    %v495 = vunpack.c.l.b16 %v165
    %v496 = vunpack.c.h.b16 %v165
    %v497 = vunpack.c.l.b16 %v166
    %v498 = vunpack.c.h.b16 %v166
    %v499 = vunpack.c.l.b16 %v167
    %v500 = vunpack.c.h.b16 %v167
    %v501 = vunpack.c.l.b16 %v168
    %v502 = vunpack.c.h.b16 %v168
    %v503 = vunpack.c.l.b16 %v169
    %v504 = vunpack.c.h.b16 %v169
    %v505 = vunpack.c.l.b16 %v170
    %v506 = vunpack.c.h.b16 %v170
    %v507 = vunpack.c.l.b16 %v171
    %v508 = vunpack.c.h.b16 %v171
    %v509 = vunpack.c.l.b16 %v172
    %v510 = vunpack.c.h.b16 %v172
    %v511 = vunpack.c.l.b16 %v173
    %v512 = vunpack.c.h.b16 %v173
    %v513 = vunpack.c.l.b16 %v174
    %v514 = vunpack.c.h.b16 %v174
    %v515 = vunpack.c.l.b16 %v175
    %v516 = vunpack.c.h.b16 %v175
    %v517 = vunpack.c.l.b16 %v176
    %v518 = vunpack.c.h.b16 %v176
    %v519 = vunpack.c.l.b16 %v177
    %v520 = vunpack.c.h.b16 %v177
    %v521 = vunpack.c.l.b16 %v178
    %v522 = vunpack.c.h.b16 %v178
    %v523 = vunpack.c.l.b16 %v179
    %v524 = vunpack.c.h.b16 %v179
    %v525 = vunpack.c.l.b16 %v180
    %v526 = vunpack.c.h.b16 %v180
    %v527 = vunpack.c.l.b16 %v181
    %v528 = vunpack.c.h.b16 %v181
    %v529 = vunpack.c.l.b16 %v182
    %v530 = vunpack.c.h.b16 %v182
    %v531 = vunpack.c.l.b16 %v183
    %v532 = vunpack.c.h.b16 %v183
    %v533 = vunpack.c.l.b16 %v184
    %v534 = vunpack.c.h.b16 %v184
    %v535 = vunpack.c.l.b16 %v185
    %v536 = vunpack.c.h.b16 %v185
    %v537 = vunpack.c.l.b16 %v186
    %v538 = vunpack.c.h.b16 %v186
    %v539 = vunpack.c.l.b16 %v187
    %v540 = vunpack.c.h.b16 %v187
    %v541 = vunpack.c.l.b16 %v188
    %v542 = vunpack.c.h.b16 %v188
    %v543 = vunpack.c.l.b16 %v189
    %v544 = vunpack.c.h.b16 %v189
    %v545 = vunpack.c.l.b16 %v190
    %v546 = vunpack.c.h.b16 %v190
    %v547 = vunpack.c.l.b16 %v191
    %v548 = vunpack.c.h.b16 %v191
    %v549 = vunpack.c.l.b16 %v192
    %v550 = vunpack.c.h.b16 %v192
    %v551 = vunpack.c.l.b16 %v193
    %v552 = vunpack.c.h.b16 %v193
    %v553 = vunpack.c.l.b16 %v194
    %v554 = vunpack.c.h.b16 %v194
    %v555 = vunpack.c.l.b16 %v195
    %v556 = vunpack.c.h.b16 %v195
    %v557 = vunpack.c.l.b16 %v196
    %v558 = vunpack.c.h.b16 %v196
    %v559 = vunpack.c.l.b16 %v197
    %v560 = vunpack.c.h.b16 %v197
    %v561 = vunpack.c.l.b16 %v198
    %v562 = vunpack.c.h.b16 %v198
    %v563 = vunpack.c.l.b16 %v199
    %v564 = vunpack.c.h.b16 %v199
    %v565 = vunpack.c.l.b16 %v200
    %v566 = vunpack.c.h.b16 %v200
    %v567 = vunpack.c.l.b16 %v201
    %v568 = vunpack.c.h.b16 %v201
    %v569 = vunpack.c.l.b16 %v202
    %v570 = vunpack.c.h.b16 %v202
    %v571 = vunpack.c.l.b16 %v203
    %v572 = vunpack.c.h.b16 %v203
    %v573 = vunpack.c.l.b16 %v204
    %v574 = vunpack.c.h.b16 %v204
    %v575 = vunpack.c.l.b16 %v205
    %v576 = vunpack.c.h.b16 %v205
    %v577 = vunpack.c.l.b16 %v206
    %v578 = vunpack.c.h.b16 %v206
    %v579 = vunpack.c.l.b16 %v207
    %v580 = vunpack.c.h.b16 %v207
    %v581 = vunpack.c.l.b16 %v208
    %v582 = vunpack.c.h.b16 %v208
    %v583 = vunpack.c.l.b16 %v209
    %v584 = vunpack.c.h.b16 %v209
    %v585 = vunpack.c.l.b16 %v210
    %v586 = vunpack.c.h.b16 %v210
    %v587 = vunpack.c.l.b16 %v211
    %v588 = vunpack.c.h.b16 %v211
    %v589 = vunpack.c.l.b16 %v212
    %v590 = vunpack.c.h.b16 %v212
    %v591 = vunpack.c.l.b16 %v213
    %v592 = vunpack.c.h.b16 %v213
    %v593 = vunpack.c.l.b16 %v214
    %v594 = vunpack.c.h.b16 %v214
    %v595 = vunpack.c.l.b16 %v215
    %v596 = vunpack.c.h.b16 %v215
    %v597 = vunpack.c.l.b16 %v216
    %v598 = vunpack.c.h.b16 %v216
    %v599 = vunpack.c.l.b16 %v217
    %v600 = vunpack.c.h.b16 %v217
    %v601 = vunpack.c.l.b16 %v218
    %v602 = vunpack.c.h.b16 %v218
    %v603 = vunpack.c.l.b16 %v219
    %v604 = vunpack.c.h.b16 %v219
    %v605 = vunpack.c.l.b16 %v220
    %v606 = vunpack.c.h.b16 %v220
    %v607 = vunpack.c.l.b16 %v221
    %v608 = vunpack.c.h.b16 %v221
    %v609 = vunpack.c.l.b16 %v222
    %v610 = vunpack.c.h.b16 %v222
    %v611 = vunpack.c.l.b16 %v223
    %v612 = vunpack.c.h.b16 %v223
    %v613 = vunpack.c.l.b16 %v224
    %v614 = vunpack.c.h.b16 %v224
    %v615 = vunpack.c.l.b16 %v225
    %v616 = vunpack.c.h.b16 %v225
    %v617 = vunpack.c.l.b16 %v226
    %v618 = vunpack.c.h.b16 %v226
    %v619 = vunpack.c.l.b16 %v227
    %v620 = vunpack.c.h.b16 %v227
    %v621 = vunpack.c.l.b16 %v228
    %v622 = vunpack.c.h.b16 %v228
    %v623 = vunpack.c.l.b16 %v229
    %v624 = vunpack.c.h.b16 %v229
    %v625 = vunpack.c.l.b16 %v230
    %v626 = vunpack.c.h.b16 %v230
    %v627 = vunpack.c.l.b16 %v231
    %v628 = vunpack.c.h.b16 %v231
    %v629 = vunpack.c.l.b16 %v232
    %v630 = vunpack.c.h.b16 %v232
    %v631 = vunpack.c.l.b16 %v233
    %v632 = vunpack.c.h.b16 %v233
    %v633 = vunpack.c.l.b16 %v234
    %v634 = vunpack.c.h.b16 %v234
    %v635 = vunpack.c.l.b16 %v235
    %v636 = vunpack.c.h.b16 %v235
    %v637 = vunpack.c.l.b16 %v236
    %v638 = vunpack.c.h.b16 %v236
    %v639 = vunpack.c.l.b16 %v237
    %v640 = vunpack.c.h.b16 %v237
    %v641 = vunpack.c.l.b16 %v238
    %v642 = vunpack.c.h.b16 %v238
    %v643 = vunpack.c.l.b16 %v239
    %v644 = vunpack.c.h.b16 %v239
    %v645 = vunpack.c.l.b16 %v240
    %v646 = vunpack.c.h.b16 %v240
    %v647 = vunpack.c.l.b16 %v241
    %v648 = vunpack.c.h.b16 %v241
    %v649 = vunpack.c.l.b16 %v242
    %v650 = vunpack.c.h.b16 %v242
    %v651 = vunpack.c.l.b16 %v243
    %v652 = vunpack.c.h.b16 %v243
    %v653 = vunpack.c.l.b16 %v244
    %v654 = vunpack.c.h.b16 %v244
    %v655 = vunpack.c.l.b16 %v245
    %v656 = vunpack.c.h.b16 %v245
    %v657 = vunpack.c.l.b16 %v246
    %v658 = vunpack.c.h.b16 %v246
    %v659 = vunpack.c.l.b16 %v247
    %v660 = vunpack.c.h.b16 %v247
    %v661 = vunpack.c.l.b16 %v248
    %v662 = vunpack.c.h.b16 %v248
    %v663 = vunpack.c.l.b16 %v249
    %v664 = vunpack.c.h.b16 %v249
    %v665 = vunpack.c.l.b16 %v250
    %v666 = vunpack.c.h.b16 %v250
    %v667 = vunpack.c.l.b16 %v251
    %v668 = vunpack.c.h.b16 %v251
    %v669 = vunpack.c.l.b16 %v252
    %v670 = vunpack.c.h.b16 %v252
    %v671 = vunpack.c.l.b16 %v253
    %v672 = vunpack.c.h.b16 %v253
    %v673 = vunpack.c.l.b16 %v254
    %v674 = vunpack.c.h.b16 %v254
    %v675 = vunpack.c.l.b16 %v255
    %v676 = vunpack.c.h.b16 %v255
    %v677 = vunpack.c.l.b16 %v256
    %v678 = vunpack.c.h.b16 %v256
    %v679 = vunpack.c.l.b16 %v257
    %v680 = vunpack.c.h.b16 %v257
    %v681 = vunpack.c.l.b16 %v258
    %v682 = vunpack.c.h.b16 %v258
    %v683 = vunpack.c.l.b16 %v259
    %v684 = vunpack.c.h.b16 %v259
    %v685 = vunpack.c.l.b16 %v260
    %v686 = vunpack.c.h.b16 %v260
    %v687 = vunpack.c.l.b16 %v261
    %v688 = vunpack.c.h.b16 %v261
    %v689 = vunpack.c.l.b16 %v262
    %v690 = vunpack.c.h.b16 %v262
    %v691 = vunpack.c.l.b16 %v263
    %v692 = vunpack.c.h.b16 %v263
    %v693 = vunpack.c.l.b16 %v264
    %v694 = vunpack.c.h.b16 %v264
    %v695 = vunpack.c.l.b16 %v265
    %v696 = vunpack.c.h.b16 %v265
    %v697 = vunpack.c.l.b16 %v266
    %v698 = vunpack.c.h.b16 %v266
    %v699 = vunpack.c.l.b16 %v267
    %v700 = vunpack.c.h.b16 %v267
    %v701 = vunpack.c.l.b16 %v268
    %v702 = vunpack.c.h.b16 %v268
    %v703 = vunpack.c.l.b16 %v269
    %v704 = vunpack.c.h.b16 %v269
    %v705 = vunpack.c.l.b16 %v270
    %v706 = vunpack.c.h.b16 %v270
    %v707 = vunpack.c.l.b16 %v271
    %v708 = vunpack.c.h.b16 %v271
    %v709 = vunpack.c.l.b16 %v272
    %v710 = vunpack.c.h.b16 %v272
    %v711 = vunpack.c.l.b16 %v273
    %v712 = vunpack.c.h.b16 %v273
    %v713 = vunpack.c.l.b16 %v274
    %v714 = vunpack.c.h.b16 %v274
    %v715 = vunpack.c.l.b16 %v275
    %v716 = vunpack.c.h.b16 %v275
    %v717 = vunpack.c.l.b16 %v276
    %v718 = vunpack.c.h.b16 %v276
    %v719 = vunpack.c.l.b16 %v277
    %v720 = vunpack.c.h.b16 %v277
    %v721 = vunpack.c.l.b16 %v278
    %v722 = vunpack.c.h.b16 %v278
    %v723 = vunpack.c.l.b16 %v279
    %v724 = vunpack.c.h.b16 %v279
    %v725 = vunpack.c.l.b16 %v280
    %v726 = vunpack.c.h.b16 %v280
    %v727 = vunpack.c.l.b16 %v281
    %v728 = vunpack.c.h.b16 %v281
    %v729 = vunpack.c.l.b16 %v282
    %v730 = vunpack.c.h.b16 %v282
    %v731 = vunpack.c.l.b16 %v283
    %v732 = vunpack.c.h.b16 %v283
    %v733 = vunpack.c.l.b16 %v284
    %v734 = vunpack.c.h.b16 %v284
    %v735 = vunpack.c.l.b16 %v285
    %v736 = vunpack.c.h.b16 %v285
    %v737 = vunpack.c.l.b16 %v286
    %v738 = vunpack.c.h.b16 %v286
    %v739 = vunpack.c.l.b16 %v287
    %v740 = vunpack.c.h.b16 %v287
    %v741 = vunpack.c.l.b16 %v288
    %v742 = vunpack.c.h.b16 %v288
    %v743 = vpack.c.b16 %v489, %v487
    %v744 = vpack.c.b16 %v490, %v488
    %v745 = vpack.c.b16 %v493, %v491
    %v746 = vpack.c.b16 %v494, %v492
    %v747 = vpack.c.b16 %v497, %v495
    %v748 = vpack.c.b16 %v498, %v496
    %v749 = vpack.c.b16 %v501, %v499
    %v750 = vpack.c.b16 %v502, %v500
    %v751 = vpack.c.b16 %v505, %v503
    %v752 = vpack.c.b16 %v506, %v504
    %v753 = vpack.c.b16 %v509, %v507
    %v754 = vpack.c.b16 %v510, %v508
    %v755 = vpack.c.b16 %v513, %v511
    %v756 = vpack.c.b16 %v514, %v512
    %v757 = vpack.c.b16 %v517, %v515
    %v758 = vpack.c.b16 %v518, %v516
    %v759 = vpack.c.b16 %v521, %v519
    %v760 = vpack.c.b16 %v522, %v520
    %v761 = vpack.c.b16 %v525, %v523
    %v762 = vpack.c.b16 %v526, %v524
    %v763 = vpack.c.b16 %v529, %v527
    %v764 = vpack.c.b16 %v530, %v528
    %v765 = vpack.c.b16 %v533, %v531
    %v766 = vpack.c.b16 %v534, %v532
    %v767 = vpack.c.b16 %v537, %v535
    %v768 = vpack.c.b16 %v538, %v536
    %v769 = vpack.c.b16 %v541, %v539
    %v770 = vpack.c.b16 %v542, %v540
    %v771 = vpack.c.b16 %v545, %v543
    %v772 = vpack.c.b16 %v546, %v544
    %v773 = vpack.c.b16 %v549, %v547
    %v774 = vpack.c.b16 %v550, %v548
    %v775 = vpack.c.b16 %v553, %v551
    %v776 = vpack.c.b16 %v554, %v552
    %v777 = vpack.c.b16 %v557, %v555
    %v778 = vpack.c.b16 %v558, %v556
    %v779 = vpack.c.b16 %v561, %v559
    %v780 = vpack.c.b16 %v562, %v560
    %v781 = vpack.c.b16 %v565, %v563
    %v782 = vpack.c.b16 %v566, %v564
    %v783 = vpack.c.b16 %v569, %v567
    %v784 = vpack.c.b16 %v570, %v568
    %v785 = vpack.c.b16 %v573, %v571
    %v786 = vpack.c.b16 %v574, %v572
    %v787 = vpack.c.b16 %v577, %v575
    %v788 = vpack.c.b16 %v578, %v576
    %v789 = vpack.c.b16 %v581, %v579
    %v790 = vpack.c.b16 %v582, %v580
    %v791 = vpack.c.b16 %v585, %v583
    %v792 = vpack.c.b16 %v586, %v584
    %v793 = vpack.c.b16 %v589, %v587
    %v794 = vpack.c.b16 %v590, %v588
    %v795 = vpack.c.b16 %v593, %v591
    %v796 = vpack.c.b16 %v594, %v592
    %v797 = vpack.c.b16 %v597, %v595
    %v798 = vpack.c.b16 %v598, %v596
    %v799 = vpack.c.b16 %v601, %v599
    %v800 = vpack.c.b16 %v602, %v600
    %v801 = vpack.c.b16 %v605, %v603
    %v802 = vpack.c.b16 %v606, %v604
    %v803 = vpack.c.b16 %v609, %v607
    %v804 = vpack.c.b16 %v610, %v608
    %v805 = vpack.c.b16 %v613, %v611
    %v806 = vpack.c.b16 %v614, %v612
    %v807 = vpack.c.b16 %v617, %v615
    %v808 = vpack.c.b16 %v618, %v616
    %v809 = vpack.c.b16 %v621, %v619
    %v810 = vpack.c.b16 %v622, %v620
    %v811 = vpack.c.b16 %v625, %v623
    %v812 = vpack.c.b16 %v626, %v624
    %v813 = vpack.c.b16 %v629, %v627
    %v814 = vpack.c.b16 %v630, %v628
    %v815 = vpack.c.b16 %v633, %v631
    %v816 = vpack.c.b16 %v634, %v632
    %v817 = vpack.c.b16 %v637, %v635
    %v818 = vpack.c.b16 %v638, %v636
    %v819 = vpack.c.b16 %v641, %v639
    %v820 = vpack.c.b16 %v642, %v640
    %v821 = vpack.c.b16 %v645, %v643
    %v822 = vpack.c.b16 %v646, %v644
    %v823 = vpack.c.b16 %v649, %v647
    %v824 = vpack.c.b16 %v650, %v648
    %v825 = vpack.c.b16 %v653, %v651
    %v826 = vpack.c.b16 %v654, %v652
    %v827 = vpack.c.b16 %v657, %v655
    %v828 = vpack.c.b16 %v658, %v656
    %v829 = vpack.c.b16 %v661, %v659
    %v830 = vpack.c.b16 %v662, %v660
    %v831 = vpack.c.b16 %v665, %v663
    %v832 = vpack.c.b16 %v666, %v664
    %v833 = vpack.c.b16 %v669, %v667
    %v834 = vpack.c.b16 %v670, %v668
    %v835 = vpack.c.b16 %v673, %v671
    %v836 = vpack.c.b16 %v674, %v672
    %v837 = vpack.c.b16 %v677, %v675
    %v838 = vpack.c.b16 %v678, %v676
    %v839 = vpack.c.b16 %v681, %v679
    %v840 = vpack.c.b16 %v682, %v680
    %v841 = vpack.c.b16 %v685, %v683
    %v842 = vpack.c.b16 %v686, %v684
    %v843 = vpack.c.b16 %v689, %v687
    %v844 = vpack.c.b16 %v690, %v688
    %v845 = vpack.c.b16 %v693, %v691
    %v846 = vpack.c.b16 %v694, %v692
    %v847 = vpack.c.b16 %v697, %v695
    %v848 = vpack.c.b16 %v698, %v696
    %v849 = vpack.c.b16 %v701, %v699
    %v850 = vpack.c.b16 %v702, %v700
    %v851 = vpack.c.b16 %v705, %v703
    %v852 = vpack.c.b16 %v706, %v704
    %v853 = vpack.c.b16 %v709, %v707
    %v854 = vpack.c.b16 %v710, %v708
    %v855 = vpack.c.b16 %v713, %v711
    %v856 = vpack.c.b16 %v714, %v712
    %v857 = vpack.c.b16 %v717, %v715
    %v858 = vpack.c.b16 %v718, %v716
    %v859 = vpack.c.b16 %v721, %v719
    %v860 = vpack.c.b16 %v722, %v720
    %v861 = vpack.c.b16 %v725, %v723
    %v862 = vpack.c.b16 %v726, %v724
    %v863 = vpack.c.b16 %v729, %v727
    %v864 = vpack.c.b16 %v730, %v728
    %v865 = vpack.c.b16 %v733, %v731
    %v866 = vpack.c.b16 %v734, %v732
    %v867 = vpack.c.b16 %v737, %v735
    %v868 = vpack.c.b16 %v738, %v736
    %v869 = vpack.c.b16 %v741, %v739
    %v870 = vpack.c.b16 %v742, %v740
    %999 = vmatprep.subr.bf16.mxu0 %v744
    %1000 = vmatpush1.bf16.msra.mxu0 %v743
    %1001 = vmatprep.subr.bf16.mxu0 %v746
    %1002 = vmatpush1.bf16.msra.mxu0 %v745
    %1003 = vmatprep.subr.bf16.mxu0 %v748
    %1004 = vmatpush1.bf16.msra.mxu0 %v747
    %1005 = vmatprep.subr.bf16.mxu0 %v750
    %1006 = vmatpush1.bf16.msra.mxu0 %v749
    %1007 = vmatprep.subr.bf16.mxu0 %v752
    %1008 = vmatpush1.bf16.msra.mxu0 %v751
    %1009 = vmatprep.subr.bf16.mxu0 %v754
    %1010 = vmatpush1.bf16.msra.mxu0 %v753
    %1011 = vmatprep.subr.bf16.mxu0 %v756
    %1012 = vmatpush1.bf16.msra.mxu0 %v755
    %1013 = vmatprep.subr.bf16.mxu0 %v758
    %1014 = vmatpush1.bf16.msra.mxu0 %v757
    %1015 = vmatprep.subr.bf16.mxu0 %v760
    %1016 = vmatpush1.bf16.msra.mxu0 %v759
    %1017 = vmatprep.subr.bf16.mxu0 %v762
    %1018 = vmatpush1.bf16.msra.mxu0 %v761
    %1019 = vmatprep.subr.bf16.mxu0 %v764
    %1020 = vmatpush1.bf16.msra.mxu0 %v763
    %1021 = vmatprep.subr.bf16.mxu0 %v766
    %1022 = vmatpush1.bf16.msra.mxu0 %v765
    %1023 = vmatprep.subr.bf16.mxu0 %v768
    %1024 = vmatpush1.bf16.msra.mxu0 %v767
    %1025 = vmatprep.subr.bf16.mxu0 %v770
    %1026 = vmatpush1.bf16.msra.mxu0 %v769
    %1027 = vmatprep.subr.bf16.mxu0 %v772
    %1028 = vmatpush1.bf16.msra.mxu0 %v771
    %1029 = vmatprep.subr.bf16.mxu0 %v774
    %1030 = vmatpush1.bf16.msra.mxu0 %v773
    %1031 = vmatprep.mubr.bf16.mxu0 %v339
    %1032 = vmatmul.mubr.bf16.gmra.mrb[0].mxu0 %v325
    %v1033 = vpop.f32.mrb[0].mxu0
    %v1034 = vadd.f32 %v294, %v1033
    %v1035 = vpop.f32.mrb[0].mxu0
    %v1036 = vadd.f32 %v298, %v1035
    %v1037 = vpop.f32.mrb[0].mxu0
    %v1038 = vpop.f32.mrb[0].mxu0
    %1039 = vdwg.mxu0
    %1040 = vmatprep.subr.bf16.mxu0 %v776
    %1041 = vmatpush1.bf16.msra.mxu0 %v775
    %1042 = vmatprep.subr.bf16.mxu0 %v778
    %1043 = vmatpush1.bf16.msra.mxu0 %v777
    %1044 = vmatprep.subr.bf16.mxu0 %v780
    %1045 = vmatpush1.bf16.msra.mxu0 %v779
    %1046 = vmatprep.subr.bf16.mxu0 %v782
    %1047 = vmatpush1.bf16.msra.mxu0 %v781
    %1048 = vmatprep.subr.bf16.mxu0 %v784
    %1049 = vmatpush1.bf16.msra.mxu0 %v783
    %1050 = vmatprep.subr.bf16.mxu0 %v786
    %1051 = vmatpush1.bf16.msra.mxu0 %v785
    %1052 = vmatprep.subr.bf16.mxu0 %v788
    %1053 = vmatpush1.bf16.msra.mxu0 %v787
    %1054 = vmatprep.subr.bf16.mxu0 %v790
    %1055 = vmatpush1.bf16.msra.mxu0 %v789
    %1056 = vmatprep.subr.bf16.mxu0 %v792
    %1057 = vmatpush1.bf16.msra.mxu0 %v791
    %1058 = vmatprep.subr.bf16.mxu0 %v794
    %1059 = vmatpush1.bf16.msra.mxu0 %v793
    %1060 = vmatprep.subr.bf16.mxu0 %v796
    %1061 = vmatpush1.bf16.msra.mxu0 %v795
    %1062 = vmatprep.subr.bf16.mxu0 %v798
    %1063 = vmatpush1.bf16.msra.mxu0 %v797
    %1064 = vmatprep.subr.bf16.mxu0 %v800
    %1065 = vmatpush1.bf16.msra.mxu0 %v799
    %1066 = vmatprep.subr.bf16.mxu0 %v802
    %1067 = vmatpush1.bf16.msra.mxu0 %v801
    %1068 = vmatprep.subr.bf16.mxu0 %v804
    %1069 = vmatpush1.bf16.msra.mxu0 %v803
    %1070 = vmatprep.subr.bf16.mxu0 %v806
    %1071 = vmatpush1.bf16.msra.mxu0 %v805
    %1072 = vmatprep.mubr.bf16.mxu0 %v349
    %1073 = vmatmul.mubr.bf16.gmra.mrb[0].mxu0 %v347
    %v1074 = vpop.f32.mrb[0].mxu0
    %v1075 = vadd.f32 %v1034, %v1074
    %v1076 = vpop.f32.mrb[0].mxu0
    %v1077 = vadd.f32 %v1036, %v1076
    %v1078 = vpop.f32.mrb[0].mxu0
    %v1079 = vpop.f32.mrb[0].mxu0
    %1080 = vdwg.mxu0
    %1081 = vmatprep.subr.bf16.mxu0 %v808
    %1082 = vmatpush1.bf16.msra.mxu0 %v807
    %1083 = vmatprep.subr.bf16.mxu0 %v810
    %1084 = vmatpush1.bf16.msra.mxu0 %v809
    %1085 = vmatprep.subr.bf16.mxu0 %v812
    %1086 = vmatpush1.bf16.msra.mxu0 %v811
    %1087 = vmatprep.subr.bf16.mxu0 %v814
    %1088 = vmatpush1.bf16.msra.mxu0 %v813
    %1089 = vmatprep.subr.bf16.mxu0 %v816
    %1090 = vmatpush1.bf16.msra.mxu0 %v815
    %1091 = vmatprep.subr.bf16.mxu0 %v818
    %1092 = vmatpush1.bf16.msra.mxu0 %v817
    %1093 = vmatprep.subr.bf16.mxu0 %v820
    %1094 = vmatpush1.bf16.msra.mxu0 %v819
    %1095 = vmatprep.subr.bf16.mxu0 %v822
    %1096 = vmatpush1.bf16.msra.mxu0 %v821
    %1097 = vmatprep.subr.bf16.mxu0 %v824
    %1098 = vmatpush1.bf16.msra.mxu0 %v823
    %1099 = vmatprep.subr.bf16.mxu0 %v826
    %1100 = vmatpush1.bf16.msra.mxu0 %v825
    %1101 = vmatprep.subr.bf16.mxu0 %v828
    %1102 = vmatpush1.bf16.msra.mxu0 %v827
    %1103 = vmatprep.subr.bf16.mxu0 %v830
    %1104 = vmatpush1.bf16.msra.mxu0 %v829
    %1105 = vmatprep.subr.bf16.mxu0 %v832
    %1106 = vmatpush1.bf16.msra.mxu0 %v831
    %1107 = vmatprep.subr.bf16.mxu0 %v834
    %1108 = vmatpush1.bf16.msra.mxu0 %v833
    %1109 = vmatprep.subr.bf16.mxu0 %v836
    %1110 = vmatpush1.bf16.msra.mxu0 %v835
    %1111 = vmatprep.subr.bf16.mxu0 %v838
    %1112 = vmatpush1.bf16.msra.mxu0 %v837
    %1113 = vmatprep.mubr.bf16.mxu0 %v346
    %1114 = vmatmul.mubr.bf16.gmra.mrb[0].mxu0 %v332
    %v1115 = vpop.f32.mrb[0].mxu0
    %v1116 = vadd.f32 %v1075, %v1115
    %v1117 = vpop.f32.mrb[0].mxu0
    %v1118 = vadd.f32 %v1077, %v1117
    %v1119 = vpop.f32.mrb[0].mxu0
    %v1120 = vpop.f32.mrb[0].mxu0
    %1121 = vdwg.mxu0
    %1122 = vmatprep.subr.bf16.mxu0 %v840
    %1123 = vmatpush1.bf16.msra.mxu0 %v839
    %1124 = vmatprep.subr.bf16.mxu0 %v842
    %1125 = vmatpush1.bf16.msra.mxu0 %v841
    %1126 = vmatprep.subr.bf16.mxu0 %v844
    %1127 = vmatpush1.bf16.msra.mxu0 %v843
    %1128 = vmatprep.subr.bf16.mxu0 %v846
    %1129 = vmatpush1.bf16.msra.mxu0 %v845
    %1130 = vmatprep.subr.bf16.mxu0 %v848
    %1131 = vmatpush1.bf16.msra.mxu0 %v847
    %1132 = vmatprep.subr.bf16.mxu0 %v850
    %1133 = vmatpush1.bf16.msra.mxu0 %v849
    %1134 = vmatprep.subr.bf16.mxu0 %v852
    %1135 = vmatpush1.bf16.msra.mxu0 %v851
    %1136 = vmatprep.subr.bf16.mxu0 %v854
    %1137 = vmatpush1.bf16.msra.mxu0 %v853
    %1138 = vmatprep.subr.bf16.mxu0 %v856
    %1139 = vmatpush1.bf16.msra.mxu0 %v855
    %1140 = vmatprep.subr.bf16.mxu0 %v858
    %1141 = vmatpush1.bf16.msra.mxu0 %v857
    %1142 = vmatprep.subr.bf16.mxu0 %v860
    %1143 = vmatpush1.bf16.msra.mxu0 %v859
    %1144 = vmatprep.subr.bf16.mxu0 %v862
    %1145 = vmatpush1.bf16.msra.mxu0 %v861
    %1146 = vmatprep.subr.bf16.mxu0 %v864
    %1147 = vmatpush1.bf16.msra.mxu0 %v863
    %1148 = vmatprep.subr.bf16.mxu0 %v866
    %1149 = vmatpush1.bf16.msra.mxu0 %v865
    %1150 = vmatprep.subr.bf16.mxu0 %v868
    %1151 = vmatpush1.bf16.msra.mxu0 %v867
    %1152 = vmatprep.subr.bf16.mxu0 %v870
    %1153 = vmatpush1.bf16.msra.mxu0 %v869
    %1154 = vmatprep.mubr.bf16.mxu0 %v350
    %1155 = vmatmul.mubr.bf16.gmra.mrb[0].mxu0 %v348
    %v1156 = vpop.f32.mrb[0].mxu0
    %v1157 = vadd.f32 %v1116, %v1156
    %v1158 = vpop.f32.mrb[0].mxu0
    %v1159 = vadd.f32 %v1118, %v1158
    %v1160 = vpop.f32.mrb[0].mxu0
    %v1161 = vpop.f32.mrb[0].mxu0
    %1162 = vdwg.mxu0
    %vm1163 = vcmp.gt.f32.partialorder %v1157, 0.0
    %vm1164 = vcmp.gt.f32.partialorder %v1159, 0.0
    %v1165 = vmul.f32 %v1157, 0.01
    %v1166 = vmul.f32 %v1159, 0.01
    %v1167 = vsel %vm1163, %v1157, %v1165
    %v1168 = vsel %vm1164, %v1159, %v1166
    %v1169 = vpack.c.bf16 %v1167, %v1167
    %v1170 = vpack.c.bf16 %v1168, %v1168
    %v1171 = vld [vmem:[#allocation8] sm:$0xff]
    %v1172 = vld [vmem:[#allocation8 + $0x8] sm:$0xff]
    %v1173 = vld [vmem:[#allocation8 + $0x10] sm:$0xff]
    %v1174 = vld [vmem:[#allocation8 + $0x18] sm:$0xff]
    %v1175 = vld [vmem:[#allocation8 + $0x20] sm:$0xff]
    %v1176 = vld [vmem:[#allocation8 + $0x28] sm:$0xff]
    %v1177 = vld [vmem:[#allocation8 + $0x30] sm:$0xff]
    %v1178 = vld [vmem:[#allocation8 + $0x38] sm:$0xff]
    %v1179 = vld [vmem:[#allocation8 + $0x40] sm:$0xff]
    %v1180 = vld [vmem:[#allocation8 + $0x48] sm:$0xff]
    %v1181 = vld [vmem:[#allocation8 + $0x50] sm:$0xff]
    %v1182 = vld [vmem:[#allocation8 + $0x58] sm:$0xff]
    %v1183 = vld [vmem:[#allocation8 + $0x60] sm:$0xff]
    %v1184 = vld [vmem:[#allocation8 + $0x68] sm:$0xff]
    %v1185 = vld [vmem:[#allocation8 + $0x70] sm:$0xff]
    %v1186 = vld [vmem:[#allocation8 + $0x78] sm:$0xff]
    %v1187 = vld [vmem:[#allocation8 + $0x80] sm:$0xff]
    %v1188 = vld [vmem:[#allocation8 + $0x88] sm:$0xff]
    %v1189 = vld [vmem:[#allocation8 + $0x90] sm:$0xff]
    %v1190 = vld [vmem:[#allocation8 + $0x98] sm:$0xff]
    %v1191 = vld [vmem:[#allocation8 + $0xa0] sm:$0xff]
    %v1192 = vld [vmem:[#allocation8 + $0xa8] sm:$0xff]
    %v1193 = vld [vmem:[#allocation8 + $0xb0] sm:$0xff]
    %v1194 = vld [vmem:[#allocation8 + $0xb8] sm:$0xff]
    %v1195 = vld [vmem:[#allocation8 + $0xc0] sm:$0xff]
    %v1196 = vld [vmem:[#allocation8 + $0xc8] sm:$0xff]
    %v1197 = vld [vmem:[#allocation8 + $0xd0] sm:$0xff]
    %v1198 = vld [vmem:[#allocation8 + $0xd8] sm:$0xff]
    %v1199 = vld [vmem:[#allocation8 + $0xe0] sm:$0xff]
    %v1200 = vld [vmem:[#allocation8 + $0xe8] sm:$0xff]
    %v1201 = vld [vmem:[#allocation8 + $0xf0] sm:$0xff]
    %v1202 = vld [vmem:[#allocation8 + $0xf8] sm:$0xff]
    %v1203 = vld [vmem:[#allocation10] sm:$0x3]
    %v1205 = vlaneseq
    %v1206 = vshrl.u32 %v1205, 7
    %v1207 = vsub.s32 0, %v1206
    %v1208 = vrot.slane %v1203, %v1207
    %v1209 = vlaneseq
    %v1210 = vshrl.u32 %v1209, 7
    %v1211 = vsub.s32 1, %v1210
    %v1212 = vrot.slane %v1203, %v1211
    %v1247 = vunpack.c.l.b16 %v1171
    %v1248 = vunpack.c.h.b16 %v1171
    %v1249 = vunpack.c.l.b16 %v1172
    %v1250 = vunpack.c.h.b16 %v1172
    %v1251 = vunpack.c.l.b16 %v1173
    %v1252 = vunpack.c.h.b16 %v1173
    %v1253 = vunpack.c.l.b16 %v1174
    %v1254 = vunpack.c.h.b16 %v1174
    %v1255 = vunpack.c.l.b16 %v1175
    %v1256 = vunpack.c.h.b16 %v1175
    %v1257 = vunpack.c.l.b16 %v1176
    %v1258 = vunpack.c.h.b16 %v1176
    %v1259 = vunpack.c.l.b16 %v1177
    %v1260 = vunpack.c.h.b16 %v1177
    %v1261 = vunpack.c.l.b16 %v1178
    %v1262 = vunpack.c.h.b16 %v1178
    %v1263 = vunpack.c.l.b16 %v1179
    %v1264 = vunpack.c.h.b16 %v1179
    %v1265 = vunpack.c.l.b16 %v1180
    %v1266 = vunpack.c.h.b16 %v1180
    %v1267 = vunpack.c.l.b16 %v1181
    %v1268 = vunpack.c.h.b16 %v1181
    %v1269 = vunpack.c.l.b16 %v1182
    %v1270 = vunpack.c.h.b16 %v1182
    %v1271 = vunpack.c.l.b16 %v1183
    %v1272 = vunpack.c.h.b16 %v1183
    %v1273 = vunpack.c.l.b16 %v1184
    %v1274 = vunpack.c.h.b16 %v1184
    %v1275 = vunpack.c.l.b16 %v1185
    %v1276 = vunpack.c.h.b16 %v1185
    %v1277 = vunpack.c.l.b16 %v1186
    %v1278 = vunpack.c.h.b16 %v1186
    %v1279 = vunpack.c.l.b16 %v1187
    %v1280 = vunpack.c.h.b16 %v1187
    %v1281 = vunpack.c.l.b16 %v1188
    %v1282 = vunpack.c.h.b16 %v1188
    %v1283 = vunpack.c.l.b16 %v1189
    %v1284 = vunpack.c.h.b16 %v1189
    %v1285 = vunpack.c.l.b16 %v1190
    %v1286 = vunpack.c.h.b16 %v1190
    %v1287 = vunpack.c.l.b16 %v1191
    %v1288 = vunpack.c.h.b16 %v1191
    %v1289 = vunpack.c.l.b16 %v1192
    %v1290 = vunpack.c.h.b16 %v1192
    %v1291 = vunpack.c.l.b16 %v1193
    %v1292 = vunpack.c.h.b16 %v1193
    %v1293 = vunpack.c.l.b16 %v1194
    %v1294 = vunpack.c.h.b16 %v1194
    %v1295 = vunpack.c.l.b16 %v1195
    %v1296 = vunpack.c.h.b16 %v1195
    %v1297 = vunpack.c.l.b16 %v1196
    %v1298 = vunpack.c.h.b16 %v1196
    %v1299 = vunpack.c.l.b16 %v1197
    %v1300 = vunpack.c.h.b16 %v1197
    %v1301 = vunpack.c.l.b16 %v1198
    %v1302 = vunpack.c.h.b16 %v1198
    %v1303 = vunpack.c.l.b16 %v1199
    %v1304 = vunpack.c.h.b16 %v1199
    %v1305 = vunpack.c.l.b16 %v1200
    %v1306 = vunpack.c.h.b16 %v1200
    %v1307 = vunpack.c.l.b16 %v1201
    %v1308 = vunpack.c.h.b16 %v1201
    %v1309 = vunpack.c.l.b16 %v1202
    %v1310 = vunpack.c.h.b16 %v1202
    %v1311 = vpack.c.b16 %v1249, %v1247
    %v1312 = vpack.c.b16 %v1250, %v1248
    %v1313 = vpack.c.b16 %v1253, %v1251
    %v1314 = vpack.c.b16 %v1254, %v1252
    %v1315 = vpack.c.b16 %v1257, %v1255
    %v1316 = vpack.c.b16 %v1258, %v1256
    %v1317 = vpack.c.b16 %v1261, %v1259
    %v1318 = vpack.c.b16 %v1262, %v1260
    %v1319 = vpack.c.b16 %v1265, %v1263
    %v1320 = vpack.c.b16 %v1266, %v1264
    %v1321 = vpack.c.b16 %v1269, %v1267
    %v1322 = vpack.c.b16 %v1270, %v1268
    %v1323 = vpack.c.b16 %v1273, %v1271
    %v1324 = vpack.c.b16 %v1274, %v1272
    %v1325 = vpack.c.b16 %v1277, %v1275
    %v1326 = vpack.c.b16 %v1278, %v1276
    %v1327 = vpack.c.b16 %v1281, %v1279
    %v1328 = vpack.c.b16 %v1282, %v1280
    %v1329 = vpack.c.b16 %v1285, %v1283
    %v1330 = vpack.c.b16 %v1286, %v1284
    %v1331 = vpack.c.b16 %v1289, %v1287
    %v1332 = vpack.c.b16 %v1290, %v1288
    %v1333 = vpack.c.b16 %v1293, %v1291
    %v1334 = vpack.c.b16 %v1294, %v1292
    %v1335 = vpack.c.b16 %v1297, %v1295
    %v1336 = vpack.c.b16 %v1298, %v1296
    %v1337 = vpack.c.b16 %v1301, %v1299
    %v1338 = vpack.c.b16 %v1302, %v1300
    %v1339 = vpack.c.b16 %v1305, %v1303
    %v1340 = vpack.c.b16 %v1306, %v1304
    %v1341 = vpack.c.b16 %v1309, %v1307
    %v1342 = vpack.c.b16 %v1310, %v1308
    %1375 = vmatprep.subr.bf16.mxu0 %v1312
    %1376 = vmatpush1.bf16.msra.mxu0 %v1311
    %1377 = vmatprep.subr.bf16.mxu0 %v1314
    %1378 = vmatpush1.bf16.msra.mxu0 %v1313
    %1379 = vmatprep.subr.bf16.mxu0 %v1316
    %1380 = vmatpush1.bf16.msra.mxu0 %v1315
    %1381 = vmatprep.subr.bf16.mxu0 %v1318
    %1382 = vmatpush1.bf16.msra.mxu0 %v1317
    %1383 = vmatprep.subr.bf16.mxu0 %v1320
    %1384 = vmatpush1.bf16.msra.mxu0 %v1319
    %1385 = vmatprep.subr.bf16.mxu0 %v1322
    %1386 = vmatpush1.bf16.msra.mxu0 %v1321
    %1387 = vmatprep.subr.bf16.mxu0 %v1324
    %1388 = vmatpush1.bf16.msra.mxu0 %v1323
    %1389 = vmatprep.subr.bf16.mxu0 %v1326
    %1390 = vmatpush1.bf16.msra.mxu0 %v1325
    %1391 = vmatprep.subr.bf16.mxu0 %v1328
    %1392 = vmatpush1.bf16.msra.mxu0 %v1327
    %1393 = vmatprep.subr.bf16.mxu0 %v1330
    %1394 = vmatpush1.bf16.msra.mxu0 %v1329
    %1395 = vmatprep.subr.bf16.mxu0 %v1332
    %1396 = vmatpush1.bf16.msra.mxu0 %v1331
    %1397 = vmatprep.subr.bf16.mxu0 %v1334
    %1398 = vmatpush1.bf16.msra.mxu0 %v1333
    %1399 = vmatprep.subr.bf16.mxu0 %v1336
    %1400 = vmatpush1.bf16.msra.mxu0 %v1335
    %1401 = vmatprep.subr.bf16.mxu0 %v1338
    %1402 = vmatpush1.bf16.msra.mxu0 %v1337
    %1403 = vmatprep.subr.bf16.mxu0 %v1340
    %1404 = vmatpush1.bf16.msra.mxu0 %v1339
    %1405 = vmatprep.subr.bf16.mxu0 %v1342
    %1406 = vmatpush1.bf16.msra.mxu0 %v1341
    %1407 = vmatprep.mubr.bf16.mxu0 %v1170
    %1408 = vmatmul.mubr.bf16.gmra.mrb[0].mxu0 %v1169
    %v1409 = vpop.f32.mrb[0].mxu0
    %v1410 = vadd.f32 %v1208, %v1409
    %v1411 = vpop.f32.mrb[0].mxu0
    %v1412 = vadd.f32 %v1212, %v1411
    %v1413 = vpop.f32.mrb[0].mxu0
    %v1414 = vpop.f32.mrb[0].mxu0
    %1415 = vdwg.mxu0
    %vm1416 = vcmp.gt.f32.partialorder %v1410, 0.0
    %vm1417 = vcmp.gt.f32.partialorder %v1412, 0.0
    %v1418 = vmul.f32 %v1410, 0.01
    %v1419 = vmul.f32 %v1412, 0.01
    %v1420 = vsel %vm1416, %v1410, %v1418
    %v1421 = vsel %vm1417, %v1412, %v1419
    %v1422 = vpack.c.bf16 %v1420, %v1420
    %v1423 = vpack.c.bf16 %v1421, %v1421
    %v1424 = vld [vmem:[#allocation11] sm:$0xff]
    %v1425 = vld [vmem:[#allocation11 + $0x8] sm:$0xff]
    %v1426 = vld [vmem:[#allocation11 + $0x10] sm:$0xff]
    %v1427 = vld [vmem:[#allocation11 + $0x18] sm:$0xff]
    %v1428 = vld [vmem:[#allocation11 + $0x20] sm:$0xff]
    %v1429 = vld [vmem:[#allocation11 + $0x28] sm:$0xff]
    %v1430 = vld [vmem:[#allocation11 + $0x30] sm:$0xff]
    %v1431 = vld [vmem:[#allocation11 + $0x38] sm:$0xff]
    %v1432 = vld [vmem:[#allocation11 + $0x40] sm:$0xff]
    %v1433 = vld [vmem:[#allocation11 + $0x48] sm:$0xff]
    %v1434 = vld [vmem:[#allocation11 + $0x50] sm:$0xff]
    %v1435 = vld [vmem:[#allocation11 + $0x58] sm:$0xff]
    %v1436 = vld [vmem:[#allocation11 + $0x60] sm:$0xff]
    %v1437 = vld [vmem:[#allocation11 + $0x68] sm:$0xff]
    %v1438 = vld [vmem:[#allocation11 + $0x70] sm:$0xff]
    %v1439 = vld [vmem:[#allocation11 + $0x78] sm:$0xff]
    %v1440 = vld [vmem:[#allocation11 + $0x80] sm:$0xff]
    %v1441 = vld [vmem:[#allocation11 + $0x88] sm:$0xff]
    %v1442 = vld [vmem:[#allocation11 + $0x90] sm:$0xff]
    %v1443 = vld [vmem:[#allocation11 + $0x98] sm:$0xff]
    %v1444 = vld [vmem:[#allocation11 + $0xa0] sm:$0xff]
    %v1445 = vld [vmem:[#allocation11 + $0xa8] sm:$0xff]
    %v1446 = vld [vmem:[#allocation11 + $0xb0] sm:$0xff]
    %v1447 = vld [vmem:[#allocation11 + $0xb8] sm:$0xff]
    %v1448 = vld [vmem:[#allocation11 + $0xc0] sm:$0xff]
    %v1449 = vld [vmem:[#allocation11 + $0xc8] sm:$0xff]
    %v1450 = vld [vmem:[#allocation11 + $0xd0] sm:$0xff]
    %v1451 = vld [vmem:[#allocation11 + $0xd8] sm:$0xff]
    %v1452 = vld [vmem:[#allocation11 + $0xe0] sm:$0xff]
    %v1453 = vld [vmem:[#allocation11 + $0xe8] sm:$0xff]
    %v1454 = vld [vmem:[#allocation11 + $0xf0] sm:$0xff]
    %v1455 = vld [vmem:[#allocation11 + $0xf8] sm:$0xff]
    %v1456 = vld [vmem:[#allocation13] sm:$0x3]
    %v1458 = vlaneseq
    %v1459 = vshrl.u32 %v1458, 7
    %v1460 = vsub.s32 0, %v1459
    %v1461 = vrot.slane %v1456, %v1460
    %v1462 = vlaneseq
    %v1463 = vshrl.u32 %v1462, 7
    %v1464 = vsub.s32 1, %v1463
    %v1465 = vrot.slane %v1456, %v1464
    %v1500 = vunpack.c.l.b16 %v1424
    %v1501 = vunpack.c.h.b16 %v1424
    %v1502 = vunpack.c.l.b16 %v1425
    %v1503 = vunpack.c.h.b16 %v1425
    %v1504 = vunpack.c.l.b16 %v1426
    %v1505 = vunpack.c.h.b16 %v1426
    %v1506 = vunpack.c.l.b16 %v1427
    %v1507 = vunpack.c.h.b16 %v1427
    %v1508 = vunpack.c.l.b16 %v1428
    %v1509 = vunpack.c.h.b16 %v1428
    %v1510 = vunpack.c.l.b16 %v1429
    %v1511 = vunpack.c.h.b16 %v1429
    %v1512 = vunpack.c.l.b16 %v1430
    %v1513 = vunpack.c.h.b16 %v1430
    %v1514 = vunpack.c.l.b16 %v1431
    %v1515 = vunpack.c.h.b16 %v1431
    %v1516 = vunpack.c.l.b16 %v1432
    %v1517 = vunpack.c.h.b16 %v1432
    %v1518 = vunpack.c.l.b16 %v1433
    %v1519 = vunpack.c.h.b16 %v1433
    %v1520 = vunpack.c.l.b16 %v1434
    %v1521 = vunpack.c.h.b16 %v1434
    %v1522 = vunpack.c.l.b16 %v1435
    %v1523 = vunpack.c.h.b16 %v1435
    %v1524 = vunpack.c.l.b16 %v1436
    %v1525 = vunpack.c.h.b16 %v1436
    %v1526 = vunpack.c.l.b16 %v1437
    %v1527 = vunpack.c.h.b16 %v1437
    %v1528 = vunpack.c.l.b16 %v1438
    %v1529 = vunpack.c.h.b16 %v1438
    %v1530 = vunpack.c.l.b16 %v1439
    %v1531 = vunpack.c.h.b16 %v1439
    %v1532 = vunpack.c.l.b16 %v1440
    %v1533 = vunpack.c.h.b16 %v1440
    %v1534 = vunpack.c.l.b16 %v1441
    %v1535 = vunpack.c.h.b16 %v1441
    %v1536 = vunpack.c.l.b16 %v1442
    %v1537 = vunpack.c.h.b16 %v1442
    %v1538 = vunpack.c.l.b16 %v1443
    %v1539 = vunpack.c.h.b16 %v1443
    %v1540 = vunpack.c.l.b16 %v1444
    %v1541 = vunpack.c.h.b16 %v1444
    %v1542 = vunpack.c.l.b16 %v1445
    %v1543 = vunpack.c.h.b16 %v1445
    %v1544 = vunpack.c.l.b16 %v1446
    %v1545 = vunpack.c.h.b16 %v1446
    %v1546 = vunpack.c.l.b16 %v1447
    %v1547 = vunpack.c.h.b16 %v1447
    %v1548 = vunpack.c.l.b16 %v1448
    %v1549 = vunpack.c.h.b16 %v1448
    %v1550 = vunpack.c.l.b16 %v1449
    %v1551 = vunpack.c.h.b16 %v1449
    %v1552 = vunpack.c.l.b16 %v1450
    %v1553 = vunpack.c.h.b16 %v1450
    %v1554 = vunpack.c.l.b16 %v1451
    %v1555 = vunpack.c.h.b16 %v1451
    %v1556 = vunpack.c.l.b16 %v1452
    %v1557 = vunpack.c.h.b16 %v1452
    %v1558 = vunpack.c.l.b16 %v1453
    %v1559 = vunpack.c.h.b16 %v1453
    %v1560 = vunpack.c.l.b16 %v1454
    %v1561 = vunpack.c.h.b16 %v1454
    %v1562 = vunpack.c.l.b16 %v1455
    %v1563 = vunpack.c.h.b16 %v1455
    %v1564 = vpack.c.b16 %v1502, %v1500
    %v1565 = vpack.c.b16 %v1503, %v1501
    %v1566 = vpack.c.b16 %v1506, %v1504
    %v1567 = vpack.c.b16 %v1507, %v1505
    %v1568 = vpack.c.b16 %v1510, %v1508
    %v1569 = vpack.c.b16 %v1511, %v1509
    %v1570 = vpack.c.b16 %v1514, %v1512
    %v1571 = vpack.c.b16 %v1515, %v1513
    %v1572 = vpack.c.b16 %v1518, %v1516
    %v1573 = vpack.c.b16 %v1519, %v1517
    %v1574 = vpack.c.b16 %v1522, %v1520
    %v1575 = vpack.c.b16 %v1523, %v1521
    %v1576 = vpack.c.b16 %v1526, %v1524
    %v1577 = vpack.c.b16 %v1527, %v1525
    %v1578 = vpack.c.b16 %v1530, %v1528
    %v1579 = vpack.c.b16 %v1531, %v1529
    %v1580 = vpack.c.b16 %v1534, %v1532
    %v1581 = vpack.c.b16 %v1535, %v1533
    %v1582 = vpack.c.b16 %v1538, %v1536
    %v1583 = vpack.c.b16 %v1539, %v1537
    %v1584 = vpack.c.b16 %v1542, %v1540
    %v1585 = vpack.c.b16 %v1543, %v1541
    %v1586 = vpack.c.b16 %v1546, %v1544
    %v1587 = vpack.c.b16 %v1547, %v1545
    %v1588 = vpack.c.b16 %v1550, %v1548
    %v1589 = vpack.c.b16 %v1551, %v1549
    %v1590 = vpack.c.b16 %v1554, %v1552
    %v1591 = vpack.c.b16 %v1555, %v1553
    %v1592 = vpack.c.b16 %v1558, %v1556
    %v1593 = vpack.c.b16 %v1559, %v1557
    %v1594 = vpack.c.b16 %v1562, %v1560
    %v1595 = vpack.c.b16 %v1563, %v1561
    %1628 = vmatprep.subr.bf16.mxu0 %v1565
    %1629 = vmatpush1.bf16.msra.mxu0 %v1564
    %1630 = vmatprep.subr.bf16.mxu0 %v1567
    %1631 = vmatpush1.bf16.msra.mxu0 %v1566
    %1632 = vmatprep.subr.bf16.mxu0 %v1569
    %1633 = vmatpush1.bf16.msra.mxu0 %v1568
    %1634 = vmatprep.subr.bf16.mxu0 %v1571
    %1635 = vmatpush1.bf16.msra.mxu0 %v1570
    %1636 = vmatprep.subr.bf16.mxu0 %v1573
    %1637 = vmatpush1.bf16.msra.mxu0 %v1572
    %1638 = vmatprep.subr.bf16.mxu0 %v1575
    %1639 = vmatpush1.bf16.msra.mxu0 %v1574
    %1640 = vmatprep.subr.bf16.mxu0 %v1577
    %1641 = vmatpush1.bf16.msra.mxu0 %v1576
    %1642 = vmatprep.subr.bf16.mxu0 %v1579
    %1643 = vmatpush1.bf16.msra.mxu0 %v1578
    %1644 = vmatprep.subr.bf16.mxu0 %v1581
    %1645 = vmatpush1.bf16.msra.mxu0 %v1580
    %1646 = vmatprep.subr.bf16.mxu0 %v1583
    %1647 = vmatpush1.bf16.msra.mxu0 %v1582
    %1648 = vmatprep.subr.bf16.mxu0 %v1585
    %1649 = vmatpush1.bf16.msra.mxu0 %v1584
    %1650 = vmatprep.subr.bf16.mxu0 %v1587
    %1651 = vmatpush1.bf16.msra.mxu0 %v1586
    %1652 = vmatprep.subr.bf16.mxu0 %v1589
    %1653 = vmatpush1.bf16.msra.mxu0 %v1588
    %1654 = vmatprep.subr.bf16.mxu0 %v1591
    %1655 = vmatpush1.bf16.msra.mxu0 %v1590
    %1656 = vmatprep.subr.bf16.mxu0 %v1593
    %1657 = vmatpush1.bf16.msra.mxu0 %v1592
    %1658 = vmatprep.subr.bf16.mxu0 %v1595
    %1659 = vmatpush1.bf16.msra.mxu0 %v1594
    %1660 = vmatprep.mubr.bf16.mxu0 %v1423
    %1661 = vmatmul.mubr.bf16.gmra.mrb[0].mxu0 %v1422
    %v1662 = vpop.f32.mrb[0].mxu0
    %v1663 = vadd.f32 %v1461, %v1662
    %v1664 = vpop.f32.mrb[0].mxu0
    %v1665 = vadd.f32 %v1465, %v1664
    %v1666 = vpop.f32.mrb[0].mxu0
    %v1667 = vpop.f32.mrb[0].mxu0
    %1668 = vdwg.mxu0
    %v1669 = vmax.f32 %v1663, 0.0
    %v1670 = vmax.f32 %v1665, 0.0
    %v1671 = vpack.c.bf16 %v1669, %v1669
    %v1672 = vpack.c.bf16 %v1670, %v1670
    %v1673 = vld [vmem:[#allocation14] sm:$0xff]
    %v1674 = vld [vmem:[#allocation14 + $0x8] sm:$0xff]
    %v1675 = vld [vmem:[#allocation14 + $0x10] sm:$0xff]
    %v1676 = vld [vmem:[#allocation14 + $0x18] sm:$0xff]
    %v1677 = vld [vmem:[#allocation14 + $0x20] sm:$0xff]
    %v1678 = vld [vmem:[#allocation14 + $0x28] sm:$0xff]
    %v1679 = vld [vmem:[#allocation14 + $0x30] sm:$0xff]
    %v1680 = vld [vmem:[#allocation14 + $0x38] sm:$0xff]
    %v1681 = vld [vmem:[#allocation14 + $0x40] sm:$0xff]
    %v1682 = vld [vmem:[#allocation14 + $0x48] sm:$0xff]
    %v1683 = vld [vmem:[#allocation14 + $0x50] sm:$0xff]
    %v1684 = vld [vmem:[#allocation14 + $0x58] sm:$0xff]
    %v1685 = vld [vmem:[#allocation14 + $0x60] sm:$0xff]
    %v1686 = vld [vmem:[#allocation14 + $0x68] sm:$0xff]
    %v1687 = vld [vmem:[#allocation14 + $0x70] sm:$0xff]
    %v1688 = vld [vmem:[#allocation14 + $0x78] sm:$0xff]
    %v1689 = vld [vmem:[#allocation14 + $0x80] sm:$0xff]
    %v1690 = vld [vmem:[#allocation14 + $0x88] sm:$0xff]
    %v1691 = vld [vmem:[#allocation14 + $0x90] sm:$0xff]
    %v1692 = vld [vmem:[#allocation14 + $0x98] sm:$0xff]
    %v1693 = vld [vmem:[#allocation14 + $0xa0] sm:$0xff]
    %v1694 = vld [vmem:[#allocation14 + $0xa8] sm:$0xff]
    %v1695 = vld [vmem:[#allocation14 + $0xb0] sm:$0xff]
    %v1696 = vld [vmem:[#allocation14 + $0xb8] sm:$0xff]
    %v1697 = vld [vmem:[#allocation14 + $0xc0] sm:$0xff]
    %v1698 = vld [vmem:[#allocation14 + $0xc8] sm:$0xff]
    %v1699 = vld [vmem:[#allocation14 + $0xd0] sm:$0xff]
    %v1700 = vld [vmem:[#allocation14 + $0xd8] sm:$0xff]
    %v1701 = vld [vmem:[#allocation14 + $0xe0] sm:$0xff]
    %v1702 = vld [vmem:[#allocation14 + $0xe8] sm:$0xff]
    %v1703 = vld [vmem:[#allocation14 + $0xf0] sm:$0xff]
    %v1704 = vld [vmem:[#allocation14 + $0xf8] sm:$0xff]
    %v1705 = vld [vmem:[#allocation16] sm:$0x3]
    %v1707 = vlaneseq
    %v1708 = vshrl.u32 %v1707, 7
    %v1709 = vsub.s32 0, %v1708
    %v1710 = vrot.slane %v1705, %v1709
    %v1711 = vlaneseq
    %v1712 = vshrl.u32 %v1711, 7
    %v1713 = vsub.s32 1, %v1712
    %v1714 = vrot.slane %v1705, %v1713
    %v1749 = vunpack.c.l.b16 %v1673
    %v1750 = vunpack.c.h.b16 %v1673
    %v1751 = vunpack.c.l.b16 %v1674
    %v1752 = vunpack.c.h.b16 %v1674
    %v1753 = vunpack.c.l.b16 %v1675
    %v1754 = vunpack.c.h.b16 %v1675
    %v1755 = vunpack.c.l.b16 %v1676
    %v1756 = vunpack.c.h.b16 %v1676
    %v1757 = vunpack.c.l.b16 %v1677
    %v1758 = vunpack.c.h.b16 %v1677
    %v1759 = vunpack.c.l.b16 %v1678
    %v1760 = vunpack.c.h.b16 %v1678
    %v1761 = vunpack.c.l.b16 %v1679
    %v1762 = vunpack.c.h.b16 %v1679
    %v1763 = vunpack.c.l.b16 %v1680
    %v1764 = vunpack.c.h.b16 %v1680
    %v1765 = vunpack.c.l.b16 %v1681
    %v1766 = vunpack.c.h.b16 %v1681
    %v1767 = vunpack.c.l.b16 %v1682
    %v1768 = vunpack.c.h.b16 %v1682
    %v1769 = vunpack.c.l.b16 %v1683
    %v1770 = vunpack.c.h.b16 %v1683
    %v1771 = vunpack.c.l.b16 %v1684
    %v1772 = vunpack.c.h.b16 %v1684
    %v1773 = vunpack.c.l.b16 %v1685
    %v1774 = vunpack.c.h.b16 %v1685
    %v1775 = vunpack.c.l.b16 %v1686
    %v1776 = vunpack.c.h.b16 %v1686
    %v1777 = vunpack.c.l.b16 %v1687
    %v1778 = vunpack.c.h.b16 %v1687
    %v1779 = vunpack.c.l.b16 %v1688
    %v1780 = vunpack.c.h.b16 %v1688
    %v1781 = vunpack.c.l.b16 %v1689
    %v1782 = vunpack.c.h.b16 %v1689
    %v1783 = vunpack.c.l.b16 %v1690
    %v1784 = vunpack.c.h.b16 %v1690
    %v1785 = vunpack.c.l.b16 %v1691
    %v1786 = vunpack.c.h.b16 %v1691
    %v1787 = vunpack.c.l.b16 %v1692
    %v1788 = vunpack.c.h.b16 %v1692
    %v1789 = vunpack.c.l.b16 %v1693
    %v1790 = vunpack.c.h.b16 %v1693
    %v1791 = vunpack.c.l.b16 %v1694
    %v1792 = vunpack.c.h.b16 %v1694
    %v1793 = vunpack.c.l.b16 %v1695
    %v1794 = vunpack.c.h.b16 %v1695
    %v1795 = vunpack.c.l.b16 %v1696
    %v1796 = vunpack.c.h.b16 %v1696
    %v1797 = vunpack.c.l.b16 %v1697
    %v1798 = vunpack.c.h.b16 %v1697
    %v1799 = vunpack.c.l.b16 %v1698
    %v1800 = vunpack.c.h.b16 %v1698
    %v1801 = vunpack.c.l.b16 %v1699
    %v1802 = vunpack.c.h.b16 %v1699
    %v1803 = vunpack.c.l.b16 %v1700
    %v1804 = vunpack.c.h.b16 %v1700
    %v1805 = vunpack.c.l.b16 %v1701
    %v1806 = vunpack.c.h.b16 %v1701
    %v1807 = vunpack.c.l.b16 %v1702
    %v1808 = vunpack.c.h.b16 %v1702
    %v1809 = vunpack.c.l.b16 %v1703
    %v1810 = vunpack.c.h.b16 %v1703
    %v1811 = vunpack.c.l.b16 %v1704
    %v1812 = vunpack.c.h.b16 %v1704
    %v1813 = vpack.c.b16 %v1751, %v1749
    %v1814 = vpack.c.b16 %v1752, %v1750
    %v1815 = vpack.c.b16 %v1755, %v1753
    %v1816 = vpack.c.b16 %v1756, %v1754
    %v1817 = vpack.c.b16 %v1759, %v1757
    %v1818 = vpack.c.b16 %v1760, %v1758
    %v1819 = vpack.c.b16 %v1763, %v1761
    %v1820 = vpack.c.b16 %v1764, %v1762
    %v1821 = vpack.c.b16 %v1767, %v1765
    %v1822 = vpack.c.b16 %v1768, %v1766
    %v1823 = vpack.c.b16 %v1771, %v1769
    %v1824 = vpack.c.b16 %v1772, %v1770
    %v1825 = vpack.c.b16 %v1775, %v1773
    %v1826 = vpack.c.b16 %v1776, %v1774
    %v1827 = vpack.c.b16 %v1779, %v1777
    %v1828 = vpack.c.b16 %v1780, %v1778
    %v1829 = vpack.c.b16 %v1783, %v1781
    %v1830 = vpack.c.b16 %v1784, %v1782
    %v1831 = vpack.c.b16 %v1787, %v1785
    %v1832 = vpack.c.b16 %v1788, %v1786
    %v1833 = vpack.c.b16 %v1791, %v1789
    %v1834 = vpack.c.b16 %v1792, %v1790
    %v1835 = vpack.c.b16 %v1795, %v1793
    %v1836 = vpack.c.b16 %v1796, %v1794
    %v1837 = vpack.c.b16 %v1799, %v1797
    %v1838 = vpack.c.b16 %v1800, %v1798
    %v1839 = vpack.c.b16 %v1803, %v1801
    %v1840 = vpack.c.b16 %v1804, %v1802
    %v1841 = vpack.c.b16 %v1807, %v1805
    %v1842 = vpack.c.b16 %v1808, %v1806
    %v1843 = vpack.c.b16 %v1811, %v1809
    %v1844 = vpack.c.b16 %v1812, %v1810
    %1877 = vmatprep.subr.bf16.mxu0 %v1814
    %1878 = vmatpush1.bf16.msra.mxu0 %v1813
    %1879 = vmatprep.subr.bf16.mxu0 %v1816
    %1880 = vmatpush1.bf16.msra.mxu0 %v1815
    %1881 = vmatprep.subr.bf16.mxu0 %v1818
    %1882 = vmatpush1.bf16.msra.mxu0 %v1817
    %1883 = vmatprep.subr.bf16.mxu0 %v1820
    %1884 = vmatpush1.bf16.msra.mxu0 %v1819
    %1885 = vmatprep.subr.bf16.mxu0 %v1822
    %1886 = vmatpush1.bf16.msra.mxu0 %v1821
    %1887 = vmatprep.subr.bf16.mxu0 %v1824
    %1888 = vmatpush1.bf16.msra.mxu0 %v1823
    %1889 = vmatprep.subr.bf16.mxu0 %v1826
    %1890 = vmatpush1.bf16.msra.mxu0 %v1825
    %1891 = vmatprep.subr.bf16.mxu0 %v1828
    %1892 = vmatpush1.bf16.msra.mxu0 %v1827
    %1893 = vmatprep.subr.bf16.mxu0 %v1830
    %1894 = vmatpush1.bf16.msra.mxu0 %v1829
    %1895 = vmatprep.subr.bf16.mxu0 %v1832
    %1896 = vmatpush1.bf16.msra.mxu0 %v1831
    %1897 = vmatprep.subr.bf16.mxu0 %v1834
    %1898 = vmatpush1.bf16.msra.mxu0 %v1833
    %1899 = vmatprep.subr.bf16.mxu0 %v1836
    %1900 = vmatpush1.bf16.msra.mxu0 %v1835
    %1901 = vmatprep.subr.bf16.mxu0 %v1838
    %1902 = vmatpush1.bf16.msra.mxu0 %v1837
    %1903 = vmatprep.subr.bf16.mxu0 %v1840
    %1904 = vmatpush1.bf16.msra.mxu0 %v1839
    %1905 = vmatprep.subr.bf16.mxu0 %v1842
    %1906 = vmatpush1.bf16.msra.mxu0 %v1841
    %1907 = vmatprep.subr.bf16.mxu0 %v1844
    %1908 = vmatpush1.bf16.msra.mxu0 %v1843
    %1909 = vmatprep.mubr.bf16.mxu0 %v1672
    %1910 = vmatmul.mubr.bf16.gmra.mrb[0].mxu0 %v1671
    %v1911 = vpop.f32.mrb[0].mxu0
    %v1912 = vadd.f32 %v1710, %v1911
    %v1913 = vpop.f32.mrb[0].mxu0
    %v1914 = vadd.f32 %v1714, %v1913
    %v1915 = vpop.f32.mrb[0].mxu0
    %v1916 = vpop.f32.mrb[0].mxu0
    %1917 = vdwg.mxu0
    %v1918 = vmax.f32 %v1914, -10.0
    %v1919 = vmin.f32 %v1918, 2.0
    %v1920 = vmul.f32 %v1919, 1.442695
    %v1921 = vpow.pop %v1920
    %v1922 = vld [vmem:[#allocation17] sm:$0x3]
    %v1923 = vmul.f32 %v1921, %v1922
    %v1924 = vadd.f32 %v1912, %v1923
    %v1925 = vtanh.pop %v1924
    %1926 = vst [vmem:[#allocation19] sm:$0x3] %v1925
    // Predicated region
    $region82: #{bc_visual_policy_stochastic_forward.7} parent=1 // pred_check
      _
    $region83: #{bc_visual_policy_stochastic_forward.7} parent=1 // pred_check_branch
      %1928 = sbr.rel (0) target = $region85
    $region84: #{bc_visual_policy_stochastic_forward.7} parent=1 // pred_region
      %s1930 = ssub.s32 32, 32
      %1931 = vsyncadd [#allocation4], %s1930
      %s1933 = sshll.u32 [#allocation19], 4
      %s1934 = int_to_ptr.vmem [resolvable:$true] %s1933
      %1936 = dma.vmem_to_hbm [thread:$0]  %s1934, 32, %s10, [#allocation4]
    $region85: #{bc_visual_policy_stochastic_forward.7} parent=1 // pred_fallthru
      _
    // Predicated region
    $region86: #{bc_visual_policy_stochastic_forward.7} parent=1 // pred_check
      _
    $region87: #{bc_visual_policy_stochastic_forward.7} parent=1 // pred_check_branch
      %1938 = sbr.rel (0) target = $region89
    $region88: #{bc_visual_policy_stochastic_forward.7} parent=1 // pred_region
      %1939 = dma.done [#allocation4], 32
    $region89: #{bc_visual_policy_stochastic_forward.7} parent=1 // pred_fallthru
      _
    %1940 = vsyncpa [#allocation3], 1
    %1941 = vsyncpa [#allocation6], 1
    %1942 = vsyncpa [#allocation9], 1
    %1943 = vsyncpa [#allocation12], 1
    %1944 = vsyncpa [#allocation15], 1
    %1945 = vsyncpa [#allocation18], 1
    %1946 = vsyncpa [#allocation4], 1

</llo_original>
